<compile_context>
chip_gen: v5e
topology: v5e:2x2
jax: 0.10.0
libtpu: 0.0.40
codegen_flags: <defaults>
</compile_context>

<pallas_src>
import functools

import jax
import jax.numpy as jnp
from jax.experimental import pallas as pl
from jax.experimental.pallas import tpu as pltpu

# ----------------------- configuration (small shapes) -----------------------
WORD_DIM = 32        # args.word_embedding_dim
TITLE_LEN = 16       # args.title_word_size
NUM_FILTERS = 32     # args.lstur_num_filters
WINDOW = 3           # args.lstur_window_sizes
CAT_DIM = 16         # args.category_dim
SUBCAT_DIM = 16      # args.subcategory_dim
QUERY_DIM = 16       # args.query_vector_dim
CAT_SIZE = 10
SUBCAT_SIZE = 12
USER_SIZE = 10
SAMPLE_NUM = 4       # args.sample_num
CLICKED_NUM = 8      # clicked news per user
BATCH = 2            # == user_clicked_new_num in the torch code (one user/row)
H3 = NUM_FILTERS * 3     # concat(word, cat, subcat) rep dim; GRU hidden ('ini')
H3P = 128                # lane-padded rep / hidden dim (pad lanes stay zero)
CONV_K = 128             # lane-padded im2col K dim (WINDOW*WORD_DIM=96 -> 128)
B_PAD = 8                # user/batch dim padded to full sublane occupancy
LN_EPS = 1e-5


def _layer_norm(v, g, b):
    mu = jnp.mean(v, axis=-1, keepdims=True)
    var = jnp.mean(jnp.square(v - mu), axis=-1, keepdims=True)
    return (v - mu) * jax.lax.rsqrt(var + LN_EPS) * g[None, :] + b[None, :]


# ========================== fused LSTUR forward kernel =======================
def lstur_fused_kernel(slab_ref, catsub_ref, h0_ref, mask_ref,
                       convw_ref, attw_ref, fcw_ref, vb_ref,
                       wih_ref, whh_ref, gb_ref, out_ref,
                       *, n_news, title_len, b_pad, n_samples, n_clicked):
    f = convw_ref.shape[-1]                 # NUM_FILTERS
    q = attw_ref.shape[-1]                  # QUERY_DIM
    hp = h0_ref.shape[-1]                   # H3P (128)

    # packed vector bank: biases / LN params, all padded to 32 lanes
    vb = vb_ref[...]
    conv_b = vb[0]
    att_b = vb[1]
    att_q = vb[2]
    fc1_b = vb[3]
    fc2_b = vb[4]
    ln1_g, ln1_b = vb[5], vb[6]
    ln2_g, ln2_b = vb[7], vb[8]
    ln3_g, ln3_b = vb[9], vb[10]

    # ---------------- news encoder (all news at once) ----------------
    # title CNN: one MXU matmul on the wrapper-built lane-dense im2col slab
    c2 = jnp.dot(slab_ref[...], convw_ref[...],
                 preferred_element_type=jnp.float32)            # (N*T, F) f32
    c2 = jnp.maximum(c2 + conv_b[None, :], 0.0)                 # ReLU

    # additive attention pooling over title words
    h_att = jnp.tanh(jnp.dot(c2.astype(jnp.bfloat16), attw_ref[...],
                             preferred_element_type=jnp.float32)
                     + att_b[None, :q])                         # (N*T, Q)
    sc = jnp.sum(h_att * att_q[None, :q], axis=-1, keepdims=True)
    sc = sc.reshape(n_news, title_len)
    sc = sc - jnp.max(sc, axis=1, keepdims=True)
    e = jnp.exp(sc)
    att = e / jnp.sum(e, axis=1, keepdims=True)                 # (N, T)
    c3 = c2.reshape(n_news, title_len, f)
    word_rep = jnp.sum(att[:, :, None] * c3, axis=1)            # (N, F)
    word_rep = _layer_norm(word_rep, ln3_g, ln3_b)

    # packed category/subcategory FC (block-diagonal weight) + LayerNorms
    cs = jnp.dot(catsub_ref[...], fcw_ref[...],
                 preferred_element_type=jnp.float32)            # (N, 2F)
    cat_rep = _layer_norm(cs[:, :f] + fc1_b[None, :], ln1_g, ln1_b)
    sub_rep = _layer_norm(cs[:, f:] + fc2_b[None, :], ln2_g, ln2_b)

    # lane-dense 128-wide rep: [word | cat | sub | zeros]; stays in VMEM
    zfill = jnp.zeros((n_news, hp - 3 * f), jnp.float32)
    rep_all = jnp.concatenate([word_rep, cat_rep, sub_rep, zfill], axis=1)

    # split candidate / clicked reps (sublane-aligned static slices)
    n_cand = b_pad * n_samples
    cand = rep_all[:n_cand]                 # (S*b_pad, 128), sample-major
    clk = rep_all[n_cand:]                  # (C*b_pad, 128), time-major

    # ---------------- user GRU (h0 = user embedding) ----------------
    gb = gb_ref[...]
    bih = gb[0]
    bhh = gb[1]
    # input-gate projections for all users / timesteps in one matmul
    gx_all = (jnp.dot(clk.astype(jnp.bfloat16), wih_ref[...],
                      preferred_element_type=jnp.float32)
              + bih[None, :])                                   # (C*b_pad, 3*hp)

    whh = whh_ref[...]
    mask = mask_ref[...]                    # (b_pad, C) f32, precomputed
    h = h0_ref[...]                         # (b_pad, hp) f32

    # fully unrolled recurrence; every slice is sublane/lane aligned
    for step in range(n_clicked):
        gx = gx_all[step * b_pad:(step + 1) * b_pad]            # (b_pad, 3*hp)
        gh = jnp.dot(h.astype(jnp.bfloat16), whh,
                     preferred_element_type=jnp.float32) + bhh[None, :]
        r = jax.nn.sigmoid(gx[:, :hp] + gh[:, :hp])
        z = jax.nn.sigmoid(gx[:, hp:2 * hp] + gh[:, hp:2 * hp])
        nn_ = jnp.tanh(gx[:, 2 * hp:] + r * gh[:, 2 * hp:])
        h_new = (1.0 - z) * nn_ + z * h
        # pack_padded_sequence semantics: steps beyond L don't update h
        m_t = mask[:, step:step + 1]                            # (b_pad, 1)
        h = h + m_t * (h_new - h)

    # ---------------- fused score = <candidate_rep, user_rep> ----------------
    cols = []
    for si in range(n_samples):
        cand_s = cand[si * b_pad:(si + 1) * b_pad]              # (b_pad, hp)
        cols.append(jnp.sum(cand_s * h, axis=-1, keepdims=True))
    scores = jnp.concatenate(cols, axis=1)                      # (b_pad, S)
    zpad = jnp.zeros((b_pad, out_ref.shape[-1] - n_samples), jnp.float32)
    out_ref[...] = jnp.concatenate([scores, zpad], axis=1)      # lane-dense store


def lstur_fused(slab, catsub, h0, mask, wp, *, b_pad, n_samples, n_clicked,
                title_len):
    n_news = catsub.shape[0]
    kern = functools.partial(lstur_fused_kernel,
                             n_news=n_news, title_len=title_len, b_pad=b_pad,
                             n_samples=n_samples, n_clicked=n_clicked)
    args = (slab, catsub, h0, mask,
            wp['conv_w2'], wp['att_w'], wp['fcw'], wp['vbank'],
            wp['gru_wih_p'], wp['gru_whh_p'], wp['gru_bias_p'])

    def full(a):  # replicated (full-array) block
        nd = a.ndim
        return pl.BlockSpec(a.shape, lambda *_ , _nd=nd: (0,) * _nd)

    return pl.pallas_call(
        kern,
        out_shape=jax.ShapeDtypeStruct((b_pad, H3P), jnp.float32),
        grid=(1,),
        in_specs=[full(a) for a in args],
        out_specs=pl.BlockSpec((b_pad, H3P), lambda i: (0, 0)),
        compiler_params=pltpu.CompilerParams(
            dimension_semantics=("arbitrary",)),
    )(*args)


# ================================ parameters =================================
def init_params(key):
    ks = jax.random.split(key, 16)

    def nrm(k, shape, scale=0.1):
        return scale * jax.random.normal(k, shape, jnp.float32)

    p = {}
    p['cat_table'] = nrm(ks[0], (CAT_SIZE, CAT_DIM))
    p['subcat_table'] = nrm(ks[1], (SUBCAT_SIZE, SUBCAT_DIM))
    p['user_table'] = nrm(ks[2], (USER_SIZE, H3)).at[0].set(0.0)  # padding_idx=0
    p['conv_w'] = nrm(ks[3], (WINDOW, WORD_DIM, NUM_FILTERS))
    p['conv_b'] = nrm(ks[4], (NUM_FILTERS,))
    p['att_w'] = nrm(ks[5], (NUM_FILTERS, QUERY_DIM))
    p['att_b'] = nrm(ks[6], (QUERY_DIM,))
    p['att_q'] = nrm(ks[7], (QUERY_DIM, 1))
    p['fc1_w'] = nrm(ks[8], (CAT_DIM, NUM_FILTERS))
    p['fc1_b'] = nrm(ks[9], (NUM_FILTERS,))
    p['fc2_w'] = nrm(ks[10], (SUBCAT_DIM, NUM_FILTERS))
    p['fc2_b'] = nrm(ks[11], (NUM_FILTERS,))
    for nm in ('ln1', 'ln2', 'ln3'):
        p[nm + '_g'] = jnp.ones((NUM_FILTERS,), jnp.float32)
        p[nm + '_b'] = jnp.zeros((NUM_FILTERS,), jnp.float32)
    p['gru_wih'] = nrm(ks[12], (H3, 3 * H3))   # gate order: r | z | n
    p['gru_whh'] = nrm(ks[13], (H3, 3 * H3))
    p['gru_bih'] = nrm(ks[14], (3 * H3,))
    p['gru_bhh'] = nrm(ks[15], (3 * H3,))
    return p


def prepare_params(p):
    """Pack / pad / cast kernel-side parameters (done once, outside kernels).

    Invariant (relied on for exactness): all padded regions of conv_w2, fcw,
    gru_wih_p, gru_whh_p and gru_bias_p are ZERO, so padded rep/hidden lanes
    stay exactly 0 through the whole forward pass.
    """
    wp = {}
    # im2col conv weight (WINDOW*WORD_DIM, F) zero-padded to (128, F), bf16
    cw = p['conv_w'].reshape(WINDOW * WORD_DIM, NUM_FILTERS)
    wp['conv_w2'] = jnp.pad(
        cw, ((0, CONV_K - WINDOW * WORD_DIM), (0, 0))).astype(jnp.bfloat16)
    wp['att_w'] = p['att_w'].astype(jnp.bfloat16)

    # block-diagonal packed cat/sub FC weight: (128, 2F), bf16
    fcw = jnp.zeros((H3P, 2 * NUM_FILTERS), jnp.float32)
    fcw = fcw.at[:CAT_DIM, :NUM_FILTERS].set(p['fc1_w'])
    fcw = fcw.at[CAT_DIM:CAT_DIM + SUBCAT_DIM, NUM_FILTERS:].set(p['fc2_w'])
    wp['fcw'] = fcw.astype(jnp.bfloat16)

    def pad_f(v):
        return jnp.pad(v, (0, NUM_FILTERS - v.shape[0]))

    vb = jnp.stack([
        p['conv_b'],
        pad_f(p['att_b']),
        pad_f(p['att_q'].reshape(-1)),
        p['fc1_b'], p['fc2_b'],
        p['ln1_g'], p['ln1_b'],
        p['ln2_g'], p['ln2_b'],
        p['ln3_g'], p['ln3_b'],
    ], axis=0)
    wp['vbank'] = jnp.pad(vb, ((0, 16 - vb.shape[0]), (0, 0)))

    # GRU weights padded so each gate occupies a 128-lane aligned block.
    def pad_gate_mat(w):
        out = jnp.zeros((H3P, 3 * H3P), jnp.float32)
        for g in range(3):
            out = out.at[:H3, g * H3P:g * H3P + H3].set(w[:, g * H3:(g + 1) * H3])
        return out

    def pad_gate_vec(v):
        out = jnp.zeros((3 * H3P,), jnp.float32)
        for g in range(3):
            out = out.at[g * H3P:g * H3P + H3].set(v[g * H3:(g + 1) * H3])
        return out

    wp['gru_wih_p'] = pad_gate_mat(p['gru_wih']).astype(jnp.bfloat16)
    wp['gru_whh_p'] = pad_gate_mat(p['gru_whh']).astype(jnp.bfloat16)
    wp['gru_bias_p'] = jnp.stack([pad_gate_vec(p['gru_bih']),
                                  pad_gate_vec(p['gru_bhh'])], axis=0)
    return wp


# ================================ full forward ===============================
@jax.jit
def lstur_forward(p, wp,
                  candidate_word_emb,   # (B, S, T, D)
                  clicked_word_emb,     # (B, C, T, D)
                  candidate_cat_idx,    # (B, S)
                  clicked_cat_idx,      # (B, C)
                  candidate_sub_idx,    # (B, S)
                  clicked_sub_idx,      # (B, C)
                  clicked_len,          # (B,)
                  user_index):          # (B,)
    b, s, t, d = candidate_word_emb.shape
    c = clicked_word_emb.shape[1]
    bp = B_PAD

    # --- pad users to B_PAD; candidates sample-major, clicked time-major ---
    cand_w = jnp.pad(candidate_word_emb, ((0, bp - b), (0, 0), (0, 0), (0, 0)))
    cand_w = jnp.transpose(cand_w, (1, 0, 2, 3)).reshape(s * bp, t, d)
    clk_w = jnp.pad(clicked_word_emb, ((0, bp - b), (0, 0), (0, 0), (0, 0)))
    clk_w = jnp.transpose(clk_w, (1, 0, 2, 3)).reshape(c * bp, t, d)
    word_all = jnp.concatenate([cand_w, clk_w], axis=0)          # (N, T, D)
    n_news = word_all.shape[0]

    cand_cat_i = jnp.transpose(jnp.pad(candidate_cat_idx, ((0, bp - b), (0, 0))),
                               (1, 0)).reshape(-1)
    clk_cat_i = jnp.transpose(jnp.pad(clicked_cat_idx, ((0, bp - b), (0, 0))),
                              (1, 0)).reshape(-1)
    cand_sub_i = jnp.transpose(jnp.pad(candidate_sub_idx, ((0, bp - b), (0, 0))),
                               (1, 0)).reshape(-1)
    clk_sub_i = jnp.transpose(jnp.pad(clicked_sub_idx, ((0, bp - b), (0, 0))),
                              (1, 0)).reshape(-1)
    cat_idx = jnp.concatenate([cand_cat_i, clk_cat_i], axis=0)
    sub_idx = jnp.concatenate([cand_sub_i, clk_sub_i], axis=0)
    cat_all = jnp.take(p['cat_table'], cat_idx, axis=0)          # (N, 16)
    sub_all = jnp.take(p['subcat_table'], sub_idx, axis=0)       # (N, 16)
    catsub = jnp.concatenate([cat_all, sub_all], axis=-1)        # (N, 32)
    catsub = jnp.pad(catsub, ((0, 0), (0, H3P - CAT_DIM - SUBCAT_DIM)))
    catsub = catsub.astype(jnp.bfloat16)                         # (N, 128)

    # --- wrapper-side im2col for the window-3 'same' conv, lane-padded ---
    pad_w = (WINDOW - 1) // 2
    xp = jnp.pad(word_all, ((0, 0), (pad_w, pad_w), (0, 0)))
    slab = jnp.concatenate([xp[:, k:k + t, :] for k in range(WINDOW)], axis=-1)
    slab = jnp.pad(slab, ((0, 0), (0, 0), (0, CONV_K - WINDOW * d)))
    slab = slab.reshape(n_news * t, CONV_K).astype(jnp.bfloat16)

    # --- user embedding h0 (dropout2d = identity in eval) and length mask ---
    h0 = jnp.take(p['user_table'], user_index, axis=0)           # (B, H3)
    h0 = jnp.pad(h0, ((0, bp - b), (0, H3P - H3)))               # (B_PAD, 128)
    lens = jnp.pad(clicked_len.astype(jnp.int32), (0, bp - b))   # padded len=0
    mask = (lens[:, None] > jnp.arange(c, dtype=jnp.int32)[None, :]
            ).astype(jnp.float32)                                # (B_PAD, C)

    out = lstur_fused(slab, catsub, h0, mask, wp,
                      b_pad=bp, n_samples=s, n_clicked=c, title_len=t)
    return out[:b, :s]                                           # (B, S)


# ==================================== main ===================================
if __name__ == "__main__":
    key = jax.random.PRNGKey(0)
    kp, k1, k2, k3, k4, k5, k6, k7 = jax.random.split(key, 8)
    params = init_params(kp)
    kparams = prepare_params(params)

    cand_word = jax.random.normal(
        k1, (BATCH, SAMPLE_NUM, TITLE_LEN, WORD_DIM), jnp.float32)
    clk_word = jax.random.normal(
        k2, (BATCH, CLICKED_NUM, TITLE_LEN, WORD_DIM), jnp.float32)
    cand_cat = jax.random.randint(k3, (BATCH, SAMPLE_NUM), 0, CAT_SIZE)
    clk_cat = jax.random.randint(k4, (BATCH, CLICKED_NUM), 0, CAT_SIZE)
    cand_sub = jax.random.randint(k5, (BATCH, SAMPLE_NUM), 0, SUBCAT_SIZE)
    clk_sub = jax.random.randint(k6, (BATCH, CLICKED_NUM), 0, SUBCAT_SIZE)
    clicked_len = jnp.array([5, 8], dtype=jnp.int32)
    user_idx = jax.random.randint(k7, (BATCH,), 0, USER_SIZE)

    score = lstur_forward(params, kparams, cand_word, clk_word, cand_cat,
                          clk_cat, cand_sub, clk_sub, clicked_len, user_idx)
    score = jax.block_until_ready(score)
    assert score.shape == (BATCH, SAMPLE_NUM)
    assert bool(jnp.all(jnp.isfinite(score)))
    print("KERNEL_OK")
</pallas_src>

<mosaic_0001>
module attributes {stable_mosaic.version = 11 : i64} {
  func.func @lstur_fused_kernel(%arg0: i32, %arg1: memref<1536x128xbf16, #tpu.memory_space<vmem>>, %arg2: memref<96x128xbf16, #tpu.memory_space<vmem>>, %arg3: memref<8x128xf32, #tpu.memory_space<vmem>>, %arg4: memref<8x8xf32, #tpu.memory_space<vmem>>, %arg5: memref<128x32xbf16, #tpu.memory_space<vmem>>, %arg6: memref<32x16xbf16, #tpu.memory_space<vmem>>, %arg7: memref<128x64xbf16, #tpu.memory_space<vmem>>, %arg8: memref<16x32xf32, #tpu.memory_space<vmem>>, %arg9: memref<128x384xbf16, #tpu.memory_space<vmem>>, %arg10: memref<128x384xbf16, #tpu.memory_space<vmem>>, %arg11: memref<2x384xf32, #tpu.memory_space<vmem>>, %arg12: memref<8x128xf32, #tpu.memory_space<vmem>>) attributes {dimension_semantics = [#tpu.dimension_semantics<arbitrary>], iteration_bounds = array<i64: 1>, scalar_prefetch = 0 : i64, scratch_operands = 0 : i64, tpu.core_type = #tpu.core_type<tc>, window_params = [{pipeline_mode = #tpu.pipeline_mode<synchronous>, transform_indices = @transform_0, window_bounds = array<i64: 1536, 128>}, {pipeline_mode = #tpu.pipeline_mode<synchronous>, transform_indices = @transform_1, window_bounds = array<i64: 96, 128>}, {pipeline_mode = #tpu.pipeline_mode<synchronous>, transform_indices = @transform_2, window_bounds = array<i64: 8, 128>}, {pipeline_mode = #tpu.pipeline_mode<synchronous>, transform_indices = @transform_3, window_bounds = array<i64: 8, 8>}, {pipeline_mode = #tpu.pipeline_mode<synchronous>, transform_indices = @transform_4, window_bounds = array<i64: 128, 32>}, {pipeline_mode = #tpu.pipeline_mode<synchronous>, transform_indices = @transform_5, window_bounds = array<i64: 32, 16>}, {pipeline_mode = #tpu.pipeline_mode<synchronous>, transform_indices = @transform_6, window_bounds = array<i64: 128, 64>}, {pipeline_mode = #tpu.pipeline_mode<synchronous>, transform_indices = @transform_7, window_bounds = array<i64: 16, 32>}, {pipeline_mode = #tpu.pipeline_mode<synchronous>, transform_indices = @transform_8, window_bounds = array<i64: 128, 384>}, {pipeline_mode = #tpu.pipeline_mode<synchronous>, transform_indices = @transform_9, window_bounds = array<i64: 128, 384>}, {pipeline_mode = #tpu.pipeline_mode<synchronous>, transform_indices = @transform_10, window_bounds = array<i64: 2, 384>}, {pipeline_mode = #tpu.pipeline_mode<synchronous>, transform_indices = @transform_11, window_bounds = array<i64: 8, 128>}]} {
    %c0 = arith.constant 0 : index
    %c0_0 = arith.constant 0 : index
    %0 = vector.load %arg8[%c0, %c0_0] : memref<16x32xf32, #tpu.memory_space<vmem>>, vector<16x32xf32>
    %1 = vector.extract_strided_slice %0 {offsets = [0, 0], sizes = [1, 32], strides = [1, 1]} : vector<16x32xf32> to vector<1x32xf32>
    %2 = vector.shape_cast %1 : vector<1x32xf32> to vector<32xf32>
    %3 = vector.extract_strided_slice %0 {offsets = [1, 0], sizes = [1, 32], strides = [1, 1]} : vector<16x32xf32> to vector<1x32xf32>
    %4 = vector.shape_cast %3 : vector<1x32xf32> to vector<32xf32>
    %5 = vector.extract_strided_slice %0 {offsets = [2, 0], sizes = [1, 32], strides = [1, 1]} : vector<16x32xf32> to vector<1x32xf32>
    %6 = vector.shape_cast %5 : vector<1x32xf32> to vector<32xf32>
    %7 = vector.extract_strided_slice %0 {offsets = [3, 0], sizes = [1, 32], strides = [1, 1]} : vector<16x32xf32> to vector<1x32xf32>
    %8 = vector.shape_cast %7 : vector<1x32xf32> to vector<32xf32>
    %9 = vector.extract_strided_slice %0 {offsets = [4, 0], sizes = [1, 32], strides = [1, 1]} : vector<16x32xf32> to vector<1x32xf32>
    %10 = vector.shape_cast %9 : vector<1x32xf32> to vector<32xf32>
    %11 = vector.extract_strided_slice %0 {offsets = [5, 0], sizes = [1, 32], strides = [1, 1]} : vector<16x32xf32> to vector<1x32xf32>
    %12 = vector.shape_cast %11 : vector<1x32xf32> to vector<32xf32>
    %13 = vector.extract_strided_slice %0 {offsets = [6, 0], sizes = [1, 32], strides = [1, 1]} : vector<16x32xf32> to vector<1x32xf32>
    %14 = vector.shape_cast %13 : vector<1x32xf32> to vector<32xf32>
    %15 = vector.extract_strided_slice %0 {offsets = [7, 0], sizes = [1, 32], strides = [1, 1]} : vector<16x32xf32> to vector<1x32xf32>
    %16 = vector.shape_cast %15 : vector<1x32xf32> to vector<32xf32>
    %17 = vector.extract_strided_slice %0 {offsets = [8, 0], sizes = [1, 32], strides = [1, 1]} : vector<16x32xf32> to vector<1x32xf32>
    %18 = vector.shape_cast %17 : vector<1x32xf32> to vector<32xf32>
    %19 = vector.extract_strided_slice %0 {offsets = [9, 0], sizes = [1, 32], strides = [1, 1]} : vector<16x32xf32> to vector<1x32xf32>
    %20 = vector.shape_cast %19 : vector<1x32xf32> to vector<32xf32>
    %21 = vector.extract_strided_slice %0 {offsets = [10, 0], sizes = [1, 32], strides = [1, 1]} : vector<16x32xf32> to vector<1x32xf32>
    %22 = vector.shape_cast %21 : vector<1x32xf32> to vector<32xf32>
    %c0_1 = arith.constant 0 : index
    %c0_2 = arith.constant 0 : index
    %23 = vector.load %arg1[%c0_1, %c0_2] : memref<1536x128xbf16, #tpu.memory_space<vmem>>, vector<1536x128xbf16>
    %c0_3 = arith.constant 0 : index
    %c0_4 = arith.constant 0 : index
    %24 = vector.load %arg5[%c0_3, %c0_4] : memref<128x32xbf16, #tpu.memory_space<vmem>>, vector<128x32xbf16>
    %cst = arith.constant dense<0.000000e+00> : vector<1536x32xf32>
    %25 = tpu.matmul %23, %24, %cst {dimension_numbers = #tpu.dot_dimension_numbers<[1], [0], [0], [1], [0, 0, 1, 1], [], []>} : vector<1536x128xbf16>, vector<128x32xbf16>, vector<1536x32xf32> -> vector<1536x32xf32>
    %26 = vector.shape_cast %2 : vector<32xf32> to vector<1x32xf32>
    %27 = vector.broadcast %26 : vector<1x32xf32> to vector<1536x32xf32>
    %28 = arith.addf %25, %27 : vector<1536x32xf32>
    %cst_5 = arith.constant 0.000000e+00 : f32
    %29 = vector.broadcast %cst_5 : f32 to vector<1536x32xf32>
    %30 = arith.maximumf %28, %29 : vector<1536x32xf32>
    %31 = arith.truncf %30 : vector<1536x32xf32> to vector<1536x32xbf16>
    %c0_6 = arith.constant 0 : index
    %c0_7 = arith.constant 0 : index
    %32 = vector.load %arg6[%c0_6, %c0_7] : memref<32x16xbf16, #tpu.memory_space<vmem>>, vector<32x16xbf16>
    %cst_8 = arith.constant dense<0.000000e+00> : vector<1536x16xf32>
    %33 = tpu.matmul %31, %32, %cst_8 {dimension_numbers = #tpu.dot_dimension_numbers<[1], [0], [0], [1], [0, 0, 1, 1], [], []>} : vector<1536x32xbf16>, vector<32x16xbf16>, vector<1536x16xf32> -> vector<1536x16xf32>
    %34 = vector.extract_strided_slice %4 {offsets = [0], sizes = [16], strides = [1]} : vector<32xf32> to vector<16xf32>
    %35 = vector.shape_cast %34 : vector<16xf32> to vector<1x16xf32>
    %36 = vector.broadcast %35 : vector<1x16xf32> to vector<1536x16xf32>
    %37 = arith.addf %33, %36 : vector<1536x16xf32>
    %38 = math.tanh %37 : vector<1536x16xf32>
    %39 = vector.extract_strided_slice %6 {offsets = [0], sizes = [16], strides = [1]} : vector<32xf32> to vector<16xf32>
    %40 = vector.shape_cast %39 : vector<16xf32> to vector<1x16xf32>
    %41 = vector.broadcast %40 : vector<1x16xf32> to vector<1536x16xf32>
    %42 = arith.mulf %38, %41 : vector<1536x16xf32>
    %cst_9 = arith.constant dense<0.000000e+00> : vector<1536xf32>
    %43 = vector.multi_reduction <add>, %42, %cst_9 [1] : vector<1536x16xf32> to vector<1536xf32>
    %44 = vector.shape_cast %43 : vector<1536xf32> to vector<1536x1xf32>
    %45 = vector.shape_cast %44 : vector<1536x1xf32> to vector<96x16xf32>
    %cst_10 = arith.constant dense<0xFF800000> : vector<96xf32>
    %46 = vector.multi_reduction <maximumf>, %45, %cst_10 [1] : vector<96x16xf32> to vector<96xf32>
    %47 = vector.shape_cast %46 : vector<96xf32> to vector<96x1xf32>
    %48 = vector.broadcast %47 : vector<96x1xf32> to vector<96x16xf32>
    %49 = arith.subf %45, %48 : vector<96x16xf32>
    %50 = math.exp %49 : vector<96x16xf32>
    %cst_11 = arith.constant dense<0.000000e+00> : vector<96xf32>
    %51 = vector.multi_reduction <add>, %50, %cst_11 [1] : vector<96x16xf32> to vector<96xf32>
    %52 = vector.shape_cast %51 : vector<96xf32> to vector<96x1xf32>
    %53 = vector.broadcast %52 : vector<96x1xf32> to vector<96x16xf32>
    %54 = arith.divf %50, %53 : vector<96x16xf32>
    %55 = vector.shape_cast %30 : vector<1536x32xf32> to vector<96x16x32xf32>
    %56 = vector.shape_cast %54 : vector<96x16xf32> to vector<96x16x1xf32>
    %57 = vector.broadcast %56 : vector<96x16x1xf32> to vector<96x16x32xf32>
    %58 = arith.mulf %57, %55 : vector<96x16x32xf32>
    %cst_12 = arith.constant dense<0.000000e+00> : vector<96x32xf32>
    %59 = vector.multi_reduction <add>, %58, %cst_12 [1] : vector<96x16x32xf32> to vector<96x32xf32>
    %cst_13 = arith.constant dense<0.000000e+00> : vector<96xf32>
    %60 = vector.multi_reduction <add>, %59, %cst_13 [1] : vector<96x32xf32> to vector<96xf32>
    %61 = vector.shape_cast %60 : vector<96xf32> to vector<96x1xf32>
    %cst_14 = arith.constant 3.200000e+01 : f32
    %62 = vector.broadcast %cst_14 : f32 to vector<96x1xf32>
    %63 = arith.divf %61, %62 : vector<96x1xf32>
    %64 = vector.broadcast %63 : vector<96x1xf32> to vector<96x32xf32>
    %65 = arith.subf %59, %64 : vector<96x32xf32>
    %66 = arith.mulf %65, %65 : vector<96x32xf32>
    %cst_15 = arith.constant dense<0.000000e+00> : vector<96xf32>
    %67 = vector.multi_reduction <add>, %66, %cst_15 [1] : vector<96x32xf32> to vector<96xf32>
    %68 = vector.shape_cast %67 : vector<96xf32> to vector<96x1xf32>
    %cst_16 = arith.constant 3.200000e+01 : f32
    %69 = vector.broadcast %cst_16 : f32 to vector<96x1xf32>
    %70 = arith.divf %68, %69 : vector<96x1xf32>
    %71 = vector.broadcast %63 : vector<96x1xf32> to vector<96x32xf32>
    %72 = arith.subf %59, %71 : vector<96x32xf32>
    %cst_17 = arith.constant 9.99999974E-6 : f32
    %73 = vector.broadcast %cst_17 : f32 to vector<96x1xf32>
    %74 = arith.addf %70, %73 : vector<96x1xf32>
    %75 = math.rsqrt %74 : vector<96x1xf32>
    %76 = vector.broadcast %75 : vector<96x1xf32> to vector<96x32xf32>
    %77 = arith.mulf %72, %76 : vector<96x32xf32>
    %78 = vector.shape_cast %20 : vector<32xf32> to vector<1x32xf32>
    %79 = vector.broadcast %78 : vector<1x32xf32> to vector<96x32xf32>
    %80 = arith.mulf %77, %79 : vector<96x32xf32>
    %81 = vector.shape_cast %22 : vector<32xf32> to vector<1x32xf32>
    %82 = vector.broadcast %81 : vector<1x32xf32> to vector<96x32xf32>
    %83 = arith.addf %80, %82 : vector<96x32xf32>
    %c0_18 = arith.constant 0 : index
    %c0_19 = arith.constant 0 : index
    %84 = vector.load %arg2[%c0_18, %c0_19] : memref<96x128xbf16, #tpu.memory_space<vmem>>, vector<96x128xbf16>
    %c0_20 = arith.constant 0 : index
    %c0_21 = arith.constant 0 : index
    %85 = vector.load %arg7[%c0_20, %c0_21] : memref<128x64xbf16, #tpu.memory_space<vmem>>, vector<128x64xbf16>
    %cst_22 = arith.constant dense<0.000000e+00> : vector<96x64xf32>
    %86 = tpu.matmul %84, %85, %cst_22 {dimension_numbers = #tpu.dot_dimension_numbers<[1], [0], [0], [1], [0, 0, 1, 1], [], []>} : vector<96x128xbf16>, vector<128x64xbf16>, vector<96x64xf32> -> vector<96x64xf32>
    %87 = vector.extract_strided_slice %86 {offsets = [0, 0], sizes = [96, 32], strides = [1, 1]} : vector<96x64xf32> to vector<96x32xf32>
    %88 = vector.shape_cast %8 : vector<32xf32> to vector<1x32xf32>
    %89 = vector.broadcast %88 : vector<1x32xf32> to vector<96x32xf32>
    %90 = arith.addf %87, %89 : vector<96x32xf32>
    %cst_23 = arith.constant dense<0.000000e+00> : vector<96xf32>
    %91 = vector.multi_reduction <add>, %90, %cst_23 [1] : vector<96x32xf32> to vector<96xf32>
    %92 = vector.shape_cast %91 : vector<96xf32> to vector<96x1xf32>
    %cst_24 = arith.constant 3.200000e+01 : f32
    %93 = vector.broadcast %cst_24 : f32 to vector<96x1xf32>
    %94 = arith.divf %92, %93 : vector<96x1xf32>
    %95 = vector.broadcast %94 : vector<96x1xf32> to vector<96x32xf32>
    %96 = arith.subf %90, %95 : vector<96x32xf32>
    %97 = arith.mulf %96, %96 : vector<96x32xf32>
    %cst_25 = arith.constant dense<0.000000e+00> : vector<96xf32>
    %98 = vector.multi_reduction <add>, %97, %cst_25 [1] : vector<96x32xf32> to vector<96xf32>
    %99 = vector.shape_cast %98 : vector<96xf32> to vector<96x1xf32>
    %cst_26 = arith.constant 3.200000e+01 : f32
    %100 = vector.broadcast %cst_26 : f32 to vector<96x1xf32>
    %101 = arith.divf %99, %100 : vector<96x1xf32>
    %102 = vector.broadcast %94 : vector<96x1xf32> to vector<96x32xf32>
    %103 = arith.subf %90, %102 : vector<96x32xf32>
    %cst_27 = arith.constant 9.99999974E-6 : f32
    %104 = vector.broadcast %cst_27 : f32 to vector<96x1xf32>
    %105 = arith.addf %101, %104 : vector<96x1xf32>
    %106 = math.rsqrt %105 : vector<96x1xf32>
    %107 = vector.broadcast %106 : vector<96x1xf32> to vector<96x32xf32>
    %108 = arith.mulf %103, %107 : vector<96x32xf32>
    %109 = vector.shape_cast %12 : vector<32xf32> to vector<1x32xf32>
    %110 = vector.broadcast %109 : vector<1x32xf32> to vector<96x32xf32>
    %111 = arith.mulf %108, %110 : vector<96x32xf32>
    %112 = vector.shape_cast %14 : vector<32xf32> to vector<1x32xf32>
    %113 = vector.broadcast %112 : vector<1x32xf32> to vector<96x32xf32>
    %114 = arith.addf %111, %113 : vector<96x32xf32>
    %115 = vector.extract_strided_slice %86 {offsets = [0, 32], sizes = [96, 32], strides = [1, 1]} : vector<96x64xf32> to vector<96x32xf32>
    %116 = vector.shape_cast %10 : vector<32xf32> to vector<1x32xf32>
    %117 = vector.broadcast %116 : vector<1x32xf32> to vector<96x32xf32>
    %118 = arith.addf %115, %117 : vector<96x32xf32>
    %cst_28 = arith.constant dense<0.000000e+00> : vector<96xf32>
    %119 = vector.multi_reduction <add>, %118, %cst_28 [1] : vector<96x32xf32> to vector<96xf32>
    %120 = vector.shape_cast %119 : vector<96xf32> to vector<96x1xf32>
    %cst_29 = arith.constant 3.200000e+01 : f32
    %121 = vector.broadcast %cst_29 : f32 to vector<96x1xf32>
    %122 = arith.divf %120, %121 : vector<96x1xf32>
    %123 = vector.broadcast %122 : vector<96x1xf32> to vector<96x32xf32>
    %124 = arith.subf %118, %123 : vector<96x32xf32>
    %125 = arith.mulf %124, %124 : vector<96x32xf32>
    %cst_30 = arith.constant dense<0.000000e+00> : vector<96xf32>
    %126 = vector.multi_reduction <add>, %125, %cst_30 [1] : vector<96x32xf32> to vector<96xf32>
    %127 = vector.shape_cast %126 : vector<96xf32> to vector<96x1xf32>
    %cst_31 = arith.constant 3.200000e+01 : f32
    %128 = vector.broadcast %cst_31 : f32 to vector<96x1xf32>
    %129 = arith.divf %127, %128 : vector<96x1xf32>
    %130 = vector.broadcast %122 : vector<96x1xf32> to vector<96x32xf32>
    %131 = arith.subf %118, %130 : vector<96x32xf32>
    %cst_32 = arith.constant 9.99999974E-6 : f32
    %132 = vector.broadcast %cst_32 : f32 to vector<96x1xf32>
    %133 = arith.addf %129, %132 : vector<96x1xf32>
    %134 = math.rsqrt %133 : vector<96x1xf32>
    %135 = vector.broadcast %134 : vector<96x1xf32> to vector<96x32xf32>
    %136 = arith.mulf %131, %135 : vector<96x32xf32>
    %137 = vector.shape_cast %16 : vector<32xf32> to vector<1x32xf32>
    %138 = vector.broadcast %137 : vector<1x32xf32> to vector<96x32xf32>
    %139 = arith.mulf %136, %138 : vector<96x32xf32>
    %140 = vector.shape_cast %18 : vector<32xf32> to vector<1x32xf32>
    %141 = vector.broadcast %140 : vector<1x32xf32> to vector<96x32xf32>
    %142 = arith.addf %139, %141 : vector<96x32xf32>
    %cst_33 = arith.constant 0.000000e+00 : f32
    %143 = vector.broadcast %cst_33 : f32 to vector<96x32xf32>
    %144 = tpu.concatenate %83, %114, %142, %143 in 1 : vector<96x32xf32>, vector<96x32xf32>, vector<96x32xf32>, vector<96x32xf32> -> vector<96x128xf32>
    %145 = vector.extract_strided_slice %144 {offsets = [0, 0], sizes = [32, 128], strides = [1, 1]} : vector<96x128xf32> to vector<32x128xf32>
    %146 = vector.extract_strided_slice %144 {offsets = [32, 0], sizes = [64, 128], strides = [1, 1]} : vector<96x128xf32> to vector<64x128xf32>
    %c0_34 = arith.constant 0 : index
    %c0_35 = arith.constant 0 : index
    %147 = vector.load %arg11[%c0_34, %c0_35] : memref<2x384xf32, #tpu.memory_space<vmem>>, vector<2x384xf32>
    %148 = vector.extract_strided_slice %147 {offsets = [0, 0], sizes = [1, 384], strides = [1, 1]} : vector<2x384xf32> to vector<1x384xf32>
    %149 = vector.shape_cast %148 : vector<1x384xf32> to vector<384xf32>
    %150 = vector.extract_strided_slice %147 {offsets = [1, 0], sizes = [1, 384], strides = [1, 1]} : vector<2x384xf32> to vector<1x384xf32>
    %151 = vector.shape_cast %150 : vector<1x384xf32> to vector<384xf32>
    %152 = arith.truncf %146 : vector<64x128xf32> to vector<64x128xbf16>
    %c0_36 = arith.constant 0 : index
    %c0_37 = arith.constant 0 : index
    %153 = vector.load %arg9[%c0_36, %c0_37] : memref<128x384xbf16, #tpu.memory_space<vmem>>, vector<128x384xbf16>
    %cst_38 = arith.constant dense<0.000000e+00> : vector<64x384xf32>
    %154 = tpu.matmul %152, %153, %cst_38 {dimension_numbers = #tpu.dot_dimension_numbers<[1], [0], [0], [1], [0, 0, 1, 1], [], []>} : vector<64x128xbf16>, vector<128x384xbf16>, vector<64x384xf32> -> vector<64x384xf32>
    %155 = vector.shape_cast %149 : vector<384xf32> to vector<1x384xf32>
    %156 = vector.broadcast %155 : vector<1x384xf32> to vector<64x384xf32>
    %157 = arith.addf %154, %156 : vector<64x384xf32>
    %c0_39 = arith.constant 0 : index
    %c0_40 = arith.constant 0 : index
    %158 = vector.load %arg10[%c0_39, %c0_40] : memref<128x384xbf16, #tpu.memory_space<vmem>>, vector<128x384xbf16>
    %c0_41 = arith.constant 0 : index
    %c0_42 = arith.constant 0 : index
    %159 = vector.load %arg4[%c0_41, %c0_42] : memref<8x8xf32, #tpu.memory_space<vmem>>, vector<8x8xf32>
    %c0_43 = arith.constant 0 : index
    %c0_44 = arith.constant 0 : index
    %160 = vector.load %arg3[%c0_43, %c0_44] : memref<8x128xf32, #tpu.memory_space<vmem>>, vector<8x128xf32>
    %161 = vector.extract_strided_slice %157 {offsets = [0, 0], sizes = [8, 384], strides = [1, 1]} : vector<64x384xf32> to vector<8x384xf32>
    %162 = arith.truncf %160 : vector<8x128xf32> to vector<8x128xbf16>
    %cst_45 = arith.constant dense<0.000000e+00> : vector<8x384xf32>
    %163 = tpu.matmul %162, %158, %cst_45 {dimension_numbers = #tpu.dot_dimension_numbers<[1], [0], [0], [1], [0, 0, 1, 1], [], []>} : vector<8x128xbf16>, vector<128x384xbf16>, vector<8x384xf32> -> vector<8x384xf32>
    %164 = vector.shape_cast %151 : vector<384xf32> to vector<1x384xf32>
    %165 = vector.broadcast %164 : vector<1x384xf32> to vector<8x384xf32>
    %166 = arith.addf %163, %165 : vector<8x384xf32>
    %167 = vector.extract_strided_slice %161 {offsets = [0, 0], sizes = [8, 128], strides = [1, 1]} : vector<8x384xf32> to vector<8x128xf32>
    %168 = vector.extract_strided_slice %166 {offsets = [0, 0], sizes = [8, 128], strides = [1, 1]} : vector<8x384xf32> to vector<8x128xf32>
    %169 = arith.addf %167, %168 : vector<8x128xf32>
    %170 = arith.negf %169 : vector<8x128xf32>
    %171 = math.exp %170 : vector<8x128xf32>
    %cst_46 = arith.constant 1.000000e+00 : f32
    %172 = vector.broadcast %cst_46 : f32 to vector<8x128xf32>
    %173 = arith.addf %172, %171 : vector<8x128xf32>
    %174 = arith.divf %172, %173 : vector<8x128xf32>
    %175 = vector.extract_strided_slice %161 {offsets = [0, 128], sizes = [8, 128], strides = [1, 1]} : vector<8x384xf32> to vector<8x128xf32>
    %176 = vector.extract_strided_slice %166 {offsets = [0, 128], sizes = [8, 128], strides = [1, 1]} : vector<8x384xf32> to vector<8x128xf32>
    %177 = arith.addf %175, %176 : vector<8x128xf32>
    %178 = arith.negf %177 : vector<8x128xf32>
    %179 = math.exp %178 : vector<8x128xf32>
    %cst_47 = arith.constant 1.000000e+00 : f32
    %180 = vector.broadcast %cst_47 : f32 to vector<8x128xf32>
    %181 = arith.addf %180, %179 : vector<8x128xf32>
    %182 = arith.divf %180, %181 : vector<8x128xf32>
    %183 = vector.extract_strided_slice %161 {offsets = [0, 256], sizes = [8, 128], strides = [1, 1]} : vector<8x384xf32> to vector<8x128xf32>
    %184 = vector.extract_strided_slice %166 {offsets = [0, 256], sizes = [8, 128], strides = [1, 1]} : vector<8x384xf32> to vector<8x128xf32>
    %185 = arith.mulf %174, %184 : vector<8x128xf32>
    %186 = arith.addf %183, %185 : vector<8x128xf32>
    %187 = math.tanh %186 : vector<8x128xf32>
    %cst_48 = arith.constant 1.000000e+00 : f32
    %188 = vector.broadcast %cst_48 : f32 to vector<8x128xf32>
    %189 = arith.subf %188, %182 : vector<8x128xf32>
    %190 = arith.mulf %189, %187 : vector<8x128xf32>
    %191 = arith.mulf %182, %160 : vector<8x128xf32>
    %192 = arith.addf %190, %191 : vector<8x128xf32>
    %193 = vector.extract_strided_slice %159 {offsets = [0, 0], sizes = [8, 1], strides = [1, 1]} : vector<8x8xf32> to vector<8x1xf32>
    %194 = arith.subf %192, %160 : vector<8x128xf32>
    %195 = vector.broadcast %193 : vector<8x1xf32> to vector<8x128xf32>
    %196 = arith.mulf %195, %194 : vector<8x128xf32>
    %197 = arith.addf %160, %196 : vector<8x128xf32>
    %198 = vector.extract_strided_slice %157 {offsets = [8, 0], sizes = [8, 384], strides = [1, 1]} : vector<64x384xf32> to vector<8x384xf32>
    %199 = arith.truncf %197 : vector<8x128xf32> to vector<8x128xbf16>
    %cst_49 = arith.constant dense<0.000000e+00> : vector<8x384xf32>
    %200 = tpu.matmul %199, %158, %cst_49 {dimension_numbers = #tpu.dot_dimension_numbers<[1], [0], [0], [1], [0, 0, 1, 1], [], []>} : vector<8x128xbf16>, vector<128x384xbf16>, vector<8x384xf32> -> vector<8x384xf32>
    %201 = vector.shape_cast %151 : vector<384xf32> to vector<1x384xf32>
    %202 = vector.broadcast %201 : vector<1x384xf32> to vector<8x384xf32>
    %203 = arith.addf %200, %202 : vector<8x384xf32>
    %204 = vector.extract_strided_slice %198 {offsets = [0, 0], sizes = [8, 128], strides = [1, 1]} : vector<8x384xf32> to vector<8x128xf32>
    %205 = vector.extract_strided_slice %203 {offsets = [0, 0], sizes = [8, 128], strides = [1, 1]} : vector<8x384xf32> to vector<8x128xf32>
    %206 = arith.addf %204, %205 : vector<8x128xf32>
    %207 = arith.negf %206 : vector<8x128xf32>
    %208 = math.exp %207 : vector<8x128xf32>
    %cst_50 = arith.constant 1.000000e+00 : f32
    %209 = vector.broadcast %cst_50 : f32 to vector<8x128xf32>
    %210 = arith.addf %209, %208 : vector<8x128xf32>
    %211 = arith.divf %209, %210 : vector<8x128xf32>
    %212 = vector.extract_strided_slice %198 {offsets = [0, 128], sizes = [8, 128], strides = [1, 1]} : vector<8x384xf32> to vector<8x128xf32>
    %213 = vector.extract_strided_slice %203 {offsets = [0, 128], sizes = [8, 128], strides = [1, 1]} : vector<8x384xf32> to vector<8x128xf32>
    %214 = arith.addf %212, %213 : vector<8x128xf32>
    %215 = arith.negf %214 : vector<8x128xf32>
    %216 = math.exp %215 : vector<8x128xf32>
    %cst_51 = arith.constant 1.000000e+00 : f32
    %217 = vector.broadcast %cst_51 : f32 to vector<8x128xf32>
    %218 = arith.addf %217, %216 : vector<8x128xf32>
    %219 = arith.divf %217, %218 : vector<8x128xf32>
    %220 = vector.extract_strided_slice %198 {offsets = [0, 256], sizes = [8, 128], strides = [1, 1]} : vector<8x384xf32> to vector<8x128xf32>
    %221 = vector.extract_strided_slice %203 {offsets = [0, 256], sizes = [8, 128], strides = [1, 1]} : vector<8x384xf32> to vector<8x128xf32>
    %222 = arith.mulf %211, %221 : vector<8x128xf32>
    %223 = arith.addf %220, %222 : vector<8x128xf32>
    %224 = math.tanh %223 : vector<8x128xf32>
    %cst_52 = arith.constant 1.000000e+00 : f32
    %225 = vector.broadcast %cst_52 : f32 to vector<8x128xf32>
    %226 = arith.subf %225, %219 : vector<8x128xf32>
    %227 = arith.mulf %226, %224 : vector<8x128xf32>
    %228 = arith.mulf %219, %197 : vector<8x128xf32>
    %229 = arith.addf %227, %228 : vector<8x128xf32>
    %230 = vector.extract_strided_slice %159 {offsets = [0, 1], sizes = [8, 1], strides = [1, 1]} : vector<8x8xf32> to vector<8x1xf32>
    %231 = arith.subf %229, %197 : vector<8x128xf32>
    %232 = vector.broadcast %230 : vector<8x1xf32> to vector<8x128xf32>
    %233 = arith.mulf %232, %231 : vector<8x128xf32>
    %234 = arith.addf %197, %233 : vector<8x128xf32>
    %235 = vector.extract_strided_slice %157 {offsets = [16, 0], sizes = [8, 384], strides = [1, 1]} : vector<64x384xf32> to vector<8x384xf32>
    %236 = arith.truncf %234 : vector<8x128xf32> to vector<8x128xbf16>
    %cst_53 = arith.constant dense<0.000000e+00> : vector<8x384xf32>
    %237 = tpu.matmul %236, %158, %cst_53 {dimension_numbers = #tpu.dot_dimension_numbers<[1], [0], [0], [1], [0, 0, 1, 1], [], []>} : vector<8x128xbf16>, vector<128x384xbf16>, vector<8x384xf32> -> vector<8x384xf32>
    %238 = vector.shape_cast %151 : vector<384xf32> to vector<1x384xf32>
    %239 = vector.broadcast %238 : vector<1x384xf32> to vector<8x384xf32>
    %240 = arith.addf %237, %239 : vector<8x384xf32>
    %241 = vector.extract_strided_slice %235 {offsets = [0, 0], sizes = [8, 128], strides = [1, 1]} : vector<8x384xf32> to vector<8x128xf32>
    %242 = vector.extract_strided_slice %240 {offsets = [0, 0], sizes = [8, 128], strides = [1, 1]} : vector<8x384xf32> to vector<8x128xf32>
    %243 = arith.addf %241, %242 : vector<8x128xf32>
    %244 = arith.negf %243 : vector<8x128xf32>
    %245 = math.exp %244 : vector<8x128xf32>
    %cst_54 = arith.constant 1.000000e+00 : f32
    %246 = vector.broadcast %cst_54 : f32 to vector<8x128xf32>
    %247 = arith.addf %246, %245 : vector<8x128xf32>
    %248 = arith.divf %246, %247 : vector<8x128xf32>
    %249 = vector.extract_strided_slice %235 {offsets = [0, 128], sizes = [8, 128], strides = [1, 1]} : vector<8x384xf32> to vector<8x128xf32>
    %250 = vector.extract_strided_slice %240 {offsets = [0, 128], sizes = [8, 128], strides = [1, 1]} : vector<8x384xf32> to vector<8x128xf32>
    %251 = arith.addf %249, %250 : vector<8x128xf32>
    %252 = arith.negf %251 : vector<8x128xf32>
    %253 = math.exp %252 : vector<8x128xf32>
    %cst_55 = arith.constant 1.000000e+00 : f32
    %254 = vector.broadcast %cst_55 : f32 to vector<8x128xf32>
    %255 = arith.addf %254, %253 : vector<8x128xf32>
    %256 = arith.divf %254, %255 : vector<8x128xf32>
    %257 = vector.extract_strided_slice %235 {offsets = [0, 256], sizes = [8, 128], strides = [1, 1]} : vector<8x384xf32> to vector<8x128xf32>
    %258 = vector.extract_strided_slice %240 {offsets = [0, 256], sizes = [8, 128], strides = [1, 1]} : vector<8x384xf32> to vector<8x128xf32>
    %259 = arith.mulf %248, %258 : vector<8x128xf32>
    %260 = arith.addf %257, %259 : vector<8x128xf32>
    %261 = math.tanh %260 : vector<8x128xf32>
    %cst_56 = arith.constant 1.000000e+00 : f32
    %262 = vector.broadcast %cst_56 : f32 to vector<8x128xf32>
    %263 = arith.subf %262, %256 : vector<8x128xf32>
    %264 = arith.mulf %263, %261 : vector<8x128xf32>
    %265 = arith.mulf %256, %234 : vector<8x128xf32>
    %266 = arith.addf %264, %265 : vector<8x128xf32>
    %267 = vector.extract_strided_slice %159 {offsets = [0, 2], sizes = [8, 1], strides = [1, 1]} : vector<8x8xf32> to vector<8x1xf32>
    %268 = arith.subf %266, %234 : vector<8x128xf32>
    %269 = vector.broadcast %267 : vector<8x1xf32> to vector<8x128xf32>
    %270 = arith.mulf %269, %268 : vector<8x128xf32>
    %271 = arith.addf %234, %270 : vector<8x128xf32>
    %272 = vector.extract_strided_slice %157 {offsets = [24, 0], sizes = [8, 384], strides = [1, 1]} : vector<64x384xf32> to vector<8x384xf32>
    %273 = arith.truncf %271 : vector<8x128xf32> to vector<8x128xbf16>
    %cst_57 = arith.constant dense<0.000000e+00> : vector<8x384xf32>
    %274 = tpu.matmul %273, %158, %cst_57 {dimension_numbers = #tpu.dot_dimension_numbers<[1], [0], [0], [1], [0, 0, 1, 1], [], []>} : vector<8x128xbf16>, vector<128x384xbf16>, vector<8x384xf32> -> vector<8x384xf32>
    %275 = vector.shape_cast %151 : vector<384xf32> to vector<1x384xf32>
    %276 = vector.broadcast %275 : vector<1x384xf32> to vector<8x384xf32>
    %277 = arith.addf %274, %276 : vector<8x384xf32>
    %278 = vector.extract_strided_slice %272 {offsets = [0, 0], sizes = [8, 128], strides = [1, 1]} : vector<8x384xf32> to vector<8x128xf32>
    %279 = vector.extract_strided_slice %277 {offsets = [0, 0], sizes = [8, 128], strides = [1, 1]} : vector<8x384xf32> to vector<8x128xf32>
    %280 = arith.addf %278, %279 : vector<8x128xf32>
    %281 = arith.negf %280 : vector<8x128xf32>
    %282 = math.exp %281 : vector<8x128xf32>
    %cst_58 = arith.constant 1.000000e+00 : f32
    %283 = vector.broadcast %cst_58 : f32 to vector<8x128xf32>
    %284 = arith.addf %283, %282 : vector<8x128xf32>
    %285 = arith.divf %283, %284 : vector<8x128xf32>
    %286 = vector.extract_strided_slice %272 {offsets = [0, 128], sizes = [8, 128], strides = [1, 1]} : vector<8x384xf32> to vector<8x128xf32>
    %287 = vector.extract_strided_slice %277 {offsets = [0, 128], sizes = [8, 128], strides = [1, 1]} : vector<8x384xf32> to vector<8x128xf32>
    %288 = arith.addf %286, %287 : vector<8x128xf32>
    %289 = arith.negf %288 : vector<8x128xf32>
    %290 = math.exp %289 : vector<8x128xf32>
    %cst_59 = arith.constant 1.000000e+00 : f32
    %291 = vector.broadcast %cst_59 : f32 to vector<8x128xf32>
    %292 = arith.addf %291, %290 : vector<8x128xf32>
    %293 = arith.divf %291, %292 : vector<8x128xf32>
    %294 = vector.extract_strided_slice %272 {offsets = [0, 256], sizes = [8, 128], strides = [1, 1]} : vector<8x384xf32> to vector<8x128xf32>
    %295 = vector.extract_strided_slice %277 {offsets = [0, 256], sizes = [8, 128], strides = [1, 1]} : vector<8x384xf32> to vector<8x128xf32>
    %296 = arith.mulf %285, %295 : vector<8x128xf32>
    %297 = arith.addf %294, %296 : vector<8x128xf32>
    %298 = math.tanh %297 : vector<8x128xf32>
    %cst_60 = arith.constant 1.000000e+00 : f32
    %299 = vector.broadcast %cst_60 : f32 to vector<8x128xf32>
    %300 = arith.subf %299, %293 : vector<8x128xf32>
    %301 = arith.mulf %300, %298 : vector<8x128xf32>
    %302 = arith.mulf %293, %271 : vector<8x128xf32>
    %303 = arith.addf %301, %302 : vector<8x128xf32>
    %304 = vector.extract_strided_slice %159 {offsets = [0, 3], sizes = [8, 1], strides = [1, 1]} : vector<8x8xf32> to vector<8x1xf32>
    %305 = arith.subf %303, %271 : vector<8x128xf32>
    %306 = vector.broadcast %304 : vector<8x1xf32> to vector<8x128xf32>
    %307 = arith.mulf %306, %305 : vector<8x128xf32>
    %308 = arith.addf %271, %307 : vector<8x128xf32>
    %309 = vector.extract_strided_slice %157 {offsets = [32, 0], sizes = [8, 384], strides = [1, 1]} : vector<64x384xf32> to vector<8x384xf32>
    %310 = arith.truncf %308 : vector<8x128xf32> to vector<8x128xbf16>
    %cst_61 = arith.constant dense<0.000000e+00> : vector<8x384xf32>
    %311 = tpu.matmul %310, %158, %cst_61 {dimension_numbers = #tpu.dot_dimension_numbers<[1], [0], [0], [1], [0, 0, 1, 1], [], []>} : vector<8x128xbf16>, vector<128x384xbf16>, vector<8x384xf32> -> vector<8x384xf32>
    %312 = vector.shape_cast %151 : vector<384xf32> to vector<1x384xf32>
    %313 = vector.broadcast %312 : vector<1x384xf32> to vector<8x384xf32>
    %314 = arith.addf %311, %313 : vector<8x384xf32>
    %315 = vector.extract_strided_slice %309 {offsets = [0, 0], sizes = [8, 128], strides = [1, 1]} : vector<8x384xf32> to vector<8x128xf32>
    %316 = vector.extract_strided_slice %314 {offsets = [0, 0], sizes = [8, 128], strides = [1, 1]} : vector<8x384xf32> to vector<8x128xf32>
    %317 = arith.addf %315, %316 : vector<8x128xf32>
    %318 = arith.negf %317 : vector<8x128xf32>
    %319 = math.exp %318 : vector<8x128xf32>
    %cst_62 = arith.constant 1.000000e+00 : f32
    %320 = vector.broadcast %cst_62 : f32 to vector<8x128xf32>
    %321 = arith.addf %320, %319 : vector<8x128xf32>
    %322 = arith.divf %320, %321 : vector<8x128xf32>
    %323 = vector.extract_strided_slice %309 {offsets = [0, 128], sizes = [8, 128], strides = [1, 1]} : vector<8x384xf32> to vector<8x128xf32>
    %324 = vector.extract_strided_slice %314 {offsets = [0, 128], sizes = [8, 128], strides = [1, 1]} : vector<8x384xf32> to vector<8x128xf32>
    %325 = arith.addf %323, %324 : vector<8x128xf32>
    %326 = arith.negf %325 : vector<8x128xf32>
    %327 = math.exp %326 : vector<8x128xf32>
    %cst_63 = arith.constant 1.000000e+00 : f32
    %328 = vector.broadcast %cst_63 : f32 to vector<8x128xf32>
    %329 = arith.addf %328, %327 : vector<8x128xf32>
    %330 = arith.divf %328, %329 : vector<8x128xf32>
    %331 = vector.extract_strided_slice %309 {offsets = [0, 256], sizes = [8, 128], strides = [1, 1]} : vector<8x384xf32> to vector<8x128xf32>
    %332 = vector.extract_strided_slice %314 {offsets = [0, 256], sizes = [8, 128], strides = [1, 1]} : vector<8x384xf32> to vector<8x128xf32>
    %333 = arith.mulf %322, %332 : vector<8x128xf32>
    %334 = arith.addf %331, %333 : vector<8x128xf32>
    %335 = math.tanh %334 : vector<8x128xf32>
    %cst_64 = arith.constant 1.000000e+00 : f32
    %336 = vector.broadcast %cst_64 : f32 to vector<8x128xf32>
    %337 = arith.subf %336, %330 : vector<8x128xf32>
    %338 = arith.mulf %337, %335 : vector<8x128xf32>
    %339 = arith.mulf %330, %308 : vector<8x128xf32>
    %340 = arith.addf %338, %339 : vector<8x128xf32>
    %341 = vector.extract_strided_slice %159 {offsets = [0, 4], sizes = [8, 1], strides = [1, 1]} : vector<8x8xf32> to vector<8x1xf32>
    %342 = arith.subf %340, %308 : vector<8x128xf32>
    %343 = vector.broadcast %341 : vector<8x1xf32> to vector<8x128xf32>
    %344 = arith.mulf %343, %342 : vector<8x128xf32>
    %345 = arith.addf %308, %344 : vector<8x128xf32>
    %346 = vector.extract_strided_slice %157 {offsets = [40, 0], sizes = [8, 384], strides = [1, 1]} : vector<64x384xf32> to vector<8x384xf32>
    %347 = arith.truncf %345 : vector<8x128xf32> to vector<8x128xbf16>
    %cst_65 = arith.constant dense<0.000000e+00> : vector<8x384xf32>
    %348 = tpu.matmul %347, %158, %cst_65 {dimension_numbers = #tpu.dot_dimension_numbers<[1], [0], [0], [1], [0, 0, 1, 1], [], []>} : vector<8x128xbf16>, vector<128x384xbf16>, vector<8x384xf32> -> vector<8x384xf32>
    %349 = vector.shape_cast %151 : vector<384xf32> to vector<1x384xf32>
    %350 = vector.broadcast %349 : vector<1x384xf32> to vector<8x384xf32>
    %351 = arith.addf %348, %350 : vector<8x384xf32>
    %352 = vector.extract_strided_slice %346 {offsets = [0, 0], sizes = [8, 128], strides = [1, 1]} : vector<8x384xf32> to vector<8x128xf32>
    %353 = vector.extract_strided_slice %351 {offsets = [0, 0], sizes = [8, 128], strides = [1, 1]} : vector<8x384xf32> to vector<8x128xf32>
    %354 = arith.addf %352, %353 : vector<8x128xf32>
    %355 = arith.negf %354 : vector<8x128xf32>
    %356 = math.exp %355 : vector<8x128xf32>
    %cst_66 = arith.constant 1.000000e+00 : f32
    %357 = vector.broadcast %cst_66 : f32 to vector<8x128xf32>
    %358 = arith.addf %357, %356 : vector<8x128xf32>
    %359 = arith.divf %357, %358 : vector<8x128xf32>
    %360 = vector.extract_strided_slice %346 {offsets = [0, 128], sizes = [8, 128], strides = [1, 1]} : vector<8x384xf32> to vector<8x128xf32>
    %361 = vector.extract_strided_slice %351 {offsets = [0, 128], sizes = [8, 128], strides = [1, 1]} : vector<8x384xf32> to vector<8x128xf32>
    %362 = arith.addf %360, %361 : vector<8x128xf32>
    %363 = arith.negf %362 : vector<8x128xf32>
    %364 = math.exp %363 : vector<8x128xf32>
    %cst_67 = arith.constant 1.000000e+00 : f32
    %365 = vector.broadcast %cst_67 : f32 to vector<8x128xf32>
    %366 = arith.addf %365, %364 : vector<8x128xf32>
    %367 = arith.divf %365, %366 : vector<8x128xf32>
    %368 = vector.extract_strided_slice %346 {offsets = [0, 256], sizes = [8, 128], strides = [1, 1]} : vector<8x384xf32> to vector<8x128xf32>
    %369 = vector.extract_strided_slice %351 {offsets = [0, 256], sizes = [8, 128], strides = [1, 1]} : vector<8x384xf32> to vector<8x128xf32>
    %370 = arith.mulf %359, %369 : vector<8x128xf32>
    %371 = arith.addf %368, %370 : vector<8x128xf32>
    %372 = math.tanh %371 : vector<8x128xf32>
    %cst_68 = arith.constant 1.000000e+00 : f32
    %373 = vector.broadcast %cst_68 : f32 to vector<8x128xf32>
    %374 = arith.subf %373, %367 : vector<8x128xf32>
    %375 = arith.mulf %374, %372 : vector<8x128xf32>
    %376 = arith.mulf %367, %345 : vector<8x128xf32>
    %377 = arith.addf %375, %376 : vector<8x128xf32>
    %378 = vector.extract_strided_slice %159 {offsets = [0, 5], sizes = [8, 1], strides = [1, 1]} : vector<8x8xf32> to vector<8x1xf32>
    %379 = arith.subf %377, %345 : vector<8x128xf32>
    %380 = vector.broadcast %378 : vector<8x1xf32> to vector<8x128xf32>
    %381 = arith.mulf %380, %379 : vector<8x128xf32>
    %382 = arith.addf %345, %381 : vector<8x128xf32>
    %383 = vector.extract_strided_slice %157 {offsets = [48, 0], sizes = [8, 384], strides = [1, 1]} : vector<64x384xf32> to vector<8x384xf32>
    %384 = arith.truncf %382 : vector<8x128xf32> to vector<8x128xbf16>
    %cst_69 = arith.constant dense<0.000000e+00> : vector<8x384xf32>
    %385 = tpu.matmul %384, %158, %cst_69 {dimension_numbers = #tpu.dot_dimension_numbers<[1], [0], [0], [1], [0, 0, 1, 1], [], []>} : vector<8x128xbf16>, vector<128x384xbf16>, vector<8x384xf32> -> vector<8x384xf32>
    %386 = vector.shape_cast %151 : vector<384xf32> to vector<1x384xf32>
    %387 = vector.broadcast %386 : vector<1x384xf32> to vector<8x384xf32>
    %388 = arith.addf %385, %387 : vector<8x384xf32>
    %389 = vector.extract_strided_slice %383 {offsets = [0, 0], sizes = [8, 128], strides = [1, 1]} : vector<8x384xf32> to vector<8x128xf32>
    %390 = vector.extract_strided_slice %388 {offsets = [0, 0], sizes = [8, 128], strides = [1, 1]} : vector<8x384xf32> to vector<8x128xf32>
    %391 = arith.addf %389, %390 : vector<8x128xf32>
    %392 = arith.negf %391 : vector<8x128xf32>
    %393 = math.exp %392 : vector<8x128xf32>
    %cst_70 = arith.constant 1.000000e+00 : f32
    %394 = vector.broadcast %cst_70 : f32 to vector<8x128xf32>
    %395 = arith.addf %394, %393 : vector<8x128xf32>
    %396 = arith.divf %394, %395 : vector<8x128xf32>
    %397 = vector.extract_strided_slice %383 {offsets = [0, 128], sizes = [8, 128], strides = [1, 1]} : vector<8x384xf32> to vector<8x128xf32>
    %398 = vector.extract_strided_slice %388 {offsets = [0, 128], sizes = [8, 128], strides = [1, 1]} : vector<8x384xf32> to vector<8x128xf32>
    %399 = arith.addf %397, %398 : vector<8x128xf32>
    %400 = arith.negf %399 : vector<8x128xf32>
    %401 = math.exp %400 : vector<8x128xf32>
    %cst_71 = arith.constant 1.000000e+00 : f32
    %402 = vector.broadcast %cst_71 : f32 to vector<8x128xf32>
    %403 = arith.addf %402, %401 : vector<8x128xf32>
    %404 = arith.divf %402, %403 : vector<8x128xf32>
    %405 = vector.extract_strided_slice %383 {offsets = [0, 256], sizes = [8, 128], strides = [1, 1]} : vector<8x384xf32> to vector<8x128xf32>
    %406 = vector.extract_strided_slice %388 {offsets = [0, 256], sizes = [8, 128], strides = [1, 1]} : vector<8x384xf32> to vector<8x128xf32>
    %407 = arith.mulf %396, %406 : vector<8x128xf32>
    %408 = arith.addf %405, %407 : vector<8x128xf32>
    %409 = math.tanh %408 : vector<8x128xf32>
    %cst_72 = arith.constant 1.000000e+00 : f32
    %410 = vector.broadcast %cst_72 : f32 to vector<8x128xf32>
    %411 = arith.subf %410, %404 : vector<8x128xf32>
    %412 = arith.mulf %411, %409 : vector<8x128xf32>
    %413 = arith.mulf %404, %382 : vector<8x128xf32>
    %414 = arith.addf %412, %413 : vector<8x128xf32>
    %415 = vector.extract_strided_slice %159 {offsets = [0, 6], sizes = [8, 1], strides = [1, 1]} : vector<8x8xf32> to vector<8x1xf32>
    %416 = arith.subf %414, %382 : vector<8x128xf32>
    %417 = vector.broadcast %415 : vector<8x1xf32> to vector<8x128xf32>
    %418 = arith.mulf %417, %416 : vector<8x128xf32>
    %419 = arith.addf %382, %418 : vector<8x128xf32>
    %420 = vector.extract_strided_slice %157 {offsets = [56, 0], sizes = [8, 384], strides = [1, 1]} : vector<64x384xf32> to vector<8x384xf32>
    %421 = arith.truncf %419 : vector<8x128xf32> to vector<8x128xbf16>
    %cst_73 = arith.constant dense<0.000000e+00> : vector<8x384xf32>
    %422 = tpu.matmul %421, %158, %cst_73 {dimension_numbers = #tpu.dot_dimension_numbers<[1], [0], [0], [1], [0, 0, 1, 1], [], []>} : vector<8x128xbf16>, vector<128x384xbf16>, vector<8x384xf32> -> vector<8x384xf32>
    %423 = vector.shape_cast %151 : vector<384xf32> to vector<1x384xf32>
    %424 = vector.broadcast %423 : vector<1x384xf32> to vector<8x384xf32>
    %425 = arith.addf %422, %424 : vector<8x384xf32>
    %426 = vector.extract_strided_slice %420 {offsets = [0, 0], sizes = [8, 128], strides = [1, 1]} : vector<8x384xf32> to vector<8x128xf32>
    %427 = vector.extract_strided_slice %425 {offsets = [0, 0], sizes = [8, 128], strides = [1, 1]} : vector<8x384xf32> to vector<8x128xf32>
    %428 = arith.addf %426, %427 : vector<8x128xf32>
    %429 = arith.negf %428 : vector<8x128xf32>
    %430 = math.exp %429 : vector<8x128xf32>
    %cst_74 = arith.constant 1.000000e+00 : f32
    %431 = vector.broadcast %cst_74 : f32 to vector<8x128xf32>
    %432 = arith.addf %431, %430 : vector<8x128xf32>
    %433 = arith.divf %431, %432 : vector<8x128xf32>
    %434 = vector.extract_strided_slice %420 {offsets = [0, 128], sizes = [8, 128], strides = [1, 1]} : vector<8x384xf32> to vector<8x128xf32>
    %435 = vector.extract_strided_slice %425 {offsets = [0, 128], sizes = [8, 128], strides = [1, 1]} : vector<8x384xf32> to vector<8x128xf32>
    %436 = arith.addf %434, %435 : vector<8x128xf32>
    %437 = arith.negf %436 : vector<8x128xf32>
    %438 = math.exp %437 : vector<8x128xf32>
    %cst_75 = arith.constant 1.000000e+00 : f32
    %439 = vector.broadcast %cst_75 : f32 to vector<8x128xf32>
    %440 = arith.addf %439, %438 : vector<8x128xf32>
    %441 = arith.divf %439, %440 : vector<8x128xf32>
    %442 = vector.extract_strided_slice %420 {offsets = [0, 256], sizes = [8, 128], strides = [1, 1]} : vector<8x384xf32> to vector<8x128xf32>
    %443 = vector.extract_strided_slice %425 {offsets = [0, 256], sizes = [8, 128], strides = [1, 1]} : vector<8x384xf32> to vector<8x128xf32>
    %444 = arith.mulf %433, %443 : vector<8x128xf32>
    %445 = arith.addf %442, %444 : vector<8x128xf32>
    %446 = math.tanh %445 : vector<8x128xf32>
    %cst_76 = arith.constant 1.000000e+00 : f32
    %447 = vector.broadcast %cst_76 : f32 to vector<8x128xf32>
    %448 = arith.subf %447, %441 : vector<8x128xf32>
    %449 = arith.mulf %448, %446 : vector<8x128xf32>
    %450 = arith.mulf %441, %419 : vector<8x128xf32>
    %451 = arith.addf %449, %450 : vector<8x128xf32>
    %452 = vector.extract_strided_slice %159 {offsets = [0, 7], sizes = [8, 1], strides = [1, 1]} : vector<8x8xf32> to vector<8x1xf32>
    %453 = arith.subf %451, %419 : vector<8x128xf32>
    %454 = vector.broadcast %452 : vector<8x1xf32> to vector<8x128xf32>
    %455 = arith.mulf %454, %453 : vector<8x128xf32>
    %456 = arith.addf %419, %455 : vector<8x128xf32>
    %457 = vector.extract_strided_slice %145 {offsets = [0, 0], sizes = [8, 128], strides = [1, 1]} : vector<32x128xf32> to vector<8x128xf32>
    %458 = arith.mulf %457, %456 : vector<8x128xf32>
    %cst_77 = arith.constant dense<0.000000e+00> : vector<8xf32>
    %459 = vector.multi_reduction <add>, %458, %cst_77 [1] : vector<8x128xf32> to vector<8xf32>
    %460 = vector.shape_cast %459 : vector<8xf32> to vector<8x1xf32>
    %461 = vector.extract_strided_slice %145 {offsets = [8, 0], sizes = [8, 128], strides = [1, 1]} : vector<32x128xf32> to vector<8x128xf32>
    %462 = arith.mulf %461, %456 : vector<8x128xf32>
    %cst_78 = arith.constant dense<0.000000e+00> : vector<8xf32>
    %463 = vector.multi_reduction <add>, %462, %cst_78 [1] : vector<8x128xf32> to vector<8xf32>
    %464 = vector.shape_cast %463 : vector<8xf32> to vector<8x1xf32>
    %465 = vector.extract_strided_slice %145 {offsets = [16, 0], sizes = [8, 128], strides = [1, 1]} : vector<32x128xf32> to vector<8x128xf32>
    %466 = arith.mulf %465, %456 : vector<8x128xf32>
    %cst_79 = arith.constant dense<0.000000e+00> : vector<8xf32>
    %467 = vector.multi_reduction <add>, %466, %cst_79 [1] : vector<8x128xf32> to vector<8xf32>
    %468 = vector.shape_cast %467 : vector<8xf32> to vector<8x1xf32>
    %469 = vector.extract_strided_slice %145 {offsets = [24, 0], sizes = [8, 128], strides = [1, 1]} : vector<32x128xf32> to vector<8x128xf32>
    %470 = arith.mulf %469, %456 : vector<8x128xf32>
    %cst_80 = arith.constant dense<0.000000e+00> : vector<8xf32>
    %471 = vector.multi_reduction <add>, %470, %cst_80 [1] : vector<8x128xf32> to vector<8xf32>
    %472 = vector.shape_cast %471 : vector<8xf32> to vector<8x1xf32>
    %473 = tpu.concatenate %460, %464, %468, %472 in 1 : vector<8x1xf32>, vector<8x1xf32>, vector<8x1xf32>, vector<8x1xf32> -> vector<8x4xf32>
    %cst_81 = arith.constant 0.000000e+00 : f32
    %474 = vector.broadcast %cst_81 : f32 to vector<8x124xf32>
    %475 = tpu.concatenate %473, %474 in 1 : vector<8x4xf32>, vector<8x124xf32> -> vector<8x128xf32>
    %c0_82 = arith.constant 0 : index
    %c0_83 = arith.constant 0 : index
    %476 = vector.load %arg12[%c0_82, %c0_83] : memref<8x128xf32, #tpu.memory_space<vmem>>, vector<8x128xf32>
    tpu.vector_store %arg12[%c0_82, %c0_83], %475 {strides = array<i32>} : memref<8x128xf32, #tpu.memory_space<vmem>>, vector<8x128xf32>,
    return
  }
  func.func @transform_0(%arg0: i32) -> (i32, i32) {
    %c0_i32 = arith.constant 0 : i32
    %c0_i32_0 = arith.constant 0 : i32
    %c0_i32_1 = arith.constant 0 : i32
    return %c0_i32, %c0_i32_0 : i32, i32
  }
  func.func @transform_1(%arg0: i32) -> (i32, i32) {
    %c0_i32 = arith.constant 0 : i32
    %c0_i32_0 = arith.constant 0 : i32
    %c0_i32_1 = arith.constant 0 : i32
    return %c0_i32, %c0_i32_0 : i32, i32
  }
  func.func @transform_2(%arg0: i32) -> (i32, i32) {
    %c0_i32 = arith.constant 0 : i32
    %c0_i32_0 = arith.constant 0 : i32
    %c0_i32_1 = arith.constant 0 : i32
    return %c0_i32, %c0_i32_0 : i32, i32
  }
  func.func @transform_3(%arg0: i32) -> (i32, i32) {
    %c0_i32 = arith.constant 0 : i32
    %c0_i32_0 = arith.constant 0 : i32
    %c0_i32_1 = arith.constant 0 : i32
    return %c0_i32, %c0_i32_0 : i32, i32
  }
  func.func @transform_4(%arg0: i32) -> (i32, i32) {
    %c0_i32 = arith.constant 0 : i32
    %c0_i32_0 = arith.constant 0 : i32
    %c0_i32_1 = arith.constant 0 : i32
    return %c0_i32, %c0_i32_0 : i32, i32
  }
  func.func @transform_5(%arg0: i32) -> (i32, i32) {
    %c0_i32 = arith.constant 0 : i32
    %c0_i32_0 = arith.constant 0 : i32
    %c0_i32_1 = arith.constant 0 : i32
    return %c0_i32, %c0_i32_0 : i32, i32
  }
  func.func @transform_6(%arg0: i32) -> (i32, i32) {
    %c0_i32 = arith.constant 0 : i32
    %c0_i32_0 = arith.constant 0 : i32
    %c0_i32_1 = arith.constant 0 : i32
    return %c0_i32, %c0_i32_0 : i32, i32
  }
  func.func @transform_7(%arg0: i32) -> (i32, i32) {
    %c0_i32 = arith.constant 0 : i32
    %c0_i32_0 = arith.constant 0 : i32
    %c0_i32_1 = arith.constant 0 : i32
    return %c0_i32, %c0_i32_0 : i32, i32
  }
  func.func @transform_8(%arg0: i32) -> (i32, i32) {
    %c0_i32 = arith.constant 0 : i32
    %c0_i32_0 = arith.constant 0 : i32
    %c0_i32_1 = arith.constant 0 : i32
    return %c0_i32, %c0_i32_0 : i32, i32
  }
  func.func @transform_9(%arg0: i32) -> (i32, i32) {
    %c0_i32 = arith.constant 0 : i32
    %c0_i32_0 = arith.constant 0 : i32
    %c0_i32_1 = arith.constant 0 : i32
    return %c0_i32, %c0_i32_0 : i32, i32
  }
  func.func @transform_10(%arg0: i32) -> (i32, i32) {
    %c0_i32 = arith.constant 0 : i32
    %c0_i32_0 = arith.constant 0 : i32
    %c0_i32_1 = arith.constant 0 : i32
    return %c0_i32, %c0_i32_0 : i32, i32
  }
  func.func @transform_11(%arg0: i32) -> (i32, i32) {
    %c0_i32 = arith.constant 0 : i32
    %c0_i32_0 = arith.constant 0 : i32
    %c0_i32_1 = arith.constant 0 : i32
    return %c0_i32, %c0_i32_0 : i32, i32
  }
}

</mosaic_0001>

<llo_original>
// kernel: lstur_forward.1
$region0: #{lstur_forward.1}
  #allocation0 [shape = 'u32[]', space=smem, size = 0x4, offset = 0x4, fixed_abs, tag = 'smem constant byte address 0x4 - core index']
  #allocation1 [shape = 'u32[72,128]{1,0:T(1,128)}', space=vmem, size = 0x9000, scoped, tag = 'internal scratch']
  %s0 = inlined_call_operand.vmem [shape: bf16[1536,128], index: 0, kind: input, shape index: {}]
  %s1 = inlined_call_operand.vmem [shape: bf16[96,128], index: 1, kind: input, shape index: {}]
  %s2 = inlined_call_operand.vmem [shape: f32[8,128], index: 2, kind: input, shape index: {}]
  %s3 = inlined_call_operand.vmem [shape: f32[8,8], index: 3, kind: input, shape index: {}]
  %s4 = inlined_call_operand.vmem [shape: bf16[128,32], index: 4, kind: input, shape index: {}]
  %s5 = inlined_call_operand.vmem [shape: bf16[32,16], index: 5, kind: input, shape index: {}]
  %s6 = inlined_call_operand.vmem [shape: bf16[128,64], index: 6, kind: input, shape index: {}]
  %s7 = inlined_call_operand.vmem [shape: f32[16,32], index: 7, kind: input, shape index: {}]
  %s8 = inlined_call_operand.vmem [shape: bf16[128,384], index: 8, kind: input, shape index: {}]
  %s9 = inlined_call_operand.vmem [shape: bf16[128,384], index: 9, kind: input, shape index: {}]
  %s10 = inlined_call_operand.vmem [shape: f32[2,384], index: 10, kind: input, shape index: {}]
  %s11 = inlined_call_operand.vmem [shape: f32[8,128], index: 11, kind: output, shape index: {}]
  %s12 = sld [smem:[#allocation0]]
  $region54: #{lstur_forward.1} parent=0
    _
  %s14 = ssub.s32 1, %s12
  %s15 = scalar_select 0, %s14, %s12
  // Predicated region
  $region2: #{lstur_forward.1} parent=0 // pred_check
    _
  $region3: #{lstur_forward.1} parent=0 // pred_check_branch
    %17 = sbr.rel (0) target = $region5
  $region4: #{lstur_forward.1} parent=0 // pred_region
    _
  $region5: #{lstur_forward.1} parent=0 // pred_fallthru
    _
  // Predicated region
  $region6: #{lstur_forward.1} parent=0 // pred_check
    _
  $region7: #{lstur_forward.1} parent=0 // pred_check_branch
    %19 = sbr.rel (0) target = $region9
  $region8: #{lstur_forward.1} parent=0 // pred_region
    _
  $region9: #{lstur_forward.1} parent=0 // pred_fallthru
    _
  // Predicated region
  $region10: #{lstur_forward.1} parent=0 // pred_check
    _
  $region11: #{lstur_forward.1} parent=0 // pred_check_branch
    %21 = sbr.rel (0) target = $region13
  $region12: #{lstur_forward.1} parent=0 // pred_region
    _
  $region13: #{lstur_forward.1} parent=0 // pred_fallthru
    _
  // Predicated region
  $region14: #{lstur_forward.1} parent=0 // pred_check
    _
  $region15: #{lstur_forward.1} parent=0 // pred_check_branch
    %23 = sbr.rel (0) target = $region17
  $region16: #{lstur_forward.1} parent=0 // pred_region
    _
  $region17: #{lstur_forward.1} parent=0 // pred_fallthru
    _
  // Predicated region
  $region18: #{lstur_forward.1} parent=0 // pred_check
    _
  $region19: #{lstur_forward.1} parent=0 // pred_check_branch
    %25 = sbr.rel (0) target = $region21
  $region20: #{lstur_forward.1} parent=0 // pred_region
    _
  $region21: #{lstur_forward.1} parent=0 // pred_fallthru
    _
  // Predicated region
  $region22: #{lstur_forward.1} parent=0 // pred_check
    _
  $region23: #{lstur_forward.1} parent=0 // pred_check_branch
    %27 = sbr.rel (0) target = $region25
  $region24: #{lstur_forward.1} parent=0 // pred_region
    _
  $region25: #{lstur_forward.1} parent=0 // pred_fallthru
    _
  // Predicated region
  $region26: #{lstur_forward.1} parent=0 // pred_check
    _
  $region27: #{lstur_forward.1} parent=0 // pred_check_branch
    %29 = sbr.rel (0) target = $region29
  $region28: #{lstur_forward.1} parent=0 // pred_region
    _
  $region29: #{lstur_forward.1} parent=0 // pred_fallthru
    _
  // Predicated region
  $region30: #{lstur_forward.1} parent=0 // pred_check
    _
  $region31: #{lstur_forward.1} parent=0 // pred_check_branch
    %31 = sbr.rel (0) target = $region33
  $region32: #{lstur_forward.1} parent=0 // pred_region
    _
  $region33: #{lstur_forward.1} parent=0 // pred_fallthru
    _
  // Predicated region
  $region34: #{lstur_forward.1} parent=0 // pred_check
    _
  $region35: #{lstur_forward.1} parent=0 // pred_check_branch
    %33 = sbr.rel (0) target = $region37
  $region36: #{lstur_forward.1} parent=0 // pred_region
    _
  $region37: #{lstur_forward.1} parent=0 // pred_fallthru
    _
  // Predicated region
  $region38: #{lstur_forward.1} parent=0 // pred_check
    _
  $region39: #{lstur_forward.1} parent=0 // pred_check_branch
    %35 = sbr.rel (0) target = $region41
  $region40: #{lstur_forward.1} parent=0 // pred_region
    _
  $region41: #{lstur_forward.1} parent=0 // pred_fallthru
    _
  // Predicated region
  $region42: #{lstur_forward.1} parent=0 // pred_check
    _
  $region43: #{lstur_forward.1} parent=0 // pred_check_branch
    %37 = sbr.rel (0) target = $region45
  $region44: #{lstur_forward.1} parent=0 // pred_region
    _
  $region45: #{lstur_forward.1} parent=0 // pred_fallthru
    _
  %v39 = vld [vmem:[%s7] sm:$0xff]
  %v40 = vld [vmem:[%s7 + $0x8] sm:$0xff]
  %v41 = vld [vmem:[%s0] sm:$0xf]
  %v42 = vld [vmem:[%s0 + $0x4] sm:$0xf]
  %v43 = vld [vmem:[%s0 + $0x8] sm:$0xf]
  %v44 = vld [vmem:[%s0 + $0xc] sm:$0xf]
  %v45 = vld [vmem:[%s0 + $0x10] sm:$0xf]
  %v46 = vld [vmem:[%s0 + $0x14] sm:$0xf]
  %v47 = vld [vmem:[%s0 + $0x18] sm:$0xf]
  %v48 = vld [vmem:[%s0 + $0x1c] sm:$0xf]
  %v49 = vld [vmem:[%s0 + $0x20] sm:$0xf]
  %v50 = vld [vmem:[%s0 + $0x24] sm:$0xf]
  %v51 = vld [vmem:[%s0 + $0x28] sm:$0xf]
  %v52 = vld [vmem:[%s0 + $0x2c] sm:$0xf]
  %v53 = vld [vmem:[%s0 + $0x30] sm:$0xf]
  %v54 = vld [vmem:[%s0 + $0x34] sm:$0xf]
  %v55 = vld [vmem:[%s0 + $0x38] sm:$0xf]
  %v56 = vld [vmem:[%s0 + $0x3c] sm:$0xf]
  %v57 = vld [vmem:[%s0 + $0x40] sm:$0xf]
  %v58 = vld [vmem:[%s0 + $0x44] sm:$0xf]
  %v59 = vld [vmem:[%s0 + $0x48] sm:$0xf]
  %v60 = vld [vmem:[%s0 + $0x4c] sm:$0xf]
  %v61 = vld [vmem:[%s0 + $0x50] sm:$0xf]
  %v62 = vld [vmem:[%s0 + $0x54] sm:$0xf]
  %v63 = vld [vmem:[%s0 + $0x58] sm:$0xf]
  %v64 = vld [vmem:[%s0 + $0x5c] sm:$0xf]
  %v65 = vld [vmem:[%s0 + $0x60] sm:$0xf]
  %v66 = vld [vmem:[%s0 + $0x64] sm:$0xf]
  %v67 = vld [vmem:[%s0 + $0x68] sm:$0xf]
  %v68 = vld [vmem:[%s0 + $0x6c] sm:$0xf]
  %v69 = vld [vmem:[%s0 + $0x70] sm:$0xf]
  %v70 = vld [vmem:[%s0 + $0x74] sm:$0xf]
  %v71 = vld [vmem:[%s0 + $0x78] sm:$0xf]
  %v72 = vld [vmem:[%s0 + $0x7c] sm:$0xf]
  %v73 = vld [vmem:[%s0 + $0x80] sm:$0xf]
  %v74 = vld [vmem:[%s0 + $0x84] sm:$0xf]
  %v75 = vld [vmem:[%s0 + $0x88] sm:$0xf]
  %v76 = vld [vmem:[%s0 + $0x8c] sm:$0xf]
  %v77 = vld [vmem:[%s0 + $0x90] sm:$0xf]
  %v78 = vld [vmem:[%s0 + $0x94] sm:$0xf]
  %v79 = vld [vmem:[%s0 + $0x98] sm:$0xf]
  %v80 = vld [vmem:[%s0 + $0x9c] sm:$0xf]
  %v81 = vld [vmem:[%s0 + $0xa0] sm:$0xf]
  %v82 = vld [vmem:[%s0 + $0xa4] sm:$0xf]
  %v83 = vld [vmem:[%s0 + $0xa8] sm:$0xf]
  %v84 = vld [vmem:[%s0 + $0xac] sm:$0xf]
  %v85 = vld [vmem:[%s0 + $0xb0] sm:$0xf]
  %v86 = vld [vmem:[%s0 + $0xb4] sm:$0xf]
  %v87 = vld [vmem:[%s0 + $0xb8] sm:$0xf]
  %v88 = vld [vmem:[%s0 + $0xbc] sm:$0xf]
  %v89 = vld [vmem:[%s0 + $0xc0] sm:$0xf]
  %v90 = vld [vmem:[%s0 + $0xc4] sm:$0xf]
  %v91 = vld [vmem:[%s0 + $0xc8] sm:$0xf]
  %v92 = vld [vmem:[%s0 + $0xcc] sm:$0xf]
  %v93 = vld [vmem:[%s0 + $0xd0] sm:$0xf]
  %v94 = vld [vmem:[%s0 + $0xd4] sm:$0xf]
  %v95 = vld [vmem:[%s0 + $0xd8] sm:$0xf]
  %v96 = vld [vmem:[%s0 + $0xdc] sm:$0xf]
  %v97 = vld [vmem:[%s0 + $0xe0] sm:$0xf]
  %v98 = vld [vmem:[%s0 + $0xe4] sm:$0xf]
  %v99 = vld [vmem:[%s0 + $0xe8] sm:$0xf]
  %v100 = vld [vmem:[%s0 + $0xec] sm:$0xf]
  %v101 = vld [vmem:[%s0 + $0xf0] sm:$0xf]
  %v102 = vld [vmem:[%s0 + $0xf4] sm:$0xf]
  %v103 = vld [vmem:[%s0 + $0xf8] sm:$0xf]
  %v104 = vld [vmem:[%s0 + $0xfc] sm:$0xf]
  %v105 = vld [vmem:[%s0 + $0x100] sm:$0xf]
  %v106 = vld [vmem:[%s0 + $0x104] sm:$0xf]
  %v107 = vld [vmem:[%s0 + $0x108] sm:$0xf]
  %v108 = vld [vmem:[%s0 + $0x10c] sm:$0xf]
  %v109 = vld [vmem:[%s0 + $0x110] sm:$0xf]
  %v110 = vld [vmem:[%s0 + $0x114] sm:$0xf]
  %v111 = vld [vmem:[%s0 + $0x118] sm:$0xf]
  %v112 = vld [vmem:[%s0 + $0x11c] sm:$0xf]
  %v113 = vld [vmem:[%s0 + $0x120] sm:$0xf]
  %v114 = vld [vmem:[%s0 + $0x124] sm:$0xf]
  %v115 = vld [vmem:[%s0 + $0x128] sm:$0xf]
  %v116 = vld [vmem:[%s0 + $0x12c] sm:$0xf]
  %v117 = vld [vmem:[%s0 + $0x130] sm:$0xf]
  %v118 = vld [vmem:[%s0 + $0x134] sm:$0xf]
  %v119 = vld [vmem:[%s0 + $0x138] sm:$0xf]
  %v120 = vld [vmem:[%s0 + $0x13c] sm:$0xf]
  %v121 = vld [vmem:[%s0 + $0x140] sm:$0xf]
  %v122 = vld [vmem:[%s0 + $0x144] sm:$0xf]
  %v123 = vld [vmem:[%s0 + $0x148] sm:$0xf]
  %v124 = vld [vmem:[%s0 + $0x14c] sm:$0xf]
  %v125 = vld [vmem:[%s0 + $0x150] sm:$0xf]
  %v126 = vld [vmem:[%s0 + $0x154] sm:$0xf]
  %v127 = vld [vmem:[%s0 + $0x158] sm:$0xf]
  %v128 = vld [vmem:[%s0 + $0x15c] sm:$0xf]
  %v129 = vld [vmem:[%s0 + $0x160] sm:$0xf]
  %v130 = vld [vmem:[%s0 + $0x164] sm:$0xf]
  %v131 = vld [vmem:[%s0 + $0x168] sm:$0xf]
  %v132 = vld [vmem:[%s0 + $0x16c] sm:$0xf]
  %v133 = vld [vmem:[%s0 + $0x170] sm:$0xf]
  %v134 = vld [vmem:[%s0 + $0x174] sm:$0xf]
  %v135 = vld [vmem:[%s0 + $0x178] sm:$0xf]
  %v136 = vld [vmem:[%s0 + $0x17c] sm:$0xf]
  %v137 = vld [vmem:[%s0 + $0x180] sm:$0xf]
  %v138 = vld [vmem:[%s0 + $0x184] sm:$0xf]
  %v139 = vld [vmem:[%s0 + $0x188] sm:$0xf]
  %v140 = vld [vmem:[%s0 + $0x18c] sm:$0xf]
  %v141 = vld [vmem:[%s0 + $0x190] sm:$0xf]
  %v142 = vld [vmem:[%s0 + $0x194] sm:$0xf]
  %v143 = vld [vmem:[%s0 + $0x198] sm:$0xf]
  %v144 = vld [vmem:[%s0 + $0x19c] sm:$0xf]
  %v145 = vld [vmem:[%s0 + $0x1a0] sm:$0xf]
  %v146 = vld [vmem:[%s0 + $0x1a4] sm:$0xf]
  %v147 = vld [vmem:[%s0 + $0x1a8] sm:$0xf]
  %v148 = vld [vmem:[%s0 + $0x1ac] sm:$0xf]
  %v149 = vld [vmem:[%s0 + $0x1b0] sm:$0xf]
  %v150 = vld [vmem:[%s0 + $0x1b4] sm:$0xf]
  %v151 = vld [vmem:[%s0 + $0x1b8] sm:$0xf]
  %v152 = vld [vmem:[%s0 + $0x1bc] sm:$0xf]
  %v153 = vld [vmem:[%s0 + $0x1c0] sm:$0xf]
  %v154 = vld [vmem:[%s0 + $0x1c4] sm:$0xf]
  %v155 = vld [vmem:[%s0 + $0x1c8] sm:$0xf]
  %v156 = vld [vmem:[%s0 + $0x1cc] sm:$0xf]
  %v157 = vld [vmem:[%s0 + $0x1d0] sm:$0xf]
  %v158 = vld [vmem:[%s0 + $0x1d4] sm:$0xf]
  %v159 = vld [vmem:[%s0 + $0x1d8] sm:$0xf]
  %v160 = vld [vmem:[%s0 + $0x1dc] sm:$0xf]
  %v161 = vld [vmem:[%s0 + $0x1e0] sm:$0xf]
  %v162 = vld [vmem:[%s0 + $0x1e4] sm:$0xf]
  %v163 = vld [vmem:[%s0 + $0x1e8] sm:$0xf]
  %v164 = vld [vmem:[%s0 + $0x1ec] sm:$0xf]
  %v165 = vld [vmem:[%s0 + $0x1f0] sm:$0xf]
  %v166 = vld [vmem:[%s0 + $0x1f4] sm:$0xf]
  %v167 = vld [vmem:[%s0 + $0x1f8] sm:$0xf]
  %v168 = vld [vmem:[%s0 + $0x1fc] sm:$0xf]
  %v169 = vld [vmem:[%s0 + $0x200] sm:$0xf]
  %v170 = vld [vmem:[%s0 + $0x204] sm:$0xf]
  %v171 = vld [vmem:[%s0 + $0x208] sm:$0xf]
  %v172 = vld [vmem:[%s0 + $0x20c] sm:$0xf]
  %v173 = vld [vmem:[%s0 + $0x210] sm:$0xf]
  %v174 = vld [vmem:[%s0 + $0x214] sm:$0xf]
  %v175 = vld [vmem:[%s0 + $0x218] sm:$0xf]
  %v176 = vld [vmem:[%s0 + $0x21c] sm:$0xf]
  %v177 = vld [vmem:[%s0 + $0x220] sm:$0xf]
  %v178 = vld [vmem:[%s0 + $0x224] sm:$0xf]
  %v179 = vld [vmem:[%s0 + $0x228] sm:$0xf]
  %v180 = vld [vmem:[%s0 + $0x22c] sm:$0xf]
  %v181 = vld [vmem:[%s0 + $0x230] sm:$0xf]
  %v182 = vld [vmem:[%s0 + $0x234] sm:$0xf]
  %v183 = vld [vmem:[%s0 + $0x238] sm:$0xf]
  %v184 = vld [vmem:[%s0 + $0x23c] sm:$0xf]
  %v185 = vld [vmem:[%s0 + $0x240] sm:$0xf]
  %v186 = vld [vmem:[%s0 + $0x244] sm:$0xf]
  %v187 = vld [vmem:[%s0 + $0x248] sm:$0xf]
  %v188 = vld [vmem:[%s0 + $0x24c] sm:$0xf]
  %v189 = vld [vmem:[%s0 + $0x250] sm:$0xf]
  %v190 = vld [vmem:[%s0 + $0x254] sm:$0xf]
  %v191 = vld [vmem:[%s0 + $0x258] sm:$0xf]
  %v192 = vld [vmem:[%s0 + $0x25c] sm:$0xf]
  %v193 = vld [vmem:[%s0 + $0x260] sm:$0xf]
  %v194 = vld [vmem:[%s0 + $0x264] sm:$0xf]
  %v195 = vld [vmem:[%s0 + $0x268] sm:$0xf]
  %v196 = vld [vmem:[%s0 + $0x26c] sm:$0xf]
  %v197 = vld [vmem:[%s0 + $0x270] sm:$0xf]
  %v198 = vld [vmem:[%s0 + $0x274] sm:$0xf]
  %v199 = vld [vmem:[%s0 + $0x278] sm:$0xf]
  %v200 = vld [vmem:[%s0 + $0x27c] sm:$0xf]
  %v201 = vld [vmem:[%s0 + $0x280] sm:$0xf]
  %v202 = vld [vmem:[%s0 + $0x284] sm:$0xf]
  %v203 = vld [vmem:[%s0 + $0x288] sm:$0xf]
  %v204 = vld [vmem:[%s0 + $0x28c] sm:$0xf]
  %v205 = vld [vmem:[%s0 + $0x290] sm:$0xf]
  %v206 = vld [vmem:[%s0 + $0x294] sm:$0xf]
  %v207 = vld [vmem:[%s0 + $0x298] sm:$0xf]
  %v208 = vld [vmem:[%s0 + $0x29c] sm:$0xf]
  %v209 = vld [vmem:[%s0 + $0x2a0] sm:$0xf]
  %v210 = vld [vmem:[%s0 + $0x2a4] sm:$0xf]
  %v211 = vld [vmem:[%s0 + $0x2a8] sm:$0xf]
  %v212 = vld [vmem:[%s0 + $0x2ac] sm:$0xf]
  %v213 = vld [vmem:[%s0 + $0x2b0] sm:$0xf]
  %v214 = vld [vmem:[%s0 + $0x2b4] sm:$0xf]
  %v215 = vld [vmem:[%s0 + $0x2b8] sm:$0xf]
  %v216 = vld [vmem:[%s0 + $0x2bc] sm:$0xf]
  %v217 = vld [vmem:[%s0 + $0x2c0] sm:$0xf]
  %v218 = vld [vmem:[%s0 + $0x2c4] sm:$0xf]
  %v219 = vld [vmem:[%s0 + $0x2c8] sm:$0xf]
  %v220 = vld [vmem:[%s0 + $0x2cc] sm:$0xf]
  %v221 = vld [vmem:[%s0 + $0x2d0] sm:$0xf]
  %v222 = vld [vmem:[%s0 + $0x2d4] sm:$0xf]
  %v223 = vld [vmem:[%s0 + $0x2d8] sm:$0xf]
  %v224 = vld [vmem:[%s0 + $0x2dc] sm:$0xf]
  %v225 = vld [vmem:[%s0 + $0x2e0] sm:$0xf]
  %v226 = vld [vmem:[%s0 + $0x2e4] sm:$0xf]
  %v227 = vld [vmem:[%s0 + $0x2e8] sm:$0xf]
  %v228 = vld [vmem:[%s0 + $0x2ec] sm:$0xf]
  %v229 = vld [vmem:[%s0 + $0x2f0] sm:$0xf]
  %v230 = vld [vmem:[%s0 + $0x2f4] sm:$0xf]
  %v231 = vld [vmem:[%s0 + $0x2f8] sm:$0xf]
  %v232 = vld [vmem:[%s0 + $0x2fc] sm:$0xf]
  %v233 = vld [vmem:[%s4] sm:$0xf]
  %v234 = vld [vmem:[%s4 + $0x4] sm:$0xf]
  %v235 = vld [vmem:[%s4 + $0x8] sm:$0xf]
  %v236 = vld [vmem:[%s4 + $0xc] sm:$0xf]
  %v237 = vld [vmem:[%s4 + $0x10] sm:$0xf]
  %v238 = vld [vmem:[%s4 + $0x14] sm:$0xf]
  %v239 = vld [vmem:[%s4 + $0x18] sm:$0xf]
  %v240 = vld [vmem:[%s4 + $0x1c] sm:$0xf]
  %v241 = vld [vmem:[%s4 + $0x20] sm:$0xf]
  %v242 = vld [vmem:[%s4 + $0x24] sm:$0xf]
  %v243 = vld [vmem:[%s4 + $0x28] sm:$0xf]
  %v244 = vld [vmem:[%s4 + $0x2c] sm:$0xf]
  %v245 = vld [vmem:[%s4 + $0x30] sm:$0xf]
  %v246 = vld [vmem:[%s4 + $0x34] sm:$0xf]
  %v247 = vld [vmem:[%s4 + $0x38] sm:$0xf]
  %v248 = vld [vmem:[%s4 + $0x3c] sm:$0xf]
  %v249 = vperm.slane %v39, 0
  %v442 = vunpack.c.l.b16 %v41
  %v443 = vunpack.c.l.b16 %v42
  %v444 = vunpack.c.l.b16 %v43
  %v445 = vunpack.c.l.b16 %v44
  %v446 = vunpack.c.l.b16 %v45
  %v447 = vunpack.c.l.b16 %v46
  %v448 = vunpack.c.l.b16 %v47
  %v449 = vunpack.c.l.b16 %v48
  %v450 = vunpack.c.l.b16 %v49
  %v451 = vunpack.c.l.b16 %v50
  %v452 = vunpack.c.l.b16 %v51
  %v453 = vunpack.c.l.b16 %v52
  %v454 = vunpack.c.l.b16 %v53
  %v455 = vunpack.c.l.b16 %v54
  %v456 = vunpack.c.l.b16 %v55
  %v457 = vunpack.c.l.b16 %v56
  %v458 = vunpack.c.l.b16 %v57
  %v459 = vunpack.c.l.b16 %v58
  %v460 = vunpack.c.l.b16 %v59
  %v461 = vunpack.c.l.b16 %v60
  %v462 = vunpack.c.l.b16 %v61
  %v463 = vunpack.c.l.b16 %v62
  %v464 = vunpack.c.l.b16 %v63
  %v465 = vunpack.c.l.b16 %v64
  %v466 = vunpack.c.l.b16 %v65
  %v467 = vunpack.c.l.b16 %v66
  %v468 = vunpack.c.l.b16 %v67
  %v469 = vunpack.c.l.b16 %v68
  %v470 = vunpack.c.l.b16 %v69
  %v471 = vunpack.c.l.b16 %v70
  %v472 = vunpack.c.l.b16 %v71
  %v473 = vunpack.c.l.b16 %v72
  %v474 = vunpack.c.l.b16 %v73
  %v475 = vunpack.c.l.b16 %v74
  %v476 = vunpack.c.l.b16 %v75
  %v477 = vunpack.c.l.b16 %v76
  %v478 = vunpack.c.l.b16 %v77
  %v479 = vunpack.c.l.b16 %v78
  %v480 = vunpack.c.l.b16 %v79
  %v481 = vunpack.c.l.b16 %v80
  %v482 = vunpack.c.l.b16 %v81
  %v483 = vunpack.c.l.b16 %v82
  %v484 = vunpack.c.l.b16 %v83
  %v485 = vunpack.c.l.b16 %v84
  %v486 = vunpack.c.l.b16 %v85
  %v487 = vunpack.c.l.b16 %v86
  %v488 = vunpack.c.l.b16 %v87
  %v489 = vunpack.c.l.b16 %v88
  %v490 = vunpack.c.l.b16 %v89
  %v491 = vunpack.c.l.b16 %v90
  %v492 = vunpack.c.l.b16 %v91
  %v493 = vunpack.c.l.b16 %v92
  %v494 = vunpack.c.l.b16 %v93
  %v495 = vunpack.c.l.b16 %v94
  %v496 = vunpack.c.l.b16 %v95
  %v497 = vunpack.c.l.b16 %v96
  %v498 = vunpack.c.l.b16 %v97
  %v499 = vunpack.c.l.b16 %v98
  %v500 = vunpack.c.l.b16 %v99
  %v501 = vunpack.c.l.b16 %v100
  %v502 = vunpack.c.l.b16 %v101
  %v503 = vunpack.c.l.b16 %v102
  %v504 = vunpack.c.l.b16 %v103
  %v505 = vunpack.c.l.b16 %v104
  %v506 = vunpack.c.l.b16 %v105
  %v507 = vunpack.c.l.b16 %v106
  %v508 = vunpack.c.l.b16 %v107
  %v509 = vunpack.c.l.b16 %v108
  %v510 = vunpack.c.l.b16 %v109
  %v511 = vunpack.c.l.b16 %v110
  %v512 = vunpack.c.l.b16 %v111
  %v513 = vunpack.c.l.b16 %v112
  %v514 = vunpack.c.l.b16 %v113
  %v515 = vunpack.c.l.b16 %v114
  %v516 = vunpack.c.l.b16 %v115
  %v517 = vunpack.c.l.b16 %v116
  %v518 = vunpack.c.l.b16 %v117
  %v519 = vunpack.c.l.b16 %v118
  %v520 = vunpack.c.l.b16 %v119
  %v521 = vunpack.c.l.b16 %v120
  %v522 = vunpack.c.l.b16 %v121
  %v523 = vunpack.c.l.b16 %v122
  %v524 = vunpack.c.l.b16 %v123
  %v525 = vunpack.c.l.b16 %v124
  %v526 = vunpack.c.l.b16 %v125
  %v527 = vunpack.c.l.b16 %v126
  %v528 = vunpack.c.l.b16 %v127
  %v529 = vunpack.c.l.b16 %v128
  %v530 = vunpack.c.l.b16 %v129
  %v531 = vunpack.c.l.b16 %v130
  %v532 = vunpack.c.l.b16 %v131
  %v533 = vunpack.c.l.b16 %v132
  %v534 = vunpack.c.l.b16 %v133
  %v535 = vunpack.c.l.b16 %v134
  %v536 = vunpack.c.l.b16 %v135
  %v537 = vunpack.c.l.b16 %v136
  %v538 = vunpack.c.l.b16 %v137
  %v539 = vunpack.c.l.b16 %v138
  %v540 = vunpack.c.l.b16 %v139
  %v541 = vunpack.c.l.b16 %v140
  %v542 = vunpack.c.l.b16 %v141
  %v543 = vunpack.c.l.b16 %v142
  %v544 = vunpack.c.l.b16 %v143
  %v545 = vunpack.c.l.b16 %v144
  %v546 = vunpack.c.l.b16 %v145
  %v547 = vunpack.c.l.b16 %v146
  %v548 = vunpack.c.l.b16 %v147
  %v549 = vunpack.c.l.b16 %v148
  %v550 = vunpack.c.l.b16 %v149
  %v551 = vunpack.c.l.b16 %v150
  %v552 = vunpack.c.l.b16 %v151
  %v553 = vunpack.c.l.b16 %v152
  %v554 = vunpack.c.l.b16 %v153
  %v555 = vunpack.c.l.b16 %v154
  %v556 = vunpack.c.l.b16 %v155
  %v557 = vunpack.c.l.b16 %v156
  %v558 = vunpack.c.l.b16 %v157
  %v559 = vunpack.c.l.b16 %v158
  %v560 = vunpack.c.l.b16 %v159
  %v561 = vunpack.c.l.b16 %v160
  %v562 = vunpack.c.l.b16 %v161
  %v563 = vunpack.c.l.b16 %v162
  %v564 = vunpack.c.l.b16 %v163
  %v565 = vunpack.c.l.b16 %v164
  %v566 = vunpack.c.l.b16 %v165
  %v567 = vunpack.c.l.b16 %v166
  %v568 = vunpack.c.l.b16 %v167
  %v569 = vunpack.c.l.b16 %v168
  %v570 = vunpack.c.l.b16 %v169
  %v571 = vunpack.c.l.b16 %v170
  %v572 = vunpack.c.l.b16 %v171
  %v573 = vunpack.c.l.b16 %v172
  %v574 = vunpack.c.l.b16 %v173
  %v575 = vunpack.c.l.b16 %v174
  %v576 = vunpack.c.l.b16 %v175
  %v577 = vunpack.c.l.b16 %v176
  %v578 = vunpack.c.l.b16 %v177
  %v579 = vunpack.c.l.b16 %v178
  %v580 = vunpack.c.l.b16 %v179
  %v581 = vunpack.c.l.b16 %v180
  %v582 = vunpack.c.l.b16 %v181
  %v583 = vunpack.c.l.b16 %v182
  %v584 = vunpack.c.l.b16 %v183
  %v585 = vunpack.c.l.b16 %v184
  %v586 = vunpack.c.l.b16 %v185
  %v587 = vunpack.c.l.b16 %v186
  %v588 = vunpack.c.l.b16 %v187
  %v589 = vunpack.c.l.b16 %v188
  %v590 = vunpack.c.l.b16 %v189
  %v591 = vunpack.c.l.b16 %v190
  %v592 = vunpack.c.l.b16 %v191
  %v593 = vunpack.c.l.b16 %v192
  %v594 = vunpack.c.l.b16 %v193
  %v595 = vunpack.c.l.b16 %v194
  %v596 = vunpack.c.l.b16 %v195
  %v597 = vunpack.c.l.b16 %v196
  %v598 = vunpack.c.l.b16 %v197
  %v599 = vunpack.c.l.b16 %v198
  %v600 = vunpack.c.l.b16 %v199
  %v601 = vunpack.c.l.b16 %v200
  %v602 = vunpack.c.l.b16 %v201
  %v603 = vunpack.c.l.b16 %v202
  %v604 = vunpack.c.l.b16 %v203
  %v605 = vunpack.c.l.b16 %v204
  %v606 = vunpack.c.l.b16 %v205
  %v607 = vunpack.c.l.b16 %v206
  %v608 = vunpack.c.l.b16 %v207
  %v609 = vunpack.c.l.b16 %v208
  %v610 = vunpack.c.l.b16 %v209
  %v611 = vunpack.c.l.b16 %v210
  %v612 = vunpack.c.l.b16 %v211
  %v613 = vunpack.c.l.b16 %v212
  %v614 = vunpack.c.l.b16 %v213
  %v615 = vunpack.c.l.b16 %v214
  %v616 = vunpack.c.l.b16 %v215
  %v617 = vunpack.c.l.b16 %v216
  %v618 = vunpack.c.l.b16 %v217
  %v619 = vunpack.c.l.b16 %v218
  %v620 = vunpack.c.l.b16 %v219
  %v621 = vunpack.c.l.b16 %v220
  %v622 = vunpack.c.l.b16 %v221
  %v623 = vunpack.c.l.b16 %v222
  %v624 = vunpack.c.l.b16 %v223
  %v625 = vunpack.c.l.b16 %v224
  %v626 = vunpack.c.l.b16 %v225
  %v627 = vunpack.c.l.b16 %v226
  %v628 = vunpack.c.l.b16 %v227
  %v629 = vunpack.c.l.b16 %v228
  %v630 = vunpack.c.l.b16 %v229
  %v631 = vunpack.c.l.b16 %v230
  %v632 = vunpack.c.l.b16 %v231
  %v633 = vunpack.c.l.b16 %v232
  %v634 = vpack.c.b16 %v443, %v442
  %v635 = vpack.c.b16 %v445, %v444
  %v636 = vpack.c.b16 %v447, %v446
  %v637 = vpack.c.b16 %v449, %v448
  %v638 = vpack.c.b16 %v451, %v450
  %v639 = vpack.c.b16 %v453, %v452
  %v640 = vpack.c.b16 %v455, %v454
  %v641 = vpack.c.b16 %v457, %v456
  %v642 = vpack.c.b16 %v459, %v458
  %v643 = vpack.c.b16 %v461, %v460
  %v644 = vpack.c.b16 %v463, %v462
  %v645 = vpack.c.b16 %v465, %v464
  %v646 = vpack.c.b16 %v467, %v466
  %v647 = vpack.c.b16 %v469, %v468
  %v648 = vpack.c.b16 %v471, %v470
  %v649 = vpack.c.b16 %v473, %v472
  %v650 = vpack.c.b16 %v475, %v474
  %v651 = vpack.c.b16 %v477, %v476
  %v652 = vpack.c.b16 %v479, %v478
  %v653 = vpack.c.b16 %v481, %v480
  %v654 = vpack.c.b16 %v483, %v482
  %v655 = vpack.c.b16 %v485, %v484
  %v656 = vpack.c.b16 %v487, %v486
  %v657 = vpack.c.b16 %v489, %v488
  %v658 = vpack.c.b16 %v491, %v490
  %v659 = vpack.c.b16 %v493, %v492
  %v660 = vpack.c.b16 %v495, %v494
  %v661 = vpack.c.b16 %v497, %v496
  %v662 = vpack.c.b16 %v499, %v498
  %v663 = vpack.c.b16 %v501, %v500
  %v664 = vpack.c.b16 %v503, %v502
  %v665 = vpack.c.b16 %v505, %v504
  %v666 = vpack.c.b16 %v507, %v506
  %v667 = vpack.c.b16 %v509, %v508
  %v668 = vpack.c.b16 %v511, %v510
  %v669 = vpack.c.b16 %v513, %v512
  %v670 = vpack.c.b16 %v515, %v514
  %v671 = vpack.c.b16 %v517, %v516
  %v672 = vpack.c.b16 %v519, %v518
  %v673 = vpack.c.b16 %v521, %v520
  %v674 = vpack.c.b16 %v523, %v522
  %v675 = vpack.c.b16 %v525, %v524
  %v676 = vpack.c.b16 %v527, %v526
  %v677 = vpack.c.b16 %v529, %v528
  %v678 = vpack.c.b16 %v531, %v530
  %v679 = vpack.c.b16 %v533, %v532
  %v680 = vpack.c.b16 %v535, %v534
  %v681 = vpack.c.b16 %v537, %v536
  %v682 = vpack.c.b16 %v539, %v538
  %v683 = vpack.c.b16 %v541, %v540
  %v684 = vpack.c.b16 %v543, %v542
  %v685 = vpack.c.b16 %v545, %v544
  %v686 = vpack.c.b16 %v547, %v546
  %v687 = vpack.c.b16 %v549, %v548
  %v688 = vpack.c.b16 %v551, %v550
  %v689 = vpack.c.b16 %v553, %v552
  %v690 = vpack.c.b16 %v555, %v554
  %v691 = vpack.c.b16 %v557, %v556
  %v692 = vpack.c.b16 %v559, %v558
  %v693 = vpack.c.b16 %v561, %v560
  %v694 = vpack.c.b16 %v563, %v562
  %v695 = vpack.c.b16 %v565, %v564
  %v696 = vpack.c.b16 %v567, %v566
  %v697 = vpack.c.b16 %v569, %v568
  %v698 = vpack.c.b16 %v571, %v570
  %v699 = vpack.c.b16 %v573, %v572
  %v700 = vpack.c.b16 %v575, %v574
  %v701 = vpack.c.b16 %v577, %v576
  %v702 = vpack.c.b16 %v579, %v578
  %v703 = vpack.c.b16 %v581, %v580
  %v704 = vpack.c.b16 %v583, %v582
  %v705 = vpack.c.b16 %v585, %v584
  %v706 = vpack.c.b16 %v587, %v586
  %v707 = vpack.c.b16 %v589, %v588
  %v708 = vpack.c.b16 %v591, %v590
  %v709 = vpack.c.b16 %v593, %v592
  %v710 = vpack.c.b16 %v595, %v594
  %v711 = vpack.c.b16 %v597, %v596
  %v712 = vpack.c.b16 %v599, %v598
  %v713 = vpack.c.b16 %v601, %v600
  %v714 = vpack.c.b16 %v603, %v602
  %v715 = vpack.c.b16 %v605, %v604
  %v716 = vpack.c.b16 %v607, %v606
  %v717 = vpack.c.b16 %v609, %v608
  %v718 = vpack.c.b16 %v611, %v610
  %v719 = vpack.c.b16 %v613, %v612
  %v720 = vpack.c.b16 %v615, %v614
  %v721 = vpack.c.b16 %v617, %v616
  %v722 = vpack.c.b16 %v619, %v618
  %v723 = vpack.c.b16 %v621, %v620
  %v724 = vpack.c.b16 %v623, %v622
  %v725 = vpack.c.b16 %v625, %v624
  %v726 = vpack.c.b16 %v627, %v626
  %v727 = vpack.c.b16 %v629, %v628
  %v728 = vpack.c.b16 %v631, %v630
  %v729 = vpack.c.b16 %v633, %v632
  %v842 = vunpack.c.l.b16 %v233
  %v843 = vunpack.c.l.b16 %v234
  %v844 = vunpack.c.l.b16 %v235
  %v845 = vunpack.c.l.b16 %v236
  %v846 = vunpack.c.l.b16 %v237
  %v847 = vunpack.c.l.b16 %v238
  %v848 = vunpack.c.l.b16 %v239
  %v849 = vunpack.c.l.b16 %v240
  %v850 = vunpack.c.l.b16 %v241
  %v851 = vunpack.c.l.b16 %v242
  %v852 = vunpack.c.l.b16 %v243
  %v853 = vunpack.c.l.b16 %v244
  %v854 = vunpack.c.l.b16 %v245
  %v855 = vunpack.c.l.b16 %v246
  %v856 = vunpack.c.l.b16 %v247
  %v857 = vunpack.c.l.b16 %v248
  %v858 = vpack.c.b16 %v843, %v842
  %v859 = vpack.c.b16 %v845, %v844
  %v860 = vpack.c.b16 %v847, %v846
  %v861 = vpack.c.b16 %v849, %v848
  %v862 = vpack.c.b16 %v851, %v850
  %v863 = vpack.c.b16 %v853, %v852
  %v864 = vpack.c.b16 %v855, %v854
  %v865 = vpack.c.b16 %v857, %v856
  %874 = vmatpush.bf16.msra.mxu0 %v865
  %875 = vmatpush.bf16.msra.mxu0 %v864
  %876 = vmatpush.bf16.msra.mxu0 %v863
  %877 = vmatpush.bf16.msra.mxu0 %v862
  %878 = vmatpush.bf16.msra.mxu0 %v861
  %879 = vmatpush.bf16.msra.mxu0 %v860
  %880 = vmatpush.bf16.msra.mxu0 %v859
  %881 = vmatpush.bf16.msra.mxu0 %v858
  %882 = vmatmul.bf16.gmra.mxu0 %v634
  %v883 = vpop.f32.mrf.mxu0
  %v884 = vadd.f32 %v249, %v883
  %v885 = vpop.f32.mrf.mxu0
  %v886 = vadd.f32 %v249, %v885
  %887 = vmatmul.bf16.gmra.mxu0 %v635
  %v888 = vpop.f32.mrf.mxu0
  %v889 = vadd.f32 %v249, %v888
  %v890 = vpop.f32.mrf.mxu0
  %v891 = vadd.f32 %v249, %v890
  %892 = vmatmul.bf16.gmra.mxu0 %v636
  %v893 = vpop.f32.mrf.mxu0
  %v894 = vadd.f32 %v249, %v893
  %v895 = vpop.f32.mrf.mxu0
  %v896 = vadd.f32 %v249, %v895
  %897 = vmatmul.bf16.gmra.mxu0 %v637
  %v898 = vpop.f32.mrf.mxu0
  %v899 = vadd.f32 %v249, %v898
  %v900 = vpop.f32.mrf.mxu0
  %v901 = vadd.f32 %v249, %v900
  %902 = vmatmul.bf16.gmra.mxu0 %v638
  %v903 = vpop.f32.mrf.mxu0
  %v904 = vadd.f32 %v249, %v903
  %v905 = vpop.f32.mrf.mxu0
  %v906 = vadd.f32 %v249, %v905
  %907 = vmatmul.bf16.gmra.mxu0 %v639
  %v908 = vpop.f32.mrf.mxu0
  %v909 = vadd.f32 %v249, %v908
  %v910 = vpop.f32.mrf.mxu0
  %v911 = vadd.f32 %v249, %v910
  %912 = vmatmul.bf16.gmra.mxu0 %v640
  %v913 = vpop.f32.mrf.mxu0
  %v914 = vadd.f32 %v249, %v913
  %v915 = vpop.f32.mrf.mxu0
  %v916 = vadd.f32 %v249, %v915
  %917 = vmatmul.bf16.gmra.mxu0 %v641
  %v918 = vpop.f32.mrf.mxu0
  %v919 = vadd.f32 %v249, %v918
  %v920 = vpop.f32.mrf.mxu0
  %v921 = vadd.f32 %v249, %v920
  %922 = vmatmul.bf16.gmra.mxu0 %v642
  %v923 = vpop.f32.mrf.mxu0
  %v924 = vadd.f32 %v249, %v923
  %v925 = vpop.f32.mrf.mxu0
  %v926 = vadd.f32 %v249, %v925
  %927 = vmatmul.bf16.gmra.mxu0 %v643
  %v928 = vpop.f32.mrf.mxu0
  %v929 = vadd.f32 %v249, %v928
  %v930 = vpop.f32.mrf.mxu0
  %v931 = vadd.f32 %v249, %v930
  %932 = vmatmul.bf16.gmra.mxu0 %v644
  %v933 = vpop.f32.mrf.mxu0
  %v934 = vadd.f32 %v249, %v933
  %v935 = vpop.f32.mrf.mxu0
  %v936 = vadd.f32 %v249, %v935
  %937 = vmatmul.bf16.gmra.mxu0 %v645
  %v938 = vpop.f32.mrf.mxu0
  %v939 = vadd.f32 %v249, %v938
  %v940 = vpop.f32.mrf.mxu0
  %v941 = vadd.f32 %v249, %v940
  %942 = vmatmul.bf16.gmra.mxu0 %v646
  %v943 = vpop.f32.mrf.mxu0
  %v944 = vadd.f32 %v249, %v943
  %v945 = vpop.f32.mrf.mxu0
  %v946 = vadd.f32 %v249, %v945
  %947 = vmatmul.bf16.gmra.mxu0 %v647
  %v948 = vpop.f32.mrf.mxu0
  %v949 = vadd.f32 %v249, %v948
  %v950 = vpop.f32.mrf.mxu0
  %v951 = vadd.f32 %v249, %v950
  %952 = vmatmul.bf16.gmra.mxu0 %v648
  %v953 = vpop.f32.mrf.mxu0
  %v954 = vadd.f32 %v249, %v953
  %v955 = vpop.f32.mrf.mxu0
  %v956 = vadd.f32 %v249, %v955
  %957 = vmatmul.bf16.gmra.mxu0 %v649
  %v958 = vpop.f32.mrf.mxu0
  %v959 = vadd.f32 %v249, %v958
  %v960 = vpop.f32.mrf.mxu0
  %v961 = vadd.f32 %v249, %v960
  %962 = vmatmul.bf16.gmra.mxu0 %v650
  %v963 = vpop.f32.mrf.mxu0
  %v964 = vadd.f32 %v249, %v963
  %v965 = vpop.f32.mrf.mxu0
  %v966 = vadd.f32 %v249, %v965
  %967 = vmatmul.bf16.gmra.mxu0 %v651
  %v968 = vpop.f32.mrf.mxu0
  %v969 = vadd.f32 %v249, %v968
  %v970 = vpop.f32.mrf.mxu0
  %v971 = vadd.f32 %v249, %v970
  %972 = vmatmul.bf16.gmra.mxu0 %v652
  %v973 = vpop.f32.mrf.mxu0
  %v974 = vadd.f32 %v249, %v973
  %v975 = vpop.f32.mrf.mxu0
  %v976 = vadd.f32 %v249, %v975
  %977 = vmatmul.bf16.gmra.mxu0 %v653
  %v978 = vpop.f32.mrf.mxu0
  %v979 = vadd.f32 %v249, %v978
  %v980 = vpop.f32.mrf.mxu0
  %v981 = vadd.f32 %v249, %v980
  %982 = vmatmul.bf16.gmra.mxu0 %v654
  %v983 = vpop.f32.mrf.mxu0
  %v984 = vadd.f32 %v249, %v983
  %v985 = vpop.f32.mrf.mxu0
  %v986 = vadd.f32 %v249, %v985
  %987 = vmatmul.bf16.gmra.mxu0 %v655
  %v988 = vpop.f32.mrf.mxu0
  %v989 = vadd.f32 %v249, %v988
  %v990 = vpop.f32.mrf.mxu0
  %v991 = vadd.f32 %v249, %v990
  %992 = vmatmul.bf16.gmra.mxu0 %v656
  %v993 = vpop.f32.mrf.mxu0
  %v994 = vadd.f32 %v249, %v993
  %v995 = vpop.f32.mrf.mxu0
  %v996 = vadd.f32 %v249, %v995
  %997 = vmatmul.bf16.gmra.mxu0 %v657
  %v998 = vpop.f32.mrf.mxu0
  %v999 = vadd.f32 %v249, %v998
  %v1000 = vpop.f32.mrf.mxu0
  %v1001 = vadd.f32 %v249, %v1000
  %1002 = vmatmul.bf16.gmra.mxu0 %v658
  %v1003 = vpop.f32.mrf.mxu0
  %v1004 = vadd.f32 %v249, %v1003
  %v1005 = vpop.f32.mrf.mxu0
  %v1006 = vadd.f32 %v249, %v1005
  %1007 = vmatmul.bf16.gmra.mxu0 %v659
  %v1008 = vpop.f32.mrf.mxu0
  %v1009 = vadd.f32 %v249, %v1008
  %v1010 = vpop.f32.mrf.mxu0
  %v1011 = vadd.f32 %v249, %v1010
  %1012 = vmatmul.bf16.gmra.mxu0 %v660
  %v1013 = vpop.f32.mrf.mxu0
  %v1014 = vadd.f32 %v249, %v1013
  %v1015 = vpop.f32.mrf.mxu0
  %v1016 = vadd.f32 %v249, %v1015
  %1017 = vmatmul.bf16.gmra.mxu0 %v661
  %v1018 = vpop.f32.mrf.mxu0
  %v1019 = vadd.f32 %v249, %v1018
  %v1020 = vpop.f32.mrf.mxu0
  %v1021 = vadd.f32 %v249, %v1020
  %1022 = vmatmul.bf16.gmra.mxu0 %v662
  %v1023 = vpop.f32.mrf.mxu0
  %v1024 = vadd.f32 %v249, %v1023
  %v1025 = vpop.f32.mrf.mxu0
  %v1026 = vadd.f32 %v249, %v1025
  %1027 = vmatmul.bf16.gmra.mxu0 %v663
  %v1028 = vpop.f32.mrf.mxu0
  %v1029 = vadd.f32 %v249, %v1028
  %v1030 = vpop.f32.mrf.mxu0
  %v1031 = vadd.f32 %v249, %v1030
  %1032 = vmatmul.bf16.gmra.mxu0 %v664
  %v1033 = vpop.f32.mrf.mxu0
  %v1034 = vadd.f32 %v249, %v1033
  %v1035 = vpop.f32.mrf.mxu0
  %v1036 = vadd.f32 %v249, %v1035
  %1037 = vmatmul.bf16.gmra.mxu0 %v665
  %v1038 = vpop.f32.mrf.mxu0
  %v1039 = vadd.f32 %v249, %v1038
  %v1040 = vpop.f32.mrf.mxu0
  %v1041 = vadd.f32 %v249, %v1040
  %1042 = vmatmul.bf16.gmra.mxu0 %v666
  %v1043 = vpop.f32.mrf.mxu0
  %v1044 = vadd.f32 %v249, %v1043
  %v1045 = vpop.f32.mrf.mxu0
  %v1046 = vadd.f32 %v249, %v1045
  %1047 = vmatmul.bf16.gmra.mxu0 %v667
  %v1048 = vpop.f32.mrf.mxu0
  %v1049 = vadd.f32 %v249, %v1048
  %v1050 = vpop.f32.mrf.mxu0
  %v1051 = vadd.f32 %v249, %v1050
  %1052 = vmatmul.bf16.gmra.mxu0 %v668
  %v1053 = vpop.f32.mrf.mxu0
  %v1054 = vadd.f32 %v249, %v1053
  %v1055 = vpop.f32.mrf.mxu0
  %v1056 = vadd.f32 %v249, %v1055
  %1057 = vmatmul.bf16.gmra.mxu0 %v669
  %v1058 = vpop.f32.mrf.mxu0
  %v1059 = vadd.f32 %v249, %v1058
  %v1060 = vpop.f32.mrf.mxu0
  %v1061 = vadd.f32 %v249, %v1060
  %1062 = vmatmul.bf16.gmra.mxu0 %v670
  %v1063 = vpop.f32.mrf.mxu0
  %v1064 = vadd.f32 %v249, %v1063
  %v1065 = vpop.f32.mrf.mxu0
  %v1066 = vadd.f32 %v249, %v1065
  %1067 = vmatmul.bf16.gmra.mxu0 %v671
  %v1068 = vpop.f32.mrf.mxu0
  %v1069 = vadd.f32 %v249, %v1068
  %v1070 = vpop.f32.mrf.mxu0
  %v1071 = vadd.f32 %v249, %v1070
  %1072 = vmatmul.bf16.gmra.mxu0 %v672
  %v1073 = vpop.f32.mrf.mxu0
  %v1074 = vadd.f32 %v249, %v1073
  %v1075 = vpop.f32.mrf.mxu0
  %v1076 = vadd.f32 %v249, %v1075
  %1077 = vmatmul.bf16.gmra.mxu0 %v673
  %v1078 = vpop.f32.mrf.mxu0
  %v1079 = vadd.f32 %v249, %v1078
  %v1080 = vpop.f32.mrf.mxu0
  %v1081 = vadd.f32 %v249, %v1080
  %1082 = vmatmul.bf16.gmra.mxu0 %v674
  %v1083 = vpop.f32.mrf.mxu0
  %v1084 = vadd.f32 %v249, %v1083
  %v1085 = vpop.f32.mrf.mxu0
  %v1086 = vadd.f32 %v249, %v1085
  %1087 = vmatmul.bf16.gmra.mxu0 %v675
  %v1088 = vpop.f32.mrf.mxu0
  %v1089 = vadd.f32 %v249, %v1088
  %v1090 = vpop.f32.mrf.mxu0
  %v1091 = vadd.f32 %v249, %v1090
  %1092 = vmatmul.bf16.gmra.mxu0 %v676
  %v1093 = vpop.f32.mrf.mxu0
  %v1094 = vadd.f32 %v249, %v1093
  %v1095 = vpop.f32.mrf.mxu0
  %v1096 = vadd.f32 %v249, %v1095
  %1097 = vmatmul.bf16.gmra.mxu0 %v677
  %v1098 = vpop.f32.mrf.mxu0
  %v1099 = vadd.f32 %v249, %v1098
  %v1100 = vpop.f32.mrf.mxu0
  %v1101 = vadd.f32 %v249, %v1100
  %1102 = vmatmul.bf16.gmra.mxu0 %v678
  %v1103 = vpop.f32.mrf.mxu0
  %v1104 = vadd.f32 %v249, %v1103
  %v1105 = vpop.f32.mrf.mxu0
  %v1106 = vadd.f32 %v249, %v1105
  %1107 = vmatmul.bf16.gmra.mxu0 %v679
  %v1108 = vpop.f32.mrf.mxu0
  %v1109 = vadd.f32 %v249, %v1108
  %v1110 = vpop.f32.mrf.mxu0
  %v1111 = vadd.f32 %v249, %v1110
  %1112 = vmatmul.bf16.gmra.mxu0 %v680
  %v1113 = vpop.f32.mrf.mxu0
  %v1114 = vadd.f32 %v249, %v1113
  %v1115 = vpop.f32.mrf.mxu0
  %v1116 = vadd.f32 %v249, %v1115
  %1117 = vmatmul.bf16.gmra.mxu0 %v681
  %v1118 = vpop.f32.mrf.mxu0
  %v1119 = vadd.f32 %v249, %v1118
  %v1120 = vpop.f32.mrf.mxu0
  %v1121 = vadd.f32 %v249, %v1120
  %1122 = vmatmul.bf16.gmra.mxu0 %v682
  %v1123 = vpop.f32.mrf.mxu0
  %v1124 = vadd.f32 %v249, %v1123
  %v1125 = vpop.f32.mrf.mxu0
  %v1126 = vadd.f32 %v249, %v1125
  %1127 = vmatmul.bf16.gmra.mxu0 %v683
  %v1128 = vpop.f32.mrf.mxu0
  %v1129 = vadd.f32 %v249, %v1128
  %v1130 = vpop.f32.mrf.mxu0
  %v1131 = vadd.f32 %v249, %v1130
  %1132 = vmatmul.bf16.gmra.mxu0 %v684
  %v1133 = vpop.f32.mrf.mxu0
  %v1134 = vadd.f32 %v249, %v1133
  %v1135 = vpop.f32.mrf.mxu0
  %v1136 = vadd.f32 %v249, %v1135
  %1137 = vmatmul.bf16.gmra.mxu0 %v685
  %v1138 = vpop.f32.mrf.mxu0
  %v1139 = vadd.f32 %v249, %v1138
  %v1140 = vpop.f32.mrf.mxu0
  %v1141 = vadd.f32 %v249, %v1140
  %1142 = vmatmul.bf16.gmra.mxu0 %v686
  %v1143 = vpop.f32.mrf.mxu0
  %v1144 = vadd.f32 %v249, %v1143
  %v1145 = vpop.f32.mrf.mxu0
  %v1146 = vadd.f32 %v249, %v1145
  %1147 = vmatmul.bf16.gmra.mxu0 %v687
  %v1148 = vpop.f32.mrf.mxu0
  %v1149 = vadd.f32 %v249, %v1148
  %v1150 = vpop.f32.mrf.mxu0
  %v1151 = vadd.f32 %v249, %v1150
  %1152 = vmatmul.bf16.gmra.mxu0 %v688
  %v1153 = vpop.f32.mrf.mxu0
  %v1154 = vadd.f32 %v249, %v1153
  %v1155 = vpop.f32.mrf.mxu0
  %v1156 = vadd.f32 %v249, %v1155
  %1157 = vmatmul.bf16.gmra.mxu0 %v689
  %v1158 = vpop.f32.mrf.mxu0
  %v1159 = vadd.f32 %v249, %v1158
  %v1160 = vpop.f32.mrf.mxu0
  %v1161 = vadd.f32 %v249, %v1160
  %1162 = vmatmul.bf16.gmra.mxu0 %v690
  %v1163 = vpop.f32.mrf.mxu0
  %v1164 = vadd.f32 %v249, %v1163
  %v1165 = vpop.f32.mrf.mxu0
  %v1166 = vadd.f32 %v249, %v1165
  %1167 = vmatmul.bf16.gmra.mxu0 %v691
  %v1168 = vpop.f32.mrf.mxu0
  %v1169 = vadd.f32 %v249, %v1168
  %v1170 = vpop.f32.mrf.mxu0
  %v1171 = vadd.f32 %v249, %v1170
  %1172 = vmatmul.bf16.gmra.mxu0 %v692
  %v1173 = vpop.f32.mrf.mxu0
  %v1174 = vadd.f32 %v249, %v1173
  %v1175 = vpop.f32.mrf.mxu0
  %v1176 = vadd.f32 %v249, %v1175
  %1177 = vmatmul.bf16.gmra.mxu0 %v693
  %v1178 = vpop.f32.mrf.mxu0
  %v1179 = vadd.f32 %v249, %v1178
  %v1180 = vpop.f32.mrf.mxu0
  %v1181 = vadd.f32 %v249, %v1180
  %1182 = vmatmul.bf16.gmra.mxu0 %v694
  %v1183 = vpop.f32.mrf.mxu0
  %v1184 = vadd.f32 %v249, %v1183
  %v1185 = vpop.f32.mrf.mxu0
  %v1186 = vadd.f32 %v249, %v1185
  %1187 = vmatmul.bf16.gmra.mxu0 %v695
  %v1188 = vpop.f32.mrf.mxu0
  %v1189 = vadd.f32 %v249, %v1188
  %v1190 = vpop.f32.mrf.mxu0
  %v1191 = vadd.f32 %v249, %v1190
  %1192 = vmatmul.bf16.gmra.mxu0 %v696
  %v1193 = vpop.f32.mrf.mxu0
  %v1194 = vadd.f32 %v249, %v1193
  %v1195 = vpop.f32.mrf.mxu0
  %v1196 = vadd.f32 %v249, %v1195
  %1197 = vmatmul.bf16.gmra.mxu0 %v697
  %v1198 = vpop.f32.mrf.mxu0
  %v1199 = vadd.f32 %v249, %v1198
  %v1200 = vpop.f32.mrf.mxu0
  %v1201 = vadd.f32 %v249, %v1200
  %1202 = vmatmul.bf16.gmra.mxu0 %v698
  %v1203 = vpop.f32.mrf.mxu0
  %v1204 = vadd.f32 %v249, %v1203
  %v1205 = vpop.f32.mrf.mxu0
  %v1206 = vadd.f32 %v249, %v1205
  %1207 = vmatmul.bf16.gmra.mxu0 %v699
  %v1208 = vpop.f32.mrf.mxu0
  %v1209 = vadd.f32 %v249, %v1208
  %v1210 = vpop.f32.mrf.mxu0
  %v1211 = vadd.f32 %v249, %v1210
  %1212 = vmatmul.bf16.gmra.mxu0 %v700
  %v1213 = vpop.f32.mrf.mxu0
  %v1214 = vadd.f32 %v249, %v1213
  %v1215 = vpop.f32.mrf.mxu0
  %v1216 = vadd.f32 %v249, %v1215
  %1217 = vmatmul.bf16.gmra.mxu0 %v701
  %v1218 = vpop.f32.mrf.mxu0
  %v1219 = vadd.f32 %v249, %v1218
  %v1220 = vpop.f32.mrf.mxu0
  %v1221 = vadd.f32 %v249, %v1220
  %1222 = vmatmul.bf16.gmra.mxu0 %v702
  %v1223 = vpop.f32.mrf.mxu0
  %v1224 = vadd.f32 %v249, %v1223
  %v1225 = vpop.f32.mrf.mxu0
  %v1226 = vadd.f32 %v249, %v1225
  %1227 = vmatmul.bf16.gmra.mxu0 %v703
  %v1228 = vpop.f32.mrf.mxu0
  %v1229 = vadd.f32 %v249, %v1228
  %v1230 = vpop.f32.mrf.mxu0
  %v1231 = vadd.f32 %v249, %v1230
  %1232 = vmatmul.bf16.gmra.mxu0 %v704
  %v1233 = vpop.f32.mrf.mxu0
  %v1234 = vadd.f32 %v249, %v1233
  %v1235 = vpop.f32.mrf.mxu0
  %v1236 = vadd.f32 %v249, %v1235
  %1237 = vmatmul.bf16.gmra.mxu0 %v705
  %v1238 = vpop.f32.mrf.mxu0
  %v1239 = vadd.f32 %v249, %v1238
  %v1240 = vpop.f32.mrf.mxu0
  %v1241 = vadd.f32 %v249, %v1240
  %1242 = vmatmul.bf16.gmra.mxu0 %v706
  %v1243 = vpop.f32.mrf.mxu0
  %v1244 = vadd.f32 %v249, %v1243
  %v1245 = vpop.f32.mrf.mxu0
  %v1246 = vadd.f32 %v249, %v1245
  %1247 = vmatmul.bf16.gmra.mxu0 %v707
  %v1248 = vpop.f32.mrf.mxu0
  %v1249 = vadd.f32 %v249, %v1248
  %v1250 = vpop.f32.mrf.mxu0
  %v1251 = vadd.f32 %v249, %v1250
  %1252 = vmatmul.bf16.gmra.mxu0 %v708
  %v1253 = vpop.f32.mrf.mxu0
  %v1254 = vadd.f32 %v249, %v1253
  %v1255 = vpop.f32.mrf.mxu0
  %v1256 = vadd.f32 %v249, %v1255
  %1257 = vmatmul.bf16.gmra.mxu0 %v709
  %v1258 = vpop.f32.mrf.mxu0
  %v1259 = vadd.f32 %v249, %v1258
  %v1260 = vpop.f32.mrf.mxu0
  %v1261 = vadd.f32 %v249, %v1260
  %1262 = vmatmul.bf16.gmra.mxu0 %v710
  %v1263 = vpop.f32.mrf.mxu0
  %v1264 = vadd.f32 %v249, %v1263
  %v1265 = vpop.f32.mrf.mxu0
  %v1266 = vadd.f32 %v249, %v1265
  %1267 = vmatmul.bf16.gmra.mxu0 %v711
  %v1268 = vpop.f32.mrf.mxu0
  %v1269 = vadd.f32 %v249, %v1268
  %v1270 = vpop.f32.mrf.mxu0
  %v1271 = vadd.f32 %v249, %v1270
  %1272 = vmatmul.bf16.gmra.mxu0 %v712
  %v1273 = vpop.f32.mrf.mxu0
  %v1274 = vadd.f32 %v249, %v1273
  %v1275 = vpop.f32.mrf.mxu0
  %v1276 = vadd.f32 %v249, %v1275
  %1277 = vmatmul.bf16.gmra.mxu0 %v713
  %v1278 = vpop.f32.mrf.mxu0
  %v1279 = vadd.f32 %v249, %v1278
  %v1280 = vpop.f32.mrf.mxu0
  %v1281 = vadd.f32 %v249, %v1280
  %1282 = vmatmul.bf16.gmra.mxu0 %v714
  %v1283 = vpop.f32.mrf.mxu0
  %v1284 = vadd.f32 %v249, %v1283
  %v1285 = vpop.f32.mrf.mxu0
  %v1286 = vadd.f32 %v249, %v1285
  %1287 = vmatmul.bf16.gmra.mxu0 %v715
  %v1288 = vpop.f32.mrf.mxu0
  %v1289 = vadd.f32 %v249, %v1288
  %v1290 = vpop.f32.mrf.mxu0
  %v1291 = vadd.f32 %v249, %v1290
  %1292 = vmatmul.bf16.gmra.mxu0 %v716
  %v1293 = vpop.f32.mrf.mxu0
  %v1294 = vadd.f32 %v249, %v1293
  %v1295 = vpop.f32.mrf.mxu0
  %v1296 = vadd.f32 %v249, %v1295
  %1297 = vmatmul.bf16.gmra.mxu0 %v717
  %v1298 = vpop.f32.mrf.mxu0
  %v1299 = vadd.f32 %v249, %v1298
  %v1300 = vpop.f32.mrf.mxu0
  %v1301 = vadd.f32 %v249, %v1300
  %1302 = vmatmul.bf16.gmra.mxu0 %v718
  %v1303 = vpop.f32.mrf.mxu0
  %v1304 = vadd.f32 %v249, %v1303
  %v1305 = vpop.f32.mrf.mxu0
  %v1306 = vadd.f32 %v249, %v1305
  %1307 = vmatmul.bf16.gmra.mxu0 %v719
  %v1308 = vpop.f32.mrf.mxu0
  %v1309 = vadd.f32 %v249, %v1308
  %v1310 = vpop.f32.mrf.mxu0
  %v1311 = vadd.f32 %v249, %v1310
  %1312 = vmatmul.bf16.gmra.mxu0 %v720
  %v1313 = vpop.f32.mrf.mxu0
  %v1314 = vadd.f32 %v249, %v1313
  %v1315 = vpop.f32.mrf.mxu0
  %v1316 = vadd.f32 %v249, %v1315
  %1317 = vmatmul.bf16.gmra.mxu0 %v721
  %v1318 = vpop.f32.mrf.mxu0
  %v1319 = vadd.f32 %v249, %v1318
  %v1320 = vpop.f32.mrf.mxu0
  %v1321 = vadd.f32 %v249, %v1320
  %1322 = vmatmul.bf16.gmra.mxu0 %v722
  %v1323 = vpop.f32.mrf.mxu0
  %v1324 = vadd.f32 %v249, %v1323
  %v1325 = vpop.f32.mrf.mxu0
  %v1326 = vadd.f32 %v249, %v1325
  %1327 = vmatmul.bf16.gmra.mxu0 %v723
  %v1328 = vpop.f32.mrf.mxu0
  %v1329 = vadd.f32 %v249, %v1328
  %v1330 = vpop.f32.mrf.mxu0
  %v1331 = vadd.f32 %v249, %v1330
  %1332 = vmatmul.bf16.gmra.mxu0 %v724
  %v1333 = vpop.f32.mrf.mxu0
  %v1334 = vadd.f32 %v249, %v1333
  %v1335 = vpop.f32.mrf.mxu0
  %v1336 = vadd.f32 %v249, %v1335
  %1337 = vmatmul.bf16.gmra.mxu0 %v725
  %v1338 = vpop.f32.mrf.mxu0
  %v1339 = vadd.f32 %v249, %v1338
  %v1340 = vpop.f32.mrf.mxu0
  %v1341 = vadd.f32 %v249, %v1340
  %1342 = vmatmul.bf16.gmra.mxu0 %v726
  %v1343 = vpop.f32.mrf.mxu0
  %v1344 = vadd.f32 %v249, %v1343
  %v1345 = vpop.f32.mrf.mxu0
  %v1346 = vadd.f32 %v249, %v1345
  %1347 = vmatmul.bf16.gmra.mxu0 %v727
  %v1348 = vpop.f32.mrf.mxu0
  %v1349 = vadd.f32 %v249, %v1348
  %v1350 = vpop.f32.mrf.mxu0
  %v1351 = vadd.f32 %v249, %v1350
  %1352 = vmatmul.bf16.gmra.mxu0 %v728
  %v1353 = vpop.f32.mrf.mxu0
  %v1354 = vadd.f32 %v249, %v1353
  %v1355 = vpop.f32.mrf.mxu0
  %v1356 = vadd.f32 %v249, %v1355
  %1357 = vmatmul.bf16.gmra.mxu0 %v729
  %v1358 = vpop.f32.mrf.mxu0
  %v1359 = vadd.f32 %v249, %v1358
  %v1360 = vpop.f32.mrf.mxu0
  %v1361 = vadd.f32 %v249, %v1360
  %1362 = vdwg.mxu0
  %v1363 = vmax.f32 %v884, 0.0
  %v1364 = vmax.f32 %v886, 0.0
  %v1365 = vmax.f32 %v889, 0.0
  %v1366 = vmax.f32 %v891, 0.0
  %v1367 = vmax.f32 %v894, 0.0
  %v1368 = vmax.f32 %v896, 0.0
  %v1369 = vmax.f32 %v899, 0.0
  %v1370 = vmax.f32 %v901, 0.0
  %v1371 = vmax.f32 %v904, 0.0
  %v1372 = vmax.f32 %v906, 0.0
  %v1373 = vmax.f32 %v909, 0.0
  %v1374 = vmax.f32 %v911, 0.0
  %v1375 = vmax.f32 %v914, 0.0
  %v1376 = vmax.f32 %v916, 0.0
  %v1377 = vmax.f32 %v919, 0.0
  %v1378 = vmax.f32 %v921, 0.0
  %v1379 = vmax.f32 %v924, 0.0
  %v1380 = vmax.f32 %v926, 0.0
  %v1381 = vmax.f32 %v929, 0.0
  %v1382 = vmax.f32 %v931, 0.0
  %v1383 = vmax.f32 %v934, 0.0
  %v1384 = vmax.f32 %v936, 0.0
  %v1385 = vmax.f32 %v939, 0.0
  %v1386 = vmax.f32 %v941, 0.0
  %v1387 = vmax.f32 %v944, 0.0
  %v1388 = vmax.f32 %v946, 0.0
  %v1389 = vmax.f32 %v949, 0.0
  %v1390 = vmax.f32 %v951, 0.0
  %v1391 = vmax.f32 %v954, 0.0
  %v1392 = vmax.f32 %v956, 0.0
  %v1393 = vmax.f32 %v959, 0.0
  %v1394 = vmax.f32 %v961, 0.0
  %v1395 = vmax.f32 %v964, 0.0
  %v1396 = vmax.f32 %v966, 0.0
  %v1397 = vmax.f32 %v969, 0.0
  %v1398 = vmax.f32 %v971, 0.0
  %v1399 = vmax.f32 %v974, 0.0
  %v1400 = vmax.f32 %v976, 0.0
  %v1401 = vmax.f32 %v979, 0.0
  %v1402 = vmax.f32 %v981, 0.0
  %v1403 = vmax.f32 %v984, 0.0
  %v1404 = vmax.f32 %v986, 0.0
  %v1405 = vmax.f32 %v989, 0.0
  %v1406 = vmax.f32 %v991, 0.0
  %v1407 = vmax.f32 %v994, 0.0
  %v1408 = vmax.f32 %v996, 0.0
  %v1409 = vmax.f32 %v999, 0.0
  %v1410 = vmax.f32 %v1001, 0.0
  %v1411 = vmax.f32 %v1004, 0.0
  %v1412 = vmax.f32 %v1006, 0.0
  %v1413 = vmax.f32 %v1009, 0.0
  %v1414 = vmax.f32 %v1011, 0.0
  %v1415 = vmax.f32 %v1014, 0.0
  %v1416 = vmax.f32 %v1016, 0.0
  %v1417 = vmax.f32 %v1019, 0.0
  %v1418 = vmax.f32 %v1021, 0.0
  %v1419 = vmax.f32 %v1024, 0.0
  %v1420 = vmax.f32 %v1026, 0.0
  %v1421 = vmax.f32 %v1029, 0.0
  %v1422 = vmax.f32 %v1031, 0.0
  %v1423 = vmax.f32 %v1034, 0.0
  %v1424 = vmax.f32 %v1036, 0.0
  %v1425 = vmax.f32 %v1039, 0.0
  %v1426 = vmax.f32 %v1041, 0.0
  %v1427 = vmax.f32 %v1044, 0.0
  %v1428 = vmax.f32 %v1046, 0.0
  %v1429 = vmax.f32 %v1049, 0.0
  %v1430 = vmax.f32 %v1051, 0.0
  %v1431 = vmax.f32 %v1054, 0.0
  %v1432 = vmax.f32 %v1056, 0.0
  %v1433 = vmax.f32 %v1059, 0.0
  %v1434 = vmax.f32 %v1061, 0.0
  %v1435 = vmax.f32 %v1064, 0.0
  %v1436 = vmax.f32 %v1066, 0.0
  %v1437 = vmax.f32 %v1069, 0.0
  %v1438 = vmax.f32 %v1071, 0.0
  %v1439 = vmax.f32 %v1074, 0.0
  %v1440 = vmax.f32 %v1076, 0.0
  %v1441 = vmax.f32 %v1079, 0.0
  %v1442 = vmax.f32 %v1081, 0.0
  %v1443 = vmax.f32 %v1084, 0.0
  %v1444 = vmax.f32 %v1086, 0.0
  %v1445 = vmax.f32 %v1089, 0.0
  %v1446 = vmax.f32 %v1091, 0.0
  %v1447 = vmax.f32 %v1094, 0.0
  %v1448 = vmax.f32 %v1096, 0.0
  %v1449 = vmax.f32 %v1099, 0.0
  %v1450 = vmax.f32 %v1101, 0.0
  %v1451 = vmax.f32 %v1104, 0.0
  %v1452 = vmax.f32 %v1106, 0.0
  %v1453 = vmax.f32 %v1109, 0.0
  %v1454 = vmax.f32 %v1111, 0.0
  %v1455 = vmax.f32 %v1114, 0.0
  %v1456 = vmax.f32 %v1116, 0.0
  %v1457 = vmax.f32 %v1119, 0.0
  %v1458 = vmax.f32 %v1121, 0.0
  %v1459 = vmax.f32 %v1124, 0.0
  %v1460 = vmax.f32 %v1126, 0.0
  %v1461 = vmax.f32 %v1129, 0.0
  %v1462 = vmax.f32 %v1131, 0.0
  %v1463 = vmax.f32 %v1134, 0.0
  %v1464 = vmax.f32 %v1136, 0.0
  %v1465 = vmax.f32 %v1139, 0.0
  %v1466 = vmax.f32 %v1141, 0.0
  %v1467 = vmax.f32 %v1144, 0.0
  %v1468 = vmax.f32 %v1146, 0.0
  %v1469 = vmax.f32 %v1149, 0.0
  %v1470 = vmax.f32 %v1151, 0.0
  %v1471 = vmax.f32 %v1154, 0.0
  %v1472 = vmax.f32 %v1156, 0.0
  %v1473 = vmax.f32 %v1159, 0.0
  %v1474 = vmax.f32 %v1161, 0.0
  %v1475 = vmax.f32 %v1164, 0.0
  %v1476 = vmax.f32 %v1166, 0.0
  %v1477 = vmax.f32 %v1169, 0.0
  %v1478 = vmax.f32 %v1171, 0.0
  %v1479 = vmax.f32 %v1174, 0.0
  %v1480 = vmax.f32 %v1176, 0.0
  %v1481 = vmax.f32 %v1179, 0.0
  %v1482 = vmax.f32 %v1181, 0.0
  %v1483 = vmax.f32 %v1184, 0.0
  %v1484 = vmax.f32 %v1186, 0.0
  %v1485 = vmax.f32 %v1189, 0.0
  %v1486 = vmax.f32 %v1191, 0.0
  %v1487 = vmax.f32 %v1194, 0.0
  %v1488 = vmax.f32 %v1196, 0.0
  %v1489 = vmax.f32 %v1199, 0.0
  %v1490 = vmax.f32 %v1201, 0.0
  %v1491 = vmax.f32 %v1204, 0.0
  %v1492 = vmax.f32 %v1206, 0.0
  %v1493 = vmax.f32 %v1209, 0.0
  %v1494 = vmax.f32 %v1211, 0.0
  %v1495 = vmax.f32 %v1214, 0.0
  %v1496 = vmax.f32 %v1216, 0.0
  %v1497 = vmax.f32 %v1219, 0.0
  %v1498 = vmax.f32 %v1221, 0.0
  %v1499 = vmax.f32 %v1224, 0.0
  %v1500 = vmax.f32 %v1226, 0.0
  %v1501 = vmax.f32 %v1229, 0.0
  %v1502 = vmax.f32 %v1231, 0.0
  %v1503 = vmax.f32 %v1234, 0.0
  %v1504 = vmax.f32 %v1236, 0.0
  %v1505 = vmax.f32 %v1239, 0.0
  %v1506 = vmax.f32 %v1241, 0.0
  %v1507 = vmax.f32 %v1244, 0.0
  %v1508 = vmax.f32 %v1246, 0.0
  %v1509 = vmax.f32 %v1249, 0.0
  %v1510 = vmax.f32 %v1251, 0.0
  %v1511 = vmax.f32 %v1254, 0.0
  %v1512 = vmax.f32 %v1256, 0.0
  %v1513 = vmax.f32 %v1259, 0.0
  %v1514 = vmax.f32 %v1261, 0.0
  %v1515 = vmax.f32 %v1264, 0.0
  %v1516 = vmax.f32 %v1266, 0.0
  %v1517 = vmax.f32 %v1269, 0.0
  %v1518 = vmax.f32 %v1271, 0.0
  %v1519 = vmax.f32 %v1274, 0.0
  %v1520 = vmax.f32 %v1276, 0.0
  %v1521 = vmax.f32 %v1279, 0.0
  %v1522 = vmax.f32 %v1281, 0.0
  %v1523 = vmax.f32 %v1284, 0.0
  %v1524 = vmax.f32 %v1286, 0.0
  %v1525 = vmax.f32 %v1289, 0.0
  %v1526 = vmax.f32 %v1291, 0.0
  %v1527 = vmax.f32 %v1294, 0.0
  %v1528 = vmax.f32 %v1296, 0.0
  %v1529 = vmax.f32 %v1299, 0.0
  %v1530 = vmax.f32 %v1301, 0.0
  %v1531 = vmax.f32 %v1304, 0.0
  %v1532 = vmax.f32 %v1306, 0.0
  %v1533 = vmax.f32 %v1309, 0.0
  %v1534 = vmax.f32 %v1311, 0.0
  %v1535 = vmax.f32 %v1314, 0.0
  %v1536 = vmax.f32 %v1316, 0.0
  %v1537 = vmax.f32 %v1319, 0.0
  %v1538 = vmax.f32 %v1321, 0.0
  %v1539 = vmax.f32 %v1324, 0.0
  %v1540 = vmax.f32 %v1326, 0.0
  %v1541 = vmax.f32 %v1329, 0.0
  %v1542 = vmax.f32 %v1331, 0.0
  %v1543 = vmax.f32 %v1334, 0.0
  %v1544 = vmax.f32 %v1336, 0.0
  %v1545 = vmax.f32 %v1339, 0.0
  %v1546 = vmax.f32 %v1341, 0.0
  %v1547 = vmax.f32 %v1344, 0.0
  %v1548 = vmax.f32 %v1346, 0.0
  %v1549 = vmax.f32 %v1349, 0.0
  %v1550 = vmax.f32 %v1351, 0.0
  %v1551 = vmax.f32 %v1354, 0.0
  %v1552 = vmax.f32 %v1356, 0.0
  %v1553 = vmax.f32 %v1359, 0.0
  %v1554 = vmax.f32 %v1361, 0.0
  %v1555 = vpack.c.bf16 %v1364, %v1363
  %v1556 = vpack.c.bf16 %v1366, %v1365
  %v1557 = vpack.c.bf16 %v1368, %v1367
  %v1558 = vpack.c.bf16 %v1370, %v1369
  %v1559 = vpack.c.bf16 %v1372, %v1371
  %v1560 = vpack.c.bf16 %v1374, %v1373
  %v1561 = vpack.c.bf16 %v1376, %v1375
  %v1562 = vpack.c.bf16 %v1378, %v1377
  %v1563 = vpack.c.bf16 %v1380, %v1379
  %v1564 = vpack.c.bf16 %v1382, %v1381
  %v1565 = vpack.c.bf16 %v1384, %v1383
  %v1566 = vpack.c.bf16 %v1386, %v1385
  %v1567 = vpack.c.bf16 %v1388, %v1387
  %v1568 = vpack.c.bf16 %v1390, %v1389
  %v1569 = vpack.c.bf16 %v1392, %v1391
  %v1570 = vpack.c.bf16 %v1394, %v1393
  %v1571 = vpack.c.bf16 %v1396, %v1395
  %v1572 = vpack.c.bf16 %v1398, %v1397
  %v1573 = vpack.c.bf16 %v1400, %v1399
  %v1574 = vpack.c.bf16 %v1402, %v1401
  %v1575 = vpack.c.bf16 %v1404, %v1403
  %v1576 = vpack.c.bf16 %v1406, %v1405
  %v1577 = vpack.c.bf16 %v1408, %v1407
  %v1578 = vpack.c.bf16 %v1410, %v1409
  %v1579 = vpack.c.bf16 %v1412, %v1411
  %v1580 = vpack.c.bf16 %v1414, %v1413
  %v1581 = vpack.c.bf16 %v1416, %v1415
  %v1582 = vpack.c.bf16 %v1418, %v1417
  %v1583 = vpack.c.bf16 %v1420, %v1419
  %v1584 = vpack.c.bf16 %v1422, %v1421
  %v1585 = vpack.c.bf16 %v1424, %v1423
  %v1586 = vpack.c.bf16 %v1426, %v1425
  %v1587 = vpack.c.bf16 %v1428, %v1427
  %v1588 = vpack.c.bf16 %v1430, %v1429
  %v1589 = vpack.c.bf16 %v1432, %v1431
  %v1590 = vpack.c.bf16 %v1434, %v1433
  %v1591 = vpack.c.bf16 %v1436, %v1435
  %v1592 = vpack.c.bf16 %v1438, %v1437
  %v1593 = vpack.c.bf16 %v1440, %v1439
  %v1594 = vpack.c.bf16 %v1442, %v1441
  %v1595 = vpack.c.bf16 %v1444, %v1443
  %v1596 = vpack.c.bf16 %v1446, %v1445
  %v1597 = vpack.c.bf16 %v1448, %v1447
  %v1598 = vpack.c.bf16 %v1450, %v1449
  %v1599 = vpack.c.bf16 %v1452, %v1451
  %v1600 = vpack.c.bf16 %v1454, %v1453
  %v1601 = vpack.c.bf16 %v1456, %v1455
  %v1602 = vpack.c.bf16 %v1458, %v1457
  %v1603 = vpack.c.bf16 %v1460, %v1459
  %v1604 = vpack.c.bf16 %v1462, %v1461
  %v1605 = vpack.c.bf16 %v1464, %v1463
  %v1606 = vpack.c.bf16 %v1466, %v1465
  %v1607 = vpack.c.bf16 %v1468, %v1467
  %v1608 = vpack.c.bf16 %v1470, %v1469
  %v1609 = vpack.c.bf16 %v1472, %v1471
  %v1610 = vpack.c.bf16 %v1474, %v1473
  %v1611 = vpack.c.bf16 %v1476, %v1475
  %v1612 = vpack.c.bf16 %v1478, %v1477
  %v1613 = vpack.c.bf16 %v1480, %v1479
  %v1614 = vpack.c.bf16 %v1482, %v1481
  %v1615 = vpack.c.bf16 %v1484, %v1483
  %v1616 = vpack.c.bf16 %v1486, %v1485
  %v1617 = vpack.c.bf16 %v1488, %v1487
  %v1618 = vpack.c.bf16 %v1490, %v1489
  %v1619 = vpack.c.bf16 %v1492, %v1491
  %v1620 = vpack.c.bf16 %v1494, %v1493
  %v1621 = vpack.c.bf16 %v1496, %v1495
  %v1622 = vpack.c.bf16 %v1498, %v1497
  %v1623 = vpack.c.bf16 %v1500, %v1499
  %v1624 = vpack.c.bf16 %v1502, %v1501
  %v1625 = vpack.c.bf16 %v1504, %v1503
  %v1626 = vpack.c.bf16 %v1506, %v1505
  %v1627 = vpack.c.bf16 %v1508, %v1507
  %v1628 = vpack.c.bf16 %v1510, %v1509
  %v1629 = vpack.c.bf16 %v1512, %v1511
  %v1630 = vpack.c.bf16 %v1514, %v1513
  %v1631 = vpack.c.bf16 %v1516, %v1515
  %v1632 = vpack.c.bf16 %v1518, %v1517
  %v1633 = vpack.c.bf16 %v1520, %v1519
  %v1634 = vpack.c.bf16 %v1522, %v1521
  %v1635 = vpack.c.bf16 %v1524, %v1523
  %v1636 = vpack.c.bf16 %v1526, %v1525
  %v1637 = vpack.c.bf16 %v1528, %v1527
  %v1638 = vpack.c.bf16 %v1530, %v1529
  %v1639 = vpack.c.bf16 %v1532, %v1531
  %v1640 = vpack.c.bf16 %v1534, %v1533
  %v1641 = vpack.c.bf16 %v1536, %v1535
  %v1642 = vpack.c.bf16 %v1538, %v1537
  %v1643 = vpack.c.bf16 %v1540, %v1539
  %v1644 = vpack.c.bf16 %v1542, %v1541
  %v1645 = vpack.c.bf16 %v1544, %v1543
  %v1646 = vpack.c.bf16 %v1546, %v1545
  %v1647 = vpack.c.bf16 %v1548, %v1547
  %v1648 = vpack.c.bf16 %v1550, %v1549
  %v1649 = vpack.c.bf16 %v1552, %v1551
  %v1650 = vpack.c.bf16 %v1554, %v1553
  %v1651 = vld [vmem:[%s5] sm:$0xf]
  %v1652 = vld [vmem:[%s5 + $0x4] sm:$0xf]
  %v1653 = vld [vmem:[%s5 + $0x8] sm:$0xf]
  %v1654 = vld [vmem:[%s5 + $0xc] sm:$0xf]
  %v1655 = vperm.slane %v39, 1
  %v1660 = vunpack.c.l.b16 %v1651
  %v1661 = vunpack.c.l.b16 %v1652
  %v1662 = vunpack.c.l.b16 %v1653
  %v1663 = vunpack.c.l.b16 %v1654
  %v1664 = vpack.c.b16 %v1661, %v1660
  %v1665 = vpack.c.b16 %v1663, %v1662
  %vm1668 = vcmask 261120
  %v1670 = vsel %vm1668, %v1555, 0
  %v1673 = vsel %vm1668, %v1556, 0
  %v1676 = vsel %vm1668, %v1557, 0
  %v1679 = vsel %vm1668, %v1558, 0
  %v1682 = vsel %vm1668, %v1559, 0
  %v1685 = vsel %vm1668, %v1560, 0
  %v1688 = vsel %vm1668, %v1561, 0
  %v1691 = vsel %vm1668, %v1562, 0
  %v1694 = vsel %vm1668, %v1563, 0
  %v1697 = vsel %vm1668, %v1564, 0
  %v1700 = vsel %vm1668, %v1565, 0
  %v1703 = vsel %vm1668, %v1566, 0
  %v1706 = vsel %vm1668, %v1567, 0
  %v1709 = vsel %vm1668, %v1568, 0
  %v1712 = vsel %vm1668, %v1569, 0
  %v1715 = vsel %vm1668, %v1570, 0
  %v1718 = vsel %vm1668, %v1571, 0
  %v1721 = vsel %vm1668, %v1572, 0
  %v1724 = vsel %vm1668, %v1573, 0
  %v1727 = vsel %vm1668, %v1574, 0
  %v1730 = vsel %vm1668, %v1575, 0
  %v1733 = vsel %vm1668, %v1576, 0
  %v1736 = vsel %vm1668, %v1577, 0
  %v1739 = vsel %vm1668, %v1578, 0
  %v1742 = vsel %vm1668, %v1579, 0
  %v1745 = vsel %vm1668, %v1580, 0
  %v1748 = vsel %vm1668, %v1581, 0
  %v1751 = vsel %vm1668, %v1582, 0
  %v1754 = vsel %vm1668, %v1583, 0
  %v1757 = vsel %vm1668, %v1584, 0
  %v1760 = vsel %vm1668, %v1585, 0
  %v1763 = vsel %vm1668, %v1586, 0
  %v1766 = vsel %vm1668, %v1587, 0
  %v1769 = vsel %vm1668, %v1588, 0
  %v1772 = vsel %vm1668, %v1589, 0
  %v1775 = vsel %vm1668, %v1590, 0
  %v1778 = vsel %vm1668, %v1591, 0
  %v1781 = vsel %vm1668, %v1592, 0
  %v1784 = vsel %vm1668, %v1593, 0
  %v1787 = vsel %vm1668, %v1594, 0
  %v1790 = vsel %vm1668, %v1595, 0
  %v1793 = vsel %vm1668, %v1596, 0
  %v1796 = vsel %vm1668, %v1597, 0
  %v1799 = vsel %vm1668, %v1598, 0
  %v1802 = vsel %vm1668, %v1599, 0
  %v1805 = vsel %vm1668, %v1600, 0
  %v1808 = vsel %vm1668, %v1601, 0
  %v1811 = vsel %vm1668, %v1602, 0
  %v1814 = vsel %vm1668, %v1603, 0
  %v1817 = vsel %vm1668, %v1604, 0
  %v1820 = vsel %vm1668, %v1605, 0
  %v1823 = vsel %vm1668, %v1606, 0
  %v1826 = vsel %vm1668, %v1607, 0
  %v1829 = vsel %vm1668, %v1608, 0
  %v1832 = vsel %vm1668, %v1609, 0
  %v1835 = vsel %vm1668, %v1610, 0
  %v1838 = vsel %vm1668, %v1611, 0
  %v1841 = vsel %vm1668, %v1612, 0
  %v1844 = vsel %vm1668, %v1613, 0
  %v1847 = vsel %vm1668, %v1614, 0
  %v1850 = vsel %vm1668, %v1615, 0
  %v1853 = vsel %vm1668, %v1616, 0
  %v1856 = vsel %vm1668, %v1617, 0
  %v1859 = vsel %vm1668, %v1618, 0
  %v1862 = vsel %vm1668, %v1619, 0
  %v1865 = vsel %vm1668, %v1620, 0
  %v1868 = vsel %vm1668, %v1621, 0
  %v1871 = vsel %vm1668, %v1622, 0
  %v1874 = vsel %vm1668, %v1623, 0
  %v1877 = vsel %vm1668, %v1624, 0
  %v1880 = vsel %vm1668, %v1625, 0
  %v1883 = vsel %vm1668, %v1626, 0
  %v1886 = vsel %vm1668, %v1627, 0
  %v1889 = vsel %vm1668, %v1628, 0
  %v1892 = vsel %vm1668, %v1629, 0
  %v1895 = vsel %vm1668, %v1630, 0
  %v1898 = vsel %vm1668, %v1631, 0
  %v1901 = vsel %vm1668, %v1632, 0
  %v1904 = vsel %vm1668, %v1633, 0
  %v1907 = vsel %vm1668, %v1634, 0
  %v1910 = vsel %vm1668, %v1635, 0
  %v1913 = vsel %vm1668, %v1636, 0
  %v1916 = vsel %vm1668, %v1637, 0
  %v1919 = vsel %vm1668, %v1638, 0
  %v1922 = vsel %vm1668, %v1639, 0
  %v1925 = vsel %vm1668, %v1640, 0
  %v1928 = vsel %vm1668, %v1641, 0
  %v1931 = vsel %vm1668, %v1642, 0
  %v1934 = vsel %vm1668, %v1643, 0
  %v1937 = vsel %vm1668, %v1644, 0
  %v1940 = vsel %vm1668, %v1645, 0
  %v1943 = vsel %vm1668, %v1646, 0
  %v1946 = vsel %vm1668, %v1647, 0
  %v1949 = vsel %vm1668, %v1648, 0
  %v1952 = vsel %vm1668, %v1649, 0
  %v1955 = vsel %vm1668, %v1650, 0
  %1957 = vmatpush.bf16.msra.mxu0 0
  %1958 = vmatpush.bf16.msra.mxu0 0
  %1959 = vmatpush.bf16.msra.mxu0 0
  %1960 = vmatpush.bf16.msra.mxu0 0
  %1961 = vmatpush.bf16.msra.mxu0 0
  %1962 = vmatpush.bf16.msra.mxu0 0
  %1963 = vmatpush.bf16.msra.mxu0 %v1665
  %1964 = vmatpush.bf16.msra.mxu0 %v1664
  %1965 = vmatmul.bf16.gmra.mxu0 %v1670
  %v1966 = vpop.f32.mrf.mxu0
  %v1967 = vadd.f32 %v1655, %v1966
  %v1968 = vpop.f32.mrf.mxu0
  %v1969 = vadd.f32 %v1655, %v1968
  %1970 = vmatmul.bf16.gmra.mxu0 %v1673
  %v1971 = vpop.f32.mrf.mxu0
  %v1972 = vadd.f32 %v1655, %v1971
  %v1973 = vpop.f32.mrf.mxu0
  %v1974 = vadd.f32 %v1655, %v1973
  %1975 = vmatmul.bf16.gmra.mxu0 %v1676
  %v1976 = vpop.f32.mrf.mxu0
  %v1977 = vadd.f32 %v1655, %v1976
  %v1978 = vpop.f32.mrf.mxu0
  %v1979 = vadd.f32 %v1655, %v1978
  %1980 = vmatmul.bf16.gmra.mxu0 %v1679
  %v1981 = vpop.f32.mrf.mxu0
  %v1982 = vadd.f32 %v1655, %v1981
  %v1983 = vpop.f32.mrf.mxu0
  %v1984 = vadd.f32 %v1655, %v1983
  %1985 = vmatmul.bf16.gmra.mxu0 %v1682
  %v1986 = vpop.f32.mrf.mxu0
  %v1987 = vadd.f32 %v1655, %v1986
  %v1988 = vpop.f32.mrf.mxu0
  %v1989 = vadd.f32 %v1655, %v1988
  %1990 = vmatmul.bf16.gmra.mxu0 %v1685
  %v1991 = vpop.f32.mrf.mxu0
  %v1992 = vadd.f32 %v1655, %v1991
  %v1993 = vpop.f32.mrf.mxu0
  %v1994 = vadd.f32 %v1655, %v1993
  %1995 = vmatmul.bf16.gmra.mxu0 %v1688
  %v1996 = vpop.f32.mrf.mxu0
  %v1997 = vadd.f32 %v1655, %v1996
  %v1998 = vpop.f32.mrf.mxu0
  %v1999 = vadd.f32 %v1655, %v1998
  %2000 = vmatmul.bf16.gmra.mxu0 %v1691
  %v2001 = vpop.f32.mrf.mxu0
  %v2002 = vadd.f32 %v1655, %v2001
  %v2003 = vpop.f32.mrf.mxu0
  %v2004 = vadd.f32 %v1655, %v2003
  %2005 = vmatmul.bf16.gmra.mxu0 %v1694
  %v2006 = vpop.f32.mrf.mxu0
  %v2007 = vadd.f32 %v1655, %v2006
  %v2008 = vpop.f32.mrf.mxu0
  %v2009 = vadd.f32 %v1655, %v2008
  %2010 = vmatmul.bf16.gmra.mxu0 %v1697
  %v2011 = vpop.f32.mrf.mxu0
  %v2012 = vadd.f32 %v1655, %v2011
  %v2013 = vpop.f32.mrf.mxu0
  %v2014 = vadd.f32 %v1655, %v2013
  %2015 = vmatmul.bf16.gmra.mxu0 %v1700
  %v2016 = vpop.f32.mrf.mxu0
  %v2017 = vadd.f32 %v1655, %v2016
  %v2018 = vpop.f32.mrf.mxu0
  %v2019 = vadd.f32 %v1655, %v2018
  %2020 = vmatmul.bf16.gmra.mxu0 %v1703
  %v2021 = vpop.f32.mrf.mxu0
  %v2022 = vadd.f32 %v1655, %v2021
  %v2023 = vpop.f32.mrf.mxu0
  %v2024 = vadd.f32 %v1655, %v2023
  %2025 = vmatmul.bf16.gmra.mxu0 %v1706
  %v2026 = vpop.f32.mrf.mxu0
  %v2027 = vadd.f32 %v1655, %v2026
  %v2028 = vpop.f32.mrf.mxu0
  %v2029 = vadd.f32 %v1655, %v2028
  %2030 = vmatmul.bf16.gmra.mxu0 %v1709
  %v2031 = vpop.f32.mrf.mxu0
  %v2032 = vadd.f32 %v1655, %v2031
  %v2033 = vpop.f32.mrf.mxu0
  %v2034 = vadd.f32 %v1655, %v2033
  %2035 = vmatmul.bf16.gmra.mxu0 %v1712
  %v2036 = vpop.f32.mrf.mxu0
  %v2037 = vadd.f32 %v1655, %v2036
  %v2038 = vpop.f32.mrf.mxu0
  %v2039 = vadd.f32 %v1655, %v2038
  %2040 = vmatmul.bf16.gmra.mxu0 %v1715
  %v2041 = vpop.f32.mrf.mxu0
  %v2042 = vadd.f32 %v1655, %v2041
  %v2043 = vpop.f32.mrf.mxu0
  %v2044 = vadd.f32 %v1655, %v2043
  %2045 = vmatmul.bf16.gmra.mxu0 %v1718
  %v2046 = vpop.f32.mrf.mxu0
  %v2047 = vadd.f32 %v1655, %v2046
  %v2048 = vpop.f32.mrf.mxu0
  %v2049 = vadd.f32 %v1655, %v2048
  %2050 = vmatmul.bf16.gmra.mxu0 %v1721
  %v2051 = vpop.f32.mrf.mxu0
  %v2052 = vadd.f32 %v1655, %v2051
  %v2053 = vpop.f32.mrf.mxu0
  %v2054 = vadd.f32 %v1655, %v2053
  %2055 = vmatmul.bf16.gmra.mxu0 %v1724
  %v2056 = vpop.f32.mrf.mxu0
  %v2057 = vadd.f32 %v1655, %v2056
  %v2058 = vpop.f32.mrf.mxu0
  %v2059 = vadd.f32 %v1655, %v2058
  %2060 = vmatmul.bf16.gmra.mxu0 %v1727
  %v2061 = vpop.f32.mrf.mxu0
  %v2062 = vadd.f32 %v1655, %v2061
  %v2063 = vpop.f32.mrf.mxu0
  %v2064 = vadd.f32 %v1655, %v2063
  %2065 = vmatmul.bf16.gmra.mxu0 %v1730
  %v2066 = vpop.f32.mrf.mxu0
  %v2067 = vadd.f32 %v1655, %v2066
  %v2068 = vpop.f32.mrf.mxu0
  %v2069 = vadd.f32 %v1655, %v2068
  %2070 = vmatmul.bf16.gmra.mxu0 %v1733
  %v2071 = vpop.f32.mrf.mxu0
  %v2072 = vadd.f32 %v1655, %v2071
  %v2073 = vpop.f32.mrf.mxu0
  %v2074 = vadd.f32 %v1655, %v2073
  %2075 = vmatmul.bf16.gmra.mxu0 %v1736
  %v2076 = vpop.f32.mrf.mxu0
  %v2077 = vadd.f32 %v1655, %v2076
  %v2078 = vpop.f32.mrf.mxu0
  %v2079 = vadd.f32 %v1655, %v2078
  %2080 = vmatmul.bf16.gmra.mxu0 %v1739
  %v2081 = vpop.f32.mrf.mxu0
  %v2082 = vadd.f32 %v1655, %v2081
  %v2083 = vpop.f32.mrf.mxu0
  %v2084 = vadd.f32 %v1655, %v2083
  %2085 = vmatmul.bf16.gmra.mxu0 %v1742
  %v2086 = vpop.f32.mrf.mxu0
  %v2087 = vadd.f32 %v1655, %v2086
  %v2088 = vpop.f32.mrf.mxu0
  %v2089 = vadd.f32 %v1655, %v2088
  %2090 = vmatmul.bf16.gmra.mxu0 %v1745
  %v2091 = vpop.f32.mrf.mxu0
  %v2092 = vadd.f32 %v1655, %v2091
  %v2093 = vpop.f32.mrf.mxu0
  %v2094 = vadd.f32 %v1655, %v2093
  %2095 = vmatmul.bf16.gmra.mxu0 %v1748
  %v2096 = vpop.f32.mrf.mxu0
  %v2097 = vadd.f32 %v1655, %v2096
  %v2098 = vpop.f32.mrf.mxu0
  %v2099 = vadd.f32 %v1655, %v2098
  %2100 = vmatmul.bf16.gmra.mxu0 %v1751
  %v2101 = vpop.f32.mrf.mxu0
  %v2102 = vadd.f32 %v1655, %v2101
  %v2103 = vpop.f32.mrf.mxu0
  %v2104 = vadd.f32 %v1655, %v2103
  %2105 = vmatmul.bf16.gmra.mxu0 %v1754
  %v2106 = vpop.f32.mrf.mxu0
  %v2107 = vadd.f32 %v1655, %v2106
  %v2108 = vpop.f32.mrf.mxu0
  %v2109 = vadd.f32 %v1655, %v2108
  %2110 = vmatmul.bf16.gmra.mxu0 %v1757
  %v2111 = vpop.f32.mrf.mxu0
  %v2112 = vadd.f32 %v1655, %v2111
  %v2113 = vpop.f32.mrf.mxu0
  %v2114 = vadd.f32 %v1655, %v2113
  %2115 = vmatmul.bf16.gmra.mxu0 %v1760
  %v2116 = vpop.f32.mrf.mxu0
  %v2117 = vadd.f32 %v1655, %v2116
  %v2118 = vpop.f32.mrf.mxu0
  %v2119 = vadd.f32 %v1655, %v2118
  %2120 = vmatmul.bf16.gmra.mxu0 %v1763
  %v2121 = vpop.f32.mrf.mxu0
  %v2122 = vadd.f32 %v1655, %v2121
  %v2123 = vpop.f32.mrf.mxu0
  %v2124 = vadd.f32 %v1655, %v2123
  %2125 = vmatmul.bf16.gmra.mxu0 %v1766
  %v2126 = vpop.f32.mrf.mxu0
  %v2127 = vadd.f32 %v1655, %v2126
  %v2128 = vpop.f32.mrf.mxu0
  %v2129 = vadd.f32 %v1655, %v2128
  %2130 = vmatmul.bf16.gmra.mxu0 %v1769
  %v2131 = vpop.f32.mrf.mxu0
  %v2132 = vadd.f32 %v1655, %v2131
  %v2133 = vpop.f32.mrf.mxu0
  %v2134 = vadd.f32 %v1655, %v2133
  %2135 = vmatmul.bf16.gmra.mxu0 %v1772
  %v2136 = vpop.f32.mrf.mxu0
  %v2137 = vadd.f32 %v1655, %v2136
  %v2138 = vpop.f32.mrf.mxu0
  %v2139 = vadd.f32 %v1655, %v2138
  %2140 = vmatmul.bf16.gmra.mxu0 %v1775
  %v2141 = vpop.f32.mrf.mxu0
  %v2142 = vadd.f32 %v1655, %v2141
  %v2143 = vpop.f32.mrf.mxu0
  %v2144 = vadd.f32 %v1655, %v2143
  %2145 = vmatmul.bf16.gmra.mxu0 %v1778
  %v2146 = vpop.f32.mrf.mxu0
  %v2147 = vadd.f32 %v1655, %v2146
  %v2148 = vpop.f32.mrf.mxu0
  %v2149 = vadd.f32 %v1655, %v2148
  %2150 = vmatmul.bf16.gmra.mxu0 %v1781
  %v2151 = vpop.f32.mrf.mxu0
  %v2152 = vadd.f32 %v1655, %v2151
  %v2153 = vpop.f32.mrf.mxu0
  %v2154 = vadd.f32 %v1655, %v2153
  %2155 = vmatmul.bf16.gmra.mxu0 %v1784
  %v2156 = vpop.f32.mrf.mxu0
  %v2157 = vadd.f32 %v1655, %v2156
  %v2158 = vpop.f32.mrf.mxu0
  %v2159 = vadd.f32 %v1655, %v2158
  %2160 = vmatmul.bf16.gmra.mxu0 %v1787
  %v2161 = vpop.f32.mrf.mxu0
  %v2162 = vadd.f32 %v1655, %v2161
  %v2163 = vpop.f32.mrf.mxu0
  %v2164 = vadd.f32 %v1655, %v2163
  %2165 = vmatmul.bf16.gmra.mxu0 %v1790
  %v2166 = vpop.f32.mrf.mxu0
  %v2167 = vadd.f32 %v1655, %v2166
  %v2168 = vpop.f32.mrf.mxu0
  %v2169 = vadd.f32 %v1655, %v2168
  %2170 = vmatmul.bf16.gmra.mxu0 %v1793
  %v2171 = vpop.f32.mrf.mxu0
  %v2172 = vadd.f32 %v1655, %v2171
  %v2173 = vpop.f32.mrf.mxu0
  %v2174 = vadd.f32 %v1655, %v2173
  %2175 = vmatmul.bf16.gmra.mxu0 %v1796
  %v2176 = vpop.f32.mrf.mxu0
  %v2177 = vadd.f32 %v1655, %v2176
  %v2178 = vpop.f32.mrf.mxu0
  %v2179 = vadd.f32 %v1655, %v2178
  %2180 = vmatmul.bf16.gmra.mxu0 %v1799
  %v2181 = vpop.f32.mrf.mxu0
  %v2182 = vadd.f32 %v1655, %v2181
  %v2183 = vpop.f32.mrf.mxu0
  %v2184 = vadd.f32 %v1655, %v2183
  %2185 = vmatmul.bf16.gmra.mxu0 %v1802
  %v2186 = vpop.f32.mrf.mxu0
  %v2187 = vadd.f32 %v1655, %v2186
  %v2188 = vpop.f32.mrf.mxu0
  %v2189 = vadd.f32 %v1655, %v2188
  %2190 = vmatmul.bf16.gmra.mxu0 %v1805
  %v2191 = vpop.f32.mrf.mxu0
  %v2192 = vadd.f32 %v1655, %v2191
  %v2193 = vpop.f32.mrf.mxu0
  %v2194 = vadd.f32 %v1655, %v2193
  %2195 = vmatmul.bf16.gmra.mxu0 %v1808
  %v2196 = vpop.f32.mrf.mxu0
  %v2197 = vadd.f32 %v1655, %v2196
  %v2198 = vpop.f32.mrf.mxu0
  %v2199 = vadd.f32 %v1655, %v2198
  %2200 = vmatmul.bf16.gmra.mxu0 %v1811
  %v2201 = vpop.f32.mrf.mxu0
  %v2202 = vadd.f32 %v1655, %v2201
  %v2203 = vpop.f32.mrf.mxu0
  %v2204 = vadd.f32 %v1655, %v2203
  %2205 = vmatmul.bf16.gmra.mxu0 %v1814
  %v2206 = vpop.f32.mrf.mxu0
  %v2207 = vadd.f32 %v1655, %v2206
  %v2208 = vpop.f32.mrf.mxu0
  %v2209 = vadd.f32 %v1655, %v2208
  %2210 = vmatmul.bf16.gmra.mxu0 %v1817
  %v2211 = vpop.f32.mrf.mxu0
  %v2212 = vadd.f32 %v1655, %v2211
  %v2213 = vpop.f32.mrf.mxu0
  %v2214 = vadd.f32 %v1655, %v2213
  %2215 = vmatmul.bf16.gmra.mxu0 %v1820
  %v2216 = vpop.f32.mrf.mxu0
  %v2217 = vadd.f32 %v1655, %v2216
  %v2218 = vpop.f32.mrf.mxu0
  %v2219 = vadd.f32 %v1655, %v2218
  %2220 = vmatmul.bf16.gmra.mxu0 %v1823
  %v2221 = vpop.f32.mrf.mxu0
  %v2222 = vadd.f32 %v1655, %v2221
  %v2223 = vpop.f32.mrf.mxu0
  %v2224 = vadd.f32 %v1655, %v2223
  %2225 = vmatmul.bf16.gmra.mxu0 %v1826
  %v2226 = vpop.f32.mrf.mxu0
  %v2227 = vadd.f32 %v1655, %v2226
  %v2228 = vpop.f32.mrf.mxu0
  %v2229 = vadd.f32 %v1655, %v2228
  %2230 = vmatmul.bf16.gmra.mxu0 %v1829
  %v2231 = vpop.f32.mrf.mxu0
  %v2232 = vadd.f32 %v1655, %v2231
  %v2233 = vpop.f32.mrf.mxu0
  %v2234 = vadd.f32 %v1655, %v2233
  %2235 = vmatmul.bf16.gmra.mxu0 %v1832
  %v2236 = vpop.f32.mrf.mxu0
  %v2237 = vadd.f32 %v1655, %v2236
  %v2238 = vpop.f32.mrf.mxu0
  %v2239 = vadd.f32 %v1655, %v2238
  %2240 = vmatmul.bf16.gmra.mxu0 %v1835
  %v2241 = vpop.f32.mrf.mxu0
  %v2242 = vadd.f32 %v1655, %v2241
  %v2243 = vpop.f32.mrf.mxu0
  %v2244 = vadd.f32 %v1655, %v2243
  %2245 = vmatmul.bf16.gmra.mxu0 %v1838
  %v2246 = vpop.f32.mrf.mxu0
  %v2247 = vadd.f32 %v1655, %v2246
  %v2248 = vpop.f32.mrf.mxu0
  %v2249 = vadd.f32 %v1655, %v2248
  %2250 = vmatmul.bf16.gmra.mxu0 %v1841
  %v2251 = vpop.f32.mrf.mxu0
  %v2252 = vadd.f32 %v1655, %v2251
  %v2253 = vpop.f32.mrf.mxu0
  %v2254 = vadd.f32 %v1655, %v2253
  %2255 = vmatmul.bf16.gmra.mxu0 %v1844
  %v2256 = vpop.f32.mrf.mxu0
  %v2257 = vadd.f32 %v1655, %v2256
  %v2258 = vpop.f32.mrf.mxu0
  %v2259 = vadd.f32 %v1655, %v2258
  %2260 = vmatmul.bf16.gmra.mxu0 %v1847
  %v2261 = vpop.f32.mrf.mxu0
  %v2262 = vadd.f32 %v1655, %v2261
  %v2263 = vpop.f32.mrf.mxu0
  %v2264 = vadd.f32 %v1655, %v2263
  %2265 = vmatmul.bf16.gmra.mxu0 %v1850
  %v2266 = vpop.f32.mrf.mxu0
  %v2267 = vadd.f32 %v1655, %v2266
  %v2268 = vpop.f32.mrf.mxu0
  %v2269 = vadd.f32 %v1655, %v2268
  %2270 = vmatmul.bf16.gmra.mxu0 %v1853
  %v2271 = vpop.f32.mrf.mxu0
  %v2272 = vadd.f32 %v1655, %v2271
  %v2273 = vpop.f32.mrf.mxu0
  %v2274 = vadd.f32 %v1655, %v2273
  %2275 = vmatmul.bf16.gmra.mxu0 %v1856
  %v2276 = vpop.f32.mrf.mxu0
  %v2277 = vadd.f32 %v1655, %v2276
  %v2278 = vpop.f32.mrf.mxu0
  %v2279 = vadd.f32 %v1655, %v2278
  %2280 = vmatmul.bf16.gmra.mxu0 %v1859
  %v2281 = vpop.f32.mrf.mxu0
  %v2282 = vadd.f32 %v1655, %v2281
  %v2283 = vpop.f32.mrf.mxu0
  %v2284 = vadd.f32 %v1655, %v2283
  %2285 = vmatmul.bf16.gmra.mxu0 %v1862
  %v2286 = vpop.f32.mrf.mxu0
  %v2287 = vadd.f32 %v1655, %v2286
  %v2288 = vpop.f32.mrf.mxu0
  %v2289 = vadd.f32 %v1655, %v2288
  %2290 = vmatmul.bf16.gmra.mxu0 %v1865
  %v2291 = vpop.f32.mrf.mxu0
  %v2292 = vadd.f32 %v1655, %v2291
  %v2293 = vpop.f32.mrf.mxu0
  %v2294 = vadd.f32 %v1655, %v2293
  %2295 = vmatmul.bf16.gmra.mxu0 %v1868
  %v2296 = vpop.f32.mrf.mxu0
  %v2297 = vadd.f32 %v1655, %v2296
  %v2298 = vpop.f32.mrf.mxu0
  %v2299 = vadd.f32 %v1655, %v2298
  %2300 = vmatmul.bf16.gmra.mxu0 %v1871
  %v2301 = vpop.f32.mrf.mxu0
  %v2302 = vadd.f32 %v1655, %v2301
  %v2303 = vpop.f32.mrf.mxu0
  %v2304 = vadd.f32 %v1655, %v2303
  %2305 = vmatmul.bf16.gmra.mxu0 %v1874
  %v2306 = vpop.f32.mrf.mxu0
  %v2307 = vadd.f32 %v1655, %v2306
  %v2308 = vpop.f32.mrf.mxu0
  %v2309 = vadd.f32 %v1655, %v2308
  %2310 = vmatmul.bf16.gmra.mxu0 %v1877
  %v2311 = vpop.f32.mrf.mxu0
  %v2312 = vadd.f32 %v1655, %v2311
  %v2313 = vpop.f32.mrf.mxu0
  %v2314 = vadd.f32 %v1655, %v2313
  %2315 = vmatmul.bf16.gmra.mxu0 %v1880
  %v2316 = vpop.f32.mrf.mxu0
  %v2317 = vadd.f32 %v1655, %v2316
  %v2318 = vpop.f32.mrf.mxu0
  %v2319 = vadd.f32 %v1655, %v2318
  %2320 = vmatmul.bf16.gmra.mxu0 %v1883
  %v2321 = vpop.f32.mrf.mxu0
  %v2322 = vadd.f32 %v1655, %v2321
  %v2323 = vpop.f32.mrf.mxu0
  %v2324 = vadd.f32 %v1655, %v2323
  %2325 = vmatmul.bf16.gmra.mxu0 %v1886
  %v2326 = vpop.f32.mrf.mxu0
  %v2327 = vadd.f32 %v1655, %v2326
  %v2328 = vpop.f32.mrf.mxu0
  %v2329 = vadd.f32 %v1655, %v2328
  %2330 = vmatmul.bf16.gmra.mxu0 %v1889
  %v2331 = vpop.f32.mrf.mxu0
  %v2332 = vadd.f32 %v1655, %v2331
  %v2333 = vpop.f32.mrf.mxu0
  %v2334 = vadd.f32 %v1655, %v2333
  %2335 = vmatmul.bf16.gmra.mxu0 %v1892
  %v2336 = vpop.f32.mrf.mxu0
  %v2337 = vadd.f32 %v1655, %v2336
  %v2338 = vpop.f32.mrf.mxu0
  %v2339 = vadd.f32 %v1655, %v2338
  %2340 = vmatmul.bf16.gmra.mxu0 %v1895
  %v2341 = vpop.f32.mrf.mxu0
  %v2342 = vadd.f32 %v1655, %v2341
  %v2343 = vpop.f32.mrf.mxu0
  %v2344 = vadd.f32 %v1655, %v2343
  %2345 = vmatmul.bf16.gmra.mxu0 %v1898
  %v2346 = vpop.f32.mrf.mxu0
  %v2347 = vadd.f32 %v1655, %v2346
  %v2348 = vpop.f32.mrf.mxu0
  %v2349 = vadd.f32 %v1655, %v2348
  %2350 = vmatmul.bf16.gmra.mxu0 %v1901
  %v2351 = vpop.f32.mrf.mxu0
  %v2352 = vadd.f32 %v1655, %v2351
  %v2353 = vpop.f32.mrf.mxu0
  %v2354 = vadd.f32 %v1655, %v2353
  %2355 = vmatmul.bf16.gmra.mxu0 %v1904
  %v2356 = vpop.f32.mrf.mxu0
  %v2357 = vadd.f32 %v1655, %v2356
  %v2358 = vpop.f32.mrf.mxu0
  %v2359 = vadd.f32 %v1655, %v2358
  %2360 = vmatmul.bf16.gmra.mxu0 %v1907
  %v2361 = vpop.f32.mrf.mxu0
  %v2362 = vadd.f32 %v1655, %v2361
  %v2363 = vpop.f32.mrf.mxu0
  %v2364 = vadd.f32 %v1655, %v2363
  %2365 = vmatmul.bf16.gmra.mxu0 %v1910
  %v2366 = vpop.f32.mrf.mxu0
  %v2367 = vadd.f32 %v1655, %v2366
  %v2368 = vpop.f32.mrf.mxu0
  %v2369 = vadd.f32 %v1655, %v2368
  %2370 = vmatmul.bf16.gmra.mxu0 %v1913
  %v2371 = vpop.f32.mrf.mxu0
  %v2372 = vadd.f32 %v1655, %v2371
  %v2373 = vpop.f32.mrf.mxu0
  %v2374 = vadd.f32 %v1655, %v2373
  %2375 = vmatmul.bf16.gmra.mxu0 %v1916
  %v2376 = vpop.f32.mrf.mxu0
  %v2377 = vadd.f32 %v1655, %v2376
  %v2378 = vpop.f32.mrf.mxu0
  %v2379 = vadd.f32 %v1655, %v2378
  %2380 = vmatmul.bf16.gmra.mxu0 %v1919
  %v2381 = vpop.f32.mrf.mxu0
  %v2382 = vadd.f32 %v1655, %v2381
  %v2383 = vpop.f32.mrf.mxu0
  %v2384 = vadd.f32 %v1655, %v2383
  %2385 = vmatmul.bf16.gmra.mxu0 %v1922
  %v2386 = vpop.f32.mrf.mxu0
  %v2387 = vadd.f32 %v1655, %v2386
  %v2388 = vpop.f32.mrf.mxu0
  %v2389 = vadd.f32 %v1655, %v2388
  %2390 = vmatmul.bf16.gmra.mxu0 %v1925
  %v2391 = vpop.f32.mrf.mxu0
  %v2392 = vadd.f32 %v1655, %v2391
  %v2393 = vpop.f32.mrf.mxu0
  %v2394 = vadd.f32 %v1655, %v2393
  %2395 = vmatmul.bf16.gmra.mxu0 %v1928
  %v2396 = vpop.f32.mrf.mxu0
  %v2397 = vadd.f32 %v1655, %v2396
  %v2398 = vpop.f32.mrf.mxu0
  %v2399 = vadd.f32 %v1655, %v2398
  %2400 = vmatmul.bf16.gmra.mxu0 %v1931
  %v2401 = vpop.f32.mrf.mxu0
  %v2402 = vadd.f32 %v1655, %v2401
  %v2403 = vpop.f32.mrf.mxu0
  %v2404 = vadd.f32 %v1655, %v2403
  %2405 = vmatmul.bf16.gmra.mxu0 %v1934
  %v2406 = vpop.f32.mrf.mxu0
  %v2407 = vadd.f32 %v1655, %v2406
  %v2408 = vpop.f32.mrf.mxu0
  %v2409 = vadd.f32 %v1655, %v2408
  %2410 = vmatmul.bf16.gmra.mxu0 %v1937
  %v2411 = vpop.f32.mrf.mxu0
  %v2412 = vadd.f32 %v1655, %v2411
  %v2413 = vpop.f32.mrf.mxu0
  %v2414 = vadd.f32 %v1655, %v2413
  %2415 = vmatmul.bf16.gmra.mxu0 %v1940
  %v2416 = vpop.f32.mrf.mxu0
  %v2417 = vadd.f32 %v1655, %v2416
  %v2418 = vpop.f32.mrf.mxu0
  %v2419 = vadd.f32 %v1655, %v2418
  %2420 = vmatmul.bf16.gmra.mxu0 %v1943
  %v2421 = vpop.f32.mrf.mxu0
  %v2422 = vadd.f32 %v1655, %v2421
  %v2423 = vpop.f32.mrf.mxu0
  %v2424 = vadd.f32 %v1655, %v2423
  %2425 = vmatmul.bf16.gmra.mxu0 %v1946
  %v2426 = vpop.f32.mrf.mxu0
  %v2427 = vadd.f32 %v1655, %v2426
  %v2428 = vpop.f32.mrf.mxu0
  %v2429 = vadd.f32 %v1655, %v2428
  %2430 = vmatmul.bf16.gmra.mxu0 %v1949
  %v2431 = vpop.f32.mrf.mxu0
  %v2432 = vadd.f32 %v1655, %v2431
  %v2433 = vpop.f32.mrf.mxu0
  %v2434 = vadd.f32 %v1655, %v2433
  %2435 = vmatmul.bf16.gmra.mxu0 %v1952
  %v2436 = vpop.f32.mrf.mxu0
  %v2437 = vadd.f32 %v1655, %v2436
  %v2438 = vpop.f32.mrf.mxu0
  %v2439 = vadd.f32 %v1655, %v2438
  %2440 = vmatmul.bf16.gmra.mxu0 %v1955
  %v2441 = vpop.f32.mrf.mxu0
  %v2442 = vadd.f32 %v1655, %v2441
  %v2443 = vpop.f32.mrf.mxu0
  %v2444 = vadd.f32 %v1655, %v2443
  %2445 = vdwg.mxu0
  %v2446 = vtanh.pop %v1967
  %v2447 = vtanh.pop %v1969
  %v2448 = vtanh.pop %v1972
  %v2449 = vtanh.pop %v1974
  %v2450 = vtanh.pop %v1977
  %v2451 = vtanh.pop %v1979
  %v2452 = vtanh.pop %v1982
  %v2453 = vtanh.pop %v1984
  %v2454 = vtanh.pop %v1987
  %v2455 = vtanh.pop %v1989
  %v2456 = vtanh.pop %v1992
  %v2457 = vtanh.pop %v1994
  %v2458 = vtanh.pop %v1997
  %v2459 = vtanh.pop %v1999
  %v2460 = vtanh.pop %v2002
  %v2461 = vtanh.pop %v2004
  %v2462 = vtanh.pop %v2007
  %v2463 = vtanh.pop %v2009
  %v2464 = vtanh.pop %v2012
  %v2465 = vtanh.pop %v2014
  %v2466 = vtanh.pop %v2017
  %v2467 = vtanh.pop %v2019
  %v2468 = vtanh.pop %v2022
  %v2469 = vtanh.pop %v2024
  %v2470 = vtanh.pop %v2027
  %v2471 = vtanh.pop %v2029
  %v2472 = vtanh.pop %v2032
  %v2473 = vtanh.pop %v2034
  %v2474 = vtanh.pop %v2037
  %v2475 = vtanh.pop %v2039
  %v2476 = vtanh.pop %v2042
  %v2477 = vtanh.pop %v2044
  %v2478 = vtanh.pop %v2047
  %v2479 = vtanh.pop %v2049
  %v2480 = vtanh.pop %v2052
  %v2481 = vtanh.pop %v2054
  %v2482 = vtanh.pop %v2057
  %v2483 = vtanh.pop %v2059
  %v2484 = vtanh.pop %v2062
  %v2485 = vtanh.pop %v2064
  %v2486 = vtanh.pop %v2067
  %v2487 = vtanh.pop %v2069
  %v2488 = vtanh.pop %v2072
  %v2489 = vtanh.pop %v2074
  %v2490 = vtanh.pop %v2077
  %v2491 = vtanh.pop %v2079
  %v2492 = vtanh.pop %v2082
  %v2493 = vtanh.pop %v2084
  %v2494 = vtanh.pop %v2087
  %v2495 = vtanh.pop %v2089
  %v2496 = vtanh.pop %v2092
  %v2497 = vtanh.pop %v2094
  %v2498 = vtanh.pop %v2097
  %v2499 = vtanh.pop %v2099
  %v2500 = vtanh.pop %v2102
  %v2501 = vtanh.pop %v2104
  %v2502 = vtanh.pop %v2107
  %v2503 = vtanh.pop %v2109
  %v2504 = vtanh.pop %v2112
  %v2505 = vtanh.pop %v2114
  %v2506 = vtanh.pop %v2117
  %v2507 = vtanh.pop %v2119
  %v2508 = vtanh.pop %v2122
  %v2509 = vtanh.pop %v2124
  %v2510 = vtanh.pop %v2127
  %v2511 = vtanh.pop %v2129
  %v2512 = vtanh.pop %v2132
  %v2513 = vtanh.pop %v2134
  %v2514 = vtanh.pop %v2137
  %v2515 = vtanh.pop %v2139
  %v2516 = vtanh.pop %v2142
  %v2517 = vtanh.pop %v2144
  %v2518 = vtanh.pop %v2147
  %v2519 = vtanh.pop %v2149
  %v2520 = vtanh.pop %v2152
  %v2521 = vtanh.pop %v2154
  %v2522 = vtanh.pop %v2157
  %v2523 = vtanh.pop %v2159
  %v2524 = vtanh.pop %v2162
  %v2525 = vtanh.pop %v2164
  %v2526 = vtanh.pop %v2167
  %v2527 = vtanh.pop %v2169
  %v2528 = vtanh.pop %v2172
  %v2529 = vtanh.pop %v2174
  %v2530 = vtanh.pop %v2177
  %v2531 = vtanh.pop %v2179
  %v2532 = vtanh.pop %v2182
  %v2533 = vtanh.pop %v2184
  %v2534 = vtanh.pop %v2187
  %v2535 = vtanh.pop %v2189
  %v2536 = vtanh.pop %v2192
  %v2537 = vtanh.pop %v2194
  %v2538 = vtanh.pop %v2197
  %v2539 = vtanh.pop %v2199
  %v2540 = vtanh.pop %v2202
  %v2541 = vtanh.pop %v2204
  %v2542 = vtanh.pop %v2207
  %v2543 = vtanh.pop %v2209
  %v2544 = vtanh.pop %v2212
  %v2545 = vtanh.pop %v2214
  %v2546 = vtanh.pop %v2217
  %v2547 = vtanh.pop %v2219
  %v2548 = vtanh.pop %v2222
  %v2549 = vtanh.pop %v2224
  %v2550 = vtanh.pop %v2227
  %v2551 = vtanh.pop %v2229
  %v2552 = vtanh.pop %v2232
  %v2553 = vtanh.pop %v2234
  %v2554 = vtanh.pop %v2237
  %v2555 = vtanh.pop %v2239
  %v2556 = vtanh.pop %v2242
  %v2557 = vtanh.pop %v2244
  %v2558 = vtanh.pop %v2247
  %v2559 = vtanh.pop %v2249
  %v2560 = vtanh.pop %v2252
  %v2561 = vtanh.pop %v2254
  %v2562 = vtanh.pop %v2257
  %v2563 = vtanh.pop %v2259
  %v2564 = vtanh.pop %v2262
  %v2565 = vtanh.pop %v2264
  %v2566 = vtanh.pop %v2267
  %v2567 = vtanh.pop %v2269
  %v2568 = vtanh.pop %v2272
  %v2569 = vtanh.pop %v2274
  %v2570 = vtanh.pop %v2277
  %v2571 = vtanh.pop %v2279
  %v2572 = vtanh.pop %v2282
  %v2573 = vtanh.pop %v2284
  %v2574 = vtanh.pop %v2287
  %v2575 = vtanh.pop %v2289
  %v2576 = vtanh.pop %v2292
  %v2577 = vtanh.pop %v2294
  %v2578 = vtanh.pop %v2297
  %v2579 = vtanh.pop %v2299
  %v2580 = vtanh.pop %v2302
  %v2581 = vtanh.pop %v2304
  %v2582 = vtanh.pop %v2307
  %v2583 = vtanh.pop %v2309
  %v2584 = vtanh.pop %v2312
  %v2585 = vtanh.pop %v2314
  %v2586 = vtanh.pop %v2317
  %v2587 = vtanh.pop %v2319
  %v2588 = vtanh.pop %v2322
  %v2589 = vtanh.pop %v2324
  %v2590 = vtanh.pop %v2327
  %v2591 = vtanh.pop %v2329
  %v2592 = vtanh.pop %v2332
  %v2593 = vtanh.pop %v2334
  %v2594 = vtanh.pop %v2337
  %v2595 = vtanh.pop %v2339
  %v2596 = vtanh.pop %v2342
  %v2597 = vtanh.pop %v2344
  %v2598 = vtanh.pop %v2347
  %v2599 = vtanh.pop %v2349
  %v2600 = vtanh.pop %v2352
  %v2601 = vtanh.pop %v2354
  %v2602 = vtanh.pop %v2357
  %v2603 = vtanh.pop %v2359
  %v2604 = vtanh.pop %v2362
  %v2605 = vtanh.pop %v2364
  %v2606 = vtanh.pop %v2367
  %v2607 = vtanh.pop %v2369
  %v2608 = vtanh.pop %v2372
  %v2609 = vtanh.pop %v2374
  %v2610 = vtanh.pop %v2377
  %v2611 = vtanh.pop %v2379
  %v2612 = vtanh.pop %v2382
  %v2613 = vtanh.pop %v2384
  %v2614 = vtanh.pop %v2387
  %v2615 = vtanh.pop %v2389
  %v2616 = vtanh.pop %v2392
  %v2617 = vtanh.pop %v2394
  %v2618 = vtanh.pop %v2397
  %v2619 = vtanh.pop %v2399
  %v2620 = vtanh.pop %v2402
  %v2621 = vtanh.pop %v2404
  %v2622 = vtanh.pop %v2407
  %v2623 = vtanh.pop %v2409
  %v2624 = vtanh.pop %v2412
  %v2625 = vtanh.pop %v2414
  %v2626 = vtanh.pop %v2417
  %v2627 = vtanh.pop %v2419
  %v2628 = vtanh.pop %v2422
  %v2629 = vtanh.pop %v2424
  %v2630 = vtanh.pop %v2427
  %v2631 = vtanh.pop %v2429
  %v2632 = vtanh.pop %v2432
  %v2633 = vtanh.pop %v2434
  %v2634 = vtanh.pop %v2437
  %v2635 = vtanh.pop %v2439
  %v2636 = vtanh.pop %v2442
  %v2637 = vtanh.pop %v2444
  %v2638 = vperm.slane %v39, 2
  %v2639 = vmul.f32 %v2446, %v2638
  %v2640 = vmul.f32 %v2447, %v2638
  %v2641 = vmul.f32 %v2448, %v2638
  %v2642 = vmul.f32 %v2449, %v2638
  %v2643 = vmul.f32 %v2450, %v2638
  %v2644 = vmul.f32 %v2451, %v2638
  %v2645 = vmul.f32 %v2452, %v2638
  %v2646 = vmul.f32 %v2453, %v2638
  %v2647 = vmul.f32 %v2454, %v2638
  %v2648 = vmul.f32 %v2455, %v2638
  %v2649 = vmul.f32 %v2456, %v2638
  %v2650 = vmul.f32 %v2457, %v2638
  %v2651 = vmul.f32 %v2458, %v2638
  %v2652 = vmul.f32 %v2459, %v2638
  %v2653 = vmul.f32 %v2460, %v2638
  %v2654 = vmul.f32 %v2461, %v2638
  %v2655 = vmul.f32 %v2462, %v2638
  %v2656 = vmul.f32 %v2463, %v2638
  %v2657 = vmul.f32 %v2464, %v2638
  %v2658 = vmul.f32 %v2465, %v2638
  %v2659 = vmul.f32 %v2466, %v2638
  %v2660 = vmul.f32 %v2467, %v2638
  %v2661 = vmul.f32 %v2468, %v2638
  %v2662 = vmul.f32 %v2469, %v2638
  %v2663 = vmul.f32 %v2470, %v2638
  %v2664 = vmul.f32 %v2471, %v2638
  %v2665 = vmul.f32 %v2472, %v2638
  %v2666 = vmul.f32 %v2473, %v2638
  %v2667 = vmul.f32 %v2474, %v2638
  %v2668 = vmul.f32 %v2475, %v2638
  %v2669 = vmul.f32 %v2476, %v2638
  %v2670 = vmul.f32 %v2477, %v2638
  %v2671 = vmul.f32 %v2478, %v2638
  %v2672 = vmul.f32 %v2479, %v2638
  %v2673 = vmul.f32 %v2480, %v2638
  %v2674 = vmul.f32 %v2481, %v2638
  %v2675 = vmul.f32 %v2482, %v2638
  %v2676 = vmul.f32 %v2483, %v2638
  %v2677 = vmul.f32 %v2484, %v2638
  %v2678 = vmul.f32 %v2485, %v2638
  %v2679 = vmul.f32 %v2486, %v2638
  %v2680 = vmul.f32 %v2487, %v2638
  %v2681 = vmul.f32 %v2488, %v2638
  %v2682 = vmul.f32 %v2489, %v2638
  %v2683 = vmul.f32 %v2490, %v2638
  %v2684 = vmul.f32 %v2491, %v2638
  %v2685 = vmul.f32 %v2492, %v2638
  %v2686 = vmul.f32 %v2493, %v2638
  %v2687 = vmul.f32 %v2494, %v2638
  %v2688 = vmul.f32 %v2495, %v2638
  %v2689 = vmul.f32 %v2496, %v2638
  %v2690 = vmul.f32 %v2497, %v2638
  %v2691 = vmul.f32 %v2498, %v2638
  %v2692 = vmul.f32 %v2499, %v2638
  %v2693 = vmul.f32 %v2500, %v2638
  %v2694 = vmul.f32 %v2501, %v2638
  %v2695 = vmul.f32 %v2502, %v2638
  %v2696 = vmul.f32 %v2503, %v2638
  %v2697 = vmul.f32 %v2504, %v2638
  %v2698 = vmul.f32 %v2505, %v2638
  %v2699 = vmul.f32 %v2506, %v2638
  %v2700 = vmul.f32 %v2507, %v2638
  %v2701 = vmul.f32 %v2508, %v2638
  %v2702 = vmul.f32 %v2509, %v2638
  %v2703 = vmul.f32 %v2510, %v2638
  %v2704 = vmul.f32 %v2511, %v2638
  %v2705 = vmul.f32 %v2512, %v2638
  %v2706 = vmul.f32 %v2513, %v2638
  %v2707 = vmul.f32 %v2514, %v2638
  %v2708 = vmul.f32 %v2515, %v2638
  %v2709 = vmul.f32 %v2516, %v2638
  %v2710 = vmul.f32 %v2517, %v2638
  %v2711 = vmul.f32 %v2518, %v2638
  %v2712 = vmul.f32 %v2519, %v2638
  %v2713 = vmul.f32 %v2520, %v2638
  %v2714 = vmul.f32 %v2521, %v2638
  %v2715 = vmul.f32 %v2522, %v2638
  %v2716 = vmul.f32 %v2523, %v2638
  %v2717 = vmul.f32 %v2524, %v2638
  %v2718 = vmul.f32 %v2525, %v2638
  %v2719 = vmul.f32 %v2526, %v2638
  %v2720 = vmul.f32 %v2527, %v2638
  %v2721 = vmul.f32 %v2528, %v2638
  %v2722 = vmul.f32 %v2529, %v2638
  %v2723 = vmul.f32 %v2530, %v2638
  %v2724 = vmul.f32 %v2531, %v2638
  %v2725 = vmul.f32 %v2532, %v2638
  %v2726 = vmul.f32 %v2533, %v2638
  %v2727 = vmul.f32 %v2534, %v2638
  %v2728 = vmul.f32 %v2535, %v2638
  %v2729 = vmul.f32 %v2536, %v2638
  %v2730 = vmul.f32 %v2537, %v2638
  %v2731 = vmul.f32 %v2538, %v2638
  %v2732 = vmul.f32 %v2539, %v2638
  %v2733 = vmul.f32 %v2540, %v2638
  %v2734 = vmul.f32 %v2541, %v2638
  %v2735 = vmul.f32 %v2542, %v2638
  %v2736 = vmul.f32 %v2543, %v2638
  %v2737 = vmul.f32 %v2544, %v2638
  %v2738 = vmul.f32 %v2545, %v2638
  %v2739 = vmul.f32 %v2546, %v2638
  %v2740 = vmul.f32 %v2547, %v2638
  %v2741 = vmul.f32 %v2548, %v2638
  %v2742 = vmul.f32 %v2549, %v2638
  %v2743 = vmul.f32 %v2550, %v2638
  %v2744 = vmul.f32 %v2551, %v2638
  %v2745 = vmul.f32 %v2552, %v2638
  %v2746 = vmul.f32 %v2553, %v2638
  %v2747 = vmul.f32 %v2554, %v2638
  %v2748 = vmul.f32 %v2555, %v2638
  %v2749 = vmul.f32 %v2556, %v2638
  %v2750 = vmul.f32 %v2557, %v2638
  %v2751 = vmul.f32 %v2558, %v2638
  %v2752 = vmul.f32 %v2559, %v2638
  %v2753 = vmul.f32 %v2560, %v2638
  %v2754 = vmul.f32 %v2561, %v2638
  %v2755 = vmul.f32 %v2562, %v2638
  %v2756 = vmul.f32 %v2563, %v2638
  %v2757 = vmul.f32 %v2564, %v2638
  %v2758 = vmul.f32 %v2565, %v2638
  %v2759 = vmul.f32 %v2566, %v2638
  %v2760 = vmul.f32 %v2567, %v2638
  %v2761 = vmul.f32 %v2568, %v2638
  %v2762 = vmul.f32 %v2569, %v2638
  %v2763 = vmul.f32 %v2570, %v2638
  %v2764 = vmul.f32 %v2571, %v2638
  %v2765 = vmul.f32 %v2572, %v2638
  %v2766 = vmul.f32 %v2573, %v2638
  %v2767 = vmul.f32 %v2574, %v2638
  %v2768 = vmul.f32 %v2575, %v2638
  %v2769 = vmul.f32 %v2576, %v2638
  %v2770 = vmul.f32 %v2577, %v2638
  %v2771 = vmul.f32 %v2578, %v2638
  %v2772 = vmul.f32 %v2579, %v2638
  %v2773 = vmul.f32 %v2580, %v2638
  %v2774 = vmul.f32 %v2581, %v2638
  %v2775 = vmul.f32 %v2582, %v2638
  %v2776 = vmul.f32 %v2583, %v2638
  %v2777 = vmul.f32 %v2584, %v2638
  %v2778 = vmul.f32 %v2585, %v2638
  %v2779 = vmul.f32 %v2586, %v2638
  %v2780 = vmul.f32 %v2587, %v2638
  %v2781 = vmul.f32 %v2588, %v2638
  %v2782 = vmul.f32 %v2589, %v2638
  %v2783 = vmul.f32 %v2590, %v2638
  %v2784 = vmul.f32 %v2591, %v2638
  %v2785 = vmul.f32 %v2592, %v2638
  %v2786 = vmul.f32 %v2593, %v2638
  %v2787 = vmul.f32 %v2594, %v2638
  %v2788 = vmul.f32 %v2595, %v2638
  %v2789 = vmul.f32 %v2596, %v2638
  %v2790 = vmul.f32 %v2597, %v2638
  %v2791 = vmul.f32 %v2598, %v2638
  %v2792 = vmul.f32 %v2599, %v2638
  %v2793 = vmul.f32 %v2600, %v2638
  %v2794 = vmul.f32 %v2601, %v2638
  %v2795 = vmul.f32 %v2602, %v2638
  %v2796 = vmul.f32 %v2603, %v2638
  %v2797 = vmul.f32 %v2604, %v2638
  %v2798 = vmul.f32 %v2605, %v2638
  %v2799 = vmul.f32 %v2606, %v2638
  %v2800 = vmul.f32 %v2607, %v2638
  %v2801 = vmul.f32 %v2608, %v2638
  %v2802 = vmul.f32 %v2609, %v2638
  %v2803 = vmul.f32 %v2610, %v2638
  %v2804 = vmul.f32 %v2611, %v2638
  %v2805 = vmul.f32 %v2612, %v2638
  %v2806 = vmul.f32 %v2613, %v2638
  %v2807 = vmul.f32 %v2614, %v2638
  %v2808 = vmul.f32 %v2615, %v2638
  %v2809 = vmul.f32 %v2616, %v2638
  %v2810 = vmul.f32 %v2617, %v2638
  %v2811 = vmul.f32 %v2618, %v2638
  %v2812 = vmul.f32 %v2619, %v2638
  %v2813 = vmul.f32 %v2620, %v2638
  %v2814 = vmul.f32 %v2621, %v2638
  %v2815 = vmul.f32 %v2622, %v2638
  %v2816 = vmul.f32 %v2623, %v2638
  %v2817 = vmul.f32 %v2624, %v2638
  %v2818 = vmul.f32 %v2625, %v2638
  %v2819 = vmul.f32 %v2626, %v2638
  %v2820 = vmul.f32 %v2627, %v2638
  %v2821 = vmul.f32 %v2628, %v2638
  %v2822 = vmul.f32 %v2629, %v2638
  %v2823 = vmul.f32 %v2630, %v2638
  %v2824 = vmul.f32 %v2631, %v2638
  %v2825 = vmul.f32 %v2632, %v2638
  %v2826 = vmul.f32 %v2633, %v2638
  %v2827 = vmul.f32 %v2634, %v2638
  %v2828 = vmul.f32 %v2635, %v2638
  %v2829 = vmul.f32 %v2636, %v2638
  %v2830 = vmul.f32 %v2637, %v2638
  %vm2831 = vcmask 130048
  %v2832 = vsel %vm2831, %v2639, 0.0
  %2833 = vadd.xlane.f32.xlu0 %v2832
  %v2834 = vpop.xlane.xlu0 %2833
  %v2835 = vsel %vm2831, %v2640, 0.0
  %2836 = vadd.xlane.f32.xlu0 %v2835
  %v2837 = vpop.xlane.xlu0 %2836
  %v2838 = vsel %vm2831, %v2641, 0.0
  %2839 = vadd.xlane.f32.xlu0 %v2838
  %v2840 = vpop.xlane.xlu0 %2839
  %v2841 = vsel %vm2831, %v2642, 0.0
  %2842 = vadd.xlane.f32.xlu0 %v2841
  %v2843 = vpop.xlane.xlu0 %2842
  %v2844 = vsel %vm2831, %v2643, 0.0
  %2845 = vadd.xlane.f32.xlu0 %v2844
  %v2846 = vpop.xlane.xlu0 %2845
  %v2847 = vsel %vm2831, %v2644, 0.0
  %2848 = vadd.xlane.f32.xlu0 %v2847
  %v2849 = vpop.xlane.xlu0 %2848
  %v2850 = vsel %vm2831, %v2645, 0.0
  %2851 = vadd.xlane.f32.xlu0 %v2850
  %v2852 = vpop.xlane.xlu0 %2851
  %v2853 = vsel %vm2831, %v2646, 0.0
  %2854 = vadd.xlane.f32.xlu0 %v2853
  %v2855 = vpop.xlane.xlu0 %2854
  %v2856 = vsel %vm2831, %v2647, 0.0
  %2857 = vadd.xlane.f32.xlu0 %v2856
  %v2858 = vpop.xlane.xlu0 %2857
  %v2859 = vsel %vm2831, %v2648, 0.0
  %2860 = vadd.xlane.f32.xlu0 %v2859
  %v2861 = vpop.xlane.xlu0 %2860
  %v2862 = vsel %vm2831, %v2649, 0.0
  %2863 = vadd.xlane.f32.xlu0 %v2862
  %v2864 = vpop.xlane.xlu0 %2863
  %v2865 = vsel %vm2831, %v2650, 0.0
  %2866 = vadd.xlane.f32.xlu0 %v2865
  %v2867 = vpop.xlane.xlu0 %2866
  %v2868 = vsel %vm2831, %v2651, 0.0
  %2869 = vadd.xlane.f32.xlu0 %v2868
  %v2870 = vpop.xlane.xlu0 %2869
  %v2871 = vsel %vm2831, %v2652, 0.0
  %2872 = vadd.xlane.f32.xlu0 %v2871
  %v2873 = vpop.xlane.xlu0 %2872
  %v2874 = vsel %vm2831, %v2653, 0.0
  %2875 = vadd.xlane.f32.xlu0 %v2874
  %v2876 = vpop.xlane.xlu0 %2875
  %v2877 = vsel %vm2831, %v2654, 0.0
  %2878 = vadd.xlane.f32.xlu0 %v2877
  %v2879 = vpop.xlane.xlu0 %2878
  %v2880 = vsel %vm2831, %v2655, 0.0
  %2881 = vadd.xlane.f32.xlu0 %v2880
  %v2882 = vpop.xlane.xlu0 %2881
  %v2883 = vsel %vm2831, %v2656, 0.0
  %2884 = vadd.xlane.f32.xlu0 %v2883
  %v2885 = vpop.xlane.xlu0 %2884
  %v2886 = vsel %vm2831, %v2657, 0.0
  %2887 = vadd.xlane.f32.xlu0 %v2886
  %v2888 = vpop.xlane.xlu0 %2887
  %v2889 = vsel %vm2831, %v2658, 0.0
  %2890 = vadd.xlane.f32.xlu0 %v2889
  %v2891 = vpop.xlane.xlu0 %2890
  %v2892 = vsel %vm2831, %v2659, 0.0
  %2893 = vadd.xlane.f32.xlu0 %v2892
  %v2894 = vpop.xlane.xlu0 %2893
  %v2895 = vsel %vm2831, %v2660, 0.0
  %2896 = vadd.xlane.f32.xlu0 %v2895
  %v2897 = vpop.xlane.xlu0 %2896
  %v2898 = vsel %vm2831, %v2661, 0.0
  %2899 = vadd.xlane.f32.xlu0 %v2898
  %v2900 = vpop.xlane.xlu0 %2899
  %v2901 = vsel %vm2831, %v2662, 0.0
  %2902 = vadd.xlane.f32.xlu0 %v2901
  %v2903 = vpop.xlane.xlu0 %2902
  %v2904 = vsel %vm2831, %v2663, 0.0
  %2905 = vadd.xlane.f32.xlu0 %v2904
  %v2906 = vpop.xlane.xlu0 %2905
  %v2907 = vsel %vm2831, %v2664, 0.0
  %2908 = vadd.xlane.f32.xlu0 %v2907
  %v2909 = vpop.xlane.xlu0 %2908
  %v2910 = vsel %vm2831, %v2665, 0.0
  %2911 = vadd.xlane.f32.xlu0 %v2910
  %v2912 = vpop.xlane.xlu0 %2911
  %v2913 = vsel %vm2831, %v2666, 0.0
  %2914 = vadd.xlane.f32.xlu0 %v2913
  %v2915 = vpop.xlane.xlu0 %2914
  %v2916 = vsel %vm2831, %v2667, 0.0
  %2917 = vadd.xlane.f32.xlu0 %v2916
  %v2918 = vpop.xlane.xlu0 %2917
  %v2919 = vsel %vm2831, %v2668, 0.0
  %2920 = vadd.xlane.f32.xlu0 %v2919
  %v2921 = vpop.xlane.xlu0 %2920
  %v2922 = vsel %vm2831, %v2669, 0.0
  %2923 = vadd.xlane.f32.xlu0 %v2922
  %v2924 = vpop.xlane.xlu0 %2923
  %v2925 = vsel %vm2831, %v2670, 0.0
  %2926 = vadd.xlane.f32.xlu0 %v2925
  %v2927 = vpop.xlane.xlu0 %2926
  %v2928 = vsel %vm2831, %v2671, 0.0
  %2929 = vadd.xlane.f32.xlu0 %v2928
  %v2930 = vpop.xlane.xlu0 %2929
  %v2931 = vsel %vm2831, %v2672, 0.0
  %2932 = vadd.xlane.f32.xlu0 %v2931
  %v2933 = vpop.xlane.xlu0 %2932
  %v2934 = vsel %vm2831, %v2673, 0.0
  %2935 = vadd.xlane.f32.xlu0 %v2934
  %v2936 = vpop.xlane.xlu0 %2935
  %v2937 = vsel %vm2831, %v2674, 0.0
  %2938 = vadd.xlane.f32.xlu0 %v2937
  %v2939 = vpop.xlane.xlu0 %2938
  %v2940 = vsel %vm2831, %v2675, 0.0
  %2941 = vadd.xlane.f32.xlu0 %v2940
  %v2942 = vpop.xlane.xlu0 %2941
  %v2943 = vsel %vm2831, %v2676, 0.0
  %2944 = vadd.xlane.f32.xlu0 %v2943
  %v2945 = vpop.xlane.xlu0 %2944
  %v2946 = vsel %vm2831, %v2677, 0.0
  %2947 = vadd.xlane.f32.xlu0 %v2946
  %v2948 = vpop.xlane.xlu0 %2947
  %v2949 = vsel %vm2831, %v2678, 0.0
  %2950 = vadd.xlane.f32.xlu0 %v2949
  %v2951 = vpop.xlane.xlu0 %2950
  %v2952 = vsel %vm2831, %v2679, 0.0
  %2953 = vadd.xlane.f32.xlu0 %v2952
  %v2954 = vpop.xlane.xlu0 %2953
  %v2955 = vsel %vm2831, %v2680, 0.0
  %2956 = vadd.xlane.f32.xlu0 %v2955
  %v2957 = vpop.xlane.xlu0 %2956
  %v2958 = vsel %vm2831, %v2681, 0.0
  %2959 = vadd.xlane.f32.xlu0 %v2958
  %v2960 = vpop.xlane.xlu0 %2959
  %v2961 = vsel %vm2831, %v2682, 0.0
  %2962 = vadd.xlane.f32.xlu0 %v2961
  %v2963 = vpop.xlane.xlu0 %2962
  %v2964 = vsel %vm2831, %v2683, 0.0
  %2965 = vadd.xlane.f32.xlu0 %v2964
  %v2966 = vpop.xlane.xlu0 %2965
  %v2967 = vsel %vm2831, %v2684, 0.0
  %2968 = vadd.xlane.f32.xlu0 %v2967
  %v2969 = vpop.xlane.xlu0 %2968
  %v2970 = vsel %vm2831, %v2685, 0.0
  %2971 = vadd.xlane.f32.xlu0 %v2970
  %v2972 = vpop.xlane.xlu0 %2971
  %v2973 = vsel %vm2831, %v2686, 0.0
  %2974 = vadd.xlane.f32.xlu0 %v2973
  %v2975 = vpop.xlane.xlu0 %2974
  %v2976 = vsel %vm2831, %v2687, 0.0
  %2977 = vadd.xlane.f32.xlu0 %v2976
  %v2978 = vpop.xlane.xlu0 %2977
  %v2979 = vsel %vm2831, %v2688, 0.0
  %2980 = vadd.xlane.f32.xlu0 %v2979
  %v2981 = vpop.xlane.xlu0 %2980
  %v2982 = vsel %vm2831, %v2689, 0.0
  %2983 = vadd.xlane.f32.xlu0 %v2982
  %v2984 = vpop.xlane.xlu0 %2983
  %v2985 = vsel %vm2831, %v2690, 0.0
  %2986 = vadd.xlane.f32.xlu0 %v2985
  %v2987 = vpop.xlane.xlu0 %2986
  %v2988 = vsel %vm2831, %v2691, 0.0
  %2989 = vadd.xlane.f32.xlu0 %v2988
  %v2990 = vpop.xlane.xlu0 %2989
  %v2991 = vsel %vm2831, %v2692, 0.0
  %2992 = vadd.xlane.f32.xlu0 %v2991
  %v2993 = vpop.xlane.xlu0 %2992
  %v2994 = vsel %vm2831, %v2693, 0.0
  %2995 = vadd.xlane.f32.xlu0 %v2994
  %v2996 = vpop.xlane.xlu0 %2995
  %v2997 = vsel %vm2831, %v2694, 0.0
  %2998 = vadd.xlane.f32.xlu0 %v2997
  %v2999 = vpop.xlane.xlu0 %2998
  %v3000 = vsel %vm2831, %v2695, 0.0
  %3001 = vadd.xlane.f32.xlu0 %v3000
  %v3002 = vpop.xlane.xlu0 %3001
  %v3003 = vsel %vm2831, %v2696, 0.0
  %3004 = vadd.xlane.f32.xlu0 %v3003
  %v3005 = vpop.xlane.xlu0 %3004
  %v3006 = vsel %vm2831, %v2697, 0.0
  %3007 = vadd.xlane.f32.xlu0 %v3006
  %v3008 = vpop.xlane.xlu0 %3007
  %v3009 = vsel %vm2831, %v2698, 0.0
  %3010 = vadd.xlane.f32.xlu0 %v3009
  %v3011 = vpop.xlane.xlu0 %3010
  %v3012 = vsel %vm2831, %v2699, 0.0
  %3013 = vadd.xlane.f32.xlu0 %v3012
  %v3014 = vpop.xlane.xlu0 %3013
  %v3015 = vsel %vm2831, %v2700, 0.0
  %3016 = vadd.xlane.f32.xlu0 %v3015
  %v3017 = vpop.xlane.xlu0 %3016
  %v3018 = vsel %vm2831, %v2701, 0.0
  %3019 = vadd.xlane.f32.xlu0 %v3018
  %v3020 = vpop.xlane.xlu0 %3019
  %v3021 = vsel %vm2831, %v2702, 0.0
  %3022 = vadd.xlane.f32.xlu0 %v3021
  %v3023 = vpop.xlane.xlu0 %3022
  %v3024 = vsel %vm2831, %v2703, 0.0
  %3025 = vadd.xlane.f32.xlu0 %v3024
  %v3026 = vpop.xlane.xlu0 %3025
  %v3027 = vsel %vm2831, %v2704, 0.0
  %3028 = vadd.xlane.f32.xlu0 %v3027
  %v3029 = vpop.xlane.xlu0 %3028
  %v3030 = vsel %vm2831, %v2705, 0.0
  %3031 = vadd.xlane.f32.xlu0 %v3030
  %v3032 = vpop.xlane.xlu0 %3031
  %v3033 = vsel %vm2831, %v2706, 0.0
  %3034 = vadd.xlane.f32.xlu0 %v3033
  %v3035 = vpop.xlane.xlu0 %3034
  %v3036 = vsel %vm2831, %v2707, 0.0
  %3037 = vadd.xlane.f32.xlu0 %v3036
  %v3038 = vpop.xlane.xlu0 %3037
  %v3039 = vsel %vm2831, %v2708, 0.0
  %3040 = vadd.xlane.f32.xlu0 %v3039
  %v3041 = vpop.xlane.xlu0 %3040
  %v3042 = vsel %vm2831, %v2709, 0.0
  %3043 = vadd.xlane.f32.xlu0 %v3042
  %v3044 = vpop.xlane.xlu0 %3043
  %v3045 = vsel %vm2831, %v2710, 0.0
  %3046 = vadd.xlane.f32.xlu0 %v3045
  %v3047 = vpop.xlane.xlu0 %3046
  %v3048 = vsel %vm2831, %v2711, 0.0
  %3049 = vadd.xlane.f32.xlu0 %v3048
  %v3050 = vpop.xlane.xlu0 %3049
  %v3051 = vsel %vm2831, %v2712, 0.0
  %3052 = vadd.xlane.f32.xlu0 %v3051
  %v3053 = vpop.xlane.xlu0 %3052
  %v3054 = vsel %vm2831, %v2713, 0.0
  %3055 = vadd.xlane.f32.xlu0 %v3054
  %v3056 = vpop.xlane.xlu0 %3055
  %v3057 = vsel %vm2831, %v2714, 0.0
  %3058 = vadd.xlane.f32.xlu0 %v3057
  %v3059 = vpop.xlane.xlu0 %3058
  %v3060 = vsel %vm2831, %v2715, 0.0
  %3061 = vadd.xlane.f32.xlu0 %v3060
  %v3062 = vpop.xlane.xlu0 %3061
  %v3063 = vsel %vm2831, %v2716, 0.0
  %3064 = vadd.xlane.f32.xlu0 %v3063
  %v3065 = vpop.xlane.xlu0 %3064
  %v3066 = vsel %vm2831, %v2717, 0.0
  %3067 = vadd.xlane.f32.xlu0 %v3066
  %v3068 = vpop.xlane.xlu0 %3067
  %v3069 = vsel %vm2831, %v2718, 0.0
  %3070 = vadd.xlane.f32.xlu0 %v3069
  %v3071 = vpop.xlane.xlu0 %3070
  %v3072 = vsel %vm2831, %v2719, 0.0
  %3073 = vadd.xlane.f32.xlu0 %v3072
  %v3074 = vpop.xlane.xlu0 %3073
  %v3075 = vsel %vm2831, %v2720, 0.0
  %3076 = vadd.xlane.f32.xlu0 %v3075
  %v3077 = vpop.xlane.xlu0 %3076
  %v3078 = vsel %vm2831, %v2721, 0.0
  %3079 = vadd.xlane.f32.xlu0 %v3078
  %v3080 = vpop.xlane.xlu0 %3079
  %v3081 = vsel %vm2831, %v2722, 0.0
  %3082 = vadd.xlane.f32.xlu0 %v3081
  %v3083 = vpop.xlane.xlu0 %3082
  %v3084 = vsel %vm2831, %v2723, 0.0
  %3085 = vadd.xlane.f32.xlu0 %v3084
  %v3086 = vpop.xlane.xlu0 %3085
  %v3087 = vsel %vm2831, %v2724, 0.0
  %3088 = vadd.xlane.f32.xlu0 %v3087
  %v3089 = vpop.xlane.xlu0 %3088
  %v3090 = vsel %vm2831, %v2725, 0.0
  %3091 = vadd.xlane.f32.xlu0 %v3090
  %v3092 = vpop.xlane.xlu0 %3091
  %v3093 = vsel %vm2831, %v2726, 0.0
  %3094 = vadd.xlane.f32.xlu0 %v3093
  %v3095 = vpop.xlane.xlu0 %3094
  %v3096 = vsel %vm2831, %v2727, 0.0
  %3097 = vadd.xlane.f32.xlu0 %v3096
  %v3098 = vpop.xlane.xlu0 %3097
  %v3099 = vsel %vm2831, %v2728, 0.0
  %3100 = vadd.xlane.f32.xlu0 %v3099
  %v3101 = vpop.xlane.xlu0 %3100
  %v3102 = vsel %vm2831, %v2729, 0.0
  %3103 = vadd.xlane.f32.xlu0 %v3102
  %v3104 = vpop.xlane.xlu0 %3103
  %v3105 = vsel %vm2831, %v2730, 0.0
  %3106 = vadd.xlane.f32.xlu0 %v3105
  %v3107 = vpop.xlane.xlu0 %3106
  %v3108 = vsel %vm2831, %v2731, 0.0
  %3109 = vadd.xlane.f32.xlu0 %v3108
  %v3110 = vpop.xlane.xlu0 %3109
  %v3111 = vsel %vm2831, %v2732, 0.0
  %3112 = vadd.xlane.f32.xlu0 %v3111
  %v3113 = vpop.xlane.xlu0 %3112
  %v3114 = vsel %vm2831, %v2733, 0.0
  %3115 = vadd.xlane.f32.xlu0 %v3114
  %v3116 = vpop.xlane.xlu0 %3115
  %v3117 = vsel %vm2831, %v2734, 0.0
  %3118 = vadd.xlane.f32.xlu0 %v3117
  %v3119 = vpop.xlane.xlu0 %3118
  %v3120 = vsel %vm2831, %v2735, 0.0
  %3121 = vadd.xlane.f32.xlu0 %v3120
  %v3122 = vpop.xlane.xlu0 %3121
  %v3123 = vsel %vm2831, %v2736, 0.0
  %3124 = vadd.xlane.f32.xlu0 %v3123
  %v3125 = vpop.xlane.xlu0 %3124
  %v3126 = vsel %vm2831, %v2737, 0.0
  %3127 = vadd.xlane.f32.xlu0 %v3126
  %v3128 = vpop.xlane.xlu0 %3127
  %v3129 = vsel %vm2831, %v2738, 0.0
  %3130 = vadd.xlane.f32.xlu0 %v3129
  %v3131 = vpop.xlane.xlu0 %3130
  %v3132 = vsel %vm2831, %v2739, 0.0
  %3133 = vadd.xlane.f32.xlu0 %v3132
  %v3134 = vpop.xlane.xlu0 %3133
  %v3135 = vsel %vm2831, %v2740, 0.0
  %3136 = vadd.xlane.f32.xlu0 %v3135
  %v3137 = vpop.xlane.xlu0 %3136
  %v3138 = vsel %vm2831, %v2741, 0.0
  %3139 = vadd.xlane.f32.xlu0 %v3138
  %v3140 = vpop.xlane.xlu0 %3139
  %v3141 = vsel %vm2831, %v2742, 0.0
  %3142 = vadd.xlane.f32.xlu0 %v3141
  %v3143 = vpop.xlane.xlu0 %3142
  %v3144 = vsel %vm2831, %v2743, 0.0
  %3145 = vadd.xlane.f32.xlu0 %v3144
  %v3146 = vpop.xlane.xlu0 %3145
  %v3147 = vsel %vm2831, %v2744, 0.0
  %3148 = vadd.xlane.f32.xlu0 %v3147
  %v3149 = vpop.xlane.xlu0 %3148
  %v3150 = vsel %vm2831, %v2745, 0.0
  %3151 = vadd.xlane.f32.xlu0 %v3150
  %v3152 = vpop.xlane.xlu0 %3151
  %v3153 = vsel %vm2831, %v2746, 0.0
  %3154 = vadd.xlane.f32.xlu0 %v3153
  %v3155 = vpop.xlane.xlu0 %3154
  %v3156 = vsel %vm2831, %v2747, 0.0
  %3157 = vadd.xlane.f32.xlu0 %v3156
  %v3158 = vpop.xlane.xlu0 %3157
  %v3159 = vsel %vm2831, %v2748, 0.0
  %3160 = vadd.xlane.f32.xlu0 %v3159
  %v3161 = vpop.xlane.xlu0 %3160
  %v3162 = vsel %vm2831, %v2749, 0.0
  %3163 = vadd.xlane.f32.xlu0 %v3162
  %v3164 = vpop.xlane.xlu0 %3163
  %v3165 = vsel %vm2831, %v2750, 0.0
  %3166 = vadd.xlane.f32.xlu0 %v3165
  %v3167 = vpop.xlane.xlu0 %3166
  %v3168 = vsel %vm2831, %v2751, 0.0
  %3169 = vadd.xlane.f32.xlu0 %v3168
  %v3170 = vpop.xlane.xlu0 %3169
  %v3171 = vsel %vm2831, %v2752, 0.0
  %3172 = vadd.xlane.f32.xlu0 %v3171
  %v3173 = vpop.xlane.xlu0 %3172
  %v3174 = vsel %vm2831, %v2753, 0.0
  %3175 = vadd.xlane.f32.xlu0 %v3174
  %v3176 = vpop.xlane.xlu0 %3175
  %v3177 = vsel %vm2831, %v2754, 0.0
  %3178 = vadd.xlane.f32.xlu0 %v3177
  %v3179 = vpop.xlane.xlu0 %3178
  %v3180 = vsel %vm2831, %v2755, 0.0
  %3181 = vadd.xlane.f32.xlu0 %v3180
  %v3182 = vpop.xlane.xlu0 %3181
  %v3183 = vsel %vm2831, %v2756, 0.0
  %3184 = vadd.xlane.f32.xlu0 %v3183
  %v3185 = vpop.xlane.xlu0 %3184
  %v3186 = vsel %vm2831, %v2757, 0.0
  %3187 = vadd.xlane.f32.xlu0 %v3186
  %v3188 = vpop.xlane.xlu0 %3187
  %v3189 = vsel %vm2831, %v2758, 0.0
  %3190 = vadd.xlane.f32.xlu0 %v3189
  %v3191 = vpop.xlane.xlu0 %3190
  %v3192 = vsel %vm2831, %v2759, 0.0
  %3193 = vadd.xlane.f32.xlu0 %v3192
  %v3194 = vpop.xlane.xlu0 %3193
  %v3195 = vsel %vm2831, %v2760, 0.0
  %3196 = vadd.xlane.f32.xlu0 %v3195
  %v3197 = vpop.xlane.xlu0 %3196
  %v3198 = vsel %vm2831, %v2761, 0.0
  %3199 = vadd.xlane.f32.xlu0 %v3198
  %v3200 = vpop.xlane.xlu0 %3199
  %v3201 = vsel %vm2831, %v2762, 0.0
  %3202 = vadd.xlane.f32.xlu0 %v3201
  %v3203 = vpop.xlane.xlu0 %3202
  %v3204 = vsel %vm2831, %v2763, 0.0
  %3205 = vadd.xlane.f32.xlu0 %v3204
  %v3206 = vpop.xlane.xlu0 %3205
  %v3207 = vsel %vm2831, %v2764, 0.0
  %3208 = vadd.xlane.f32.xlu0 %v3207
  %v3209 = vpop.xlane.xlu0 %3208
  %v3210 = vsel %vm2831, %v2765, 0.0
  %3211 = vadd.xlane.f32.xlu0 %v3210
  %v3212 = vpop.xlane.xlu0 %3211
  %v3213 = vsel %vm2831, %v2766, 0.0
  %3214 = vadd.xlane.f32.xlu0 %v3213
  %v3215 = vpop.xlane.xlu0 %3214
  %v3216 = vsel %vm2831, %v2767, 0.0
  %3217 = vadd.xlane.f32.xlu0 %v3216
  %v3218 = vpop.xlane.xlu0 %3217
  %v3219 = vsel %vm2831, %v2768, 0.0
  %3220 = vadd.xlane.f32.xlu0 %v3219
  %v3221 = vpop.xlane.xlu0 %3220
  %v3222 = vsel %vm2831, %v2769, 0.0
  %3223 = vadd.xlane.f32.xlu0 %v3222
  %v3224 = vpop.xlane.xlu0 %3223
  %v3225 = vsel %vm2831, %v2770, 0.0
  %3226 = vadd.xlane.f32.xlu0 %v3225
  %v3227 = vpop.xlane.xlu0 %3226
  %v3228 = vsel %vm2831, %v2771, 0.0
  %3229 = vadd.xlane.f32.xlu0 %v3228
  %v3230 = vpop.xlane.xlu0 %3229
  %v3231 = vsel %vm2831, %v2772, 0.0
  %3232 = vadd.xlane.f32.xlu0 %v3231
  %v3233 = vpop.xlane.xlu0 %3232
  %v3234 = vsel %vm2831, %v2773, 0.0
  %3235 = vadd.xlane.f32.xlu0 %v3234
  %v3236 = vpop.xlane.xlu0 %3235
  %v3237 = vsel %vm2831, %v2774, 0.0
  %3238 = vadd.xlane.f32.xlu0 %v3237
  %v3239 = vpop.xlane.xlu0 %3238
  %v3240 = vsel %vm2831, %v2775, 0.0
  %3241 = vadd.xlane.f32.xlu0 %v3240
  %v3242 = vpop.xlane.xlu0 %3241
  %v3243 = vsel %vm2831, %v2776, 0.0
  %3244 = vadd.xlane.f32.xlu0 %v3243
  %v3245 = vpop.xlane.xlu0 %3244
  %v3246 = vsel %vm2831, %v2777, 0.0
  %3247 = vadd.xlane.f32.xlu0 %v3246
  %v3248 = vpop.xlane.xlu0 %3247
  %v3249 = vsel %vm2831, %v2778, 0.0
  %3250 = vadd.xlane.f32.xlu0 %v3249
  %v3251 = vpop.xlane.xlu0 %3250
  %v3252 = vsel %vm2831, %v2779, 0.0
  %3253 = vadd.xlane.f32.xlu0 %v3252
  %v3254 = vpop.xlane.xlu0 %3253
  %v3255 = vsel %vm2831, %v2780, 0.0
  %3256 = vadd.xlane.f32.xlu0 %v3255
  %v3257 = vpop.xlane.xlu0 %3256
  %v3258 = vsel %vm2831, %v2781, 0.0
  %3259 = vadd.xlane.f32.xlu0 %v3258
  %v3260 = vpop.xlane.xlu0 %3259
  %v3261 = vsel %vm2831, %v2782, 0.0
  %3262 = vadd.xlane.f32.xlu0 %v3261
  %v3263 = vpop.xlane.xlu0 %3262
  %v3264 = vsel %vm2831, %v2783, 0.0
  %3265 = vadd.xlane.f32.xlu0 %v3264
  %v3266 = vpop.xlane.xlu0 %3265
  %v3267 = vsel %vm2831, %v2784, 0.0
  %3268 = vadd.xlane.f32.xlu0 %v3267
  %v3269 = vpop.xlane.xlu0 %3268
  %v3270 = vsel %vm2831, %v2785, 0.0
  %3271 = vadd.xlane.f32.xlu0 %v3270
  %v3272 = vpop.xlane.xlu0 %3271
  %v3273 = vsel %vm2831, %v2786, 0.0
  %3274 = vadd.xlane.f32.xlu0 %v3273
  %v3275 = vpop.xlane.xlu0 %3274
  %v3276 = vsel %vm2831, %v2787, 0.0
  %3277 = vadd.xlane.f32.xlu0 %v3276
  %v3278 = vpop.xlane.xlu0 %3277
  %v3279 = vsel %vm2831, %v2788, 0.0
  %3280 = vadd.xlane.f32.xlu0 %v3279
  %v3281 = vpop.xlane.xlu0 %3280
  %v3282 = vsel %vm2831, %v2789, 0.0
  %3283 = vadd.xlane.f32.xlu0 %v3282
  %v3284 = vpop.xlane.xlu0 %3283
  %v3285 = vsel %vm2831, %v2790, 0.0
  %3286 = vadd.xlane.f32.xlu0 %v3285
  %v3287 = vpop.xlane.xlu0 %3286
  %v3288 = vsel %vm2831, %v2791, 0.0
  %3289 = vadd.xlane.f32.xlu0 %v3288
  %v3290 = vpop.xlane.xlu0 %3289
  %v3291 = vsel %vm2831, %v2792, 0.0
  %3292 = vadd.xlane.f32.xlu0 %v3291
  %v3293 = vpop.xlane.xlu0 %3292
  %v3294 = vsel %vm2831, %v2793, 0.0
  %3295 = vadd.xlane.f32.xlu0 %v3294
  %v3296 = vpop.xlane.xlu0 %3295
  %v3297 = vsel %vm2831, %v2794, 0.0
  %3298 = vadd.xlane.f32.xlu0 %v3297
  %v3299 = vpop.xlane.xlu0 %3298
  %v3300 = vsel %vm2831, %v2795, 0.0
  %3301 = vadd.xlane.f32.xlu0 %v3300
  %v3302 = vpop.xlane.xlu0 %3301
  %v3303 = vsel %vm2831, %v2796, 0.0
  %3304 = vadd.xlane.f32.xlu0 %v3303
  %v3305 = vpop.xlane.xlu0 %3304
  %v3306 = vsel %vm2831, %v2797, 0.0
  %3307 = vadd.xlane.f32.xlu0 %v3306
  %v3308 = vpop.xlane.xlu0 %3307
  %v3309 = vsel %vm2831, %v2798, 0.0
  %3310 = vadd.xlane.f32.xlu0 %v3309
  %v3311 = vpop.xlane.xlu0 %3310
  %v3312 = vsel %vm2831, %v2799, 0.0
  %3313 = vadd.xlane.f32.xlu0 %v3312
  %v3314 = vpop.xlane.xlu0 %3313
  %v3315 = vsel %vm2831, %v2800, 0.0
  %3316 = vadd.xlane.f32.xlu0 %v3315
  %v3317 = vpop.xlane.xlu0 %3316
  %v3318 = vsel %vm2831, %v2801, 0.0
  %3319 = vadd.xlane.f32.xlu0 %v3318
  %v3320 = vpop.xlane.xlu0 %3319
  %v3321 = vsel %vm2831, %v2802, 0.0
  %3322 = vadd.xlane.f32.xlu0 %v3321
  %v3323 = vpop.xlane.xlu0 %3322
  %v3324 = vsel %vm2831, %v2803, 0.0
  %3325 = vadd.xlane.f32.xlu0 %v3324
  %v3326 = vpop.xlane.xlu0 %3325
  %v3327 = vsel %vm2831, %v2804, 0.0
  %3328 = vadd.xlane.f32.xlu0 %v3327
  %v3329 = vpop.xlane.xlu0 %3328
  %v3330 = vsel %vm2831, %v2805, 0.0
  %3331 = vadd.xlane.f32.xlu0 %v3330
  %v3332 = vpop.xlane.xlu0 %3331
  %v3333 = vsel %vm2831, %v2806, 0.0
  %3334 = vadd.xlane.f32.xlu0 %v3333
  %v3335 = vpop.xlane.xlu0 %3334
  %v3336 = vsel %vm2831, %v2807, 0.0
  %3337 = vadd.xlane.f32.xlu0 %v3336
  %v3338 = vpop.xlane.xlu0 %3337
  %v3339 = vsel %vm2831, %v2808, 0.0
  %3340 = vadd.xlane.f32.xlu0 %v3339
  %v3341 = vpop.xlane.xlu0 %3340
  %v3342 = vsel %vm2831, %v2809, 0.0
  %3343 = vadd.xlane.f32.xlu0 %v3342
  %v3344 = vpop.xlane.xlu0 %3343
  %v3345 = vsel %vm2831, %v2810, 0.0
  %3346 = vadd.xlane.f32.xlu0 %v3345
  %v3347 = vpop.xlane.xlu0 %3346
  %v3348 = vsel %vm2831, %v2811, 0.0
  %3349 = vadd.xlane.f32.xlu0 %v3348
  %v3350 = vpop.xlane.xlu0 %3349
  %v3351 = vsel %vm2831, %v2812, 0.0
  %3352 = vadd.xlane.f32.xlu0 %v3351
  %v3353 = vpop.xlane.xlu0 %3352
  %v3354 = vsel %vm2831, %v2813, 0.0
  %3355 = vadd.xlane.f32.xlu0 %v3354
  %v3356 = vpop.xlane.xlu0 %3355
  %v3357 = vsel %vm2831, %v2814, 0.0
  %3358 = vadd.xlane.f32.xlu0 %v3357
  %v3359 = vpop.xlane.xlu0 %3358
  %v3360 = vsel %vm2831, %v2815, 0.0
  %3361 = vadd.xlane.f32.xlu0 %v3360
  %v3362 = vpop.xlane.xlu0 %3361
  %v3363 = vsel %vm2831, %v2816, 0.0
  %3364 = vadd.xlane.f32.xlu0 %v3363
  %v3365 = vpop.xlane.xlu0 %3364
  %v3366 = vsel %vm2831, %v2817, 0.0
  %3367 = vadd.xlane.f32.xlu0 %v3366
  %v3368 = vpop.xlane.xlu0 %3367
  %v3369 = vsel %vm2831, %v2818, 0.0
  %3370 = vadd.xlane.f32.xlu0 %v3369
  %v3371 = vpop.xlane.xlu0 %3370
  %v3372 = vsel %vm2831, %v2819, 0.0
  %3373 = vadd.xlane.f32.xlu0 %v3372
  %v3374 = vpop.xlane.xlu0 %3373
  %v3375 = vsel %vm2831, %v2820, 0.0
  %3376 = vadd.xlane.f32.xlu0 %v3375
  %v3377 = vpop.xlane.xlu0 %3376
  %v3378 = vsel %vm2831, %v2821, 0.0
  %3379 = vadd.xlane.f32.xlu0 %v3378
  %v3380 = vpop.xlane.xlu0 %3379
  %v3381 = vsel %vm2831, %v2822, 0.0
  %3382 = vadd.xlane.f32.xlu0 %v3381
  %v3383 = vpop.xlane.xlu0 %3382
  %v3384 = vsel %vm2831, %v2823, 0.0
  %3385 = vadd.xlane.f32.xlu0 %v3384
  %v3386 = vpop.xlane.xlu0 %3385
  %v3387 = vsel %vm2831, %v2824, 0.0
  %3388 = vadd.xlane.f32.xlu0 %v3387
  %v3389 = vpop.xlane.xlu0 %3388
  %v3390 = vsel %vm2831, %v2825, 0.0
  %3391 = vadd.xlane.f32.xlu0 %v3390
  %v3392 = vpop.xlane.xlu0 %3391
  %v3393 = vsel %vm2831, %v2826, 0.0
  %3394 = vadd.xlane.f32.xlu0 %v3393
  %v3395 = vpop.xlane.xlu0 %3394
  %v3396 = vsel %vm2831, %v2827, 0.0
  %3397 = vadd.xlane.f32.xlu0 %v3396
  %v3398 = vpop.xlane.xlu0 %3397
  %v3399 = vsel %vm2831, %v2828, 0.0
  %3400 = vadd.xlane.f32.xlu0 %v3399
  %v3401 = vpop.xlane.xlu0 %3400
  %v3402 = vsel %vm2831, %v2829, 0.0
  %3403 = vadd.xlane.f32.xlu0 %v3402
  %v3404 = vpop.xlane.xlu0 %3403
  %v3405 = vsel %vm2831, %v2830, 0.0
  %3406 = vadd.xlane.f32.xlu0 %v3405
  %v3407 = vpop.xlane.xlu0 %3406
  %v3600 = vlaneseq
  %v3601 = vand.u32 %v3600, 127
  %v3602 = vperm.slane %v2834, %v3601
  %v3603 = vadd.s32 %v3601, 4294967288
  %v3604 = vperm.slane %v2837, %v3603
  %vm3605 = vcmask 130112
  %v3606 = vsel %vm3605, %v3604, %v3602
  %v3607 = vperm.slane %v2840, %v3601
  %v3608 = vperm.slane %v2843, %v3603
  %v3609 = vsel %vm3605, %v3608, %v3607
  %v3610 = vperm.slane %v2846, %v3601
  %v3611 = vperm.slane %v2849, %v3603
  %v3612 = vsel %vm3605, %v3611, %v3610
  %v3613 = vperm.slane %v2852, %v3601
  %v3614 = vperm.slane %v2855, %v3603
  %v3615 = vsel %vm3605, %v3614, %v3613
  %v3616 = vperm.slane %v2858, %v3601
  %v3617 = vperm.slane %v2861, %v3603
  %v3618 = vsel %vm3605, %v3617, %v3616
  %v3619 = vperm.slane %v2864, %v3601
  %v3620 = vperm.slane %v2867, %v3603
  %v3621 = vsel %vm3605, %v3620, %v3619
  %v3622 = vperm.slane %v2870, %v3601
  %v3623 = vperm.slane %v2873, %v3603
  %v3624 = vsel %vm3605, %v3623, %v3622
  %v3625 = vperm.slane %v2876, %v3601
  %v3626 = vperm.slane %v2879, %v3603
  %v3627 = vsel %vm3605, %v3626, %v3625
  %v3628 = vperm.slane %v2882, %v3601
  %v3629 = vperm.slane %v2885, %v3603
  %v3630 = vsel %vm3605, %v3629, %v3628
  %v3631 = vperm.slane %v2888, %v3601
  %v3632 = vperm.slane %v2891, %v3603
  %v3633 = vsel %vm3605, %v3632, %v3631
  %v3634 = vperm.slane %v2894, %v3601
  %v3635 = vperm.slane %v2897, %v3603
  %v3636 = vsel %vm3605, %v3635, %v3634
  %v3637 = vperm.slane %v2900, %v3601
  %v3638 = vperm.slane %v2903, %v3603
  %v3639 = vsel %vm3605, %v3638, %v3637
  %v3640 = vperm.slane %v2906, %v3601
  %v3641 = vperm.slane %v2909, %v3603
  %v3642 = vsel %vm3605, %v3641, %v3640
  %v3643 = vperm.slane %v2912, %v3601
  %v3644 = vperm.slane %v2915, %v3603
  %v3645 = vsel %vm3605, %v3644, %v3643
  %v3646 = vperm.slane %v2918, %v3601
  %v3647 = vperm.slane %v2921, %v3603
  %v3648 = vsel %vm3605, %v3647, %v3646
  %v3649 = vperm.slane %v2924, %v3601
  %v3650 = vperm.slane %v2927, %v3603
  %v3651 = vsel %vm3605, %v3650, %v3649
  %v3652 = vperm.slane %v2930, %v3601
  %v3653 = vperm.slane %v2933, %v3603
  %v3654 = vsel %vm3605, %v3653, %v3652
  %v3655 = vperm.slane %v2936, %v3601
  %v3656 = vperm.slane %v2939, %v3603
  %v3657 = vsel %vm3605, %v3656, %v3655
  %v3658 = vperm.slane %v2942, %v3601
  %v3659 = vperm.slane %v2945, %v3603
  %v3660 = vsel %vm3605, %v3659, %v3658
  %v3661 = vperm.slane %v2948, %v3601
  %v3662 = vperm.slane %v2951, %v3603
  %v3663 = vsel %vm3605, %v3662, %v3661
  %v3664 = vperm.slane %v2954, %v3601
  %v3665 = vperm.slane %v2957, %v3603
  %v3666 = vsel %vm3605, %v3665, %v3664
  %v3667 = vperm.slane %v2960, %v3601
  %v3668 = vperm.slane %v2963, %v3603
  %v3669 = vsel %vm3605, %v3668, %v3667
  %v3670 = vperm.slane %v2966, %v3601
  %v3671 = vperm.slane %v2969, %v3603
  %v3672 = vsel %vm3605, %v3671, %v3670
  %v3673 = vperm.slane %v2972, %v3601
  %v3674 = vperm.slane %v2975, %v3603
  %v3675 = vsel %vm3605, %v3674, %v3673
  %v3676 = vperm.slane %v2978, %v3601
  %v3677 = vperm.slane %v2981, %v3603
  %v3678 = vsel %vm3605, %v3677, %v3676
  %v3679 = vperm.slane %v2984, %v3601
  %v3680 = vperm.slane %v2987, %v3603
  %v3681 = vsel %vm3605, %v3680, %v3679
  %v3682 = vperm.slane %v2990, %v3601
  %v3683 = vperm.slane %v2993, %v3603
  %v3684 = vsel %vm3605, %v3683, %v3682
  %v3685 = vperm.slane %v2996, %v3601
  %v3686 = vperm.slane %v2999, %v3603
  %v3687 = vsel %vm3605, %v3686, %v3685
  %v3688 = vperm.slane %v3002, %v3601
  %v3689 = vperm.slane %v3005, %v3603
  %v3690 = vsel %vm3605, %v3689, %v3688
  %v3691 = vperm.slane %v3008, %v3601
  %v3692 = vperm.slane %v3011, %v3603
  %v3693 = vsel %vm3605, %v3692, %v3691
  %v3694 = vperm.slane %v3014, %v3601
  %v3695 = vperm.slane %v3017, %v3603
  %v3696 = vsel %vm3605, %v3695, %v3694
  %v3697 = vperm.slane %v3020, %v3601
  %v3698 = vperm.slane %v3023, %v3603
  %v3699 = vsel %vm3605, %v3698, %v3697
  %v3700 = vperm.slane %v3026, %v3601
  %v3701 = vperm.slane %v3029, %v3603
  %v3702 = vsel %vm3605, %v3701, %v3700
  %v3703 = vperm.slane %v3032, %v3601
  %v3704 = vperm.slane %v3035, %v3603
  %v3705 = vsel %vm3605, %v3704, %v3703
  %v3706 = vperm.slane %v3038, %v3601
  %v3707 = vperm.slane %v3041, %v3603
  %v3708 = vsel %vm3605, %v3707, %v3706
  %v3709 = vperm.slane %v3044, %v3601
  %v3710 = vperm.slane %v3047, %v3603
  %v3711 = vsel %vm3605, %v3710, %v3709
  %v3712 = vperm.slane %v3050, %v3601
  %v3713 = vperm.slane %v3053, %v3603
  %v3714 = vsel %vm3605, %v3713, %v3712
  %v3715 = vperm.slane %v3056, %v3601
  %v3716 = vperm.slane %v3059, %v3603
  %v3717 = vsel %vm3605, %v3716, %v3715
  %v3718 = vperm.slane %v3062, %v3601
  %v3719 = vperm.slane %v3065, %v3603
  %v3720 = vsel %vm3605, %v3719, %v3718
  %v3721 = vperm.slane %v3068, %v3601
  %v3722 = vperm.slane %v3071, %v3603
  %v3723 = vsel %vm3605, %v3722, %v3721
  %v3724 = vperm.slane %v3074, %v3601
  %v3725 = vperm.slane %v3077, %v3603
  %v3726 = vsel %vm3605, %v3725, %v3724
  %v3727 = vperm.slane %v3080, %v3601
  %v3728 = vperm.slane %v3083, %v3603
  %v3729 = vsel %vm3605, %v3728, %v3727
  %v3730 = vperm.slane %v3086, %v3601
  %v3731 = vperm.slane %v3089, %v3603
  %v3732 = vsel %vm3605, %v3731, %v3730
  %v3733 = vperm.slane %v3092, %v3601
  %v3734 = vperm.slane %v3095, %v3603
  %v3735 = vsel %vm3605, %v3734, %v3733
  %v3736 = vperm.slane %v3098, %v3601
  %v3737 = vperm.slane %v3101, %v3603
  %v3738 = vsel %vm3605, %v3737, %v3736
  %v3739 = vperm.slane %v3104, %v3601
  %v3740 = vperm.slane %v3107, %v3603
  %v3741 = vsel %vm3605, %v3740, %v3739
  %v3742 = vperm.slane %v3110, %v3601
  %v3743 = vperm.slane %v3113, %v3603
  %v3744 = vsel %vm3605, %v3743, %v3742
  %v3745 = vperm.slane %v3116, %v3601
  %v3746 = vperm.slane %v3119, %v3603
  %v3747 = vsel %vm3605, %v3746, %v3745
  %v3748 = vperm.slane %v3122, %v3601
  %v3749 = vperm.slane %v3125, %v3603
  %v3750 = vsel %vm3605, %v3749, %v3748
  %v3751 = vperm.slane %v3128, %v3601
  %v3752 = vperm.slane %v3131, %v3603
  %v3753 = vsel %vm3605, %v3752, %v3751
  %v3754 = vperm.slane %v3134, %v3601
  %v3755 = vperm.slane %v3137, %v3603
  %v3756 = vsel %vm3605, %v3755, %v3754
  %v3757 = vperm.slane %v3140, %v3601
  %v3758 = vperm.slane %v3143, %v3603
  %v3759 = vsel %vm3605, %v3758, %v3757
  %v3760 = vperm.slane %v3146, %v3601
  %v3761 = vperm.slane %v3149, %v3603
  %v3762 = vsel %vm3605, %v3761, %v3760
  %v3763 = vperm.slane %v3152, %v3601
  %v3764 = vperm.slane %v3155, %v3603
  %v3765 = vsel %vm3605, %v3764, %v3763
  %v3766 = vperm.slane %v3158, %v3601
  %v3767 = vperm.slane %v3161, %v3603
  %v3768 = vsel %vm3605, %v3767, %v3766
  %v3769 = vperm.slane %v3164, %v3601
  %v3770 = vperm.slane %v3167, %v3603
  %v3771 = vsel %vm3605, %v3770, %v3769
  %v3772 = vperm.slane %v3170, %v3601
  %v3773 = vperm.slane %v3173, %v3603
  %v3774 = vsel %vm3605, %v3773, %v3772
  %v3775 = vperm.slane %v3176, %v3601
  %v3776 = vperm.slane %v3179, %v3603
  %v3777 = vsel %vm3605, %v3776, %v3775
  %v3778 = vperm.slane %v3182, %v3601
  %v3779 = vperm.slane %v3185, %v3603
  %v3780 = vsel %vm3605, %v3779, %v3778
  %v3781 = vperm.slane %v3188, %v3601
  %v3782 = vperm.slane %v3191, %v3603
  %v3783 = vsel %vm3605, %v3782, %v3781
  %v3784 = vperm.slane %v3194, %v3601
  %v3785 = vperm.slane %v3197, %v3603
  %v3786 = vsel %vm3605, %v3785, %v3784
  %v3787 = vperm.slane %v3200, %v3601
  %v3788 = vperm.slane %v3203, %v3603
  %v3789 = vsel %vm3605, %v3788, %v3787
  %v3790 = vperm.slane %v3206, %v3601
  %v3791 = vperm.slane %v3209, %v3603
  %v3792 = vsel %vm3605, %v3791, %v3790
  %v3793 = vperm.slane %v3212, %v3601
  %v3794 = vperm.slane %v3215, %v3603
  %v3795 = vsel %vm3605, %v3794, %v3793
  %v3796 = vperm.slane %v3218, %v3601
  %v3797 = vperm.slane %v3221, %v3603
  %v3798 = vsel %vm3605, %v3797, %v3796
  %v3799 = vperm.slane %v3224, %v3601
  %v3800 = vperm.slane %v3227, %v3603
  %v3801 = vsel %vm3605, %v3800, %v3799
  %v3802 = vperm.slane %v3230, %v3601
  %v3803 = vperm.slane %v3233, %v3603
  %v3804 = vsel %vm3605, %v3803, %v3802
  %v3805 = vperm.slane %v3236, %v3601
  %v3806 = vperm.slane %v3239, %v3603
  %v3807 = vsel %vm3605, %v3806, %v3805
  %v3808 = vperm.slane %v3242, %v3601
  %v3809 = vperm.slane %v3245, %v3603
  %v3810 = vsel %vm3605, %v3809, %v3808
  %v3811 = vperm.slane %v3248, %v3601
  %v3812 = vperm.slane %v3251, %v3603
  %v3813 = vsel %vm3605, %v3812, %v3811
  %v3814 = vperm.slane %v3254, %v3601
  %v3815 = vperm.slane %v3257, %v3603
  %v3816 = vsel %vm3605, %v3815, %v3814
  %v3817 = vperm.slane %v3260, %v3601
  %v3818 = vperm.slane %v3263, %v3603
  %v3819 = vsel %vm3605, %v3818, %v3817
  %v3820 = vperm.slane %v3266, %v3601
  %v3821 = vperm.slane %v3269, %v3603
  %v3822 = vsel %vm3605, %v3821, %v3820
  %v3823 = vperm.slane %v3272, %v3601
  %v3824 = vperm.slane %v3275, %v3603
  %v3825 = vsel %vm3605, %v3824, %v3823
  %v3826 = vperm.slane %v3278, %v3601
  %v3827 = vperm.slane %v3281, %v3603
  %v3828 = vsel %vm3605, %v3827, %v3826
  %v3829 = vperm.slane %v3284, %v3601
  %v3830 = vperm.slane %v3287, %v3603
  %v3831 = vsel %vm3605, %v3830, %v3829
  %v3832 = vperm.slane %v3290, %v3601
  %v3833 = vperm.slane %v3293, %v3603
  %v3834 = vsel %vm3605, %v3833, %v3832
  %v3835 = vperm.slane %v3296, %v3601
  %v3836 = vperm.slane %v3299, %v3603
  %v3837 = vsel %vm3605, %v3836, %v3835
  %v3838 = vperm.slane %v3302, %v3601
  %v3839 = vperm.slane %v3305, %v3603
  %v3840 = vsel %vm3605, %v3839, %v3838
  %v3841 = vperm.slane %v3308, %v3601
  %v3842 = vperm.slane %v3311, %v3603
  %v3843 = vsel %vm3605, %v3842, %v3841
  %v3844 = vperm.slane %v3314, %v3601
  %v3845 = vperm.slane %v3317, %v3603
  %v3846 = vsel %vm3605, %v3845, %v3844
  %v3847 = vperm.slane %v3320, %v3601
  %v3848 = vperm.slane %v3323, %v3603
  %v3849 = vsel %vm3605, %v3848, %v3847
  %v3850 = vperm.slane %v3326, %v3601
  %v3851 = vperm.slane %v3329, %v3603
  %v3852 = vsel %vm3605, %v3851, %v3850
  %v3853 = vperm.slane %v3332, %v3601
  %v3854 = vperm.slane %v3335, %v3603
  %v3855 = vsel %vm3605, %v3854, %v3853
  %v3856 = vperm.slane %v3338, %v3601
  %v3857 = vperm.slane %v3341, %v3603
  %v3858 = vsel %vm3605, %v3857, %v3856
  %v3859 = vperm.slane %v3344, %v3601
  %v3860 = vperm.slane %v3347, %v3603
  %v3861 = vsel %vm3605, %v3860, %v3859
  %v3862 = vperm.slane %v3350, %v3601
  %v3863 = vperm.slane %v3353, %v3603
  %v3864 = vsel %vm3605, %v3863, %v3862
  %v3865 = vperm.slane %v3356, %v3601
  %v3866 = vperm.slane %v3359, %v3603
  %v3867 = vsel %vm3605, %v3866, %v3865
  %v3868 = vperm.slane %v3362, %v3601
  %v3869 = vperm.slane %v3365, %v3603
  %v3870 = vsel %vm3605, %v3869, %v3868
  %v3871 = vperm.slane %v3368, %v3601
  %v3872 = vperm.slane %v3371, %v3603
  %v3873 = vsel %vm3605, %v3872, %v3871
  %v3874 = vperm.slane %v3374, %v3601
  %v3875 = vperm.slane %v3377, %v3603
  %v3876 = vsel %vm3605, %v3875, %v3874
  %v3877 = vperm.slane %v3380, %v3601
  %v3878 = vperm.slane %v3383, %v3603
  %v3879 = vsel %vm3605, %v3878, %v3877
  %v3880 = vperm.slane %v3386, %v3601
  %v3881 = vperm.slane %v3389, %v3603
  %v3882 = vsel %vm3605, %v3881, %v3880
  %v3883 = vperm.slane %v3392, %v3601
  %v3884 = vperm.slane %v3395, %v3603
  %v3885 = vsel %vm3605, %v3884, %v3883
  %v3886 = vperm.slane %v3398, %v3601
  %v3887 = vperm.slane %v3401, %v3603
  %v3888 = vsel %vm3605, %v3887, %v3886
  %v3889 = vperm.slane %v3404, %v3601
  %v3890 = vperm.slane %v3407, %v3603
  %v3891 = vsel %vm3605, %v3890, %v3889
  %vm3892 = vcmask 1041409
  %v3893 = vsel %vm3892, %v3609, %v3606
  %vm3894 = vcmask 1042434
  %v3895 = vsel %vm3894, %v3612, %v3893
  %vm3896 = vcmask 1043459
  %v3897 = vsel %vm3896, %v3615, %v3895
  %vm3898 = vcmask 1044484
  %v3899 = vsel %vm3898, %v3618, %v3897
  %vm3900 = vcmask 1045509
  %v3901 = vsel %vm3900, %v3621, %v3899
  %vm3902 = vcmask 1046534
  %v3903 = vsel %vm3902, %v3624, %v3901
  %vm3904 = vcmask 1047559
  %v3905 = vsel %vm3904, %v3627, %v3903
  %v3906 = vsel %vm3892, %v3633, %v3630
  %v3907 = vsel %vm3894, %v3636, %v3906
  %v3908 = vsel %vm3896, %v3639, %v3907
  %v3909 = vsel %vm3898, %v3642, %v3908
  %v3910 = vsel %vm3900, %v3645, %v3909
  %v3911 = vsel %vm3902, %v3648, %v3910
  %v3912 = vsel %vm3904, %v3651, %v3911
  %v3913 = vsel %vm3892, %v3657, %v3654
  %v3914 = vsel %vm3894, %v3660, %v3913
  %v3915 = vsel %vm3896, %v3663, %v3914
  %v3916 = vsel %vm3898, %v3666, %v3915
  %v3917 = vsel %vm3900, %v3669, %v3916
  %v3918 = vsel %vm3902, %v3672, %v3917
  %v3919 = vsel %vm3904, %v3675, %v3918
  %v3920 = vsel %vm3892, %v3681, %v3678
  %v3921 = vsel %vm3894, %v3684, %v3920
  %v3922 = vsel %vm3896, %v3687, %v3921
  %v3923 = vsel %vm3898, %v3690, %v3922
  %v3924 = vsel %vm3900, %v3693, %v3923
  %v3925 = vsel %vm3902, %v3696, %v3924
  %v3926 = vsel %vm3904, %v3699, %v3925
  %v3927 = vsel %vm3892, %v3705, %v3702
  %v3928 = vsel %vm3894, %v3708, %v3927
  %v3929 = vsel %vm3896, %v3711, %v3928
  %v3930 = vsel %vm3898, %v3714, %v3929
  %v3931 = vsel %vm3900, %v3717, %v3930
  %v3932 = vsel %vm3902, %v3720, %v3931
  %v3933 = vsel %vm3904, %v3723, %v3932
  %v3934 = vsel %vm3892, %v3729, %v3726
  %v3935 = vsel %vm3894, %v3732, %v3934
  %v3936 = vsel %vm3896, %v3735, %v3935
  %v3937 = vsel %vm3898, %v3738, %v3936
  %v3938 = vsel %vm3900, %v3741, %v3937
  %v3939 = vsel %vm3902, %v3744, %v3938
  %v3940 = vsel %vm3904, %v3747, %v3939
  %v3941 = vsel %vm3892, %v3753, %v3750
  %v3942 = vsel %vm3894, %v3756, %v3941
  %v3943 = vsel %vm3896, %v3759, %v3942
  %v3944 = vsel %vm3898, %v3762, %v3943
  %v3945 = vsel %vm3900, %v3765, %v3944
  %v3946 = vsel %vm3902, %v3768, %v3945
  %v3947 = vsel %vm3904, %v3771, %v3946
  %v3948 = vsel %vm3892, %v3777, %v3774
  %v3949 = vsel %vm3894, %v3780, %v3948
  %v3950 = vsel %vm3896, %v3783, %v3949
  %v3951 = vsel %vm3898, %v3786, %v3950
  %v3952 = vsel %vm3900, %v3789, %v3951
  %v3953 = vsel %vm3902, %v3792, %v3952
  %v3954 = vsel %vm3904, %v3795, %v3953
  %v3955 = vsel %vm3892, %v3801, %v3798
  %v3956 = vsel %vm3894, %v3804, %v3955
  %v3957 = vsel %vm3896, %v3807, %v3956
  %v3958 = vsel %vm3898, %v3810, %v3957
  %v3959 = vsel %vm3900, %v3813, %v3958
  %v3960 = vsel %vm3902, %v3816, %v3959
  %v3961 = vsel %vm3904, %v3819, %v3960
  %v3962 = vsel %vm3892, %v3825, %v3822
  %v3963 = vsel %vm3894, %v3828, %v3962
  %v3964 = vsel %vm3896, %v3831, %v3963
  %v3965 = vsel %vm3898, %v3834, %v3964
  %v3966 = vsel %vm3900, %v3837, %v3965
  %v3967 = vsel %vm3902, %v3840, %v3966
  %v3968 = vsel %vm3904, %v3843, %v3967
  %v3969 = vsel %vm3892, %v3849, %v3846
  %v3970 = vsel %vm3894, %v3852, %v3969
  %v3971 = vsel %vm3896, %v3855, %v3970
  %v3972 = vsel %vm3898, %v3858, %v3971
  %v3973 = vsel %vm3900, %v3861, %v3972
  %v3974 = vsel %vm3902, %v3864, %v3973
  %v3975 = vsel %vm3904, %v3867, %v3974
  %v3976 = vsel %vm3892, %v3873, %v3870
  %v3977 = vsel %vm3894, %v3876, %v3976
  %v3978 = vsel %vm3896, %v3879, %v3977
  %v3979 = vsel %vm3898, %v3882, %v3978
  %v3980 = vsel %vm3900, %v3885, %v3979
  %v3981 = vsel %vm3902, %v3888, %v3980
  %v3982 = vsel %vm3904, %v3891, %v3981
  %v3995 = vsel %vm2831, %v3905, -inf
  %3996 = vmax.xlane.f32.xlu0 %v3995
  %v3997 = vpop.xlane.xlu0 %3996
  %v3998 = vsel %vm2831, %v3912, -inf
  %3999 = vmax.xlane.f32.xlu0 %v3998
  %v4000 = vpop.xlane.xlu0 %3999
  %v4001 = vsel %vm2831, %v3919, -inf
  %4002 = vmax.xlane.f32.xlu0 %v4001
  %v4003 = vpop.xlane.xlu0 %4002
  %v4004 = vsel %vm2831, %v3926, -inf
  %4005 = vmax.xlane.f32.xlu0 %v4004
  %v4006 = vpop.xlane.xlu0 %4005
  %v4007 = vsel %vm2831, %v3933, -inf
  %4008 = vmax.xlane.f32.xlu0 %v4007
  %v4009 = vpop.xlane.xlu0 %4008
  %v4010 = vsel %vm2831, %v3940, -inf
  %4011 = vmax.xlane.f32.xlu0 %v4010
  %v4012 = vpop.xlane.xlu0 %4011
  %v4013 = vsel %vm2831, %v3947, -inf
  %4014 = vmax.xlane.f32.xlu0 %v4013
  %v4015 = vpop.xlane.xlu0 %4014
  %v4016 = vsel %vm2831, %v3954, -inf
  %4017 = vmax.xlane.f32.xlu0 %v4016
  %v4018 = vpop.xlane.xlu0 %4017
  %v4019 = vsel %vm2831, %v3961, -inf
  %4020 = vmax.xlane.f32.xlu0 %v4019
  %v4021 = vpop.xlane.xlu0 %4020
  %v4022 = vsel %vm2831, %v3968, -inf
  %4023 = vmax.xlane.f32.xlu0 %v4022
  %v4024 = vpop.xlane.xlu0 %4023
  %v4025 = vsel %vm2831, %v3975, -inf
  %4026 = vmax.xlane.f32.xlu0 %v4025
  %v4027 = vpop.xlane.xlu0 %4026
  %v4028 = vsel %vm2831, %v3982, -inf
  %4029 = vmax.xlane.f32.xlu0 %v4028
  %v4030 = vpop.xlane.xlu0 %4029
  %v4043 = vperm.slane %v3997, 0
  %v4044 = vperm.slane %v3997, 1
  %v4045 = vperm.slane %v3997, 2
  %v4046 = vperm.slane %v3997, 3
  %v4047 = vperm.slane %v3997, 4
  %v4048 = vperm.slane %v3997, 5
  %v4049 = vperm.slane %v3997, 6
  %v4050 = vperm.slane %v3997, 7
  %v4051 = vperm.slane %v4000, 0
  %v4052 = vperm.slane %v4000, 1
  %v4053 = vperm.slane %v4000, 2
  %v4054 = vperm.slane %v4000, 3
  %v4055 = vperm.slane %v4000, 4
  %v4056 = vperm.slane %v4000, 5
  %v4057 = vperm.slane %v4000, 6
  %v4058 = vperm.slane %v4000, 7
  %v4059 = vperm.slane %v4003, 0
  %v4060 = vperm.slane %v4003, 1
  %v4061 = vperm.slane %v4003, 2
  %v4062 = vperm.slane %v4003, 3
  %v4063 = vperm.slane %v4003, 4
  %v4064 = vperm.slane %v4003, 5
  %v4065 = vperm.slane %v4003, 6
  %v4066 = vperm.slane %v4003, 7
  %v4067 = vperm.slane %v4006, 0
  %v4068 = vperm.slane %v4006, 1
  %v4069 = vperm.slane %v4006, 2
  %v4070 = vperm.slane %v4006, 3
  %v4071 = vperm.slane %v4006, 4
  %v4072 = vperm.slane %v4006, 5
  %v4073 = vperm.slane %v4006, 6
  %v4074 = vperm.slane %v4006, 7
  %v4075 = vperm.slane %v4009, 0
  %v4076 = vperm.slane %v4009, 1
  %v4077 = vperm.slane %v4009, 2
  %v4078 = vperm.slane %v4009, 3
  %v4079 = vperm.slane %v4009, 4
  %v4080 = vperm.slane %v4009, 5
  %v4081 = vperm.slane %v4009, 6
  %v4082 = vperm.slane %v4009, 7
  %v4083 = vperm.slane %v4012, 0
  %v4084 = vperm.slane %v4012, 1
  %v4085 = vperm.slane %v4012, 2
  %v4086 = vperm.slane %v4012, 3
  %v4087 = vperm.slane %v4012, 4
  %v4088 = vperm.slane %v4012, 5
  %v4089 = vperm.slane %v4012, 6
  %v4090 = vperm.slane %v4012, 7
  %v4091 = vperm.slane %v4015, 0
  %v4092 = vperm.slane %v4015, 1
  %v4093 = vperm.slane %v4015, 2
  %v4094 = vperm.slane %v4015, 3
  %v4095 = vperm.slane %v4015, 4
  %v4096 = vperm.slane %v4015, 5
  %v4097 = vperm.slane %v4015, 6
  %v4098 = vperm.slane %v4015, 7
  %v4099 = vperm.slane %v4018, 0
  %v4100 = vperm.slane %v4018, 1
  %v4101 = vperm.slane %v4018, 2
  %v4102 = vperm.slane %v4018, 3
  %v4103 = vperm.slane %v4018, 4
  %v4104 = vperm.slane %v4018, 5
  %v4105 = vperm.slane %v4018, 6
  %v4106 = vperm.slane %v4018, 7
  %v4107 = vperm.slane %v4021, 0
  %v4108 = vperm.slane %v4021, 1
  %v4109 = vperm.slane %v4021, 2
  %v4110 = vperm.slane %v4021, 3
  %v4111 = vperm.slane %v4021, 4
  %v4112 = vperm.slane %v4021, 5
  %v4113 = vperm.slane %v4021, 6
  %v4114 = vperm.slane %v4021, 7
  %v4115 = vperm.slane %v4024, 0
  %v4116 = vperm.slane %v4024, 1
  %v4117 = vperm.slane %v4024, 2
  %v4118 = vperm.slane %v4024, 3
  %v4119 = vperm.slane %v4024, 4
  %v4120 = vperm.slane %v4024, 5
  %v4121 = vperm.slane %v4024, 6
  %v4122 = vperm.slane %v4024, 7
  %v4123 = vperm.slane %v4027, 0
  %v4124 = vperm.slane %v4027, 1
  %v4125 = vperm.slane %v4027, 2
  %v4126 = vperm.slane %v4027, 3
  %v4127 = vperm.slane %v4027, 4
  %v4128 = vperm.slane %v4027, 5
  %v4129 = vperm.slane %v4027, 6
  %v4130 = vperm.slane %v4027, 7
  %v4131 = vperm.slane %v4030, 0
  %v4132 = vperm.slane %v4030, 1
  %v4133 = vperm.slane %v4030, 2
  %v4134 = vperm.slane %v4030, 3
  %v4135 = vperm.slane %v4030, 4
  %v4136 = vperm.slane %v4030, 5
  %v4137 = vperm.slane %v4030, 6
  %v4138 = vperm.slane %v4030, 7
  %v4235 = vsub.f32 %v2834, %v4043
  %v4236 = vsub.f32 %v2837, %v4043
  %v4237 = vsub.f32 %v2840, %v4044
  %v4238 = vsub.f32 %v2843, %v4044
  %v4239 = vsub.f32 %v2846, %v4045
  %v4240 = vsub.f32 %v2849, %v4045
  %v4241 = vsub.f32 %v2852, %v4046
  %v4242 = vsub.f32 %v2855, %v4046
  %v4243 = vsub.f32 %v2858, %v4047
  %v4244 = vsub.f32 %v2861, %v4047
  %v4245 = vsub.f32 %v2864, %v4048
  %v4246 = vsub.f32 %v2867, %v4048
  %v4247 = vsub.f32 %v2870, %v4049
  %v4248 = vsub.f32 %v2873, %v4049
  %v4249 = vsub.f32 %v2876, %v4050
  %v4250 = vsub.f32 %v2879, %v4050
  %v4251 = vsub.f32 %v2882, %v4051
  %v4252 = vsub.f32 %v2885, %v4051
  %v4253 = vsub.f32 %v2888, %v4052
  %v4254 = vsub.f32 %v2891, %v4052
  %v4255 = vsub.f32 %v2894, %v4053
  %v4256 = vsub.f32 %v2897, %v4053
  %v4257 = vsub.f32 %v2900, %v4054
  %v4258 = vsub.f32 %v2903, %v4054
  %v4259 = vsub.f32 %v2906, %v4055
  %v4260 = vsub.f32 %v2909, %v4055
  %v4261 = vsub.f32 %v2912, %v4056
  %v4262 = vsub.f32 %v2915, %v4056
  %v4263 = vsub.f32 %v2918, %v4057
  %v4264 = vsub.f32 %v2921, %v4057
  %v4265 = vsub.f32 %v2924, %v4058
  %v4266 = vsub.f32 %v2927, %v4058
  %v4267 = vsub.f32 %v2930, %v4059
  %v4268 = vsub.f32 %v2933, %v4059
  %v4269 = vsub.f32 %v2936, %v4060
  %v4270 = vsub.f32 %v2939, %v4060
  %v4271 = vsub.f32 %v2942, %v4061
  %v4272 = vsub.f32 %v2945, %v4061
  %v4273 = vsub.f32 %v2948, %v4062
  %v4274 = vsub.f32 %v2951, %v4062
  %v4275 = vsub.f32 %v2954, %v4063
  %v4276 = vsub.f32 %v2957, %v4063
  %v4277 = vsub.f32 %v2960, %v4064
  %v4278 = vsub.f32 %v2963, %v4064
  %v4279 = vsub.f32 %v2966, %v4065
  %v4280 = vsub.f32 %v2969, %v4065
  %v4281 = vsub.f32 %v2972, %v4066
  %v4282 = vsub.f32 %v2975, %v4066
  %v4283 = vsub.f32 %v2978, %v4067
  %v4284 = vsub.f32 %v2981, %v4067
  %v4285 = vsub.f32 %v2984, %v4068
  %v4286 = vsub.f32 %v2987, %v4068
  %v4287 = vsub.f32 %v2990, %v4069
  %v4288 = vsub.f32 %v2993, %v4069
  %v4289 = vsub.f32 %v2996, %v4070
  %v4290 = vsub.f32 %v2999, %v4070
  %v4291 = vsub.f32 %v3002, %v4071
  %v4292 = vsub.f32 %v3005, %v4071
  %v4293 = vsub.f32 %v3008, %v4072
  %v4294 = vsub.f32 %v3011, %v4072
  %v4295 = vsub.f32 %v3014, %v4073
  %v4296 = vsub.f32 %v3017, %v4073
  %v4297 = vsub.f32 %v3020, %v4074
  %v4298 = vsub.f32 %v3023, %v4074
  %v4299 = vsub.f32 %v3026, %v4075
  %v4300 = vsub.f32 %v3029, %v4075
  %v4301 = vsub.f32 %v3032, %v4076
  %v4302 = vsub.f32 %v3035, %v4076
  %v4303 = vsub.f32 %v3038, %v4077
  %v4304 = vsub.f32 %v3041, %v4077
  %v4305 = vsub.f32 %v3044, %v4078
  %v4306 = vsub.f32 %v3047, %v4078
  %v4307 = vsub.f32 %v3050, %v4079
  %v4308 = vsub.f32 %v3053, %v4079
  %v4309 = vsub.f32 %v3056, %v4080
  %v4310 = vsub.f32 %v3059, %v4080
  %v4311 = vsub.f32 %v3062, %v4081
  %v4312 = vsub.f32 %v3065, %v4081
  %v4313 = vsub.f32 %v3068, %v4082
  %v4314 = vsub.f32 %v3071, %v4082
  %v4315 = vsub.f32 %v3074, %v4083
  %v4316 = vsub.f32 %v3077, %v4083
  %v4317 = vsub.f32 %v3080, %v4084
  %v4318 = vsub.f32 %v3083, %v4084
  %v4319 = vsub.f32 %v3086, %v4085
  %v4320 = vsub.f32 %v3089, %v4085
  %v4321 = vsub.f32 %v3092, %v4086
  %v4322 = vsub.f32 %v3095, %v4086
  %v4323 = vsub.f32 %v3098, %v4087
  %v4324 = vsub.f32 %v3101, %v4087
  %v4325 = vsub.f32 %v3104, %v4088
  %v4326 = vsub.f32 %v3107, %v4088
  %v4327 = vsub.f32 %v3110, %v4089
  %v4328 = vsub.f32 %v3113, %v4089
  %v4329 = vsub.f32 %v3116, %v4090
  %v4330 = vsub.f32 %v3119, %v4090
  %v4331 = vsub.f32 %v3122, %v4091
  %v4332 = vsub.f32 %v3125, %v4091
  %v4333 = vsub.f32 %v3128, %v4092
  %v4334 = vsub.f32 %v3131, %v4092
  %v4335 = vsub.f32 %v3134, %v4093
  %v4336 = vsub.f32 %v3137, %v4093
  %v4337 = vsub.f32 %v3140, %v4094
  %v4338 = vsub.f32 %v3143, %v4094
  %v4339 = vsub.f32 %v3146, %v4095
  %v4340 = vsub.f32 %v3149, %v4095
  %v4341 = vsub.f32 %v3152, %v4096
  %v4342 = vsub.f32 %v3155, %v4096
  %v4343 = vsub.f32 %v3158, %v4097
  %v4344 = vsub.f32 %v3161, %v4097
  %v4345 = vsub.f32 %v3164, %v4098
  %v4346 = vsub.f32 %v3167, %v4098
  %v4347 = vsub.f32 %v3170, %v4099
  %v4348 = vsub.f32 %v3173, %v4099
  %v4349 = vsub.f32 %v3176, %v4100
  %v4350 = vsub.f32 %v3179, %v4100
  %v4351 = vsub.f32 %v3182, %v4101
  %v4352 = vsub.f32 %v3185, %v4101
  %v4353 = vsub.f32 %v3188, %v4102
  %v4354 = vsub.f32 %v3191, %v4102
  %v4355 = vsub.f32 %v3194, %v4103
  %v4356 = vsub.f32 %v3197, %v4103
  %v4357 = vsub.f32 %v3200, %v4104
  %v4358 = vsub.f32 %v3203, %v4104
  %v4359 = vsub.f32 %v3206, %v4105
  %v4360 = vsub.f32 %v3209, %v4105
  %v4361 = vsub.f32 %v3212, %v4106
  %v4362 = vsub.f32 %v3215, %v4106
  %v4363 = vsub.f32 %v3218, %v4107
  %v4364 = vsub.f32 %v3221, %v4107
  %v4365 = vsub.f32 %v3224, %v4108
  %v4366 = vsub.f32 %v3227, %v4108
  %v4367 = vsub.f32 %v3230, %v4109
  %v4368 = vsub.f32 %v3233, %v4109
  %v4369 = vsub.f32 %v3236, %v4110
  %v4370 = vsub.f32 %v3239, %v4110
  %v4371 = vsub.f32 %v3242, %v4111
  %v4372 = vsub.f32 %v3245, %v4111
  %v4373 = vsub.f32 %v3248, %v4112
  %v4374 = vsub.f32 %v3251, %v4112
  %v4375 = vsub.f32 %v3254, %v4113
  %v4376 = vsub.f32 %v3257, %v4113
  %v4377 = vsub.f32 %v3260, %v4114
  %v4378 = vsub.f32 %v3263, %v4114
  %v4379 = vsub.f32 %v3266, %v4115
  %v4380 = vsub.f32 %v3269, %v4115
  %v4381 = vsub.f32 %v3272, %v4116
  %v4382 = vsub.f32 %v3275, %v4116
  %v4383 = vsub.f32 %v3278, %v4117
  %v4384 = vsub.f32 %v3281, %v4117
  %v4385 = vsub.f32 %v3284, %v4118
  %v4386 = vsub.f32 %v3287, %v4118
  %v4387 = vsub.f32 %v3290, %v4119
  %v4388 = vsub.f32 %v3293, %v4119
  %v4389 = vsub.f32 %v3296, %v4120
  %v4390 = vsub.f32 %v3299, %v4120
  %v4391 = vsub.f32 %v3302, %v4121
  %v4392 = vsub.f32 %v3305, %v4121
  %v4393 = vsub.f32 %v3308, %v4122
  %v4394 = vsub.f32 %v3311, %v4122
  %v4395 = vsub.f32 %v3314, %v4123
  %v4396 = vsub.f32 %v3317, %v4123
  %v4397 = vsub.f32 %v3320, %v4124
  %v4398 = vsub.f32 %v3323, %v4124
  %v4399 = vsub.f32 %v3326, %v4125
  %v4400 = vsub.f32 %v3329, %v4125
  %v4401 = vsub.f32 %v3332, %v4126
  %v4402 = vsub.f32 %v3335, %v4126
  %v4403 = vsub.f32 %v3338, %v4127
  %v4404 = vsub.f32 %v3341, %v4127
  %v4405 = vsub.f32 %v3344, %v4128
  %v4406 = vsub.f32 %v3347, %v4128
  %v4407 = vsub.f32 %v3350, %v4129
  %v4408 = vsub.f32 %v3353, %v4129
  %v4409 = vsub.f32 %v3356, %v4130
  %v4410 = vsub.f32 %v3359, %v4130
  %v4411 = vsub.f32 %v3362, %v4131
  %v4412 = vsub.f32 %v3365, %v4131
  %v4413 = vsub.f32 %v3368, %v4132
  %v4414 = vsub.f32 %v3371, %v4132
  %v4415 = vsub.f32 %v3374, %v4133
  %v4416 = vsub.f32 %v3377, %v4133
  %v4417 = vsub.f32 %v3380, %v4134
  %v4418 = vsub.f32 %v3383, %v4134
  %v4419 = vsub.f32 %v3386, %v4135
  %v4420 = vsub.f32 %v3389, %v4135
  %v4421 = vsub.f32 %v3392, %v4136
  %v4422 = vsub.f32 %v3395, %v4136
  %v4423 = vsub.f32 %v3398, %v4137
  %v4424 = vsub.f32 %v3401, %v4137
  %v4425 = vsub.f32 %v3404, %v4138
  %v4426 = vsub.f32 %v3407, %v4138
  %v4427 = vmul.f32 %v4235, 1.442695
  %v4428 = vpow.pop %v4427
  %v4429 = vmul.f32 %v4236, 1.442695
  %v4430 = vpow.pop %v4429
  %v4431 = vmul.f32 %v4237, 1.442695
  %v4432 = vpow.pop %v4431
  %v4433 = vmul.f32 %v4238, 1.442695
  %v4434 = vpow.pop %v4433
  %v4435 = vmul.f32 %v4239, 1.442695
  %v4436 = vpow.pop %v4435
  %v4437 = vmul.f32 %v4240, 1.442695
  %v4438 = vpow.pop %v4437
  %v4439 = vmul.f32 %v4241, 1.442695
  %v4440 = vpow.pop %v4439
  %v4441 = vmul.f32 %v4242, 1.442695
  %v4442 = vpow.pop %v4441
  %v4443 = vmul.f32 %v4243, 1.442695
  %v4444 = vpow.pop %v4443
  %v4445 = vmul.f32 %v4244, 1.442695
  %v4446 = vpow.pop %v4445
  %v4447 = vmul.f32 %v4245, 1.442695
  %v4448 = vpow.pop %v4447
  %v4449 = vmul.f32 %v4246, 1.442695
  %v4450 = vpow.pop %v4449
  %v4451 = vmul.f32 %v4247, 1.442695
  %v4452 = vpow.pop %v4451
  %v4453 = vmul.f32 %v4248, 1.442695
  %v4454 = vpow.pop %v4453
  %v4455 = vmul.f32 %v4249, 1.442695
  %v4456 = vpow.pop %v4455
  %v4457 = vmul.f32 %v4250, 1.442695
  %v4458 = vpow.pop %v4457
  %v4459 = vmul.f32 %v4251, 1.442695
  %v4460 = vpow.pop %v4459
  %v4461 = vmul.f32 %v4252, 1.442695
  %v4462 = vpow.pop %v4461
  %v4463 = vmul.f32 %v4253, 1.442695
  %v4464 = vpow.pop %v4463
  %v4465 = vmul.f32 %v4254, 1.442695
  %v4466 = vpow.pop %v4465
  %v4467 = vmul.f32 %v4255, 1.442695
  %v4468 = vpow.pop %v4467
  %v4469 = vmul.f32 %v4256, 1.442695
  %v4470 = vpow.pop %v4469
  %v4471 = vmul.f32 %v4257, 1.442695
  %v4472 = vpow.pop %v4471
  %v4473 = vmul.f32 %v4258, 1.442695
  %v4474 = vpow.pop %v4473
  %v4475 = vmul.f32 %v4259, 1.442695
  %v4476 = vpow.pop %v4475
  %v4477 = vmul.f32 %v4260, 1.442695
  %v4478 = vpow.pop %v4477
  %v4479 = vmul.f32 %v4261, 1.442695
  %v4480 = vpow.pop %v4479
  %v4481 = vmul.f32 %v4262, 1.442695
  %v4482 = vpow.pop %v4481
  %v4483 = vmul.f32 %v4263, 1.442695
  %v4484 = vpow.pop %v4483
  %v4485 = vmul.f32 %v4264, 1.442695
  %v4486 = vpow.pop %v4485
  %v4487 = vmul.f32 %v4265, 1.442695
  %v4488 = vpow.pop %v4487
  %v4489 = vmul.f32 %v4266, 1.442695
  %v4490 = vpow.pop %v4489
  %v4491 = vmul.f32 %v4267, 1.442695
  %v4492 = vpow.pop %v4491
  %v4493 = vmul.f32 %v4268, 1.442695
  %v4494 = vpow.pop %v4493
  %v4495 = vmul.f32 %v4269, 1.442695
  %v4496 = vpow.pop %v4495
  %v4497 = vmul.f32 %v4270, 1.442695
  %v4498 = vpow.pop %v4497
  %v4499 = vmul.f32 %v4271, 1.442695
  %v4500 = vpow.pop %v4499
  %v4501 = vmul.f32 %v4272, 1.442695
  %v4502 = vpow.pop %v4501
  %v4503 = vmul.f32 %v4273, 1.442695
  %v4504 = vpow.pop %v4503
  %v4505 = vmul.f32 %v4274, 1.442695
  %v4506 = vpow.pop %v4505
  %v4507 = vmul.f32 %v4275, 1.442695
  %v4508 = vpow.pop %v4507
  %v4509 = vmul.f32 %v4276, 1.442695
  %v4510 = vpow.pop %v4509
  %v4511 = vmul.f32 %v4277, 1.442695
  %v4512 = vpow.pop %v4511
  %v4513 = vmul.f32 %v4278, 1.442695
  %v4514 = vpow.pop %v4513
  %v4515 = vmul.f32 %v4279, 1.442695
  %v4516 = vpow.pop %v4515
  %v4517 = vmul.f32 %v4280, 1.442695
  %v4518 = vpow.pop %v4517
  %v4519 = vmul.f32 %v4281, 1.442695
  %v4520 = vpow.pop %v4519
  %v4521 = vmul.f32 %v4282, 1.442695
  %v4522 = vpow.pop %v4521
  %v4523 = vmul.f32 %v4283, 1.442695
  %v4524 = vpow.pop %v4523
  %v4525 = vmul.f32 %v4284, 1.442695
  %v4526 = vpow.pop %v4525
  %v4527 = vmul.f32 %v4285, 1.442695
  %v4528 = vpow.pop %v4527
  %v4529 = vmul.f32 %v4286, 1.442695
  %v4530 = vpow.pop %v4529
  %v4531 = vmul.f32 %v4287, 1.442695
  %v4532 = vpow.pop %v4531
  %v4533 = vmul.f32 %v4288, 1.442695
  %v4534 = vpow.pop %v4533
  %v4535 = vmul.f32 %v4289, 1.442695
  %v4536 = vpow.pop %v4535
  %v4537 = vmul.f32 %v4290, 1.442695
  %v4538 = vpow.pop %v4537
  %v4539 = vmul.f32 %v4291, 1.442695
  %v4540 = vpow.pop %v4539
  %v4541 = vmul.f32 %v4292, 1.442695
  %v4542 = vpow.pop %v4541
  %v4543 = vmul.f32 %v4293, 1.442695
  %v4544 = vpow.pop %v4543
  %v4545 = vmul.f32 %v4294, 1.442695
  %v4546 = vpow.pop %v4545
  %v4547 = vmul.f32 %v4295, 1.442695
  %v4548 = vpow.pop %v4547
  %v4549 = vmul.f32 %v4296, 1.442695
  %v4550 = vpow.pop %v4549
  %v4551 = vmul.f32 %v4297, 1.442695
  %v4552 = vpow.pop %v4551
  %v4553 = vmul.f32 %v4298, 1.442695
  %v4554 = vpow.pop %v4553
  %v4555 = vmul.f32 %v4299, 1.442695
  %v4556 = vpow.pop %v4555
  %v4557 = vmul.f32 %v4300, 1.442695
  %v4558 = vpow.pop %v4557
  %v4559 = vmul.f32 %v4301, 1.442695
  %v4560 = vpow.pop %v4559
  %v4561 = vmul.f32 %v4302, 1.442695
  %v4562 = vpow.pop %v4561
  %v4563 = vmul.f32 %v4303, 1.442695
  %v4564 = vpow.pop %v4563
  %v4565 = vmul.f32 %v4304, 1.442695
  %v4566 = vpow.pop %v4565
  %v4567 = vmul.f32 %v4305, 1.442695
  %v4568 = vpow.pop %v4567
  %v4569 = vmul.f32 %v4306, 1.442695
  %v4570 = vpow.pop %v4569
  %v4571 = vmul.f32 %v4307, 1.442695
  %v4572 = vpow.pop %v4571
  %v4573 = vmul.f32 %v4308, 1.442695
  %v4574 = vpow.pop %v4573
  %v4575 = vmul.f32 %v4309, 1.442695
  %v4576 = vpow.pop %v4575
  %v4577 = vmul.f32 %v4310, 1.442695
  %v4578 = vpow.pop %v4577
  %v4579 = vmul.f32 %v4311, 1.442695
  %v4580 = vpow.pop %v4579
  %v4581 = vmul.f32 %v4312, 1.442695
  %v4582 = vpow.pop %v4581
  %v4583 = vmul.f32 %v4313, 1.442695
  %v4584 = vpow.pop %v4583
  %v4585 = vmul.f32 %v4314, 1.442695
  %v4586 = vpow.pop %v4585
  %v4587 = vmul.f32 %v4315, 1.442695
  %v4588 = vpow.pop %v4587
  %v4589 = vmul.f32 %v4316, 1.442695
  %v4590 = vpow.pop %v4589
  %v4591 = vmul.f32 %v4317, 1.442695
  %v4592 = vpow.pop %v4591
  %v4593 = vmul.f32 %v4318, 1.442695
  %v4594 = vpow.pop %v4593
  %v4595 = vmul.f32 %v4319, 1.442695
  %v4596 = vpow.pop %v4595
  %v4597 = vmul.f32 %v4320, 1.442695
  %v4598 = vpow.pop %v4597
  %v4599 = vmul.f32 %v4321, 1.442695
  %v4600 = vpow.pop %v4599
  %v4601 = vmul.f32 %v4322, 1.442695
  %v4602 = vpow.pop %v4601
  %v4603 = vmul.f32 %v4323, 1.442695
  %v4604 = vpow.pop %v4603
  %v4605 = vmul.f32 %v4324, 1.442695
  %v4606 = vpow.pop %v4605
  %v4607 = vmul.f32 %v4325, 1.442695
  %v4608 = vpow.pop %v4607
  %v4609 = vmul.f32 %v4326, 1.442695
  %v4610 = vpow.pop %v4609
  %v4611 = vmul.f32 %v4327, 1.442695
  %v4612 = vpow.pop %v4611
  %v4613 = vmul.f32 %v4328, 1.442695
  %v4614 = vpow.pop %v4613
  %v4615 = vmul.f32 %v4329, 1.442695
  %v4616 = vpow.pop %v4615
  %v4617 = vmul.f32 %v4330, 1.442695
  %v4618 = vpow.pop %v4617
  %v4619 = vmul.f32 %v4331, 1.442695
  %v4620 = vpow.pop %v4619
  %v4621 = vmul.f32 %v4332, 1.442695
  %v4622 = vpow.pop %v4621
  %v4623 = vmul.f32 %v4333, 1.442695
  %v4624 = vpow.pop %v4623
  %v4625 = vmul.f32 %v4334, 1.442695
  %v4626 = vpow.pop %v4625
  %v4627 = vmul.f32 %v4335, 1.442695
  %v4628 = vpow.pop %v4627
  %v4629 = vmul.f32 %v4336, 1.442695
  %v4630 = vpow.pop %v4629
  %v4631 = vmul.f32 %v4337, 1.442695
  %v4632 = vpow.pop %v4631
  %v4633 = vmul.f32 %v4338, 1.442695
  %v4634 = vpow.pop %v4633
  %v4635 = vmul.f32 %v4339, 1.442695
  %v4636 = vpow.pop %v4635
  %v4637 = vmul.f32 %v4340, 1.442695
  %v4638 = vpow.pop %v4637
  %v4639 = vmul.f32 %v4341, 1.442695
  %v4640 = vpow.pop %v4639
  %v4641 = vmul.f32 %v4342, 1.442695
  %v4642 = vpow.pop %v4641
  %v4643 = vmul.f32 %v4343, 1.442695
  %v4644 = vpow.pop %v4643
  %v4645 = vmul.f32 %v4344, 1.442695
  %v4646 = vpow.pop %v4645
  %v4647 = vmul.f32 %v4345, 1.442695
  %v4648 = vpow.pop %v4647
  %v4649 = vmul.f32 %v4346, 1.442695
  %v4650 = vpow.pop %v4649
  %v4651 = vmul.f32 %v4347, 1.442695
  %v4652 = vpow.pop %v4651
  %v4653 = vmul.f32 %v4348, 1.442695
  %v4654 = vpow.pop %v4653
  %v4655 = vmul.f32 %v4349, 1.442695
  %v4656 = vpow.pop %v4655
  %v4657 = vmul.f32 %v4350, 1.442695
  %v4658 = vpow.pop %v4657
  %v4659 = vmul.f32 %v4351, 1.442695
  %v4660 = vpow.pop %v4659
  %v4661 = vmul.f32 %v4352, 1.442695
  %v4662 = vpow.pop %v4661
  %v4663 = vmul.f32 %v4353, 1.442695
  %v4664 = vpow.pop %v4663
  %v4665 = vmul.f32 %v4354, 1.442695
  %v4666 = vpow.pop %v4665
  %v4667 = vmul.f32 %v4355, 1.442695
  %v4668 = vpow.pop %v4667
  %v4669 = vmul.f32 %v4356, 1.442695
  %v4670 = vpow.pop %v4669
  %v4671 = vmul.f32 %v4357, 1.442695
  %v4672 = vpow.pop %v4671
  %v4673 = vmul.f32 %v4358, 1.442695
  %v4674 = vpow.pop %v4673
  %v4675 = vmul.f32 %v4359, 1.442695
  %v4676 = vpow.pop %v4675
  %v4677 = vmul.f32 %v4360, 1.442695
  %v4678 = vpow.pop %v4677
  %v4679 = vmul.f32 %v4361, 1.442695
  %v4680 = vpow.pop %v4679
  %v4681 = vmul.f32 %v4362, 1.442695
  %v4682 = vpow.pop %v4681
  %v4683 = vmul.f32 %v4363, 1.442695
  %v4684 = vpow.pop %v4683
  %v4685 = vmul.f32 %v4364, 1.442695
  %v4686 = vpow.pop %v4685
  %v4687 = vmul.f32 %v4365, 1.442695
  %v4688 = vpow.pop %v4687
  %v4689 = vmul.f32 %v4366, 1.442695
  %v4690 = vpow.pop %v4689
  %v4691 = vmul.f32 %v4367, 1.442695
  %v4692 = vpow.pop %v4691
  %v4693 = vmul.f32 %v4368, 1.442695
  %v4694 = vpow.pop %v4693
  %v4695 = vmul.f32 %v4369, 1.442695
  %v4696 = vpow.pop %v4695
  %v4697 = vmul.f32 %v4370, 1.442695
  %v4698 = vpow.pop %v4697
  %v4699 = vmul.f32 %v4371, 1.442695
  %v4700 = vpow.pop %v4699
  %v4701 = vmul.f32 %v4372, 1.442695
  %v4702 = vpow.pop %v4701
  %v4703 = vmul.f32 %v4373, 1.442695
  %v4704 = vpow.pop %v4703
  %v4705 = vmul.f32 %v4374, 1.442695
  %v4706 = vpow.pop %v4705
  %v4707 = vmul.f32 %v4375, 1.442695
  %v4708 = vpow.pop %v4707
  %v4709 = vmul.f32 %v4376, 1.442695
  %v4710 = vpow.pop %v4709
  %v4711 = vmul.f32 %v4377, 1.442695
  %v4712 = vpow.pop %v4711
  %v4713 = vmul.f32 %v4378, 1.442695
  %v4714 = vpow.pop %v4713
  %v4715 = vmul.f32 %v4379, 1.442695
  %v4716 = vpow.pop %v4715
  %v4717 = vmul.f32 %v4380, 1.442695
  %v4718 = vpow.pop %v4717
  %v4719 = vmul.f32 %v4381, 1.442695
  %v4720 = vpow.pop %v4719
  %v4721 = vmul.f32 %v4382, 1.442695
  %v4722 = vpow.pop %v4721
  %v4723 = vmul.f32 %v4383, 1.442695
  %v4724 = vpow.pop %v4723
  %v4725 = vmul.f32 %v4384, 1.442695
  %v4726 = vpow.pop %v4725
  %v4727 = vmul.f32 %v4385, 1.442695
  %v4728 = vpow.pop %v4727
  %v4729 = vmul.f32 %v4386, 1.442695
  %v4730 = vpow.pop %v4729
  %v4731 = vmul.f32 %v4387, 1.442695
  %v4732 = vpow.pop %v4731
  %v4733 = vmul.f32 %v4388, 1.442695
  %v4734 = vpow.pop %v4733
  %v4735 = vmul.f32 %v4389, 1.442695
  %v4736 = vpow.pop %v4735
  %v4737 = vmul.f32 %v4390, 1.442695
  %v4738 = vpow.pop %v4737
  %v4739 = vmul.f32 %v4391, 1.442695
  %v4740 = vpow.pop %v4739
  %v4741 = vmul.f32 %v4392, 1.442695
  %v4742 = vpow.pop %v4741
  %v4743 = vmul.f32 %v4393, 1.442695
  %v4744 = vpow.pop %v4743
  %v4745 = vmul.f32 %v4394, 1.442695
  %v4746 = vpow.pop %v4745
  %v4747 = vmul.f32 %v4395, 1.442695
  %v4748 = vpow.pop %v4747
  %v4749 = vmul.f32 %v4396, 1.442695
  %v4750 = vpow.pop %v4749
  %v4751 = vmul.f32 %v4397, 1.442695
  %v4752 = vpow.pop %v4751
  %v4753 = vmul.f32 %v4398, 1.442695
  %v4754 = vpow.pop %v4753
  %v4755 = vmul.f32 %v4399, 1.442695
  %v4756 = vpow.pop %v4755
  %v4757 = vmul.f32 %v4400, 1.442695
  %v4758 = vpow.pop %v4757
  %v4759 = vmul.f32 %v4401, 1.442695
  %v4760 = vpow.pop %v4759
  %v4761 = vmul.f32 %v4402, 1.442695
  %v4762 = vpow.pop %v4761
  %v4763 = vmul.f32 %v4403, 1.442695
  %v4764 = vpow.pop %v4763
  %v4765 = vmul.f32 %v4404, 1.442695
  %v4766 = vpow.pop %v4765
  %v4767 = vmul.f32 %v4405, 1.442695
  %v4768 = vpow.pop %v4767
  %v4769 = vmul.f32 %v4406, 1.442695
  %v4770 = vpow.pop %v4769
  %v4771 = vmul.f32 %v4407, 1.442695
  %v4772 = vpow.pop %v4771
  %v4773 = vmul.f32 %v4408, 1.442695
  %v4774 = vpow.pop %v4773
  %v4775 = vmul.f32 %v4409, 1.442695
  %v4776 = vpow.pop %v4775
  %v4777 = vmul.f32 %v4410, 1.442695
  %v4778 = vpow.pop %v4777
  %v4779 = vmul.f32 %v4411, 1.442695
  %v4780 = vpow.pop %v4779
  %v4781 = vmul.f32 %v4412, 1.442695
  %v4782 = vpow.pop %v4781
  %v4783 = vmul.f32 %v4413, 1.442695
  %v4784 = vpow.pop %v4783
  %v4785 = vmul.f32 %v4414, 1.442695
  %v4786 = vpow.pop %v4785
  %v4787 = vmul.f32 %v4415, 1.442695
  %v4788 = vpow.pop %v4787
  %v4789 = vmul.f32 %v4416, 1.442695
  %v4790 = vpow.pop %v4789
  %v4791 = vmul.f32 %v4417, 1.442695
  %v4792 = vpow.pop %v4791
  %v4793 = vmul.f32 %v4418, 1.442695
  %v4794 = vpow.pop %v4793
  %v4795 = vmul.f32 %v4419, 1.442695
  %v4796 = vpow.pop %v4795
  %v4797 = vmul.f32 %v4420, 1.442695
  %v4798 = vpow.pop %v4797
  %v4799 = vmul.f32 %v4421, 1.442695
  %v4800 = vpow.pop %v4799
  %v4801 = vmul.f32 %v4422, 1.442695
  %v4802 = vpow.pop %v4801
  %v4803 = vmul.f32 %v4423, 1.442695
  %v4804 = vpow.pop %v4803
  %v4805 = vmul.f32 %v4424, 1.442695
  %v4806 = vpow.pop %v4805
  %v4807 = vmul.f32 %v4425, 1.442695
  %v4808 = vpow.pop %v4807
  %v4809 = vmul.f32 %v4426, 1.442695
  %v4810 = vpow.pop %v4809
  %5003 = vset.pattern.permute.xlu0 0
  %5004 = vperm.xlu0 %5003, %v4428
  %v5005 = vpop.permute.xlu0 %5004
  %5006 = vset.pattern.permute.xlu0 0
  %5007 = vperm.xlu0 %5006, %v4430
  %v5008 = vpop.permute.xlu0 %5007
  %5009 = vset.pattern.permute.xlu0 0
  %5010 = vperm.xlu0 %5009, %v4432
  %v5011 = vpop.permute.xlu0 %5010
  %5012 = vset.pattern.permute.xlu0 0
  %5013 = vperm.xlu0 %5012, %v4434
  %v5014 = vpop.permute.xlu0 %5013
  %5015 = vset.pattern.permute.xlu0 0
  %5016 = vperm.xlu0 %5015, %v4436
  %v5017 = vpop.permute.xlu0 %5016
  %5018 = vset.pattern.permute.xlu0 0
  %5019 = vperm.xlu0 %5018, %v4438
  %v5020 = vpop.permute.xlu0 %5019
  %5021 = vset.pattern.permute.xlu0 0
  %5022 = vperm.xlu0 %5021, %v4440
  %v5023 = vpop.permute.xlu0 %5022
  %5024 = vset.pattern.permute.xlu0 0
  %5025 = vperm.xlu0 %5024, %v4442
  %v5026 = vpop.permute.xlu0 %5025
  %5027 = vset.pattern.permute.xlu0 0
  %5028 = vperm.xlu0 %5027, %v4444
  %v5029 = vpop.permute.xlu0 %5028
  %5030 = vset.pattern.permute.xlu0 0
  %5031 = vperm.xlu0 %5030, %v4446
  %v5032 = vpop.permute.xlu0 %5031
  %5033 = vset.pattern.permute.xlu0 0
  %5034 = vperm.xlu0 %5033, %v4448
  %v5035 = vpop.permute.xlu0 %5034
  %5036 = vset.pattern.permute.xlu0 0
  %5037 = vperm.xlu0 %5036, %v4450
  %v5038 = vpop.permute.xlu0 %5037
  %5039 = vset.pattern.permute.xlu0 0
  %5040 = vperm.xlu0 %5039, %v4452
  %v5041 = vpop.permute.xlu0 %5040
  %5042 = vset.pattern.permute.xlu0 0
  %5043 = vperm.xlu0 %5042, %v4454
  %v5044 = vpop.permute.xlu0 %5043
  %5045 = vset.pattern.permute.xlu0 0
  %5046 = vperm.xlu0 %5045, %v4456
  %v5047 = vpop.permute.xlu0 %5046
  %5048 = vset.pattern.permute.xlu0 0
  %5049 = vperm.xlu0 %5048, %v4458
  %v5050 = vpop.permute.xlu0 %5049
  %5051 = vset.pattern.permute.xlu0 0
  %5052 = vperm.xlu0 %5051, %v4460
  %v5053 = vpop.permute.xlu0 %5052
  %5054 = vset.pattern.permute.xlu0 0
  %5055 = vperm.xlu0 %5054, %v4462
  %v5056 = vpop.permute.xlu0 %5055
  %5057 = vset.pattern.permute.xlu0 0
  %5058 = vperm.xlu0 %5057, %v4464
  %v5059 = vpop.permute.xlu0 %5058
  %5060 = vset.pattern.permute.xlu0 0
  %5061 = vperm.xlu0 %5060, %v4466
  %v5062 = vpop.permute.xlu0 %5061
  %5063 = vset.pattern.permute.xlu0 0
  %5064 = vperm.xlu0 %5063, %v4468
  %v5065 = vpop.permute.xlu0 %5064
  %5066 = vset.pattern.permute.xlu0 0
  %5067 = vperm.xlu0 %5066, %v4470
  %v5068 = vpop.permute.xlu0 %5067
  %5069 = vset.pattern.permute.xlu0 0
  %5070 = vperm.xlu0 %5069, %v4472
  %v5071 = vpop.permute.xlu0 %5070
  %5072 = vset.pattern.permute.xlu0 0
  %5073 = vperm.xlu0 %5072, %v4474
  %v5074 = vpop.permute.xlu0 %5073
  %5075 = vset.pattern.permute.xlu0 0
  %5076 = vperm.xlu0 %5075, %v4476
  %v5077 = vpop.permute.xlu0 %5076
  %5078 = vset.pattern.permute.xlu0 0
  %5079 = vperm.xlu0 %5078, %v4478
  %v5080 = vpop.permute.xlu0 %5079
  %5081 = vset.pattern.permute.xlu0 0
  %5082 = vperm.xlu0 %5081, %v4480
  %v5083 = vpop.permute.xlu0 %5082
  %5084 = vset.pattern.permute.xlu0 0
  %5085 = vperm.xlu0 %5084, %v4482
  %v5086 = vpop.permute.xlu0 %5085
  %5087 = vset.pattern.permute.xlu0 0
  %5088 = vperm.xlu0 %5087, %v4484
  %v5089 = vpop.permute.xlu0 %5088
  %5090 = vset.pattern.permute.xlu0 0
  %5091 = vperm.xlu0 %5090, %v4486
  %v5092 = vpop.permute.xlu0 %5091
  %5093 = vset.pattern.permute.xlu0 0
  %5094 = vperm.xlu0 %5093, %v4488
  %v5095 = vpop.permute.xlu0 %5094
  %5096 = vset.pattern.permute.xlu0 0
  %5097 = vperm.xlu0 %5096, %v4490
  %v5098 = vpop.permute.xlu0 %5097
  %5099 = vset.pattern.permute.xlu0 0
  %5100 = vperm.xlu0 %5099, %v4492
  %v5101 = vpop.permute.xlu0 %5100
  %5102 = vset.pattern.permute.xlu0 0
  %5103 = vperm.xlu0 %5102, %v4494
  %v5104 = vpop.permute.xlu0 %5103
  %5105 = vset.pattern.permute.xlu0 0
  %5106 = vperm.xlu0 %5105, %v4496
  %v5107 = vpop.permute.xlu0 %5106
  %5108 = vset.pattern.permute.xlu0 0
  %5109 = vperm.xlu0 %5108, %v4498
  %v5110 = vpop.permute.xlu0 %5109
  %5111 = vset.pattern.permute.xlu0 0
  %5112 = vperm.xlu0 %5111, %v4500
  %v5113 = vpop.permute.xlu0 %5112
  %5114 = vset.pattern.permute.xlu0 0
  %5115 = vperm.xlu0 %5114, %v4502
  %v5116 = vpop.permute.xlu0 %5115
  %5117 = vset.pattern.permute.xlu0 0
  %5118 = vperm.xlu0 %5117, %v4504
  %v5119 = vpop.permute.xlu0 %5118
  %5120 = vset.pattern.permute.xlu0 0
  %5121 = vperm.xlu0 %5120, %v4506
  %v5122 = vpop.permute.xlu0 %5121
  %5123 = vset.pattern.permute.xlu0 0
  %5124 = vperm.xlu0 %5123, %v4508
  %v5125 = vpop.permute.xlu0 %5124
  %5126 = vset.pattern.permute.xlu0 0
  %5127 = vperm.xlu0 %5126, %v4510
  %v5128 = vpop.permute.xlu0 %5127
  %5129 = vset.pattern.permute.xlu0 0
  %5130 = vperm.xlu0 %5129, %v4512
  %v5131 = vpop.permute.xlu0 %5130
  %5132 = vset.pattern.permute.xlu0 0
  %5133 = vperm.xlu0 %5132, %v4514
  %v5134 = vpop.permute.xlu0 %5133
  %5135 = vset.pattern.permute.xlu0 0
  %5136 = vperm.xlu0 %5135, %v4516
  %v5137 = vpop.permute.xlu0 %5136
  %5138 = vset.pattern.permute.xlu0 0
  %5139 = vperm.xlu0 %5138, %v4518
  %v5140 = vpop.permute.xlu0 %5139
  %5141 = vset.pattern.permute.xlu0 0
  %5142 = vperm.xlu0 %5141, %v4520
  %v5143 = vpop.permute.xlu0 %5142
  %5144 = vset.pattern.permute.xlu0 0
  %5145 = vperm.xlu0 %5144, %v4522
  %v5146 = vpop.permute.xlu0 %5145
  %5147 = vset.pattern.permute.xlu0 0
  %5148 = vperm.xlu0 %5147, %v4524
  %v5149 = vpop.permute.xlu0 %5148
  %5150 = vset.pattern.permute.xlu0 0
  %5151 = vperm.xlu0 %5150, %v4526
  %v5152 = vpop.permute.xlu0 %5151
  %5153 = vset.pattern.permute.xlu0 0
  %5154 = vperm.xlu0 %5153, %v4528
  %v5155 = vpop.permute.xlu0 %5154
  %5156 = vset.pattern.permute.xlu0 0
  %5157 = vperm.xlu0 %5156, %v4530
  %v5158 = vpop.permute.xlu0 %5157
  %5159 = vset.pattern.permute.xlu0 0
  %5160 = vperm.xlu0 %5159, %v4532
  %v5161 = vpop.permute.xlu0 %5160
  %5162 = vset.pattern.permute.xlu0 0
  %5163 = vperm.xlu0 %5162, %v4534
  %v5164 = vpop.permute.xlu0 %5163
  %5165 = vset.pattern.permute.xlu0 0
  %5166 = vperm.xlu0 %5165, %v4536
  %v5167 = vpop.permute.xlu0 %5166
  %5168 = vset.pattern.permute.xlu0 0
  %5169 = vperm.xlu0 %5168, %v4538
  %v5170 = vpop.permute.xlu0 %5169
  %5171 = vset.pattern.permute.xlu0 0
  %5172 = vperm.xlu0 %5171, %v4540
  %v5173 = vpop.permute.xlu0 %5172
  %5174 = vset.pattern.permute.xlu0 0
  %5175 = vperm.xlu0 %5174, %v4542
  %v5176 = vpop.permute.xlu0 %5175
  %5177 = vset.pattern.permute.xlu0 0
  %5178 = vperm.xlu0 %5177, %v4544
  %v5179 = vpop.permute.xlu0 %5178
  %5180 = vset.pattern.permute.xlu0 0
  %5181 = vperm.xlu0 %5180, %v4546
  %v5182 = vpop.permute.xlu0 %5181
  %5183 = vset.pattern.permute.xlu0 0
  %5184 = vperm.xlu0 %5183, %v4548
  %v5185 = vpop.permute.xlu0 %5184
  %5186 = vset.pattern.permute.xlu0 0
  %5187 = vperm.xlu0 %5186, %v4550
  %v5188 = vpop.permute.xlu0 %5187
  %5189 = vset.pattern.permute.xlu0 0
  %5190 = vperm.xlu0 %5189, %v4552
  %v5191 = vpop.permute.xlu0 %5190
  %5192 = vset.pattern.permute.xlu0 0
  %5193 = vperm.xlu0 %5192, %v4554
  %v5194 = vpop.permute.xlu0 %5193
  %5195 = vset.pattern.permute.xlu0 0
  %5196 = vperm.xlu0 %5195, %v4556
  %v5197 = vpop.permute.xlu0 %5196
  %5198 = vset.pattern.permute.xlu0 0
  %5199 = vperm.xlu0 %5198, %v4558
  %v5200 = vpop.permute.xlu0 %5199
  %5201 = vset.pattern.permute.xlu0 0
  %5202 = vperm.xlu0 %5201, %v4560
  %v5203 = vpop.permute.xlu0 %5202
  %5204 = vset.pattern.permute.xlu0 0
  %5205 = vperm.xlu0 %5204, %v4562
  %v5206 = vpop.permute.xlu0 %5205
  %5207 = vset.pattern.permute.xlu0 0
  %5208 = vperm.xlu0 %5207, %v4564
  %v5209 = vpop.permute.xlu0 %5208
  %5210 = vset.pattern.permute.xlu0 0
  %5211 = vperm.xlu0 %5210, %v4566
  %v5212 = vpop.permute.xlu0 %5211
  %5213 = vset.pattern.permute.xlu0 0
  %5214 = vperm.xlu0 %5213, %v4568
  %v5215 = vpop.permute.xlu0 %5214
  %5216 = vset.pattern.permute.xlu0 0
  %5217 = vperm.xlu0 %5216, %v4570
  %v5218 = vpop.permute.xlu0 %5217
  %5219 = vset.pattern.permute.xlu0 0
  %5220 = vperm.xlu0 %5219, %v4572
  %v5221 = vpop.permute.xlu0 %5220
  %5222 = vset.pattern.permute.xlu0 0
  %5223 = vperm.xlu0 %5222, %v4574
  %v5224 = vpop.permute.xlu0 %5223
  %5225 = vset.pattern.permute.xlu0 0
  %5226 = vperm.xlu0 %5225, %v4576
  %v5227 = vpop.permute.xlu0 %5226
  %5228 = vset.pattern.permute.xlu0 0
  %5229 = vperm.xlu0 %5228, %v4578
  %v5230 = vpop.permute.xlu0 %5229
  %5231 = vset.pattern.permute.xlu0 0
  %5232 = vperm.xlu0 %5231, %v4580
  %v5233 = vpop.permute.xlu0 %5232
  %5234 = vset.pattern.permute.xlu0 0
  %5235 = vperm.xlu0 %5234, %v4582
  %v5236 = vpop.permute.xlu0 %5235
  %5237 = vset.pattern.permute.xlu0 0
  %5238 = vperm.xlu0 %5237, %v4584
  %v5239 = vpop.permute.xlu0 %5238
  %5240 = vset.pattern.permute.xlu0 0
  %5241 = vperm.xlu0 %5240, %v4586
  %v5242 = vpop.permute.xlu0 %5241
  %5243 = vset.pattern.permute.xlu0 0
  %5244 = vperm.xlu0 %5243, %v4588
  %v5245 = vpop.permute.xlu0 %5244
  %5246 = vset.pattern.permute.xlu0 0
  %5247 = vperm.xlu0 %5246, %v4590
  %v5248 = vpop.permute.xlu0 %5247
  %5249 = vset.pattern.permute.xlu0 0
  %5250 = vperm.xlu0 %5249, %v4592
  %v5251 = vpop.permute.xlu0 %5250
  %5252 = vset.pattern.permute.xlu0 0
  %5253 = vperm.xlu0 %5252, %v4594
  %v5254 = vpop.permute.xlu0 %5253
  %5255 = vset.pattern.permute.xlu0 0
  %5256 = vperm.xlu0 %5255, %v4596
  %v5257 = vpop.permute.xlu0 %5256
  %5258 = vset.pattern.permute.xlu0 0
  %5259 = vperm.xlu0 %5258, %v4598
  %v5260 = vpop.permute.xlu0 %5259
  %5261 = vset.pattern.permute.xlu0 0
  %5262 = vperm.xlu0 %5261, %v4600
  %v5263 = vpop.permute.xlu0 %5262
  %5264 = vset.pattern.permute.xlu0 0
  %5265 = vperm.xlu0 %5264, %v4602
  %v5266 = vpop.permute.xlu0 %5265
  %5267 = vset.pattern.permute.xlu0 0
  %5268 = vperm.xlu0 %5267, %v4604
  %v5269 = vpop.permute.xlu0 %5268
  %5270 = vset.pattern.permute.xlu0 0
  %5271 = vperm.xlu0 %5270, %v4606
  %v5272 = vpop.permute.xlu0 %5271
  %5273 = vset.pattern.permute.xlu0 0
  %5274 = vperm.xlu0 %5273, %v4608
  %v5275 = vpop.permute.xlu0 %5274
  %5276 = vset.pattern.permute.xlu0 0
  %5277 = vperm.xlu0 %5276, %v4610
  %v5278 = vpop.permute.xlu0 %5277
  %5279 = vset.pattern.permute.xlu0 0
  %5280 = vperm.xlu0 %5279, %v4612
  %v5281 = vpop.permute.xlu0 %5280
  %5282 = vset.pattern.permute.xlu0 0
  %5283 = vperm.xlu0 %5282, %v4614
  %v5284 = vpop.permute.xlu0 %5283
  %5285 = vset.pattern.permute.xlu0 0
  %5286 = vperm.xlu0 %5285, %v4616
  %v5287 = vpop.permute.xlu0 %5286
  %5288 = vset.pattern.permute.xlu0 0
  %5289 = vperm.xlu0 %5288, %v4618
  %v5290 = vpop.permute.xlu0 %5289
  %5291 = vset.pattern.permute.xlu0 0
  %5292 = vperm.xlu0 %5291, %v4620
  %v5293 = vpop.permute.xlu0 %5292
  %5294 = vset.pattern.permute.xlu0 0
  %5295 = vperm.xlu0 %5294, %v4622
  %v5296 = vpop.permute.xlu0 %5295
  %5297 = vset.pattern.permute.xlu0 0
  %5298 = vperm.xlu0 %5297, %v4624
  %v5299 = vpop.permute.xlu0 %5298
  %5300 = vset.pattern.permute.xlu0 0
  %5301 = vperm.xlu0 %5300, %v4626
  %v5302 = vpop.permute.xlu0 %5301
  %5303 = vset.pattern.permute.xlu0 0
  %5304 = vperm.xlu0 %5303, %v4628
  %v5305 = vpop.permute.xlu0 %5304
  %5306 = vset.pattern.permute.xlu0 0
  %5307 = vperm.xlu0 %5306, %v4630
  %v5308 = vpop.permute.xlu0 %5307
  %5309 = vset.pattern.permute.xlu0 0
  %5310 = vperm.xlu0 %5309, %v4632
  %v5311 = vpop.permute.xlu0 %5310
  %5312 = vset.pattern.permute.xlu0 0
  %5313 = vperm.xlu0 %5312, %v4634
  %v5314 = vpop.permute.xlu0 %5313
  %5315 = vset.pattern.permute.xlu0 0
  %5316 = vperm.xlu0 %5315, %v4636
  %v5317 = vpop.permute.xlu0 %5316
  %5318 = vset.pattern.permute.xlu0 0
  %5319 = vperm.xlu0 %5318, %v4638
  %v5320 = vpop.permute.xlu0 %5319
  %5321 = vset.pattern.permute.xlu0 0
  %5322 = vperm.xlu0 %5321, %v4640
  %v5323 = vpop.permute.xlu0 %5322
  %5324 = vset.pattern.permute.xlu0 0
  %5325 = vperm.xlu0 %5324, %v4642
  %v5326 = vpop.permute.xlu0 %5325
  %5327 = vset.pattern.permute.xlu0 0
  %5328 = vperm.xlu0 %5327, %v4644
  %v5329 = vpop.permute.xlu0 %5328
  %5330 = vset.pattern.permute.xlu0 0
  %5331 = vperm.xlu0 %5330, %v4646
  %v5332 = vpop.permute.xlu0 %5331
  %5333 = vset.pattern.permute.xlu0 0
  %5334 = vperm.xlu0 %5333, %v4648
  %v5335 = vpop.permute.xlu0 %5334
  %5336 = vset.pattern.permute.xlu0 0
  %5337 = vperm.xlu0 %5336, %v4650
  %v5338 = vpop.permute.xlu0 %5337
  %5339 = vset.pattern.permute.xlu0 0
  %5340 = vperm.xlu0 %5339, %v4652
  %v5341 = vpop.permute.xlu0 %5340
  %5342 = vset.pattern.permute.xlu0 0
  %5343 = vperm.xlu0 %5342, %v4654
  %v5344 = vpop.permute.xlu0 %5343
  %5345 = vset.pattern.permute.xlu0 0
  %5346 = vperm.xlu0 %5345, %v4656
  %v5347 = vpop.permute.xlu0 %5346
  %5348 = vset.pattern.permute.xlu0 0
  %5349 = vperm.xlu0 %5348, %v4658
  %v5350 = vpop.permute.xlu0 %5349
  %5351 = vset.pattern.permute.xlu0 0
  %5352 = vperm.xlu0 %5351, %v4660
  %v5353 = vpop.permute.xlu0 %5352
  %5354 = vset.pattern.permute.xlu0 0
  %5355 = vperm.xlu0 %5354, %v4662
  %v5356 = vpop.permute.xlu0 %5355
  %5357 = vset.pattern.permute.xlu0 0
  %5358 = vperm.xlu0 %5357, %v4664
  %v5359 = vpop.permute.xlu0 %5358
  %5360 = vset.pattern.permute.xlu0 0
  %5361 = vperm.xlu0 %5360, %v4666
  %v5362 = vpop.permute.xlu0 %5361
  %5363 = vset.pattern.permute.xlu0 0
  %5364 = vperm.xlu0 %5363, %v4668
  %v5365 = vpop.permute.xlu0 %5364
  %5366 = vset.pattern.permute.xlu0 0
  %5367 = vperm.xlu0 %5366, %v4670
  %v5368 = vpop.permute.xlu0 %5367
  %5369 = vset.pattern.permute.xlu0 0
  %5370 = vperm.xlu0 %5369, %v4672
  %v5371 = vpop.permute.xlu0 %5370
  %5372 = vset.pattern.permute.xlu0 0
  %5373 = vperm.xlu0 %5372, %v4674
  %v5374 = vpop.permute.xlu0 %5373
  %5375 = vset.pattern.permute.xlu0 0
  %5376 = vperm.xlu0 %5375, %v4676
  %v5377 = vpop.permute.xlu0 %5376
  %5378 = vset.pattern.permute.xlu0 0
  %5379 = vperm.xlu0 %5378, %v4678
  %v5380 = vpop.permute.xlu0 %5379
  %5381 = vset.pattern.permute.xlu0 0
  %5382 = vperm.xlu0 %5381, %v4680
  %v5383 = vpop.permute.xlu0 %5382
  %5384 = vset.pattern.permute.xlu0 0
  %5385 = vperm.xlu0 %5384, %v4682
  %v5386 = vpop.permute.xlu0 %5385
  %5387 = vset.pattern.permute.xlu0 0
  %5388 = vperm.xlu0 %5387, %v4684
  %v5389 = vpop.permute.xlu0 %5388
  %5390 = vset.pattern.permute.xlu0 0
  %5391 = vperm.xlu0 %5390, %v4686
  %v5392 = vpop.permute.xlu0 %5391
  %5393 = vset.pattern.permute.xlu0 0
  %5394 = vperm.xlu0 %5393, %v4688
  %v5395 = vpop.permute.xlu0 %5394
  %5396 = vset.pattern.permute.xlu0 0
  %5397 = vperm.xlu0 %5396, %v4690
  %v5398 = vpop.permute.xlu0 %5397
  %5399 = vset.pattern.permute.xlu0 0
  %5400 = vperm.xlu0 %5399, %v4692
  %v5401 = vpop.permute.xlu0 %5400
  %5402 = vset.pattern.permute.xlu0 0
  %5403 = vperm.xlu0 %5402, %v4694
  %v5404 = vpop.permute.xlu0 %5403
  %5405 = vset.pattern.permute.xlu0 0
  %5406 = vperm.xlu0 %5405, %v4696
  %v5407 = vpop.permute.xlu0 %5406
  %5408 = vset.pattern.permute.xlu0 0
  %5409 = vperm.xlu0 %5408, %v4698
  %v5410 = vpop.permute.xlu0 %5409
  %5411 = vset.pattern.permute.xlu0 0
  %5412 = vperm.xlu0 %5411, %v4700
  %v5413 = vpop.permute.xlu0 %5412
  %5414 = vset.pattern.permute.xlu0 0
  %5415 = vperm.xlu0 %5414, %v4702
  %v5416 = vpop.permute.xlu0 %5415
  %5417 = vset.pattern.permute.xlu0 0
  %5418 = vperm.xlu0 %5417, %v4704
  %v5419 = vpop.permute.xlu0 %5418
  %5420 = vset.pattern.permute.xlu0 0
  %5421 = vperm.xlu0 %5420, %v4706
  %v5422 = vpop.permute.xlu0 %5421
  %5423 = vset.pattern.permute.xlu0 0
  %5424 = vperm.xlu0 %5423, %v4708
  %v5425 = vpop.permute.xlu0 %5424
  %5426 = vset.pattern.permute.xlu0 0
  %5427 = vperm.xlu0 %5426, %v4710
  %v5428 = vpop.permute.xlu0 %5427
  %5429 = vset.pattern.permute.xlu0 0
  %5430 = vperm.xlu0 %5429, %v4712
  %v5431 = vpop.permute.xlu0 %5430
  %5432 = vset.pattern.permute.xlu0 0
  %5433 = vperm.xlu0 %5432, %v4714
  %v5434 = vpop.permute.xlu0 %5433
  %5435 = vset.pattern.permute.xlu0 0
  %5436 = vperm.xlu0 %5435, %v4716
  %v5437 = vpop.permute.xlu0 %5436
  %5438 = vset.pattern.permute.xlu0 0
  %5439 = vperm.xlu0 %5438, %v4718
  %v5440 = vpop.permute.xlu0 %5439
  %5441 = vset.pattern.permute.xlu0 0
  %5442 = vperm.xlu0 %5441, %v4720
  %v5443 = vpop.permute.xlu0 %5442
  %5444 = vset.pattern.permute.xlu0 0
  %5445 = vperm.xlu0 %5444, %v4722
  %v5446 = vpop.permute.xlu0 %5445
  %5447 = vset.pattern.permute.xlu0 0
  %5448 = vperm.xlu0 %5447, %v4724
  %v5449 = vpop.permute.xlu0 %5448
  %5450 = vset.pattern.permute.xlu0 0
  %5451 = vperm.xlu0 %5450, %v4726
  %v5452 = vpop.permute.xlu0 %5451
  %5453 = vset.pattern.permute.xlu0 0
  %5454 = vperm.xlu0 %5453, %v4728
  %v5455 = vpop.permute.xlu0 %5454
  %5456 = vset.pattern.permute.xlu0 0
  %5457 = vperm.xlu0 %5456, %v4730
  %v5458 = vpop.permute.xlu0 %5457
  %5459 = vset.pattern.permute.xlu0 0
  %5460 = vperm.xlu0 %5459, %v4732
  %v5461 = vpop.permute.xlu0 %5460
  %5462 = vset.pattern.permute.xlu0 0
  %5463 = vperm.xlu0 %5462, %v4734
  %v5464 = vpop.permute.xlu0 %5463
  %5465 = vset.pattern.permute.xlu0 0
  %5466 = vperm.xlu0 %5465, %v4736
  %v5467 = vpop.permute.xlu0 %5466
  %5468 = vset.pattern.permute.xlu0 0
  %5469 = vperm.xlu0 %5468, %v4738
  %v5470 = vpop.permute.xlu0 %5469
  %5471 = vset.pattern.permute.xlu0 0
  %5472 = vperm.xlu0 %5471, %v4740
  %v5473 = vpop.permute.xlu0 %5472
  %5474 = vset.pattern.permute.xlu0 0
  %5475 = vperm.xlu0 %5474, %v4742
  %v5476 = vpop.permute.xlu0 %5475
  %5477 = vset.pattern.permute.xlu0 0
  %5478 = vperm.xlu0 %5477, %v4744
  %v5479 = vpop.permute.xlu0 %5478
  %5480 = vset.pattern.permute.xlu0 0
  %5481 = vperm.xlu0 %5480, %v4746
  %v5482 = vpop.permute.xlu0 %5481
  %5483 = vset.pattern.permute.xlu0 0
  %5484 = vperm.xlu0 %5483, %v4748
  %v5485 = vpop.permute.xlu0 %5484
  %5486 = vset.pattern.permute.xlu0 0
  %5487 = vperm.xlu0 %5486, %v4750
  %v5488 = vpop.permute.xlu0 %5487
  %5489 = vset.pattern.permute.xlu0 0
  %5490 = vperm.xlu0 %5489, %v4752
  %v5491 = vpop.permute.xlu0 %5490
  %5492 = vset.pattern.permute.xlu0 0
  %5493 = vperm.xlu0 %5492, %v4754
  %v5494 = vpop.permute.xlu0 %5493
  %5495 = vset.pattern.permute.xlu0 0
  %5496 = vperm.xlu0 %5495, %v4756
  %v5497 = vpop.permute.xlu0 %5496
  %5498 = vset.pattern.permute.xlu0 0
  %5499 = vperm.xlu0 %5498, %v4758
  %v5500 = vpop.permute.xlu0 %5499
  %5501 = vset.pattern.permute.xlu0 0
  %5502 = vperm.xlu0 %5501, %v4760
  %v5503 = vpop.permute.xlu0 %5502
  %5504 = vset.pattern.permute.xlu0 0
  %5505 = vperm.xlu0 %5504, %v4762
  %v5506 = vpop.permute.xlu0 %5505
  %5507 = vset.pattern.permute.xlu0 0
  %5508 = vperm.xlu0 %5507, %v4764
  %v5509 = vpop.permute.xlu0 %5508
  %5510 = vset.pattern.permute.xlu0 0
  %5511 = vperm.xlu0 %5510, %v4766
  %v5512 = vpop.permute.xlu0 %5511
  %5513 = vset.pattern.permute.xlu0 0
  %5514 = vperm.xlu0 %5513, %v4768
  %v5515 = vpop.permute.xlu0 %5514
  %5516 = vset.pattern.permute.xlu0 0
  %5517 = vperm.xlu0 %5516, %v4770
  %v5518 = vpop.permute.xlu0 %5517
  %5519 = vset.pattern.permute.xlu0 0
  %5520 = vperm.xlu0 %5519, %v4772
  %v5521 = vpop.permute.xlu0 %5520
  %5522 = vset.pattern.permute.xlu0 0
  %5523 = vperm.xlu0 %5522, %v4774
  %v5524 = vpop.permute.xlu0 %5523
  %5525 = vset.pattern.permute.xlu0 0
  %5526 = vperm.xlu0 %5525, %v4776
  %v5527 = vpop.permute.xlu0 %5526
  %5528 = vset.pattern.permute.xlu0 0
  %5529 = vperm.xlu0 %5528, %v4778
  %v5530 = vpop.permute.xlu0 %5529
  %5531 = vset.pattern.permute.xlu0 0
  %5532 = vperm.xlu0 %5531, %v4780
  %v5533 = vpop.permute.xlu0 %5532
  %5534 = vset.pattern.permute.xlu0 0
  %5535 = vperm.xlu0 %5534, %v4782
  %v5536 = vpop.permute.xlu0 %5535
  %5537 = vset.pattern.permute.xlu0 0
  %5538 = vperm.xlu0 %5537, %v4784
  %v5539 = vpop.permute.xlu0 %5538
  %5540 = vset.pattern.permute.xlu0 0
  %5541 = vperm.xlu0 %5540, %v4786
  %v5542 = vpop.permute.xlu0 %5541
  %5543 = vset.pattern.permute.xlu0 0
  %5544 = vperm.xlu0 %5543, %v4788
  %v5545 = vpop.permute.xlu0 %5544
  %5546 = vset.pattern.permute.xlu0 0
  %5547 = vperm.xlu0 %5546, %v4790
  %v5548 = vpop.permute.xlu0 %5547
  %5549 = vset.pattern.permute.xlu0 0
  %5550 = vperm.xlu0 %5549, %v4792
  %v5551 = vpop.permute.xlu0 %5550
  %5552 = vset.pattern.permute.xlu0 0
  %5553 = vperm.xlu0 %5552, %v4794
  %v5554 = vpop.permute.xlu0 %5553
  %5555 = vset.pattern.permute.xlu0 0
  %5556 = vperm.xlu0 %5555, %v4796
  %v5557 = vpop.permute.xlu0 %5556
  %5558 = vset.pattern.permute.xlu0 0
  %5559 = vperm.xlu0 %5558, %v4798
  %v5560 = vpop.permute.xlu0 %5559
  %5561 = vset.pattern.permute.xlu0 0
  %5562 = vperm.xlu0 %5561, %v4800
  %v5563 = vpop.permute.xlu0 %5562
  %5564 = vset.pattern.permute.xlu0 0
  %5565 = vperm.xlu0 %5564, %v4802
  %v5566 = vpop.permute.xlu0 %5565
  %5567 = vset.pattern.permute.xlu0 0
  %5568 = vperm.xlu0 %5567, %v4804
  %v5569 = vpop.permute.xlu0 %5568
  %5570 = vset.pattern.permute.xlu0 0
  %5571 = vperm.xlu0 %5570, %v4806
  %v5572 = vpop.permute.xlu0 %5571
  %5573 = vset.pattern.permute.xlu0 0
  %5574 = vperm.xlu0 %5573, %v4808
  %v5575 = vpop.permute.xlu0 %5574
  %5576 = vset.pattern.permute.xlu0 0
  %5577 = vperm.xlu0 %5576, %v4810
  %v5578 = vpop.permute.xlu0 %5577
  %v5579 = vperm.slane %v5005, %v3601
  %v5580 = vperm.slane %v5008, %v3603
  %v5581 = vsel %vm3605, %v5580, %v5579
  %v5582 = vperm.slane %v5011, %v3601
  %v5583 = vperm.slane %v5014, %v3603
  %v5584 = vsel %vm3605, %v5583, %v5582
  %v5585 = vperm.slane %v5017, %v3601
  %v5586 = vperm.slane %v5020, %v3603
  %v5587 = vsel %vm3605, %v5586, %v5585
  %v5588 = vperm.slane %v5023, %v3601
  %v5589 = vperm.slane %v5026, %v3603
  %v5590 = vsel %vm3605, %v5589, %v5588
  %v5591 = vperm.slane %v5029, %v3601
  %v5592 = vperm.slane %v5032, %v3603
  %v5593 = vsel %vm3605, %v5592, %v5591
  %v5594 = vperm.slane %v5035, %v3601
  %v5595 = vperm.slane %v5038, %v3603
  %v5596 = vsel %vm3605, %v5595, %v5594
  %v5597 = vperm.slane %v5041, %v3601
  %v5598 = vperm.slane %v5044, %v3603
  %v5599 = vsel %vm3605, %v5598, %v5597
  %v5600 = vperm.slane %v5047, %v3601
  %v5601 = vperm.slane %v5050, %v3603
  %v5602 = vsel %vm3605, %v5601, %v5600
  %v5603 = vperm.slane %v5053, %v3601
  %v5604 = vperm.slane %v5056, %v3603
  %v5605 = vsel %vm3605, %v5604, %v5603
  %v5606 = vperm.slane %v5059, %v3601
  %v5607 = vperm.slane %v5062, %v3603
  %v5608 = vsel %vm3605, %v5607, %v5606
  %v5609 = vperm.slane %v5065, %v3601
  %v5610 = vperm.slane %v5068, %v3603
  %v5611 = vsel %vm3605, %v5610, %v5609
  %v5612 = vperm.slane %v5071, %v3601
  %v5613 = vperm.slane %v5074, %v3603
  %v5614 = vsel %vm3605, %v5613, %v5612
  %v5615 = vperm.slane %v5077, %v3601
  %v5616 = vperm.slane %v5080, %v3603
  %v5617 = vsel %vm3605, %v5616, %v5615
  %v5618 = vperm.slane %v5083, %v3601
  %v5619 = vperm.slane %v5086, %v3603
  %v5620 = vsel %vm3605, %v5619, %v5618
  %v5621 = vperm.slane %v5089, %v3601
  %v5622 = vperm.slane %v5092, %v3603
  %v5623 = vsel %vm3605, %v5622, %v5621
  %v5624 = vperm.slane %v5095, %v3601
  %v5625 = vperm.slane %v5098, %v3603
  %v5626 = vsel %vm3605, %v5625, %v5624
  %v5627 = vperm.slane %v5101, %v3601
  %v5628 = vperm.slane %v5104, %v3603
  %v5629 = vsel %vm3605, %v5628, %v5627
  %v5630 = vperm.slane %v5107, %v3601
  %v5631 = vperm.slane %v5110, %v3603
  %v5632 = vsel %vm3605, %v5631, %v5630
  %v5633 = vperm.slane %v5113, %v3601
  %v5634 = vperm.slane %v5116, %v3603
  %v5635 = vsel %vm3605, %v5634, %v5633
  %v5636 = vperm.slane %v5119, %v3601
  %v5637 = vperm.slane %v5122, %v3603
  %v5638 = vsel %vm3605, %v5637, %v5636
  %v5639 = vperm.slane %v5125, %v3601
  %v5640 = vperm.slane %v5128, %v3603
  %v5641 = vsel %vm3605, %v5640, %v5639
  %v5642 = vperm.slane %v5131, %v3601
  %v5643 = vperm.slane %v5134, %v3603
  %v5644 = vsel %vm3605, %v5643, %v5642
  %v5645 = vperm.slane %v5137, %v3601
  %v5646 = vperm.slane %v5140, %v3603
  %v5647 = vsel %vm3605, %v5646, %v5645
  %v5648 = vperm.slane %v5143, %v3601
  %v5649 = vperm.slane %v5146, %v3603
  %v5650 = vsel %vm3605, %v5649, %v5648
  %v5651 = vperm.slane %v5149, %v3601
  %v5652 = vperm.slane %v5152, %v3603
  %v5653 = vsel %vm3605, %v5652, %v5651
  %v5654 = vperm.slane %v5155, %v3601
  %v5655 = vperm.slane %v5158, %v3603
  %v5656 = vsel %vm3605, %v5655, %v5654
  %v5657 = vperm.slane %v5161, %v3601
  %v5658 = vperm.slane %v5164, %v3603
  %v5659 = vsel %vm3605, %v5658, %v5657
  %v5660 = vperm.slane %v5167, %v3601
  %v5661 = vperm.slane %v5170, %v3603
  %v5662 = vsel %vm3605, %v5661, %v5660
  %v5663 = vperm.slane %v5173, %v3601
  %v5664 = vperm.slane %v5176, %v3603
  %v5665 = vsel %vm3605, %v5664, %v5663
  %v5666 = vperm.slane %v5179, %v3601
  %v5667 = vperm.slane %v5182, %v3603
  %v5668 = vsel %vm3605, %v5667, %v5666
  %v5669 = vperm.slane %v5185, %v3601
  %v5670 = vperm.slane %v5188, %v3603
  %v5671 = vsel %vm3605, %v5670, %v5669
  %v5672 = vperm.slane %v5191, %v3601
  %v5673 = vperm.slane %v5194, %v3603
  %v5674 = vsel %vm3605, %v5673, %v5672
  %v5675 = vperm.slane %v5197, %v3601
  %v5676 = vperm.slane %v5200, %v3603
  %v5677 = vsel %vm3605, %v5676, %v5675
  %v5678 = vperm.slane %v5203, %v3601
  %v5679 = vperm.slane %v5206, %v3603
  %v5680 = vsel %vm3605, %v5679, %v5678
  %v5681 = vperm.slane %v5209, %v3601
  %v5682 = vperm.slane %v5212, %v3603
  %v5683 = vsel %vm3605, %v5682, %v5681
  %v5684 = vperm.slane %v5215, %v3601
  %v5685 = vperm.slane %v5218, %v3603
  %v5686 = vsel %vm3605, %v5685, %v5684
  %v5687 = vperm.slane %v5221, %v3601
  %v5688 = vperm.slane %v5224, %v3603
  %v5689 = vsel %vm3605, %v5688, %v5687
  %v5690 = vperm.slane %v5227, %v3601
  %v5691 = vperm.slane %v5230, %v3603
  %v5692 = vsel %vm3605, %v5691, %v5690
  %v5693 = vperm.slane %v5233, %v3601
  %v5694 = vperm.slane %v5236, %v3603
  %v5695 = vsel %vm3605, %v5694, %v5693
  %v5696 = vperm.slane %v5239, %v3601
  %v5697 = vperm.slane %v5242, %v3603
  %v5698 = vsel %vm3605, %v5697, %v5696
  %v5699 = vperm.slane %v5245, %v3601
  %v5700 = vperm.slane %v5248, %v3603
  %v5701 = vsel %vm3605, %v5700, %v5699
  %v5702 = vperm.slane %v5251, %v3601
  %v5703 = vperm.slane %v5254, %v3603
  %v5704 = vsel %vm3605, %v5703, %v5702
  %v5705 = vperm.slane %v5257, %v3601
  %v5706 = vperm.slane %v5260, %v3603
  %v5707 = vsel %vm3605, %v5706, %v5705
  %v5708 = vperm.slane %v5263, %v3601
  %v5709 = vperm.slane %v5266, %v3603
  %v5710 = vsel %vm3605, %v5709, %v5708
  %v5711 = vperm.slane %v5269, %v3601
  %v5712 = vperm.slane %v5272, %v3603
  %v5713 = vsel %vm3605, %v5712, %v5711
  %v5714 = vperm.slane %v5275, %v3601
  %v5715 = vperm.slane %v5278, %v3603
  %v5716 = vsel %vm3605, %v5715, %v5714
  %v5717 = vperm.slane %v5281, %v3601
  %v5718 = vperm.slane %v5284, %v3603
  %v5719 = vsel %vm3605, %v5718, %v5717
  %v5720 = vperm.slane %v5287, %v3601
  %v5721 = vperm.slane %v5290, %v3603
  %v5722 = vsel %vm3605, %v5721, %v5720
  %v5723 = vperm.slane %v5293, %v3601
  %v5724 = vperm.slane %v5296, %v3603
  %v5725 = vsel %vm3605, %v5724, %v5723
  %v5726 = vperm.slane %v5299, %v3601
  %v5727 = vperm.slane %v5302, %v3603
  %v5728 = vsel %vm3605, %v5727, %v5726
  %v5729 = vperm.slane %v5305, %v3601
  %v5730 = vperm.slane %v5308, %v3603
  %v5731 = vsel %vm3605, %v5730, %v5729
  %v5732 = vperm.slane %v5311, %v3601
  %v5733 = vperm.slane %v5314, %v3603
  %v5734 = vsel %vm3605, %v5733, %v5732
  %v5735 = vperm.slane %v5317, %v3601
  %v5736 = vperm.slane %v5320, %v3603
  %v5737 = vsel %vm3605, %v5736, %v5735
  %v5738 = vperm.slane %v5323, %v3601
  %v5739 = vperm.slane %v5326, %v3603
  %v5740 = vsel %vm3605, %v5739, %v5738
  %v5741 = vperm.slane %v5329, %v3601
  %v5742 = vperm.slane %v5332, %v3603
  %v5743 = vsel %vm3605, %v5742, %v5741
  %v5744 = vperm.slane %v5335, %v3601
  %v5745 = vperm.slane %v5338, %v3603
  %v5746 = vsel %vm3605, %v5745, %v5744
  %v5747 = vperm.slane %v5341, %v3601
  %v5748 = vperm.slane %v5344, %v3603
  %v5749 = vsel %vm3605, %v5748, %v5747
  %v5750 = vperm.slane %v5347, %v3601
  %v5751 = vperm.slane %v5350, %v3603
  %v5752 = vsel %vm3605, %v5751, %v5750
  %v5753 = vperm.slane %v5353, %v3601
  %v5754 = vperm.slane %v5356, %v3603
  %v5755 = vsel %vm3605, %v5754, %v5753
  %v5756 = vperm.slane %v5359, %v3601
  %v5757 = vperm.slane %v5362, %v3603
  %v5758 = vsel %vm3605, %v5757, %v5756
  %v5759 = vperm.slane %v5365, %v3601
  %v5760 = vperm.slane %v5368, %v3603
  %v5761 = vsel %vm3605, %v5760, %v5759
  %v5762 = vperm.slane %v5371, %v3601
  %v5763 = vperm.slane %v5374, %v3603
  %v5764 = vsel %vm3605, %v5763, %v5762
  %v5765 = vperm.slane %v5377, %v3601
  %v5766 = vperm.slane %v5380, %v3603
  %v5767 = vsel %vm3605, %v5766, %v5765
  %v5768 = vperm.slane %v5383, %v3601
  %v5769 = vperm.slane %v5386, %v3603
  %v5770 = vsel %vm3605, %v5769, %v5768
  %v5771 = vperm.slane %v5389, %v3601
  %v5772 = vperm.slane %v5392, %v3603
  %v5773 = vsel %vm3605, %v5772, %v5771
  %v5774 = vperm.slane %v5395, %v3601
  %v5775 = vperm.slane %v5398, %v3603
  %v5776 = vsel %vm3605, %v5775, %v5774
  %v5777 = vperm.slane %v5401, %v3601
  %v5778 = vperm.slane %v5404, %v3603
  %v5779 = vsel %vm3605, %v5778, %v5777
  %v5780 = vperm.slane %v5407, %v3601
  %v5781 = vperm.slane %v5410, %v3603
  %v5782 = vsel %vm3605, %v5781, %v5780
  %v5783 = vperm.slane %v5413, %v3601
  %v5784 = vperm.slane %v5416, %v3603
  %v5785 = vsel %vm3605, %v5784, %v5783
  %v5786 = vperm.slane %v5419, %v3601
  %v5787 = vperm.slane %v5422, %v3603
  %v5788 = vsel %vm3605, %v5787, %v5786
  %v5789 = vperm.slane %v5425, %v3601
  %v5790 = vperm.slane %v5428, %v3603
  %v5791 = vsel %vm3605, %v5790, %v5789
  %v5792 = vperm.slane %v5431, %v3601
  %v5793 = vperm.slane %v5434, %v3603
  %v5794 = vsel %vm3605, %v5793, %v5792
  %v5795 = vperm.slane %v5437, %v3601
  %v5796 = vperm.slane %v5440, %v3603
  %v5797 = vsel %vm3605, %v5796, %v5795
  %v5798 = vperm.slane %v5443, %v3601
  %v5799 = vperm.slane %v5446, %v3603
  %v5800 = vsel %vm3605, %v5799, %v5798
  %v5801 = vperm.slane %v5449, %v3601
  %v5802 = vperm.slane %v5452, %v3603
  %v5803 = vsel %vm3605, %v5802, %v5801
  %v5804 = vperm.slane %v5455, %v3601
  %v5805 = vperm.slane %v5458, %v3603
  %v5806 = vsel %vm3605, %v5805, %v5804
  %v5807 = vperm.slane %v5461, %v3601
  %v5808 = vperm.slane %v5464, %v3603
  %v5809 = vsel %vm3605, %v5808, %v5807
  %v5810 = vperm.slane %v5467, %v3601
  %v5811 = vperm.slane %v5470, %v3603
  %v5812 = vsel %vm3605, %v5811, %v5810
  %v5813 = vperm.slane %v5473, %v3601
  %v5814 = vperm.slane %v5476, %v3603
  %v5815 = vsel %vm3605, %v5814, %v5813
  %v5816 = vperm.slane %v5479, %v3601
  %v5817 = vperm.slane %v5482, %v3603
  %v5818 = vsel %vm3605, %v5817, %v5816
  %v5819 = vperm.slane %v5485, %v3601
  %v5820 = vperm.slane %v5488, %v3603
  %v5821 = vsel %vm3605, %v5820, %v5819
  %v5822 = vperm.slane %v5491, %v3601
  %v5823 = vperm.slane %v5494, %v3603
  %v5824 = vsel %vm3605, %v5823, %v5822
  %v5825 = vperm.slane %v5497, %v3601
  %v5826 = vperm.slane %v5500, %v3603
  %v5827 = vsel %vm3605, %v5826, %v5825
  %v5828 = vperm.slane %v5503, %v3601
  %v5829 = vperm.slane %v5506, %v3603
  %v5830 = vsel %vm3605, %v5829, %v5828
  %v5831 = vperm.slane %v5509, %v3601
  %v5832 = vperm.slane %v5512, %v3603
  %v5833 = vsel %vm3605, %v5832, %v5831
  %v5834 = vperm.slane %v5515, %v3601
  %v5835 = vperm.slane %v5518, %v3603
  %v5836 = vsel %vm3605, %v5835, %v5834
  %v5837 = vperm.slane %v5521, %v3601
  %v5838 = vperm.slane %v5524, %v3603
  %v5839 = vsel %vm3605, %v5838, %v5837
  %v5840 = vperm.slane %v5527, %v3601
  %v5841 = vperm.slane %v5530, %v3603
  %v5842 = vsel %vm3605, %v5841, %v5840
  %v5843 = vperm.slane %v5533, %v3601
  %v5844 = vperm.slane %v5536, %v3603
  %v5845 = vsel %vm3605, %v5844, %v5843
  %v5846 = vperm.slane %v5539, %v3601
  %v5847 = vperm.slane %v5542, %v3603
  %v5848 = vsel %vm3605, %v5847, %v5846
  %v5849 = vperm.slane %v5545, %v3601
  %v5850 = vperm.slane %v5548, %v3603
  %v5851 = vsel %vm3605, %v5850, %v5849
  %v5852 = vperm.slane %v5551, %v3601
  %v5853 = vperm.slane %v5554, %v3603
  %v5854 = vsel %vm3605, %v5853, %v5852
  %v5855 = vperm.slane %v5557, %v3601
  %v5856 = vperm.slane %v5560, %v3603
  %v5857 = vsel %vm3605, %v5856, %v5855
  %v5858 = vperm.slane %v5563, %v3601
  %v5859 = vperm.slane %v5566, %v3603
  %v5860 = vsel %vm3605, %v5859, %v5858
  %v5861 = vperm.slane %v5569, %v3601
  %v5862 = vperm.slane %v5572, %v3603
  %v5863 = vsel %vm3605, %v5862, %v5861
  %v5864 = vperm.slane %v5575, %v3601
  %v5865 = vperm.slane %v5578, %v3603
  %v5866 = vsel %vm3605, %v5865, %v5864
  %v5867 = vsel %vm3892, %v5584, %v5581
  %v5868 = vsel %vm3894, %v5587, %v5867
  %v5869 = vsel %vm3896, %v5590, %v5868
  %v5870 = vsel %vm3898, %v5593, %v5869
  %v5871 = vsel %vm3900, %v5596, %v5870
  %v5872 = vsel %vm3902, %v5599, %v5871
  %v5873 = vsel %vm3904, %v5602, %v5872
  %v5874 = vsel %vm3892, %v5608, %v5605
  %v5875 = vsel %vm3894, %v5611, %v5874
  %v5876 = vsel %vm3896, %v5614, %v5875
  %v5877 = vsel %vm3898, %v5617, %v5876
  %v5878 = vsel %vm3900, %v5620, %v5877
  %v5879 = vsel %vm3902, %v5623, %v5878
  %v5880 = vsel %vm3904, %v5626, %v5879
  %v5881 = vsel %vm3892, %v5632, %v5629
  %v5882 = vsel %vm3894, %v5635, %v5881
  %v5883 = vsel %vm3896, %v5638, %v5882
  %v5884 = vsel %vm3898, %v5641, %v5883
  %v5885 = vsel %vm3900, %v5644, %v5884
  %v5886 = vsel %vm3902, %v5647, %v5885
  %v5887 = vsel %vm3904, %v5650, %v5886
  %v5888 = vsel %vm3892, %v5656, %v5653
  %v5889 = vsel %vm3894, %v5659, %v5888
  %v5890 = vsel %vm3896, %v5662, %v5889
  %v5891 = vsel %vm3898, %v5665, %v5890
  %v5892 = vsel %vm3900, %v5668, %v5891
  %v5893 = vsel %vm3902, %v5671, %v5892
  %v5894 = vsel %vm3904, %v5674, %v5893
  %v5895 = vsel %vm3892, %v5680, %v5677
  %v5896 = vsel %vm3894, %v5683, %v5895
  %v5897 = vsel %vm3896, %v5686, %v5896
  %v5898 = vsel %vm3898, %v5689, %v5897
  %v5899 = vsel %vm3900, %v5692, %v5898
  %v5900 = vsel %vm3902, %v5695, %v5899
  %v5901 = vsel %vm3904, %v5698, %v5900
  %v5902 = vsel %vm3892, %v5704, %v5701
  %v5903 = vsel %vm3894, %v5707, %v5902
  %v5904 = vsel %vm3896, %v5710, %v5903
  %v5905 = vsel %vm3898, %v5713, %v5904
  %v5906 = vsel %vm3900, %v5716, %v5905
  %v5907 = vsel %vm3902, %v5719, %v5906
  %v5908 = vsel %vm3904, %v5722, %v5907
  %v5909 = vsel %vm3892, %v5728, %v5725
  %v5910 = vsel %vm3894, %v5731, %v5909
  %v5911 = vsel %vm3896, %v5734, %v5910
  %v5912 = vsel %vm3898, %v5737, %v5911
  %v5913 = vsel %vm3900, %v5740, %v5912
  %v5914 = vsel %vm3902, %v5743, %v5913
  %v5915 = vsel %vm3904, %v5746, %v5914
  %v5916 = vsel %vm3892, %v5752, %v5749
  %v5917 = vsel %vm3894, %v5755, %v5916
  %v5918 = vsel %vm3896, %v5758, %v5917
  %v5919 = vsel %vm3898, %v5761, %v5918
  %v5920 = vsel %vm3900, %v5764, %v5919
  %v5921 = vsel %vm3902, %v5767, %v5920
  %v5922 = vsel %vm3904, %v5770, %v5921
  %v5923 = vsel %vm3892, %v5776, %v5773
  %v5924 = vsel %vm3894, %v5779, %v5923
  %v5925 = vsel %vm3896, %v5782, %v5924
  %v5926 = vsel %vm3898, %v5785, %v5925
  %v5927 = vsel %vm3900, %v5788, %v5926
  %v5928 = vsel %vm3902, %v5791, %v5927
  %v5929 = vsel %vm3904, %v5794, %v5928
  %v5930 = vsel %vm3892, %v5800, %v5797
  %v5931 = vsel %vm3894, %v5803, %v5930
  %v5932 = vsel %vm3896, %v5806, %v5931
  %v5933 = vsel %vm3898, %v5809, %v5932
  %v5934 = vsel %vm3900, %v5812, %v5933
  %v5935 = vsel %vm3902, %v5815, %v5934
  %v5936 = vsel %vm3904, %v5818, %v5935
  %v5937 = vsel %vm3892, %v5824, %v5821
  %v5938 = vsel %vm3894, %v5827, %v5937
  %v5939 = vsel %vm3896, %v5830, %v5938
  %v5940 = vsel %vm3898, %v5833, %v5939
  %v5941 = vsel %vm3900, %v5836, %v5940
  %v5942 = vsel %vm3902, %v5839, %v5941
  %v5943 = vsel %vm3904, %v5842, %v5942
  %v5944 = vsel %vm3892, %v5848, %v5845
  %v5945 = vsel %vm3894, %v5851, %v5944
  %v5946 = vsel %vm3896, %v5854, %v5945
  %v5947 = vsel %vm3898, %v5857, %v5946
  %v5948 = vsel %vm3900, %v5860, %v5947
  %v5949 = vsel %vm3902, %v5863, %v5948
  %v5950 = vsel %vm3904, %v5866, %v5949
  %v5963 = vsel %vm2831, %v5873, 0.0
  %5964 = vadd.xlane.f32.xlu0 %v5963
  %v5965 = vpop.xlane.xlu0 %5964
  %v5966 = vsel %vm2831, %v5880, 0.0
  %5967 = vadd.xlane.f32.xlu0 %v5966
  %v5968 = vpop.xlane.xlu0 %5967
  %v5969 = vsel %vm2831, %v5887, 0.0
  %5970 = vadd.xlane.f32.xlu0 %v5969
  %v5971 = vpop.xlane.xlu0 %5970
  %v5972 = vsel %vm2831, %v5894, 0.0
  %5973 = vadd.xlane.f32.xlu0 %v5972
  %v5974 = vpop.xlane.xlu0 %5973
  %v5975 = vsel %vm2831, %v5901, 0.0
  %5976 = vadd.xlane.f32.xlu0 %v5975
  %v5977 = vpop.xlane.xlu0 %5976
  %v5978 = vsel %vm2831, %v5908, 0.0
  %5979 = vadd.xlane.f32.xlu0 %v5978
  %v5980 = vpop.xlane.xlu0 %5979
  %v5981 = vsel %vm2831, %v5915, 0.0
  %5982 = vadd.xlane.f32.xlu0 %v5981
  %v5983 = vpop.xlane.xlu0 %5982
  %v5984 = vsel %vm2831, %v5922, 0.0
  %5985 = vadd.xlane.f32.xlu0 %v5984
  %v5986 = vpop.xlane.xlu0 %5985
  %v5987 = vsel %vm2831, %v5929, 0.0
  %5988 = vadd.xlane.f32.xlu0 %v5987
  %v5989 = vpop.xlane.xlu0 %5988
  %v5990 = vsel %vm2831, %v5936, 0.0
  %5991 = vadd.xlane.f32.xlu0 %v5990
  %v5992 = vpop.xlane.xlu0 %5991
  %v5993 = vsel %vm2831, %v5943, 0.0
  %5994 = vadd.xlane.f32.xlu0 %v5993
  %v5995 = vpop.xlane.xlu0 %5994
  %v5996 = vsel %vm2831, %v5950, 0.0
  %5997 = vadd.xlane.f32.xlu0 %v5996
  %v5998 = vpop.xlane.xlu0 %5997
  %v6011 = vperm.slane %v5965, 0
  %v6012 = vperm.slane %v5965, 1
  %v6013 = vperm.slane %v5965, 2
  %v6014 = vperm.slane %v5965, 3
  %v6015 = vperm.slane %v5965, 4
  %v6016 = vperm.slane %v5965, 5
  %v6017 = vperm.slane %v5965, 6
  %v6018 = vperm.slane %v5965, 7
  %v6019 = vperm.slane %v5968, 0
  %v6020 = vperm.slane %v5968, 1
  %v6021 = vperm.slane %v5968, 2
  %v6022 = vperm.slane %v5968, 3
  %v6023 = vperm.slane %v5968, 4
  %v6024 = vperm.slane %v5968, 5
  %v6025 = vperm.slane %v5968, 6
  %v6026 = vperm.slane %v5968, 7
  %v6027 = vperm.slane %v5971, 0
  %v6028 = vperm.slane %v5971, 1
  %v6029 = vperm.slane %v5971, 2
  %v6030 = vperm.slane %v5971, 3
  %v6031 = vperm.slane %v5971, 4
  %v6032 = vperm.slane %v5971, 5
  %v6033 = vperm.slane %v5971, 6
  %v6034 = vperm.slane %v5971, 7
  %v6035 = vperm.slane %v5974, 0
  %v6036 = vperm.slane %v5974, 1
  %v6037 = vperm.slane %v5974, 2
  %v6038 = vperm.slane %v5974, 3
  %v6039 = vperm.slane %v5974, 4
  %v6040 = vperm.slane %v5974, 5
  %v6041 = vperm.slane %v5974, 6
  %v6042 = vperm.slane %v5974, 7
  %v6043 = vperm.slane %v5977, 0
  %v6044 = vperm.slane %v5977, 1
  %v6045 = vperm.slane %v5977, 2
  %v6046 = vperm.slane %v5977, 3
  %v6047 = vperm.slane %v5977, 4
  %v6048 = vperm.slane %v5977, 5
  %v6049 = vperm.slane %v5977, 6
  %v6050 = vperm.slane %v5977, 7
  %v6051 = vperm.slane %v5980, 0
  %v6052 = vperm.slane %v5980, 1
  %v6053 = vperm.slane %v5980, 2
  %v6054 = vperm.slane %v5980, 3
  %v6055 = vperm.slane %v5980, 4
  %v6056 = vperm.slane %v5980, 5
  %v6057 = vperm.slane %v5980, 6
  %v6058 = vperm.slane %v5980, 7
  %v6059 = vperm.slane %v5983, 0
  %v6060 = vperm.slane %v5983, 1
  %v6061 = vperm.slane %v5983, 2
  %v6062 = vperm.slane %v5983, 3
  %v6063 = vperm.slane %v5983, 4
  %v6064 = vperm.slane %v5983, 5
  %v6065 = vperm.slane %v5983, 6
  %v6066 = vperm.slane %v5983, 7
  %v6067 = vperm.slane %v5986, 0
  %v6068 = vperm.slane %v5986, 1
  %v6069 = vperm.slane %v5986, 2
  %v6070 = vperm.slane %v5986, 3
  %v6071 = vperm.slane %v5986, 4
  %v6072 = vperm.slane %v5986, 5
  %v6073 = vperm.slane %v5986, 6
  %v6074 = vperm.slane %v5986, 7
  %v6075 = vperm.slane %v5989, 0
  %v6076 = vperm.slane %v5989, 1
  %v6077 = vperm.slane %v5989, 2
  %v6078 = vperm.slane %v5989, 3
  %v6079 = vperm.slane %v5989, 4
  %v6080 = vperm.slane %v5989, 5
  %v6081 = vperm.slane %v5989, 6
  %v6082 = vperm.slane %v5989, 7
  %v6083 = vperm.slane %v5992, 0
  %v6084 = vperm.slane %v5992, 1
  %v6085 = vperm.slane %v5992, 2
  %v6086 = vperm.slane %v5992, 3
  %v6087 = vperm.slane %v5992, 4
  %v6088 = vperm.slane %v5992, 5
  %v6089 = vperm.slane %v5992, 6
  %v6090 = vperm.slane %v5992, 7
  %v6091 = vperm.slane %v5995, 0
  %v6092 = vperm.slane %v5995, 1
  %v6093 = vperm.slane %v5995, 2
  %v6094 = vperm.slane %v5995, 3
  %v6095 = vperm.slane %v5995, 4
  %v6096 = vperm.slane %v5995, 5
  %v6097 = vperm.slane %v5995, 6
  %v6098 = vperm.slane %v5995, 7
  %v6099 = vperm.slane %v5998, 0
  %v6100 = vperm.slane %v5998, 1
  %v6101 = vperm.slane %v5998, 2
  %v6102 = vperm.slane %v5998, 3
  %v6103 = vperm.slane %v5998, 4
  %v6104 = vperm.slane %v5998, 5
  %v6105 = vperm.slane %v5998, 6
  %v6106 = vperm.slane %v5998, 7
  %v6203 = vrcp.pop %v6011
  %v6204 = vmul.f32 %v6011, %v6203
  %v6205 = vsub.f32 1.0, %v6204
  %v6206 = vmul.f32 %v6203, %v6205
  %v6207 = vadd.f32 %v6203, %v6206
  %vm6208 = vweird.f32 %v6011
  %vm6209 = vweird.f32 %v6203
  %vm6210 = vmor %vm6208, %vm6209
  %v6211 = vsel %vm6210, %v6203, %v6207
  %v6212 = vand.u32 2147483647, %v6011
  %vm6213 = vcmp.eq.f32.partialorder %v6212, 8.507059e+37
  %v6214 = vand.u32 %v6011, 2147483648
  %v6215 = vor.u32 1.1754944e-38, %v6214
  %v6216 = vsel %vm6213, %v6215, %v6211
  %v6217 = vmul.f32 %v4428, %v6216
  %v6218 = vmul.f32 %v4430, %v6216
  %v6219 = vrcp.pop %v6012
  %v6220 = vmul.f32 %v6012, %v6219
  %v6221 = vsub.f32 1.0, %v6220
  %v6222 = vmul.f32 %v6219, %v6221
  %v6223 = vadd.f32 %v6219, %v6222
  %vm6224 = vweird.f32 %v6012
  %vm6225 = vweird.f32 %v6219
  %vm6226 = vmor %vm6224, %vm6225
  %v6227 = vsel %vm6226, %v6219, %v6223
  %v6228 = vand.u32 2147483647, %v6012
  %vm6229 = vcmp.eq.f32.partialorder %v6228, 8.507059e+37
  %v6230 = vand.u32 %v6012, 2147483648
  %v6231 = vor.u32 1.1754944e-38, %v6230
  %v6232 = vsel %vm6229, %v6231, %v6227
  %v6233 = vmul.f32 %v4432, %v6232
  %v6234 = vmul.f32 %v4434, %v6232
  %v6235 = vrcp.pop %v6013
  %v6236 = vmul.f32 %v6013, %v6235
  %v6237 = vsub.f32 1.0, %v6236
  %v6238 = vmul.f32 %v6235, %v6237
  %v6239 = vadd.f32 %v6235, %v6238
  %vm6240 = vweird.f32 %v6013
  %vm6241 = vweird.f32 %v6235
  %vm6242 = vmor %vm6240, %vm6241
  %v6243 = vsel %vm6242, %v6235, %v6239
  %v6244 = vand.u32 2147483647, %v6013
  %vm6245 = vcmp.eq.f32.partialorder %v6244, 8.507059e+37
  %v6246 = vand.u32 %v6013, 2147483648
  %v6247 = vor.u32 1.1754944e-38, %v6246
  %v6248 = vsel %vm6245, %v6247, %v6243
  %v6249 = vmul.f32 %v4436, %v6248
  %v6250 = vmul.f32 %v4438, %v6248
  %v6251 = vrcp.pop %v6014
  %v6252 = vmul.f32 %v6014, %v6251
  %v6253 = vsub.f32 1.0, %v6252
  %v6254 = vmul.f32 %v6251, %v6253
  %v6255 = vadd.f32 %v6251, %v6254
  %vm6256 = vweird.f32 %v6014
  %vm6257 = vweird.f32 %v6251
  %vm6258 = vmor %vm6256, %vm6257
  %v6259 = vsel %vm6258, %v6251, %v6255
  %v6260 = vand.u32 2147483647, %v6014
  %vm6261 = vcmp.eq.f32.partialorder %v6260, 8.507059e+37
  %v6262 = vand.u32 %v6014, 2147483648
  %v6263 = vor.u32 1.1754944e-38, %v6262
  %v6264 = vsel %vm6261, %v6263, %v6259
  %v6265 = vmul.f32 %v4440, %v6264
  %v6266 = vmul.f32 %v4442, %v6264
  %v6267 = vrcp.pop %v6015
  %v6268 = vmul.f32 %v6015, %v6267
  %v6269 = vsub.f32 1.0, %v6268
  %v6270 = vmul.f32 %v6267, %v6269
  %v6271 = vadd.f32 %v6267, %v6270
  %vm6272 = vweird.f32 %v6015
  %vm6273 = vweird.f32 %v6267
  %vm6274 = vmor %vm6272, %vm6273
  %v6275 = vsel %vm6274, %v6267, %v6271
  %v6276 = vand.u32 2147483647, %v6015
  %vm6277 = vcmp.eq.f32.partialorder %v6276, 8.507059e+37
  %v6278 = vand.u32 %v6015, 2147483648
  %v6279 = vor.u32 1.1754944e-38, %v6278
  %v6280 = vsel %vm6277, %v6279, %v6275
  %v6281 = vmul.f32 %v4444, %v6280
  %v6282 = vmul.f32 %v4446, %v6280
  %v6283 = vrcp.pop %v6016
  %v6284 = vmul.f32 %v6016, %v6283
  %v6285 = vsub.f32 1.0, %v6284
  %v6286 = vmul.f32 %v6283, %v6285
  %v6287 = vadd.f32 %v6283, %v6286
  %vm6288 = vweird.f32 %v6016
  %vm6289 = vweird.f32 %v6283
  %vm6290 = vmor %vm6288, %vm6289
  %v6291 = vsel %vm6290, %v6283, %v6287
  %v6292 = vand.u32 2147483647, %v6016
  %vm6293 = vcmp.eq.f32.partialorder %v6292, 8.507059e+37
  %v6294 = vand.u32 %v6016, 2147483648
  %v6295 = vor.u32 1.1754944e-38, %v6294
  %v6296 = vsel %vm6293, %v6295, %v6291
  %v6297 = vmul.f32 %v4448, %v6296
  %v6298 = vmul.f32 %v4450, %v6296
  %v6299 = vrcp.pop %v6017
  %v6300 = vmul.f32 %v6017, %v6299
  %v6301 = vsub.f32 1.0, %v6300
  %v6302 = vmul.f32 %v6299, %v6301
  %v6303 = vadd.f32 %v6299, %v6302
  %vm6304 = vweird.f32 %v6017
  %vm6305 = vweird.f32 %v6299
  %vm6306 = vmor %vm6304, %vm6305
  %v6307 = vsel %vm6306, %v6299, %v6303
  %v6308 = vand.u32 2147483647, %v6017
  %vm6309 = vcmp.eq.f32.partialorder %v6308, 8.507059e+37
  %v6310 = vand.u32 %v6017, 2147483648
  %v6311 = vor.u32 1.1754944e-38, %v6310
  %v6312 = vsel %vm6309, %v6311, %v6307
  %v6313 = vmul.f32 %v4452, %v6312
  %v6314 = vmul.f32 %v4454, %v6312
  %v6315 = vrcp.pop %v6018
  %v6316 = vmul.f32 %v6018, %v6315
  %v6317 = vsub.f32 1.0, %v6316
  %v6318 = vmul.f32 %v6315, %v6317
  %v6319 = vadd.f32 %v6315, %v6318
  %vm6320 = vweird.f32 %v6018
  %vm6321 = vweird.f32 %v6315
  %vm6322 = vmor %vm6320, %vm6321
  %v6323 = vsel %vm6322, %v6315, %v6319
  %v6324 = vand.u32 2147483647, %v6018
  %vm6325 = vcmp.eq.f32.partialorder %v6324, 8.507059e+37
  %v6326 = vand.u32 %v6018, 2147483648
  %v6327 = vor.u32 1.1754944e-38, %v6326
  %v6328 = vsel %vm6325, %v6327, %v6323
  %v6329 = vmul.f32 %v4456, %v6328
  %v6330 = vmul.f32 %v4458, %v6328
  %v6331 = vrcp.pop %v6019
  %v6332 = vmul.f32 %v6019, %v6331
  %v6333 = vsub.f32 1.0, %v6332
  %v6334 = vmul.f32 %v6331, %v6333
  %v6335 = vadd.f32 %v6331, %v6334
  %vm6336 = vweird.f32 %v6019
  %vm6337 = vweird.f32 %v6331
  %vm6338 = vmor %vm6336, %vm6337
  %v6339 = vsel %vm6338, %v6331, %v6335
  %v6340 = vand.u32 2147483647, %v6019
  %vm6341 = vcmp.eq.f32.partialorder %v6340, 8.507059e+37
  %v6342 = vand.u32 %v6019, 2147483648
  %v6343 = vor.u32 1.1754944e-38, %v6342
  %v6344 = vsel %vm6341, %v6343, %v6339
  %v6345 = vmul.f32 %v4460, %v6344
  %v6346 = vmul.f32 %v4462, %v6344
  %v6347 = vrcp.pop %v6020
  %v6348 = vmul.f32 %v6020, %v6347
  %v6349 = vsub.f32 1.0, %v6348
  %v6350 = vmul.f32 %v6347, %v6349
  %v6351 = vadd.f32 %v6347, %v6350
  %vm6352 = vweird.f32 %v6020
  %vm6353 = vweird.f32 %v6347
  %vm6354 = vmor %vm6352, %vm6353
  %v6355 = vsel %vm6354, %v6347, %v6351
  %v6356 = vand.u32 2147483647, %v6020
  %vm6357 = vcmp.eq.f32.partialorder %v6356, 8.507059e+37
  %v6358 = vand.u32 %v6020, 2147483648
  %v6359 = vor.u32 1.1754944e-38, %v6358
  %v6360 = vsel %vm6357, %v6359, %v6355
  %v6361 = vmul.f32 %v4464, %v6360
  %v6362 = vmul.f32 %v4466, %v6360
  %v6363 = vrcp.pop %v6021
  %v6364 = vmul.f32 %v6021, %v6363
  %v6365 = vsub.f32 1.0, %v6364
  %v6366 = vmul.f32 %v6363, %v6365
  %v6367 = vadd.f32 %v6363, %v6366
  %vm6368 = vweird.f32 %v6021
  %vm6369 = vweird.f32 %v6363
  %vm6370 = vmor %vm6368, %vm6369
  %v6371 = vsel %vm6370, %v6363, %v6367
  %v6372 = vand.u32 2147483647, %v6021
  %vm6373 = vcmp.eq.f32.partialorder %v6372, 8.507059e+37
  %v6374 = vand.u32 %v6021, 2147483648
  %v6375 = vor.u32 1.1754944e-38, %v6374
  %v6376 = vsel %vm6373, %v6375, %v6371
  %v6377 = vmul.f32 %v4468, %v6376
  %v6378 = vmul.f32 %v4470, %v6376
  %v6379 = vrcp.pop %v6022
  %v6380 = vmul.f32 %v6022, %v6379
  %v6381 = vsub.f32 1.0, %v6380
  %v6382 = vmul.f32 %v6379, %v6381
  %v6383 = vadd.f32 %v6379, %v6382
  %vm6384 = vweird.f32 %v6022
  %vm6385 = vweird.f32 %v6379
  %vm6386 = vmor %vm6384, %vm6385
  %v6387 = vsel %vm6386, %v6379, %v6383
  %v6388 = vand.u32 2147483647, %v6022
  %vm6389 = vcmp.eq.f32.partialorder %v6388, 8.507059e+37
  %v6390 = vand.u32 %v6022, 2147483648
  %v6391 = vor.u32 1.1754944e-38, %v6390
  %v6392 = vsel %vm6389, %v6391, %v6387
  %v6393 = vmul.f32 %v4472, %v6392
  %v6394 = vmul.f32 %v4474, %v6392
  %v6395 = vrcp.pop %v6023
  %v6396 = vmul.f32 %v6023, %v6395
  %v6397 = vsub.f32 1.0, %v6396
  %v6398 = vmul.f32 %v6395, %v6397
  %v6399 = vadd.f32 %v6395, %v6398
  %vm6400 = vweird.f32 %v6023
  %vm6401 = vweird.f32 %v6395
  %vm6402 = vmor %vm6400, %vm6401
  %v6403 = vsel %vm6402, %v6395, %v6399
  %v6404 = vand.u32 2147483647, %v6023
  %vm6405 = vcmp.eq.f32.partialorder %v6404, 8.507059e+37
  %v6406 = vand.u32 %v6023, 2147483648
  %v6407 = vor.u32 1.1754944e-38, %v6406
  %v6408 = vsel %vm6405, %v6407, %v6403
  %v6409 = vmul.f32 %v4476, %v6408
  %v6410 = vmul.f32 %v4478, %v6408
  %v6411 = vrcp.pop %v6024
  %v6412 = vmul.f32 %v6024, %v6411
  %v6413 = vsub.f32 1.0, %v6412
  %v6414 = vmul.f32 %v6411, %v6413
  %v6415 = vadd.f32 %v6411, %v6414
  %vm6416 = vweird.f32 %v6024
  %vm6417 = vweird.f32 %v6411
  %vm6418 = vmor %vm6416, %vm6417
  %v6419 = vsel %vm6418, %v6411, %v6415
  %v6420 = vand.u32 2147483647, %v6024
  %vm6421 = vcmp.eq.f32.partialorder %v6420, 8.507059e+37
  %v6422 = vand.u32 %v6024, 2147483648
  %v6423 = vor.u32 1.1754944e-38, %v6422
  %v6424 = vsel %vm6421, %v6423, %v6419
  %v6425 = vmul.f32 %v4480, %v6424
  %v6426 = vmul.f32 %v4482, %v6424
  %v6427 = vrcp.pop %v6025
  %v6428 = vmul.f32 %v6025, %v6427
  %v6429 = vsub.f32 1.0, %v6428
  %v6430 = vmul.f32 %v6427, %v6429
  %v6431 = vadd.f32 %v6427, %v6430
  %vm6432 = vweird.f32 %v6025
  %vm6433 = vweird.f32 %v6427
  %vm6434 = vmor %vm6432, %vm6433
  %v6435 = vsel %vm6434, %v6427, %v6431
  %v6436 = vand.u32 2147483647, %v6025
  %vm6437 = vcmp.eq.f32.partialorder %v6436, 8.507059e+37
  %v6438 = vand.u32 %v6025, 2147483648
  %v6439 = vor.u32 1.1754944e-38, %v6438
  %v6440 = vsel %vm6437, %v6439, %v6435
  %v6441 = vmul.f32 %v4484, %v6440
  %v6442 = vmul.f32 %v4486, %v6440
  %v6443 = vrcp.pop %v6026
  %v6444 = vmul.f32 %v6026, %v6443
  %v6445 = vsub.f32 1.0, %v6444
  %v6446 = vmul.f32 %v6443, %v6445
  %v6447 = vadd.f32 %v6443, %v6446
  %vm6448 = vweird.f32 %v6026
  %vm6449 = vweird.f32 %v6443
  %vm6450 = vmor %vm6448, %vm6449
  %v6451 = vsel %vm6450, %v6443, %v6447
  %v6452 = vand.u32 2147483647, %v6026
  %vm6453 = vcmp.eq.f32.partialorder %v6452, 8.507059e+37
  %v6454 = vand.u32 %v6026, 2147483648
  %v6455 = vor.u32 1.1754944e-38, %v6454
  %v6456 = vsel %vm6453, %v6455, %v6451
  %v6457 = vmul.f32 %v4488, %v6456
  %v6458 = vmul.f32 %v4490, %v6456
  %v6459 = vrcp.pop %v6027
  %v6460 = vmul.f32 %v6027, %v6459
  %v6461 = vsub.f32 1.0, %v6460
  %v6462 = vmul.f32 %v6459, %v6461
  %v6463 = vadd.f32 %v6459, %v6462
  %vm6464 = vweird.f32 %v6027
  %vm6465 = vweird.f32 %v6459
  %vm6466 = vmor %vm6464, %vm6465
  %v6467 = vsel %vm6466, %v6459, %v6463
  %v6468 = vand.u32 2147483647, %v6027
  %vm6469 = vcmp.eq.f32.partialorder %v6468, 8.507059e+37
  %v6470 = vand.u32 %v6027, 2147483648
  %v6471 = vor.u32 1.1754944e-38, %v6470
  %v6472 = vsel %vm6469, %v6471, %v6467
  %v6473 = vmul.f32 %v4492, %v6472
  %v6474 = vmul.f32 %v4494, %v6472
  %v6475 = vrcp.pop %v6028
  %v6476 = vmul.f32 %v6028, %v6475
  %v6477 = vsub.f32 1.0, %v6476
  %v6478 = vmul.f32 %v6475, %v6477
  %v6479 = vadd.f32 %v6475, %v6478
  %vm6480 = vweird.f32 %v6028
  %vm6481 = vweird.f32 %v6475
  %vm6482 = vmor %vm6480, %vm6481
  %v6483 = vsel %vm6482, %v6475, %v6479
  %v6484 = vand.u32 2147483647, %v6028
  %vm6485 = vcmp.eq.f32.partialorder %v6484, 8.507059e+37
  %v6486 = vand.u32 %v6028, 2147483648
  %v6487 = vor.u32 1.1754944e-38, %v6486
  %v6488 = vsel %vm6485, %v6487, %v6483
  %v6489 = vmul.f32 %v4496, %v6488
  %v6490 = vmul.f32 %v4498, %v6488
  %v6491 = vrcp.pop %v6029
  %v6492 = vmul.f32 %v6029, %v6491
  %v6493 = vsub.f32 1.0, %v6492
  %v6494 = vmul.f32 %v6491, %v6493
  %v6495 = vadd.f32 %v6491, %v6494
  %vm6496 = vweird.f32 %v6029
  %vm6497 = vweird.f32 %v6491
  %vm6498 = vmor %vm6496, %vm6497
  %v6499 = vsel %vm6498, %v6491, %v6495
  %v6500 = vand.u32 2147483647, %v6029
  %vm6501 = vcmp.eq.f32.partialorder %v6500, 8.507059e+37
  %v6502 = vand.u32 %v6029, 2147483648
  %v6503 = vor.u32 1.1754944e-38, %v6502
  %v6504 = vsel %vm6501, %v6503, %v6499
  %v6505 = vmul.f32 %v4500, %v6504
  %v6506 = vmul.f32 %v4502, %v6504
  %v6507 = vrcp.pop %v6030
  %v6508 = vmul.f32 %v6030, %v6507
  %v6509 = vsub.f32 1.0, %v6508
  %v6510 = vmul.f32 %v6507, %v6509
  %v6511 = vadd.f32 %v6507, %v6510
  %vm6512 = vweird.f32 %v6030
  %vm6513 = vweird.f32 %v6507
  %vm6514 = vmor %vm6512, %vm6513
  %v6515 = vsel %vm6514, %v6507, %v6511
  %v6516 = vand.u32 2147483647, %v6030
  %vm6517 = vcmp.eq.f32.partialorder %v6516, 8.507059e+37
  %v6518 = vand.u32 %v6030, 2147483648
  %v6519 = vor.u32 1.1754944e-38, %v6518
  %v6520 = vsel %vm6517, %v6519, %v6515
  %v6521 = vmul.f32 %v4504, %v6520
  %v6522 = vmul.f32 %v4506, %v6520
  %v6523 = vrcp.pop %v6031
  %v6524 = vmul.f32 %v6031, %v6523
  %v6525 = vsub.f32 1.0, %v6524
  %v6526 = vmul.f32 %v6523, %v6525
  %v6527 = vadd.f32 %v6523, %v6526
  %vm6528 = vweird.f32 %v6031
  %vm6529 = vweird.f32 %v6523
  %vm6530 = vmor %vm6528, %vm6529
  %v6531 = vsel %vm6530, %v6523, %v6527
  %v6532 = vand.u32 2147483647, %v6031
  %vm6533 = vcmp.eq.f32.partialorder %v6532, 8.507059e+37
  %v6534 = vand.u32 %v6031, 2147483648
  %v6535 = vor.u32 1.1754944e-38, %v6534
  %v6536 = vsel %vm6533, %v6535, %v6531
  %v6537 = vmul.f32 %v4508, %v6536
  %v6538 = vmul.f32 %v4510, %v6536
  %v6539 = vrcp.pop %v6032
  %v6540 = vmul.f32 %v6032, %v6539
  %v6541 = vsub.f32 1.0, %v6540
  %v6542 = vmul.f32 %v6539, %v6541
  %v6543 = vadd.f32 %v6539, %v6542
  %vm6544 = vweird.f32 %v6032
  %vm6545 = vweird.f32 %v6539
  %vm6546 = vmor %vm6544, %vm6545
  %v6547 = vsel %vm6546, %v6539, %v6543
  %v6548 = vand.u32 2147483647, %v6032
  %vm6549 = vcmp.eq.f32.partialorder %v6548, 8.507059e+37
  %v6550 = vand.u32 %v6032, 2147483648
  %v6551 = vor.u32 1.1754944e-38, %v6550
  %v6552 = vsel %vm6549, %v6551, %v6547
  %v6553 = vmul.f32 %v4512, %v6552
  %v6554 = vmul.f32 %v4514, %v6552
  %v6555 = vrcp.pop %v6033
  %v6556 = vmul.f32 %v6033, %v6555
  %v6557 = vsub.f32 1.0, %v6556
  %v6558 = vmul.f32 %v6555, %v6557
  %v6559 = vadd.f32 %v6555, %v6558
  %vm6560 = vweird.f32 %v6033
  %vm6561 = vweird.f32 %v6555
  %vm6562 = vmor %vm6560, %vm6561
  %v6563 = vsel %vm6562, %v6555, %v6559
  %v6564 = vand.u32 2147483647, %v6033
  %vm6565 = vcmp.eq.f32.partialorder %v6564, 8.507059e+37
  %v6566 = vand.u32 %v6033, 2147483648
  %v6567 = vor.u32 1.1754944e-38, %v6566
  %v6568 = vsel %vm6565, %v6567, %v6563
  %v6569 = vmul.f32 %v4516, %v6568
  %v6570 = vmul.f32 %v4518, %v6568
  %v6571 = vrcp.pop %v6034
  %v6572 = vmul.f32 %v6034, %v6571
  %v6573 = vsub.f32 1.0, %v6572
  %v6574 = vmul.f32 %v6571, %v6573
  %v6575 = vadd.f32 %v6571, %v6574
  %vm6576 = vweird.f32 %v6034
  %vm6577 = vweird.f32 %v6571
  %vm6578 = vmor %vm6576, %vm6577
  %v6579 = vsel %vm6578, %v6571, %v6575
  %v6580 = vand.u32 2147483647, %v6034
  %vm6581 = vcmp.eq.f32.partialorder %v6580, 8.507059e+37
  %v6582 = vand.u32 %v6034, 2147483648
  %v6583 = vor.u32 1.1754944e-38, %v6582
  %v6584 = vsel %vm6581, %v6583, %v6579
  %v6585 = vmul.f32 %v4520, %v6584
  %v6586 = vmul.f32 %v4522, %v6584
  %v6587 = vrcp.pop %v6035
  %v6588 = vmul.f32 %v6035, %v6587
  %v6589 = vsub.f32 1.0, %v6588
  %v6590 = vmul.f32 %v6587, %v6589
  %v6591 = vadd.f32 %v6587, %v6590
  %vm6592 = vweird.f32 %v6035
  %vm6593 = vweird.f32 %v6587
  %vm6594 = vmor %vm6592, %vm6593
  %v6595 = vsel %vm6594, %v6587, %v6591
  %v6596 = vand.u32 2147483647, %v6035
  %vm6597 = vcmp.eq.f32.partialorder %v6596, 8.507059e+37
  %v6598 = vand.u32 %v6035, 2147483648
  %v6599 = vor.u32 1.1754944e-38, %v6598
  %v6600 = vsel %vm6597, %v6599, %v6595
  %v6601 = vmul.f32 %v4524, %v6600
  %v6602 = vmul.f32 %v4526, %v6600
  %v6603 = vrcp.pop %v6036
  %v6604 = vmul.f32 %v6036, %v6603
  %v6605 = vsub.f32 1.0, %v6604
  %v6606 = vmul.f32 %v6603, %v6605
  %v6607 = vadd.f32 %v6603, %v6606
  %vm6608 = vweird.f32 %v6036
  %vm6609 = vweird.f32 %v6603
  %vm6610 = vmor %vm6608, %vm6609
  %v6611 = vsel %vm6610, %v6603, %v6607
  %v6612 = vand.u32 2147483647, %v6036
  %vm6613 = vcmp.eq.f32.partialorder %v6612, 8.507059e+37
  %v6614 = vand.u32 %v6036, 2147483648
  %v6615 = vor.u32 1.1754944e-38, %v6614
  %v6616 = vsel %vm6613, %v6615, %v6611
  %v6617 = vmul.f32 %v4528, %v6616
  %v6618 = vmul.f32 %v4530, %v6616
  %v6619 = vrcp.pop %v6037
  %v6620 = vmul.f32 %v6037, %v6619
  %v6621 = vsub.f32 1.0, %v6620
  %v6622 = vmul.f32 %v6619, %v6621
  %v6623 = vadd.f32 %v6619, %v6622
  %vm6624 = vweird.f32 %v6037
  %vm6625 = vweird.f32 %v6619
  %vm6626 = vmor %vm6624, %vm6625
  %v6627 = vsel %vm6626, %v6619, %v6623
  %v6628 = vand.u32 2147483647, %v6037
  %vm6629 = vcmp.eq.f32.partialorder %v6628, 8.507059e+37
  %v6630 = vand.u32 %v6037, 2147483648
  %v6631 = vor.u32 1.1754944e-38, %v6630
  %v6632 = vsel %vm6629, %v6631, %v6627
  %v6633 = vmul.f32 %v4532, %v6632
  %v6634 = vmul.f32 %v4534, %v6632
  %v6635 = vrcp.pop %v6038
  %v6636 = vmul.f32 %v6038, %v6635
  %v6637 = vsub.f32 1.0, %v6636
  %v6638 = vmul.f32 %v6635, %v6637
  %v6639 = vadd.f32 %v6635, %v6638
  %vm6640 = vweird.f32 %v6038
  %vm6641 = vweird.f32 %v6635
  %vm6642 = vmor %vm6640, %vm6641
  %v6643 = vsel %vm6642, %v6635, %v6639
  %v6644 = vand.u32 2147483647, %v6038
  %vm6645 = vcmp.eq.f32.partialorder %v6644, 8.507059e+37
  %v6646 = vand.u32 %v6038, 2147483648
  %v6647 = vor.u32 1.1754944e-38, %v6646
  %v6648 = vsel %vm6645, %v6647, %v6643
  %v6649 = vmul.f32 %v4536, %v6648
  %v6650 = vmul.f32 %v4538, %v6648
  %v6651 = vrcp.pop %v6039
  %v6652 = vmul.f32 %v6039, %v6651
  %v6653 = vsub.f32 1.0, %v6652
  %v6654 = vmul.f32 %v6651, %v6653
  %v6655 = vadd.f32 %v6651, %v6654
  %vm6656 = vweird.f32 %v6039
  %vm6657 = vweird.f32 %v6651
  %vm6658 = vmor %vm6656, %vm6657
  %v6659 = vsel %vm6658, %v6651, %v6655
  %v6660 = vand.u32 2147483647, %v6039
  %vm6661 = vcmp.eq.f32.partialorder %v6660, 8.507059e+37
  %v6662 = vand.u32 %v6039, 2147483648
  %v6663 = vor.u32 1.1754944e-38, %v6662
  %v6664 = vsel %vm6661, %v6663, %v6659
  %v6665 = vmul.f32 %v4540, %v6664
  %v6666 = vmul.f32 %v4542, %v6664
  %v6667 = vrcp.pop %v6040
  %v6668 = vmul.f32 %v6040, %v6667
  %v6669 = vsub.f32 1.0, %v6668
  %v6670 = vmul.f32 %v6667, %v6669
  %v6671 = vadd.f32 %v6667, %v6670
  %vm6672 = vweird.f32 %v6040
  %vm6673 = vweird.f32 %v6667
  %vm6674 = vmor %vm6672, %vm6673
  %v6675 = vsel %vm6674, %v6667, %v6671
  %v6676 = vand.u32 2147483647, %v6040
  %vm6677 = vcmp.eq.f32.partialorder %v6676, 8.507059e+37
  %v6678 = vand.u32 %v6040, 2147483648
  %v6679 = vor.u32 1.1754944e-38, %v6678
  %v6680 = vsel %vm6677, %v6679, %v6675
  %v6681 = vmul.f32 %v4544, %v6680
  %v6682 = vmul.f32 %v4546, %v6680
  %v6683 = vrcp.pop %v6041
  %v6684 = vmul.f32 %v6041, %v6683
  %v6685 = vsub.f32 1.0, %v6684
  %v6686 = vmul.f32 %v6683, %v6685
  %v6687 = vadd.f32 %v6683, %v6686
  %vm6688 = vweird.f32 %v6041
  %vm6689 = vweird.f32 %v6683
  %vm6690 = vmor %vm6688, %vm6689
  %v6691 = vsel %vm6690, %v6683, %v6687
  %v6692 = vand.u32 2147483647, %v6041
  %vm6693 = vcmp.eq.f32.partialorder %v6692, 8.507059e+37
  %v6694 = vand.u32 %v6041, 2147483648
  %v6695 = vor.u32 1.1754944e-38, %v6694
  %v6696 = vsel %vm6693, %v6695, %v6691
  %v6697 = vmul.f32 %v4548, %v6696
  %v6698 = vmul.f32 %v4550, %v6696
  %v6699 = vrcp.pop %v6042
  %v6700 = vmul.f32 %v6042, %v6699
  %v6701 = vsub.f32 1.0, %v6700
  %v6702 = vmul.f32 %v6699, %v6701
  %v6703 = vadd.f32 %v6699, %v6702
  %vm6704 = vweird.f32 %v6042
  %vm6705 = vweird.f32 %v6699
  %vm6706 = vmor %vm6704, %vm6705
  %v6707 = vsel %vm6706, %v6699, %v6703
  %v6708 = vand.u32 2147483647, %v6042
  %vm6709 = vcmp.eq.f32.partialorder %v6708, 8.507059e+37
  %v6710 = vand.u32 %v6042, 2147483648
  %v6711 = vor.u32 1.1754944e-38, %v6710
  %v6712 = vsel %vm6709, %v6711, %v6707
  %v6713 = vmul.f32 %v4552, %v6712
  %v6714 = vmul.f32 %v4554, %v6712
  %v6715 = vrcp.pop %v6043
  %v6716 = vmul.f32 %v6043, %v6715
  %v6717 = vsub.f32 1.0, %v6716
  %v6718 = vmul.f32 %v6715, %v6717
  %v6719 = vadd.f32 %v6715, %v6718
  %vm6720 = vweird.f32 %v6043
  %vm6721 = vweird.f32 %v6715
  %vm6722 = vmor %vm6720, %vm6721
  %v6723 = vsel %vm6722, %v6715, %v6719
  %v6724 = vand.u32 2147483647, %v6043
  %vm6725 = vcmp.eq.f32.partialorder %v6724, 8.507059e+37
  %v6726 = vand.u32 %v6043, 2147483648
  %v6727 = vor.u32 1.1754944e-38, %v6726
  %v6728 = vsel %vm6725, %v6727, %v6723
  %v6729 = vmul.f32 %v4556, %v6728
  %v6730 = vmul.f32 %v4558, %v6728
  %v6731 = vrcp.pop %v6044
  %v6732 = vmul.f32 %v6044, %v6731
  %v6733 = vsub.f32 1.0, %v6732
  %v6734 = vmul.f32 %v6731, %v6733
  %v6735 = vadd.f32 %v6731, %v6734
  %vm6736 = vweird.f32 %v6044
  %vm6737 = vweird.f32 %v6731
  %vm6738 = vmor %vm6736, %vm6737
  %v6739 = vsel %vm6738, %v6731, %v6735
  %v6740 = vand.u32 2147483647, %v6044
  %vm6741 = vcmp.eq.f32.partialorder %v6740, 8.507059e+37
  %v6742 = vand.u32 %v6044, 2147483648
  %v6743 = vor.u32 1.1754944e-38, %v6742
  %v6744 = vsel %vm6741, %v6743, %v6739
  %v6745 = vmul.f32 %v4560, %v6744
  %v6746 = vmul.f32 %v4562, %v6744
  %v6747 = vrcp.pop %v6045
  %v6748 = vmul.f32 %v6045, %v6747
  %v6749 = vsub.f32 1.0, %v6748
  %v6750 = vmul.f32 %v6747, %v6749
  %v6751 = vadd.f32 %v6747, %v6750
  %vm6752 = vweird.f32 %v6045
  %vm6753 = vweird.f32 %v6747
  %vm6754 = vmor %vm6752, %vm6753
  %v6755 = vsel %vm6754, %v6747, %v6751
  %v6756 = vand.u32 2147483647, %v6045
  %vm6757 = vcmp.eq.f32.partialorder %v6756, 8.507059e+37
  %v6758 = vand.u32 %v6045, 2147483648
  %v6759 = vor.u32 1.1754944e-38, %v6758
  %v6760 = vsel %vm6757, %v6759, %v6755
  %v6761 = vmul.f32 %v4564, %v6760
  %v6762 = vmul.f32 %v4566, %v6760
  %v6763 = vrcp.pop %v6046
  %v6764 = vmul.f32 %v6046, %v6763
  %v6765 = vsub.f32 1.0, %v6764
  %v6766 = vmul.f32 %v6763, %v6765
  %v6767 = vadd.f32 %v6763, %v6766
  %vm6768 = vweird.f32 %v6046
  %vm6769 = vweird.f32 %v6763
  %vm6770 = vmor %vm6768, %vm6769
  %v6771 = vsel %vm6770, %v6763, %v6767
  %v6772 = vand.u32 2147483647, %v6046
  %vm6773 = vcmp.eq.f32.partialorder %v6772, 8.507059e+37
  %v6774 = vand.u32 %v6046, 2147483648
  %v6775 = vor.u32 1.1754944e-38, %v6774
  %v6776 = vsel %vm6773, %v6775, %v6771
  %v6777 = vmul.f32 %v4568, %v6776
  %v6778 = vmul.f32 %v4570, %v6776
  %v6779 = vrcp.pop %v6047
  %v6780 = vmul.f32 %v6047, %v6779
  %v6781 = vsub.f32 1.0, %v6780
  %v6782 = vmul.f32 %v6779, %v6781
  %v6783 = vadd.f32 %v6779, %v6782
  %vm6784 = vweird.f32 %v6047
  %vm6785 = vweird.f32 %v6779
  %vm6786 = vmor %vm6784, %vm6785
  %v6787 = vsel %vm6786, %v6779, %v6783
  %v6788 = vand.u32 2147483647, %v6047
  %vm6789 = vcmp.eq.f32.partialorder %v6788, 8.507059e+37
  %v6790 = vand.u32 %v6047, 2147483648
  %v6791 = vor.u32 1.1754944e-38, %v6790
  %v6792 = vsel %vm6789, %v6791, %v6787
  %v6793 = vmul.f32 %v4572, %v6792
  %v6794 = vmul.f32 %v4574, %v6792
  %v6795 = vrcp.pop %v6048
  %v6796 = vmul.f32 %v6048, %v6795
  %v6797 = vsub.f32 1.0, %v6796
  %v6798 = vmul.f32 %v6795, %v6797
  %v6799 = vadd.f32 %v6795, %v6798
  %vm6800 = vweird.f32 %v6048
  %vm6801 = vweird.f32 %v6795
  %vm6802 = vmor %vm6800, %vm6801
  %v6803 = vsel %vm6802, %v6795, %v6799
  %v6804 = vand.u32 2147483647, %v6048
  %vm6805 = vcmp.eq.f32.partialorder %v6804, 8.507059e+37
  %v6806 = vand.u32 %v6048, 2147483648
  %v6807 = vor.u32 1.1754944e-38, %v6806
  %v6808 = vsel %vm6805, %v6807, %v6803
  %v6809 = vmul.f32 %v4576, %v6808
  %v6810 = vmul.f32 %v4578, %v6808
  %v6811 = vrcp.pop %v6049
  %v6812 = vmul.f32 %v6049, %v6811
  %v6813 = vsub.f32 1.0, %v6812
  %v6814 = vmul.f32 %v6811, %v6813
  %v6815 = vadd.f32 %v6811, %v6814
  %vm6816 = vweird.f32 %v6049
  %vm6817 = vweird.f32 %v6811
  %vm6818 = vmor %vm6816, %vm6817
  %v6819 = vsel %vm6818, %v6811, %v6815
  %v6820 = vand.u32 2147483647, %v6049
  %vm6821 = vcmp.eq.f32.partialorder %v6820, 8.507059e+37
  %v6822 = vand.u32 %v6049, 2147483648
  %v6823 = vor.u32 1.1754944e-38, %v6822
  %v6824 = vsel %vm6821, %v6823, %v6819
  %v6825 = vmul.f32 %v4580, %v6824
  %v6826 = vmul.f32 %v4582, %v6824
  %v6827 = vrcp.pop %v6050
  %v6828 = vmul.f32 %v6050, %v6827
  %v6829 = vsub.f32 1.0, %v6828
  %v6830 = vmul.f32 %v6827, %v6829
  %v6831 = vadd.f32 %v6827, %v6830
  %vm6832 = vweird.f32 %v6050
  %vm6833 = vweird.f32 %v6827
  %vm6834 = vmor %vm6832, %vm6833
  %v6835 = vsel %vm6834, %v6827, %v6831
  %v6836 = vand.u32 2147483647, %v6050
  %vm6837 = vcmp.eq.f32.partialorder %v6836, 8.507059e+37
  %v6838 = vand.u32 %v6050, 2147483648
  %v6839 = vor.u32 1.1754944e-38, %v6838
  %v6840 = vsel %vm6837, %v6839, %v6835
  %v6841 = vmul.f32 %v4584, %v6840
  %v6842 = vmul.f32 %v4586, %v6840
  %v6843 = vrcp.pop %v6051
  %v6844 = vmul.f32 %v6051, %v6843
  %v6845 = vsub.f32 1.0, %v6844
  %v6846 = vmul.f32 %v6843, %v6845
  %v6847 = vadd.f32 %v6843, %v6846
  %vm6848 = vweird.f32 %v6051
  %vm6849 = vweird.f32 %v6843
  %vm6850 = vmor %vm6848, %vm6849
  %v6851 = vsel %vm6850, %v6843, %v6847
  %v6852 = vand.u32 2147483647, %v6051
  %vm6853 = vcmp.eq.f32.partialorder %v6852, 8.507059e+37
  %v6854 = vand.u32 %v6051, 2147483648
  %v6855 = vor.u32 1.1754944e-38, %v6854
  %v6856 = vsel %vm6853, %v6855, %v6851
  %v6857 = vmul.f32 %v4588, %v6856
  %v6858 = vmul.f32 %v4590, %v6856
  %v6859 = vrcp.pop %v6052
  %v6860 = vmul.f32 %v6052, %v6859
  %v6861 = vsub.f32 1.0, %v6860
  %v6862 = vmul.f32 %v6859, %v6861
  %v6863 = vadd.f32 %v6859, %v6862
  %vm6864 = vweird.f32 %v6052
  %vm6865 = vweird.f32 %v6859
  %vm6866 = vmor %vm6864, %vm6865
  %v6867 = vsel %vm6866, %v6859, %v6863
  %v6868 = vand.u32 2147483647, %v6052
  %vm6869 = vcmp.eq.f32.partialorder %v6868, 8.507059e+37
  %v6870 = vand.u32 %v6052, 2147483648
  %v6871 = vor.u32 1.1754944e-38, %v6870
  %v6872 = vsel %vm6869, %v6871, %v6867
  %v6873 = vmul.f32 %v4592, %v6872
  %v6874 = vmul.f32 %v4594, %v6872
  %v6875 = vrcp.pop %v6053
  %v6876 = vmul.f32 %v6053, %v6875
  %v6877 = vsub.f32 1.0, %v6876
  %v6878 = vmul.f32 %v6875, %v6877
  %v6879 = vadd.f32 %v6875, %v6878
  %vm6880 = vweird.f32 %v6053
  %vm6881 = vweird.f32 %v6875
  %vm6882 = vmor %vm6880, %vm6881
  %v6883 = vsel %vm6882, %v6875, %v6879
  %v6884 = vand.u32 2147483647, %v6053
  %vm6885 = vcmp.eq.f32.partialorder %v6884, 8.507059e+37
  %v6886 = vand.u32 %v6053, 2147483648
  %v6887 = vor.u32 1.1754944e-38, %v6886
  %v6888 = vsel %vm6885, %v6887, %v6883
  %v6889 = vmul.f32 %v4596, %v6888
  %v6890 = vmul.f32 %v4598, %v6888
  %v6891 = vrcp.pop %v6054
  %v6892 = vmul.f32 %v6054, %v6891
  %v6893 = vsub.f32 1.0, %v6892
  %v6894 = vmul.f32 %v6891, %v6893
  %v6895 = vadd.f32 %v6891, %v6894
  %vm6896 = vweird.f32 %v6054
  %vm6897 = vweird.f32 %v6891
  %vm6898 = vmor %vm6896, %vm6897
  %v6899 = vsel %vm6898, %v6891, %v6895
  %v6900 = vand.u32 2147483647, %v6054
  %vm6901 = vcmp.eq.f32.partialorder %v6900, 8.507059e+37
  %v6902 = vand.u32 %v6054, 2147483648
  %v6903 = vor.u32 1.1754944e-38, %v6902
  %v6904 = vsel %vm6901, %v6903, %v6899
  %v6905 = vmul.f32 %v4600, %v6904
  %v6906 = vmul.f32 %v4602, %v6904
  %v6907 = vrcp.pop %v6055
  %v6908 = vmul.f32 %v6055, %v6907
  %v6909 = vsub.f32 1.0, %v6908
  %v6910 = vmul.f32 %v6907, %v6909
  %v6911 = vadd.f32 %v6907, %v6910
  %vm6912 = vweird.f32 %v6055
  %vm6913 = vweird.f32 %v6907
  %vm6914 = vmor %vm6912, %vm6913
  %v6915 = vsel %vm6914, %v6907, %v6911
  %v6916 = vand.u32 2147483647, %v6055
  %vm6917 = vcmp.eq.f32.partialorder %v6916, 8.507059e+37
  %v6918 = vand.u32 %v6055, 2147483648
  %v6919 = vor.u32 1.1754944e-38, %v6918
  %v6920 = vsel %vm6917, %v6919, %v6915
  %v6921 = vmul.f32 %v4604, %v6920
  %v6922 = vmul.f32 %v4606, %v6920
  %v6923 = vrcp.pop %v6056
  %v6924 = vmul.f32 %v6056, %v6923
  %v6925 = vsub.f32 1.0, %v6924
  %v6926 = vmul.f32 %v6923, %v6925
  %v6927 = vadd.f32 %v6923, %v6926
  %vm6928 = vweird.f32 %v6056
  %vm6929 = vweird.f32 %v6923
  %vm6930 = vmor %vm6928, %vm6929
  %v6931 = vsel %vm6930, %v6923, %v6927
  %v6932 = vand.u32 2147483647, %v6056
  %vm6933 = vcmp.eq.f32.partialorder %v6932, 8.507059e+37
  %v6934 = vand.u32 %v6056, 2147483648
  %v6935 = vor.u32 1.1754944e-38, %v6934
  %v6936 = vsel %vm6933, %v6935, %v6931
  %v6937 = vmul.f32 %v4608, %v6936
  %v6938 = vmul.f32 %v4610, %v6936
  %v6939 = vrcp.pop %v6057
  %v6940 = vmul.f32 %v6057, %v6939
  %v6941 = vsub.f32 1.0, %v6940
  %v6942 = vmul.f32 %v6939, %v6941
  %v6943 = vadd.f32 %v6939, %v6942
  %vm6944 = vweird.f32 %v6057
  %vm6945 = vweird.f32 %v6939
  %vm6946 = vmor %vm6944, %vm6945
  %v6947 = vsel %vm6946, %v6939, %v6943
  %v6948 = vand.u32 2147483647, %v6057
  %vm6949 = vcmp.eq.f32.partialorder %v6948, 8.507059e+37
  %v6950 = vand.u32 %v6057, 2147483648
  %v6951 = vor.u32 1.1754944e-38, %v6950
  %v6952 = vsel %vm6949, %v6951, %v6947
  %v6953 = vmul.f32 %v4612, %v6952
  %v6954 = vmul.f32 %v4614, %v6952
  %v6955 = vrcp.pop %v6058
  %v6956 = vmul.f32 %v6058, %v6955
  %v6957 = vsub.f32 1.0, %v6956
  %v6958 = vmul.f32 %v6955, %v6957
  %v6959 = vadd.f32 %v6955, %v6958
  %vm6960 = vweird.f32 %v6058
  %vm6961 = vweird.f32 %v6955
  %vm6962 = vmor %vm6960, %vm6961
  %v6963 = vsel %vm6962, %v6955, %v6959
  %v6964 = vand.u32 2147483647, %v6058
  %vm6965 = vcmp.eq.f32.partialorder %v6964, 8.507059e+37
  %v6966 = vand.u32 %v6058, 2147483648
  %v6967 = vor.u32 1.1754944e-38, %v6966
  %v6968 = vsel %vm6965, %v6967, %v6963
  %v6969 = vmul.f32 %v4616, %v6968
  %v6970 = vmul.f32 %v4618, %v6968
  %v6971 = vrcp.pop %v6059
  %v6972 = vmul.f32 %v6059, %v6971
  %v6973 = vsub.f32 1.0, %v6972
  %v6974 = vmul.f32 %v6971, %v6973
  %v6975 = vadd.f32 %v6971, %v6974
  %vm6976 = vweird.f32 %v6059
  %vm6977 = vweird.f32 %v6971
  %vm6978 = vmor %vm6976, %vm6977
  %v6979 = vsel %vm6978, %v6971, %v6975
  %v6980 = vand.u32 2147483647, %v6059
  %vm6981 = vcmp.eq.f32.partialorder %v6980, 8.507059e+37
  %v6982 = vand.u32 %v6059, 2147483648
  %v6983 = vor.u32 1.1754944e-38, %v6982
  %v6984 = vsel %vm6981, %v6983, %v6979
  %v6985 = vmul.f32 %v4620, %v6984
  %v6986 = vmul.f32 %v4622, %v6984
  %v6987 = vrcp.pop %v6060
  %v6988 = vmul.f32 %v6060, %v6987
  %v6989 = vsub.f32 1.0, %v6988
  %v6990 = vmul.f32 %v6987, %v6989
  %v6991 = vadd.f32 %v6987, %v6990
  %vm6992 = vweird.f32 %v6060
  %vm6993 = vweird.f32 %v6987
  %vm6994 = vmor %vm6992, %vm6993
  %v6995 = vsel %vm6994, %v6987, %v6991
  %v6996 = vand.u32 2147483647, %v6060
  %vm6997 = vcmp.eq.f32.partialorder %v6996, 8.507059e+37
  %v6998 = vand.u32 %v6060, 2147483648
  %v6999 = vor.u32 1.1754944e-38, %v6998
  %v7000 = vsel %vm6997, %v6999, %v6995
  %v7001 = vmul.f32 %v4624, %v7000
  %v7002 = vmul.f32 %v4626, %v7000
  %v7003 = vrcp.pop %v6061
  %v7004 = vmul.f32 %v6061, %v7003
  %v7005 = vsub.f32 1.0, %v7004
  %v7006 = vmul.f32 %v7003, %v7005
  %v7007 = vadd.f32 %v7003, %v7006
  %vm7008 = vweird.f32 %v6061
  %vm7009 = vweird.f32 %v7003
  %vm7010 = vmor %vm7008, %vm7009
  %v7011 = vsel %vm7010, %v7003, %v7007
  %v7012 = vand.u32 2147483647, %v6061
  %vm7013 = vcmp.eq.f32.partialorder %v7012, 8.507059e+37
  %v7014 = vand.u32 %v6061, 2147483648
  %v7015 = vor.u32 1.1754944e-38, %v7014
  %v7016 = vsel %vm7013, %v7015, %v7011
  %v7017 = vmul.f32 %v4628, %v7016
  %v7018 = vmul.f32 %v4630, %v7016
  %v7019 = vrcp.pop %v6062
  %v7020 = vmul.f32 %v6062, %v7019
  %v7021 = vsub.f32 1.0, %v7020
  %v7022 = vmul.f32 %v7019, %v7021
  %v7023 = vadd.f32 %v7019, %v7022
  %vm7024 = vweird.f32 %v6062
  %vm7025 = vweird.f32 %v7019
  %vm7026 = vmor %vm7024, %vm7025
  %v7027 = vsel %vm7026, %v7019, %v7023
  %v7028 = vand.u32 2147483647, %v6062
  %vm7029 = vcmp.eq.f32.partialorder %v7028, 8.507059e+37
  %v7030 = vand.u32 %v6062, 2147483648
  %v7031 = vor.u32 1.1754944e-38, %v7030
  %v7032 = vsel %vm7029, %v7031, %v7027
  %v7033 = vmul.f32 %v4632, %v7032
  %v7034 = vmul.f32 %v4634, %v7032
  %v7035 = vrcp.pop %v6063
  %v7036 = vmul.f32 %v6063, %v7035
  %v7037 = vsub.f32 1.0, %v7036
  %v7038 = vmul.f32 %v7035, %v7037
  %v7039 = vadd.f32 %v7035, %v7038
  %vm7040 = vweird.f32 %v6063
  %vm7041 = vweird.f32 %v7035
  %vm7042 = vmor %vm7040, %vm7041
  %v7043 = vsel %vm7042, %v7035, %v7039
  %v7044 = vand.u32 2147483647, %v6063
  %vm7045 = vcmp.eq.f32.partialorder %v7044, 8.507059e+37
  %v7046 = vand.u32 %v6063, 2147483648
  %v7047 = vor.u32 1.1754944e-38, %v7046
  %v7048 = vsel %vm7045, %v7047, %v7043
  %v7049 = vmul.f32 %v4636, %v7048
  %v7050 = vmul.f32 %v4638, %v7048
  %v7051 = vrcp.pop %v6064
  %v7052 = vmul.f32 %v6064, %v7051
  %v7053 = vsub.f32 1.0, %v7052
  %v7054 = vmul.f32 %v7051, %v7053
  %v7055 = vadd.f32 %v7051, %v7054
  %vm7056 = vweird.f32 %v6064
  %vm7057 = vweird.f32 %v7051
  %vm7058 = vmor %vm7056, %vm7057
  %v7059 = vsel %vm7058, %v7051, %v7055
  %v7060 = vand.u32 2147483647, %v6064
  %vm7061 = vcmp.eq.f32.partialorder %v7060, 8.507059e+37
  %v7062 = vand.u32 %v6064, 2147483648
  %v7063 = vor.u32 1.1754944e-38, %v7062
  %v7064 = vsel %vm7061, %v7063, %v7059
  %v7065 = vmul.f32 %v4640, %v7064
  %v7066 = vmul.f32 %v4642, %v7064
  %v7067 = vrcp.pop %v6065
  %v7068 = vmul.f32 %v6065, %v7067
  %v7069 = vsub.f32 1.0, %v7068
  %v7070 = vmul.f32 %v7067, %v7069
  %v7071 = vadd.f32 %v7067, %v7070
  %vm7072 = vweird.f32 %v6065
  %vm7073 = vweird.f32 %v7067
  %vm7074 = vmor %vm7072, %vm7073
  %v7075 = vsel %vm7074, %v7067, %v7071
  %v7076 = vand.u32 2147483647, %v6065
  %vm7077 = vcmp.eq.f32.partialorder %v7076, 8.507059e+37
  %v7078 = vand.u32 %v6065, 2147483648
  %v7079 = vor.u32 1.1754944e-38, %v7078
  %v7080 = vsel %vm7077, %v7079, %v7075
  %v7081 = vmul.f32 %v4644, %v7080
  %v7082 = vmul.f32 %v4646, %v7080
  %v7083 = vrcp.pop %v6066
  %v7084 = vmul.f32 %v6066, %v7083
  %v7085 = vsub.f32 1.0, %v7084
  %v7086 = vmul.f32 %v7083, %v7085
  %v7087 = vadd.f32 %v7083, %v7086
  %vm7088 = vweird.f32 %v6066
  %vm7089 = vweird.f32 %v7083
  %vm7090 = vmor %vm7088, %vm7089
  %v7091 = vsel %vm7090, %v7083, %v7087
  %v7092 = vand.u32 2147483647, %v6066
  %vm7093 = vcmp.eq.f32.partialorder %v7092, 8.507059e+37
  %v7094 = vand.u32 %v6066, 2147483648
  %v7095 = vor.u32 1.1754944e-38, %v7094
  %v7096 = vsel %vm7093, %v7095, %v7091
  %v7097 = vmul.f32 %v4648, %v7096
  %v7098 = vmul.f32 %v4650, %v7096
  %v7099 = vrcp.pop %v6067
  %v7100 = vmul.f32 %v6067, %v7099
  %v7101 = vsub.f32 1.0, %v7100
  %v7102 = vmul.f32 %v7099, %v7101
  %v7103 = vadd.f32 %v7099, %v7102
  %vm7104 = vweird.f32 %v6067
  %vm7105 = vweird.f32 %v7099
  %vm7106 = vmor %vm7104, %vm7105
  %v7107 = vsel %vm7106, %v7099, %v7103
  %v7108 = vand.u32 2147483647, %v6067
  %vm7109 = vcmp.eq.f32.partialorder %v7108, 8.507059e+37
  %v7110 = vand.u32 %v6067, 2147483648
  %v7111 = vor.u32 1.1754944e-38, %v7110
  %v7112 = vsel %vm7109, %v7111, %v7107
  %v7113 = vmul.f32 %v4652, %v7112
  %v7114 = vmul.f32 %v4654, %v7112
  %v7115 = vrcp.pop %v6068
  %v7116 = vmul.f32 %v6068, %v7115
  %v7117 = vsub.f32 1.0, %v7116
  %v7118 = vmul.f32 %v7115, %v7117
  %v7119 = vadd.f32 %v7115, %v7118
  %vm7120 = vweird.f32 %v6068
  %vm7121 = vweird.f32 %v7115
  %vm7122 = vmor %vm7120, %vm7121
  %v7123 = vsel %vm7122, %v7115, %v7119
  %v7124 = vand.u32 2147483647, %v6068
  %vm7125 = vcmp.eq.f32.partialorder %v7124, 8.507059e+37
  %v7126 = vand.u32 %v6068, 2147483648
  %v7127 = vor.u32 1.1754944e-38, %v7126
  %v7128 = vsel %vm7125, %v7127, %v7123
  %v7129 = vmul.f32 %v4656, %v7128
  %v7130 = vmul.f32 %v4658, %v7128
  %v7131 = vrcp.pop %v6069
  %v7132 = vmul.f32 %v6069, %v7131
  %v7133 = vsub.f32 1.0, %v7132
  %v7134 = vmul.f32 %v7131, %v7133
  %v7135 = vadd.f32 %v7131, %v7134
  %vm7136 = vweird.f32 %v6069
  %vm7137 = vweird.f32 %v7131
  %vm7138 = vmor %vm7136, %vm7137
  %v7139 = vsel %vm7138, %v7131, %v7135
  %v7140 = vand.u32 2147483647, %v6069
  %vm7141 = vcmp.eq.f32.partialorder %v7140, 8.507059e+37
  %v7142 = vand.u32 %v6069, 2147483648
  %v7143 = vor.u32 1.1754944e-38, %v7142
  %v7144 = vsel %vm7141, %v7143, %v7139
  %v7145 = vmul.f32 %v4660, %v7144
  %v7146 = vmul.f32 %v4662, %v7144
  %v7147 = vrcp.pop %v6070
  %v7148 = vmul.f32 %v6070, %v7147
  %v7149 = vsub.f32 1.0, %v7148
  %v7150 = vmul.f32 %v7147, %v7149
  %v7151 = vadd.f32 %v7147, %v7150
  %vm7152 = vweird.f32 %v6070
  %vm7153 = vweird.f32 %v7147
  %vm7154 = vmor %vm7152, %vm7153
  %v7155 = vsel %vm7154, %v7147, %v7151
  %v7156 = vand.u32 2147483647, %v6070
  %vm7157 = vcmp.eq.f32.partialorder %v7156, 8.507059e+37
  %v7158 = vand.u32 %v6070, 2147483648
  %v7159 = vor.u32 1.1754944e-38, %v7158
  %v7160 = vsel %vm7157, %v7159, %v7155
  %v7161 = vmul.f32 %v4664, %v7160
  %v7162 = vmul.f32 %v4666, %v7160
  %v7163 = vrcp.pop %v6071
  %v7164 = vmul.f32 %v6071, %v7163
  %v7165 = vsub.f32 1.0, %v7164
  %v7166 = vmul.f32 %v7163, %v7165
  %v7167 = vadd.f32 %v7163, %v7166
  %vm7168 = vweird.f32 %v6071
  %vm7169 = vweird.f32 %v7163
  %vm7170 = vmor %vm7168, %vm7169
  %v7171 = vsel %vm7170, %v7163, %v7167
  %v7172 = vand.u32 2147483647, %v6071
  %vm7173 = vcmp.eq.f32.partialorder %v7172, 8.507059e+37
  %v7174 = vand.u32 %v6071, 2147483648
  %v7175 = vor.u32 1.1754944e-38, %v7174
  %v7176 = vsel %vm7173, %v7175, %v7171
  %v7177 = vmul.f32 %v4668, %v7176
  %v7178 = vmul.f32 %v4670, %v7176
  %v7179 = vrcp.pop %v6072
  %v7180 = vmul.f32 %v6072, %v7179
  %v7181 = vsub.f32 1.0, %v7180
  %v7182 = vmul.f32 %v7179, %v7181
  %v7183 = vadd.f32 %v7179, %v7182
  %vm7184 = vweird.f32 %v6072
  %vm7185 = vweird.f32 %v7179
  %vm7186 = vmor %vm7184, %vm7185
  %v7187 = vsel %vm7186, %v7179, %v7183
  %v7188 = vand.u32 2147483647, %v6072
  %vm7189 = vcmp.eq.f32.partialorder %v7188, 8.507059e+37
  %v7190 = vand.u32 %v6072, 2147483648
  %v7191 = vor.u32 1.1754944e-38, %v7190
  %v7192 = vsel %vm7189, %v7191, %v7187
  %v7193 = vmul.f32 %v4672, %v7192
  %v7194 = vmul.f32 %v4674, %v7192
  %v7195 = vrcp.pop %v6073
  %v7196 = vmul.f32 %v6073, %v7195
  %v7197 = vsub.f32 1.0, %v7196
  %v7198 = vmul.f32 %v7195, %v7197
  %v7199 = vadd.f32 %v7195, %v7198
  %vm7200 = vweird.f32 %v6073
  %vm7201 = vweird.f32 %v7195
  %vm7202 = vmor %vm7200, %vm7201
  %v7203 = vsel %vm7202, %v7195, %v7199
  %v7204 = vand.u32 2147483647, %v6073
  %vm7205 = vcmp.eq.f32.partialorder %v7204, 8.507059e+37
  %v7206 = vand.u32 %v6073, 2147483648
  %v7207 = vor.u32 1.1754944e-38, %v7206
  %v7208 = vsel %vm7205, %v7207, %v7203
  %v7209 = vmul.f32 %v4676, %v7208
  %v7210 = vmul.f32 %v4678, %v7208
  %v7211 = vrcp.pop %v6074
  %v7212 = vmul.f32 %v6074, %v7211
  %v7213 = vsub.f32 1.0, %v7212
  %v7214 = vmul.f32 %v7211, %v7213
  %v7215 = vadd.f32 %v7211, %v7214
  %vm7216 = vweird.f32 %v6074
  %vm7217 = vweird.f32 %v7211
  %vm7218 = vmor %vm7216, %vm7217
  %v7219 = vsel %vm7218, %v7211, %v7215
  %v7220 = vand.u32 2147483647, %v6074
  %vm7221 = vcmp.eq.f32.partialorder %v7220, 8.507059e+37
  %v7222 = vand.u32 %v6074, 2147483648
  %v7223 = vor.u32 1.1754944e-38, %v7222
  %v7224 = vsel %vm7221, %v7223, %v7219
  %v7225 = vmul.f32 %v4680, %v7224
  %v7226 = vmul.f32 %v4682, %v7224
  %v7227 = vrcp.pop %v6075
  %v7228 = vmul.f32 %v6075, %v7227
  %v7229 = vsub.f32 1.0, %v7228
  %v7230 = vmul.f32 %v7227, %v7229
  %v7231 = vadd.f32 %v7227, %v7230
  %vm7232 = vweird.f32 %v6075
  %vm7233 = vweird.f32 %v7227
  %vm7234 = vmor %vm7232, %vm7233
  %v7235 = vsel %vm7234, %v7227, %v7231
  %v7236 = vand.u32 2147483647, %v6075
  %vm7237 = vcmp.eq.f32.partialorder %v7236, 8.507059e+37
  %v7238 = vand.u32 %v6075, 2147483648
  %v7239 = vor.u32 1.1754944e-38, %v7238
  %v7240 = vsel %vm7237, %v7239, %v7235
  %v7241 = vmul.f32 %v4684, %v7240
  %v7242 = vmul.f32 %v4686, %v7240
  %v7243 = vrcp.pop %v6076
  %v7244 = vmul.f32 %v6076, %v7243
  %v7245 = vsub.f32 1.0, %v7244
  %v7246 = vmul.f32 %v7243, %v7245
  %v7247 = vadd.f32 %v7243, %v7246
  %vm7248 = vweird.f32 %v6076
  %vm7249 = vweird.f32 %v7243
  %vm7250 = vmor %vm7248, %vm7249
  %v7251 = vsel %vm7250, %v7243, %v7247
  %v7252 = vand.u32 2147483647, %v6076
  %vm7253 = vcmp.eq.f32.partialorder %v7252, 8.507059e+37
  %v7254 = vand.u32 %v6076, 2147483648
  %v7255 = vor.u32 1.1754944e-38, %v7254
  %v7256 = vsel %vm7253, %v7255, %v7251
  %v7257 = vmul.f32 %v4688, %v7256
  %v7258 = vmul.f32 %v4690, %v7256
  %v7259 = vrcp.pop %v6077
  %v7260 = vmul.f32 %v6077, %v7259
  %v7261 = vsub.f32 1.0, %v7260
  %v7262 = vmul.f32 %v7259, %v7261
  %v7263 = vadd.f32 %v7259, %v7262
  %vm7264 = vweird.f32 %v6077
  %vm7265 = vweird.f32 %v7259
  %vm7266 = vmor %vm7264, %vm7265
  %v7267 = vsel %vm7266, %v7259, %v7263
  %v7268 = vand.u32 2147483647, %v6077
  %vm7269 = vcmp.eq.f32.partialorder %v7268, 8.507059e+37
  %v7270 = vand.u32 %v6077, 2147483648
  %v7271 = vor.u32 1.1754944e-38, %v7270
  %v7272 = vsel %vm7269, %v7271, %v7267
  %v7273 = vmul.f32 %v4692, %v7272
  %v7274 = vmul.f32 %v4694, %v7272
  %v7275 = vrcp.pop %v6078
  %v7276 = vmul.f32 %v6078, %v7275
  %v7277 = vsub.f32 1.0, %v7276
  %v7278 = vmul.f32 %v7275, %v7277
  %v7279 = vadd.f32 %v7275, %v7278
  %vm7280 = vweird.f32 %v6078
  %vm7281 = vweird.f32 %v7275
  %vm7282 = vmor %vm7280, %vm7281
  %v7283 = vsel %vm7282, %v7275, %v7279
  %v7284 = vand.u32 2147483647, %v6078
  %vm7285 = vcmp.eq.f32.partialorder %v7284, 8.507059e+37
  %v7286 = vand.u32 %v6078, 2147483648
  %v7287 = vor.u32 1.1754944e-38, %v7286
  %v7288 = vsel %vm7285, %v7287, %v7283
  %v7289 = vmul.f32 %v4696, %v7288
  %v7290 = vmul.f32 %v4698, %v7288
  %v7291 = vrcp.pop %v6079
  %v7292 = vmul.f32 %v6079, %v7291
  %v7293 = vsub.f32 1.0, %v7292
  %v7294 = vmul.f32 %v7291, %v7293
  %v7295 = vadd.f32 %v7291, %v7294
  %vm7296 = vweird.f32 %v6079
  %vm7297 = vweird.f32 %v7291
  %vm7298 = vmor %vm7296, %vm7297
  %v7299 = vsel %vm7298, %v7291, %v7295
  %v7300 = vand.u32 2147483647, %v6079
  %vm7301 = vcmp.eq.f32.partialorder %v7300, 8.507059e+37
  %v7302 = vand.u32 %v6079, 2147483648
  %v7303 = vor.u32 1.1754944e-38, %v7302
  %v7304 = vsel %vm7301, %v7303, %v7299
  %v7305 = vmul.f32 %v4700, %v7304
  %v7306 = vmul.f32 %v4702, %v7304
  %v7307 = vrcp.pop %v6080
  %v7308 = vmul.f32 %v6080, %v7307
  %v7309 = vsub.f32 1.0, %v7308
  %v7310 = vmul.f32 %v7307, %v7309
  %v7311 = vadd.f32 %v7307, %v7310
  %vm7312 = vweird.f32 %v6080
  %vm7313 = vweird.f32 %v7307
  %vm7314 = vmor %vm7312, %vm7313
  %v7315 = vsel %vm7314, %v7307, %v7311
  %v7316 = vand.u32 2147483647, %v6080
  %vm7317 = vcmp.eq.f32.partialorder %v7316, 8.507059e+37
  %v7318 = vand.u32 %v6080, 2147483648
  %v7319 = vor.u32 1.1754944e-38, %v7318
  %v7320 = vsel %vm7317, %v7319, %v7315
  %v7321 = vmul.f32 %v4704, %v7320
  %v7322 = vmul.f32 %v4706, %v7320
  %v7323 = vrcp.pop %v6081
  %v7324 = vmul.f32 %v6081, %v7323
  %v7325 = vsub.f32 1.0, %v7324
  %v7326 = vmul.f32 %v7323, %v7325
  %v7327 = vadd.f32 %v7323, %v7326
  %vm7328 = vweird.f32 %v6081
  %vm7329 = vweird.f32 %v7323
  %vm7330 = vmor %vm7328, %vm7329
  %v7331 = vsel %vm7330, %v7323, %v7327
  %v7332 = vand.u32 2147483647, %v6081
  %vm7333 = vcmp.eq.f32.partialorder %v7332, 8.507059e+37
  %v7334 = vand.u32 %v6081, 2147483648
  %v7335 = vor.u32 1.1754944e-38, %v7334
  %v7336 = vsel %vm7333, %v7335, %v7331
  %v7337 = vmul.f32 %v4708, %v7336
  %v7338 = vmul.f32 %v4710, %v7336
  %v7339 = vrcp.pop %v6082
  %v7340 = vmul.f32 %v6082, %v7339
  %v7341 = vsub.f32 1.0, %v7340
  %v7342 = vmul.f32 %v7339, %v7341
  %v7343 = vadd.f32 %v7339, %v7342
  %vm7344 = vweird.f32 %v6082
  %vm7345 = vweird.f32 %v7339
  %vm7346 = vmor %vm7344, %vm7345
  %v7347 = vsel %vm7346, %v7339, %v7343
  %v7348 = vand.u32 2147483647, %v6082
  %vm7349 = vcmp.eq.f32.partialorder %v7348, 8.507059e+37
  %v7350 = vand.u32 %v6082, 2147483648
  %v7351 = vor.u32 1.1754944e-38, %v7350
  %v7352 = vsel %vm7349, %v7351, %v7347
  %v7353 = vmul.f32 %v4712, %v7352
  %v7354 = vmul.f32 %v4714, %v7352
  %v7355 = vrcp.pop %v6083
  %v7356 = vmul.f32 %v6083, %v7355
  %v7357 = vsub.f32 1.0, %v7356
  %v7358 = vmul.f32 %v7355, %v7357
  %v7359 = vadd.f32 %v7355, %v7358
  %vm7360 = vweird.f32 %v6083
  %vm7361 = vweird.f32 %v7355
  %vm7362 = vmor %vm7360, %vm7361
  %v7363 = vsel %vm7362, %v7355, %v7359
  %v7364 = vand.u32 2147483647, %v6083
  %vm7365 = vcmp.eq.f32.partialorder %v7364, 8.507059e+37
  %v7366 = vand.u32 %v6083, 2147483648
  %v7367 = vor.u32 1.1754944e-38, %v7366
  %v7368 = vsel %vm7365, %v7367, %v7363
  %v7369 = vmul.f32 %v4716, %v7368
  %v7370 = vmul.f32 %v4718, %v7368
  %v7371 = vrcp.pop %v6084
  %v7372 = vmul.f32 %v6084, %v7371
  %v7373 = vsub.f32 1.0, %v7372
  %v7374 = vmul.f32 %v7371, %v7373
  %v7375 = vadd.f32 %v7371, %v7374
  %vm7376 = vweird.f32 %v6084
  %vm7377 = vweird.f32 %v7371
  %vm7378 = vmor %vm7376, %vm7377
  %v7379 = vsel %vm7378, %v7371, %v7375
  %v7380 = vand.u32 2147483647, %v6084
  %vm7381 = vcmp.eq.f32.partialorder %v7380, 8.507059e+37
  %v7382 = vand.u32 %v6084, 2147483648
  %v7383 = vor.u32 1.1754944e-38, %v7382
  %v7384 = vsel %vm7381, %v7383, %v7379
  %v7385 = vmul.f32 %v4720, %v7384
  %v7386 = vmul.f32 %v4722, %v7384
  %v7387 = vrcp.pop %v6085
  %v7388 = vmul.f32 %v6085, %v7387
  %v7389 = vsub.f32 1.0, %v7388
  %v7390 = vmul.f32 %v7387, %v7389
  %v7391 = vadd.f32 %v7387, %v7390
  %vm7392 = vweird.f32 %v6085
  %vm7393 = vweird.f32 %v7387
  %vm7394 = vmor %vm7392, %vm7393
  %v7395 = vsel %vm7394, %v7387, %v7391
  %v7396 = vand.u32 2147483647, %v6085
  %vm7397 = vcmp.eq.f32.partialorder %v7396, 8.507059e+37
  %v7398 = vand.u32 %v6085, 2147483648
  %v7399 = vor.u32 1.1754944e-38, %v7398
  %v7400 = vsel %vm7397, %v7399, %v7395
  %v7401 = vmul.f32 %v4724, %v7400
  %v7402 = vmul.f32 %v4726, %v7400
  %v7403 = vrcp.pop %v6086
  %v7404 = vmul.f32 %v6086, %v7403
  %v7405 = vsub.f32 1.0, %v7404
  %v7406 = vmul.f32 %v7403, %v7405
  %v7407 = vadd.f32 %v7403, %v7406
  %vm7408 = vweird.f32 %v6086
  %vm7409 = vweird.f32 %v7403
  %vm7410 = vmor %vm7408, %vm7409
  %v7411 = vsel %vm7410, %v7403, %v7407
  %v7412 = vand.u32 2147483647, %v6086
  %vm7413 = vcmp.eq.f32.partialorder %v7412, 8.507059e+37
  %v7414 = vand.u32 %v6086, 2147483648
  %v7415 = vor.u32 1.1754944e-38, %v7414
  %v7416 = vsel %vm7413, %v7415, %v7411
  %v7417 = vmul.f32 %v4728, %v7416
  %v7418 = vmul.f32 %v4730, %v7416
  %v7419 = vrcp.pop %v6087
  %v7420 = vmul.f32 %v6087, %v7419
  %v7421 = vsub.f32 1.0, %v7420
  %v7422 = vmul.f32 %v7419, %v7421
  %v7423 = vadd.f32 %v7419, %v7422
  %vm7424 = vweird.f32 %v6087
  %vm7425 = vweird.f32 %v7419
  %vm7426 = vmor %vm7424, %vm7425
  %v7427 = vsel %vm7426, %v7419, %v7423
  %v7428 = vand.u32 2147483647, %v6087
  %vm7429 = vcmp.eq.f32.partialorder %v7428, 8.507059e+37
  %v7430 = vand.u32 %v6087, 2147483648
  %v7431 = vor.u32 1.1754944e-38, %v7430
  %v7432 = vsel %vm7429, %v7431, %v7427
  %v7433 = vmul.f32 %v4732, %v7432
  %v7434 = vmul.f32 %v4734, %v7432
  %v7435 = vrcp.pop %v6088
  %v7436 = vmul.f32 %v6088, %v7435
  %v7437 = vsub.f32 1.0, %v7436
  %v7438 = vmul.f32 %v7435, %v7437
  %v7439 = vadd.f32 %v7435, %v7438
  %vm7440 = vweird.f32 %v6088
  %vm7441 = vweird.f32 %v7435
  %vm7442 = vmor %vm7440, %vm7441
  %v7443 = vsel %vm7442, %v7435, %v7439
  %v7444 = vand.u32 2147483647, %v6088
  %vm7445 = vcmp.eq.f32.partialorder %v7444, 8.507059e+37
  %v7446 = vand.u32 %v6088, 2147483648
  %v7447 = vor.u32 1.1754944e-38, %v7446
  %v7448 = vsel %vm7445, %v7447, %v7443
  %v7449 = vmul.f32 %v4736, %v7448
  %v7450 = vmul.f32 %v4738, %v7448
  %v7451 = vrcp.pop %v6089
  %v7452 = vmul.f32 %v6089, %v7451
  %v7453 = vsub.f32 1.0, %v7452
  %v7454 = vmul.f32 %v7451, %v7453
  %v7455 = vadd.f32 %v7451, %v7454
  %vm7456 = vweird.f32 %v6089
  %vm7457 = vweird.f32 %v7451
  %vm7458 = vmor %vm7456, %vm7457
  %v7459 = vsel %vm7458, %v7451, %v7455
  %v7460 = vand.u32 2147483647, %v6089
  %vm7461 = vcmp.eq.f32.partialorder %v7460, 8.507059e+37
  %v7462 = vand.u32 %v6089, 2147483648
  %v7463 = vor.u32 1.1754944e-38, %v7462
  %v7464 = vsel %vm7461, %v7463, %v7459
  %v7465 = vmul.f32 %v4740, %v7464
  %v7466 = vmul.f32 %v4742, %v7464
  %v7467 = vrcp.pop %v6090
  %v7468 = vmul.f32 %v6090, %v7467
  %v7469 = vsub.f32 1.0, %v7468
  %v7470 = vmul.f32 %v7467, %v7469
  %v7471 = vadd.f32 %v7467, %v7470
  %vm7472 = vweird.f32 %v6090
  %vm7473 = vweird.f32 %v7467
  %vm7474 = vmor %vm7472, %vm7473
  %v7475 = vsel %vm7474, %v7467, %v7471
  %v7476 = vand.u32 2147483647, %v6090
  %vm7477 = vcmp.eq.f32.partialorder %v7476, 8.507059e+37
  %v7478 = vand.u32 %v6090, 2147483648
  %v7479 = vor.u32 1.1754944e-38, %v7478
  %v7480 = vsel %vm7477, %v7479, %v7475
  %v7481 = vmul.f32 %v4744, %v7480
  %v7482 = vmul.f32 %v4746, %v7480
  %v7483 = vrcp.pop %v6091
  %v7484 = vmul.f32 %v6091, %v7483
  %v7485 = vsub.f32 1.0, %v7484
  %v7486 = vmul.f32 %v7483, %v7485
  %v7487 = vadd.f32 %v7483, %v7486
  %vm7488 = vweird.f32 %v6091
  %vm7489 = vweird.f32 %v7483
  %vm7490 = vmor %vm7488, %vm7489
  %v7491 = vsel %vm7490, %v7483, %v7487
  %v7492 = vand.u32 2147483647, %v6091
  %vm7493 = vcmp.eq.f32.partialorder %v7492, 8.507059e+37
  %v7494 = vand.u32 %v6091, 2147483648
  %v7495 = vor.u32 1.1754944e-38, %v7494
  %v7496 = vsel %vm7493, %v7495, %v7491
  %v7497 = vmul.f32 %v4748, %v7496
  %v7498 = vmul.f32 %v4750, %v7496
  %v7499 = vrcp.pop %v6092
  %v7500 = vmul.f32 %v6092, %v7499
  %v7501 = vsub.f32 1.0, %v7500
  %v7502 = vmul.f32 %v7499, %v7501
  %v7503 = vadd.f32 %v7499, %v7502
  %vm7504 = vweird.f32 %v6092
  %vm7505 = vweird.f32 %v7499
  %vm7506 = vmor %vm7504, %vm7505
  %v7507 = vsel %vm7506, %v7499, %v7503
  %v7508 = vand.u32 2147483647, %v6092
  %vm7509 = vcmp.eq.f32.partialorder %v7508, 8.507059e+37
  %v7510 = vand.u32 %v6092, 2147483648
  %v7511 = vor.u32 1.1754944e-38, %v7510
  %v7512 = vsel %vm7509, %v7511, %v7507
  %v7513 = vmul.f32 %v4752, %v7512
  %v7514 = vmul.f32 %v4754, %v7512
  %v7515 = vrcp.pop %v6093
  %v7516 = vmul.f32 %v6093, %v7515
  %v7517 = vsub.f32 1.0, %v7516
  %v7518 = vmul.f32 %v7515, %v7517
  %v7519 = vadd.f32 %v7515, %v7518
  %vm7520 = vweird.f32 %v6093
  %vm7521 = vweird.f32 %v7515
  %vm7522 = vmor %vm7520, %vm7521
  %v7523 = vsel %vm7522, %v7515, %v7519
  %v7524 = vand.u32 2147483647, %v6093
  %vm7525 = vcmp.eq.f32.partialorder %v7524, 8.507059e+37
  %v7526 = vand.u32 %v6093, 2147483648
  %v7527 = vor.u32 1.1754944e-38, %v7526
  %v7528 = vsel %vm7525, %v7527, %v7523
  %v7529 = vmul.f32 %v4756, %v7528
  %v7530 = vmul.f32 %v4758, %v7528
  %v7531 = vrcp.pop %v6094
  %v7532 = vmul.f32 %v6094, %v7531
  %v7533 = vsub.f32 1.0, %v7532
  %v7534 = vmul.f32 %v7531, %v7533
  %v7535 = vadd.f32 %v7531, %v7534
  %vm7536 = vweird.f32 %v6094
  %vm7537 = vweird.f32 %v7531
  %vm7538 = vmor %vm7536, %vm7537
  %v7539 = vsel %vm7538, %v7531, %v7535
  %v7540 = vand.u32 2147483647, %v6094
  %vm7541 = vcmp.eq.f32.partialorder %v7540, 8.507059e+37
  %v7542 = vand.u32 %v6094, 2147483648
  %v7543 = vor.u32 1.1754944e-38, %v7542
  %v7544 = vsel %vm7541, %v7543, %v7539
  %v7545 = vmul.f32 %v4760, %v7544
  %v7546 = vmul.f32 %v4762, %v7544
  %v7547 = vrcp.pop %v6095
  %v7548 = vmul.f32 %v6095, %v7547
  %v7549 = vsub.f32 1.0, %v7548
  %v7550 = vmul.f32 %v7547, %v7549
  %v7551 = vadd.f32 %v7547, %v7550
  %vm7552 = vweird.f32 %v6095
  %vm7553 = vweird.f32 %v7547
  %vm7554 = vmor %vm7552, %vm7553
  %v7555 = vsel %vm7554, %v7547, %v7551
  %v7556 = vand.u32 2147483647, %v6095
  %vm7557 = vcmp.eq.f32.partialorder %v7556, 8.507059e+37
  %v7558 = vand.u32 %v6095, 2147483648
  %v7559 = vor.u32 1.1754944e-38, %v7558
  %v7560 = vsel %vm7557, %v7559, %v7555
  %v7561 = vmul.f32 %v4764, %v7560
  %v7562 = vmul.f32 %v4766, %v7560
  %v7563 = vrcp.pop %v6096
  %v7564 = vmul.f32 %v6096, %v7563
  %v7565 = vsub.f32 1.0, %v7564
  %v7566 = vmul.f32 %v7563, %v7565
  %v7567 = vadd.f32 %v7563, %v7566
  %vm7568 = vweird.f32 %v6096
  %vm7569 = vweird.f32 %v7563
  %vm7570 = vmor %vm7568, %vm7569
  %v7571 = vsel %vm7570, %v7563, %v7567
  %v7572 = vand.u32 2147483647, %v6096
  %vm7573 = vcmp.eq.f32.partialorder %v7572, 8.507059e+37
  %v7574 = vand.u32 %v6096, 2147483648
  %v7575 = vor.u32 1.1754944e-38, %v7574
  %v7576 = vsel %vm7573, %v7575, %v7571
  %v7577 = vmul.f32 %v4768, %v7576
  %v7578 = vmul.f32 %v4770, %v7576
  %v7579 = vrcp.pop %v6097
  %v7580 = vmul.f32 %v6097, %v7579
  %v7581 = vsub.f32 1.0, %v7580
  %v7582 = vmul.f32 %v7579, %v7581
  %v7583 = vadd.f32 %v7579, %v7582
  %vm7584 = vweird.f32 %v6097
  %vm7585 = vweird.f32 %v7579
  %vm7586 = vmor %vm7584, %vm7585
  %v7587 = vsel %vm7586, %v7579, %v7583
  %v7588 = vand.u32 2147483647, %v6097
  %vm7589 = vcmp.eq.f32.partialorder %v7588, 8.507059e+37
  %v7590 = vand.u32 %v6097, 2147483648
  %v7591 = vor.u32 1.1754944e-38, %v7590
  %v7592 = vsel %vm7589, %v7591, %v7587
  %v7593 = vmul.f32 %v4772, %v7592
  %v7594 = vmul.f32 %v4774, %v7592
  %v7595 = vrcp.pop %v6098
  %v7596 = vmul.f32 %v6098, %v7595
  %v7597 = vsub.f32 1.0, %v7596
  %v7598 = vmul.f32 %v7595, %v7597
  %v7599 = vadd.f32 %v7595, %v7598
  %vm7600 = vweird.f32 %v6098
  %vm7601 = vweird.f32 %v7595
  %vm7602 = vmor %vm7600, %vm7601
  %v7603 = vsel %vm7602, %v7595, %v7599
  %v7604 = vand.u32 2147483647, %v6098
  %vm7605 = vcmp.eq.f32.partialorder %v7604, 8.507059e+37
  %v7606 = vand.u32 %v6098, 2147483648
  %v7607 = vor.u32 1.1754944e-38, %v7606
  %v7608 = vsel %vm7605, %v7607, %v7603
  %v7609 = vmul.f32 %v4776, %v7608
  %v7610 = vmul.f32 %v4778, %v7608
  %v7611 = vrcp.pop %v6099
  %v7612 = vmul.f32 %v6099, %v7611
  %v7613 = vsub.f32 1.0, %v7612
  %v7614 = vmul.f32 %v7611, %v7613
  %v7615 = vadd.f32 %v7611, %v7614
  %vm7616 = vweird.f32 %v6099
  %vm7617 = vweird.f32 %v7611
  %vm7618 = vmor %vm7616, %vm7617
  %v7619 = vsel %vm7618, %v7611, %v7615
  %v7620 = vand.u32 2147483647, %v6099
  %vm7621 = vcmp.eq.f32.partialorder %v7620, 8.507059e+37
  %v7622 = vand.u32 %v6099, 2147483648
  %v7623 = vor.u32 1.1754944e-38, %v7622
  %v7624 = vsel %vm7621, %v7623, %v7619
  %v7625 = vmul.f32 %v4780, %v7624
  %v7626 = vmul.f32 %v4782, %v7624
  %v7627 = vrcp.pop %v6100
  %v7628 = vmul.f32 %v6100, %v7627
  %v7629 = vsub.f32 1.0, %v7628
  %v7630 = vmul.f32 %v7627, %v7629
  %v7631 = vadd.f32 %v7627, %v7630
  %vm7632 = vweird.f32 %v6100
  %vm7633 = vweird.f32 %v7627
  %vm7634 = vmor %vm7632, %vm7633
  %v7635 = vsel %vm7634, %v7627, %v7631
  %v7636 = vand.u32 2147483647, %v6100
  %vm7637 = vcmp.eq.f32.partialorder %v7636, 8.507059e+37
  %v7638 = vand.u32 %v6100, 2147483648
  %v7639 = vor.u32 1.1754944e-38, %v7638
  %v7640 = vsel %vm7637, %v7639, %v7635
  %v7641 = vmul.f32 %v4784, %v7640
  %v7642 = vmul.f32 %v4786, %v7640
  %v7643 = vrcp.pop %v6101
  %v7644 = vmul.f32 %v6101, %v7643
  %v7645 = vsub.f32 1.0, %v7644
  %v7646 = vmul.f32 %v7643, %v7645
  %v7647 = vadd.f32 %v7643, %v7646
  %vm7648 = vweird.f32 %v6101
  %vm7649 = vweird.f32 %v7643
  %vm7650 = vmor %vm7648, %vm7649
  %v7651 = vsel %vm7650, %v7643, %v7647
  %v7652 = vand.u32 2147483647, %v6101
  %vm7653 = vcmp.eq.f32.partialorder %v7652, 8.507059e+37
  %v7654 = vand.u32 %v6101, 2147483648
  %v7655 = vor.u32 1.1754944e-38, %v7654
  %v7656 = vsel %vm7653, %v7655, %v7651
  %v7657 = vmul.f32 %v4788, %v7656
  %v7658 = vmul.f32 %v4790, %v7656
  %v7659 = vrcp.pop %v6102
  %v7660 = vmul.f32 %v6102, %v7659
  %v7661 = vsub.f32 1.0, %v7660
  %v7662 = vmul.f32 %v7659, %v7661
  %v7663 = vadd.f32 %v7659, %v7662
  %vm7664 = vweird.f32 %v6102
  %vm7665 = vweird.f32 %v7659
  %vm7666 = vmor %vm7664, %vm7665
  %v7667 = vsel %vm7666, %v7659, %v7663
  %v7668 = vand.u32 2147483647, %v6102
  %vm7669 = vcmp.eq.f32.partialorder %v7668, 8.507059e+37
  %v7670 = vand.u32 %v6102, 2147483648
  %v7671 = vor.u32 1.1754944e-38, %v7670
  %v7672 = vsel %vm7669, %v7671, %v7667
  %v7673 = vmul.f32 %v4792, %v7672
  %v7674 = vmul.f32 %v4794, %v7672
  %v7675 = vrcp.pop %v6103
  %v7676 = vmul.f32 %v6103, %v7675
  %v7677 = vsub.f32 1.0, %v7676
  %v7678 = vmul.f32 %v7675, %v7677
  %v7679 = vadd.f32 %v7675, %v7678
  %vm7680 = vweird.f32 %v6103
  %vm7681 = vweird.f32 %v7675
  %vm7682 = vmor %vm7680, %vm7681
  %v7683 = vsel %vm7682, %v7675, %v7679
  %v7684 = vand.u32 2147483647, %v6103
  %vm7685 = vcmp.eq.f32.partialorder %v7684, 8.507059e+37
  %v7686 = vand.u32 %v6103, 2147483648
  %v7687 = vor.u32 1.1754944e-38, %v7686
  %v7688 = vsel %vm7685, %v7687, %v7683
  %v7689 = vmul.f32 %v4796, %v7688
  %v7690 = vmul.f32 %v4798, %v7688
  %v7691 = vrcp.pop %v6104
  %v7692 = vmul.f32 %v6104, %v7691
  %v7693 = vsub.f32 1.0, %v7692
  %v7694 = vmul.f32 %v7691, %v7693
  %v7695 = vadd.f32 %v7691, %v7694
  %vm7696 = vweird.f32 %v6104
  %vm7697 = vweird.f32 %v7691
  %vm7698 = vmor %vm7696, %vm7697
  %v7699 = vsel %vm7698, %v7691, %v7695
  %v7700 = vand.u32 2147483647, %v6104
  %vm7701 = vcmp.eq.f32.partialorder %v7700, 8.507059e+37
  %v7702 = vand.u32 %v6104, 2147483648
  %v7703 = vor.u32 1.1754944e-38, %v7702
  %v7704 = vsel %vm7701, %v7703, %v7699
  %v7705 = vmul.f32 %v4800, %v7704
  %v7706 = vmul.f32 %v4802, %v7704
  %v7707 = vrcp.pop %v6105
  %v7708 = vmul.f32 %v6105, %v7707
  %v7709 = vsub.f32 1.0, %v7708
  %v7710 = vmul.f32 %v7707, %v7709
  %v7711 = vadd.f32 %v7707, %v7710
  %vm7712 = vweird.f32 %v6105
  %vm7713 = vweird.f32 %v7707
  %vm7714 = vmor %vm7712, %vm7713
  %v7715 = vsel %vm7714, %v7707, %v7711
  %v7716 = vand.u32 2147483647, %v6105
  %vm7717 = vcmp.eq.f32.partialorder %v7716, 8.507059e+37
  %v7718 = vand.u32 %v6105, 2147483648
  %v7719 = vor.u32 1.1754944e-38, %v7718
  %v7720 = vsel %vm7717, %v7719, %v7715
  %v7721 = vmul.f32 %v4804, %v7720
  %v7722 = vmul.f32 %v4806, %v7720
  %v7723 = vrcp.pop %v6106
  %v7724 = vmul.f32 %v6106, %v7723
  %v7725 = vsub.f32 1.0, %v7724
  %v7726 = vmul.f32 %v7723, %v7725
  %v7727 = vadd.f32 %v7723, %v7726
  %vm7728 = vweird.f32 %v6106
  %vm7729 = vweird.f32 %v7723
  %vm7730 = vmor %vm7728, %vm7729
  %v7731 = vsel %vm7730, %v7723, %v7727
  %v7732 = vand.u32 2147483647, %v6106
  %vm7733 = vcmp.eq.f32.partialorder %v7732, 8.507059e+37
  %v7734 = vand.u32 %v6106, 2147483648
  %v7735 = vor.u32 1.1754944e-38, %v7734
  %v7736 = vsel %vm7733, %v7735, %v7731
  %v7737 = vmul.f32 %v4808, %v7736
  %v7738 = vmul.f32 %v4810, %v7736
  %7740 = vset.pattern.permute.xlu0 0
  %7741 = vperm.xlu0 %7740, %v6217
  %v7742 = vpop.permute.xlu0 %7741
  %7745 = vset.pattern.permute.xlu0 0
  %7746 = vperm.xlu0 %7745, %v6218
  %v7747 = vpop.permute.xlu0 %7746
  %7750 = vset.pattern.permute.xlu0 0
  %7751 = vperm.xlu0 %7750, %v6233
  %v7752 = vpop.permute.xlu0 %7751
  %7755 = vset.pattern.permute.xlu0 0
  %7756 = vperm.xlu0 %7755, %v6234
  %v7757 = vpop.permute.xlu0 %7756
  %7760 = vset.pattern.permute.xlu0 0
  %7761 = vperm.xlu0 %7760, %v6249
  %v7762 = vpop.permute.xlu0 %7761
  %7765 = vset.pattern.permute.xlu0 0
  %7766 = vperm.xlu0 %7765, %v6250
  %v7767 = vpop.permute.xlu0 %7766
  %7770 = vset.pattern.permute.xlu0 0
  %7771 = vperm.xlu0 %7770, %v6265
  %v7772 = vpop.permute.xlu0 %7771
  %7775 = vset.pattern.permute.xlu0 0
  %7776 = vperm.xlu0 %7775, %v6266
  %v7777 = vpop.permute.xlu0 %7776
  %7780 = vset.pattern.permute.xlu0 0
  %7781 = vperm.xlu0 %7780, %v6281
  %v7782 = vpop.permute.xlu0 %7781
  %7785 = vset.pattern.permute.xlu0 0
  %7786 = vperm.xlu0 %7785, %v6282
  %v7787 = vpop.permute.xlu0 %7786
  %7790 = vset.pattern.permute.xlu0 0
  %7791 = vperm.xlu0 %7790, %v6297
  %v7792 = vpop.permute.xlu0 %7791
  %7795 = vset.pattern.permute.xlu0 0
  %7796 = vperm.xlu0 %7795, %v6298
  %v7797 = vpop.permute.xlu0 %7796
  %7800 = vset.pattern.permute.xlu0 0
  %7801 = vperm.xlu0 %7800, %v6313
  %v7802 = vpop.permute.xlu0 %7801
  %7805 = vset.pattern.permute.xlu0 0
  %7806 = vperm.xlu0 %7805, %v6314
  %v7807 = vpop.permute.xlu0 %7806
  %7810 = vset.pattern.permute.xlu0 0
  %7811 = vperm.xlu0 %7810, %v6329
  %v7812 = vpop.permute.xlu0 %7811
  %7815 = vset.pattern.permute.xlu0 0
  %7816 = vperm.xlu0 %7815, %v6330
  %v7817 = vpop.permute.xlu0 %7816
  %7820 = vset.pattern.permute.xlu0 0
  %7821 = vperm.xlu0 %7820, %v6345
  %v7822 = vpop.permute.xlu0 %7821
  %7825 = vset.pattern.permute.xlu0 0
  %7826 = vperm.xlu0 %7825, %v6346
  %v7827 = vpop.permute.xlu0 %7826
  %7830 = vset.pattern.permute.xlu0 0
  %7831 = vperm.xlu0 %7830, %v6361
  %v7832 = vpop.permute.xlu0 %7831
  %7835 = vset.pattern.permute.xlu0 0
  %7836 = vperm.xlu0 %7835, %v6362
  %v7837 = vpop.permute.xlu0 %7836
  %7840 = vset.pattern.permute.xlu0 0
  %7841 = vperm.xlu0 %7840, %v6377
  %v7842 = vpop.permute.xlu0 %7841
  %7845 = vset.pattern.permute.xlu0 0
  %7846 = vperm.xlu0 %7845, %v6378
  %v7847 = vpop.permute.xlu0 %7846
  %7850 = vset.pattern.permute.xlu0 0
  %7851 = vperm.xlu0 %7850, %v6393
  %v7852 = vpop.permute.xlu0 %7851
  %7855 = vset.pattern.permute.xlu0 0
  %7856 = vperm.xlu0 %7855, %v6394
  %v7857 = vpop.permute.xlu0 %7856
  %7860 = vset.pattern.permute.xlu0 0
  %7861 = vperm.xlu0 %7860, %v6409
  %v7862 = vpop.permute.xlu0 %7861
  %7865 = vset.pattern.permute.xlu0 0
  %7866 = vperm.xlu0 %7865, %v6410
  %v7867 = vpop.permute.xlu0 %7866
  %7870 = vset.pattern.permute.xlu0 0
  %7871 = vperm.xlu0 %7870, %v6425
  %v7872 = vpop.permute.xlu0 %7871
  %7875 = vset.pattern.permute.xlu0 0
  %7876 = vperm.xlu0 %7875, %v6426
  %v7877 = vpop.permute.xlu0 %7876
  %7880 = vset.pattern.permute.xlu0 0
  %7881 = vperm.xlu0 %7880, %v6441
  %v7882 = vpop.permute.xlu0 %7881
  %7885 = vset.pattern.permute.xlu0 0
  %7886 = vperm.xlu0 %7885, %v6442
  %v7887 = vpop.permute.xlu0 %7886
  %7890 = vset.pattern.permute.xlu0 0
  %7891 = vperm.xlu0 %7890, %v6457
  %v7892 = vpop.permute.xlu0 %7891
  %7895 = vset.pattern.permute.xlu0 0
  %7896 = vperm.xlu0 %7895, %v6458
  %v7897 = vpop.permute.xlu0 %7896
  %7900 = vset.pattern.permute.xlu0 0
  %7901 = vperm.xlu0 %7900, %v6473
  %v7902 = vpop.permute.xlu0 %7901
  %7905 = vset.pattern.permute.xlu0 0
  %7906 = vperm.xlu0 %7905, %v6474
  %v7907 = vpop.permute.xlu0 %7906
  %7910 = vset.pattern.permute.xlu0 0
  %7911 = vperm.xlu0 %7910, %v6489
  %v7912 = vpop.permute.xlu0 %7911
  %7915 = vset.pattern.permute.xlu0 0
  %7916 = vperm.xlu0 %7915, %v6490
  %v7917 = vpop.permute.xlu0 %7916
  %7920 = vset.pattern.permute.xlu0 0
  %7921 = vperm.xlu0 %7920, %v6505
  %v7922 = vpop.permute.xlu0 %7921
  %7925 = vset.pattern.permute.xlu0 0
  %7926 = vperm.xlu0 %7925, %v6506
  %v7927 = vpop.permute.xlu0 %7926
  %7930 = vset.pattern.permute.xlu0 0
  %7931 = vperm.xlu0 %7930, %v6521
  %v7932 = vpop.permute.xlu0 %7931
  %7935 = vset.pattern.permute.xlu0 0
  %7936 = vperm.xlu0 %7935, %v6522
  %v7937 = vpop.permute.xlu0 %7936
  %7940 = vset.pattern.permute.xlu0 0
  %7941 = vperm.xlu0 %7940, %v6537
  %v7942 = vpop.permute.xlu0 %7941
  %7945 = vset.pattern.permute.xlu0 0
  %7946 = vperm.xlu0 %7945, %v6538
  %v7947 = vpop.permute.xlu0 %7946
  %7950 = vset.pattern.permute.xlu0 0
  %7951 = vperm.xlu0 %7950, %v6553
  %v7952 = vpop.permute.xlu0 %7951
  %7955 = vset.pattern.permute.xlu0 0
  %7956 = vperm.xlu0 %7955, %v6554
  %v7957 = vpop.permute.xlu0 %7956
  %7960 = vset.pattern.permute.xlu0 0
  %7961 = vperm.xlu0 %7960, %v6569
  %v7962 = vpop.permute.xlu0 %7961
  %7965 = vset.pattern.permute.xlu0 0
  %7966 = vperm.xlu0 %7965, %v6570
  %v7967 = vpop.permute.xlu0 %7966
  %7970 = vset.pattern.permute.xlu0 0
  %7971 = vperm.xlu0 %7970, %v6585
  %v7972 = vpop.permute.xlu0 %7971
  %7975 = vset.pattern.permute.xlu0 0
  %7976 = vperm.xlu0 %7975, %v6586
  %v7977 = vpop.permute.xlu0 %7976
  %7980 = vset.pattern.permute.xlu0 0
  %7981 = vperm.xlu0 %7980, %v6601
  %v7982 = vpop.permute.xlu0 %7981
  %7985 = vset.pattern.permute.xlu0 0
  %7986 = vperm.xlu0 %7985, %v6602
  %v7987 = vpop.permute.xlu0 %7986
  %7990 = vset.pattern.permute.xlu0 0
  %7991 = vperm.xlu0 %7990, %v6617
  %v7992 = vpop.permute.xlu0 %7991
  %7995 = vset.pattern.permute.xlu0 0
  %7996 = vperm.xlu0 %7995, %v6618
  %v7997 = vpop.permute.xlu0 %7996
  %8000 = vset.pattern.permute.xlu0 0
  %8001 = vperm.xlu0 %8000, %v6633
  %v8002 = vpop.permute.xlu0 %8001
  %8005 = vset.pattern.permute.xlu0 0
  %8006 = vperm.xlu0 %8005, %v6634
  %v8007 = vpop.permute.xlu0 %8006
  %8010 = vset.pattern.permute.xlu0 0
  %8011 = vperm.xlu0 %8010, %v6649
  %v8012 = vpop.permute.xlu0 %8011
  %8015 = vset.pattern.permute.xlu0 0
  %8016 = vperm.xlu0 %8015, %v6650
  %v8017 = vpop.permute.xlu0 %8016
  %8020 = vset.pattern.permute.xlu0 0
  %8021 = vperm.xlu0 %8020, %v6665
  %v8022 = vpop.permute.xlu0 %8021
  %8025 = vset.pattern.permute.xlu0 0
  %8026 = vperm.xlu0 %8025, %v6666
  %v8027 = vpop.permute.xlu0 %8026
  %8030 = vset.pattern.permute.xlu0 0
  %8031 = vperm.xlu0 %8030, %v6681
  %v8032 = vpop.permute.xlu0 %8031
  %8035 = vset.pattern.permute.xlu0 0
  %8036 = vperm.xlu0 %8035, %v6682
  %v8037 = vpop.permute.xlu0 %8036
  %8040 = vset.pattern.permute.xlu0 0
  %8041 = vperm.xlu0 %8040, %v6697
  %v8042 = vpop.permute.xlu0 %8041
  %8045 = vset.pattern.permute.xlu0 0
  %8046 = vperm.xlu0 %8045, %v6698
  %v8047 = vpop.permute.xlu0 %8046
  %8050 = vset.pattern.permute.xlu0 0
  %8051 = vperm.xlu0 %8050, %v6713
  %v8052 = vpop.permute.xlu0 %8051
  %8055 = vset.pattern.permute.xlu0 0
  %8056 = vperm.xlu0 %8055, %v6714
  %v8057 = vpop.permute.xlu0 %8056
  %8060 = vset.pattern.permute.xlu0 0
  %8061 = vperm.xlu0 %8060, %v6729
  %v8062 = vpop.permute.xlu0 %8061
  %8065 = vset.pattern.permute.xlu0 0
  %8066 = vperm.xlu0 %8065, %v6730
  %v8067 = vpop.permute.xlu0 %8066
  %8070 = vset.pattern.permute.xlu0 0
  %8071 = vperm.xlu0 %8070, %v6745
  %v8072 = vpop.permute.xlu0 %8071
  %8075 = vset.pattern.permute.xlu0 0
  %8076 = vperm.xlu0 %8075, %v6746
  %v8077 = vpop.permute.xlu0 %8076
  %8080 = vset.pattern.permute.xlu0 0
  %8081 = vperm.xlu0 %8080, %v6761
  %v8082 = vpop.permute.xlu0 %8081
  %8085 = vset.pattern.permute.xlu0 0
  %8086 = vperm.xlu0 %8085, %v6762
  %v8087 = vpop.permute.xlu0 %8086
  %8090 = vset.pattern.permute.xlu0 0
  %8091 = vperm.xlu0 %8090, %v6777
  %v8092 = vpop.permute.xlu0 %8091
  %8095 = vset.pattern.permute.xlu0 0
  %8096 = vperm.xlu0 %8095, %v6778
  %v8097 = vpop.permute.xlu0 %8096
  %8100 = vset.pattern.permute.xlu0 0
  %8101 = vperm.xlu0 %8100, %v6793
  %v8102 = vpop.permute.xlu0 %8101
  %8105 = vset.pattern.permute.xlu0 0
  %8106 = vperm.xlu0 %8105, %v6794
  %v8107 = vpop.permute.xlu0 %8106
  %8110 = vset.pattern.permute.xlu0 0
  %8111 = vperm.xlu0 %8110, %v6809
  %v8112 = vpop.permute.xlu0 %8111
  %8115 = vset.pattern.permute.xlu0 0
  %8116 = vperm.xlu0 %8115, %v6810
  %v8117 = vpop.permute.xlu0 %8116
  %8120 = vset.pattern.permute.xlu0 0
  %8121 = vperm.xlu0 %8120, %v6825
  %v8122 = vpop.permute.xlu0 %8121
  %8125 = vset.pattern.permute.xlu0 0
  %8126 = vperm.xlu0 %8125, %v6826
  %v8127 = vpop.permute.xlu0 %8126
  %8130 = vset.pattern.permute.xlu0 0
  %8131 = vperm.xlu0 %8130, %v6841
  %v8132 = vpop.permute.xlu0 %8131
  %8135 = vset.pattern.permute.xlu0 0
  %8136 = vperm.xlu0 %8135, %v6842
  %v8137 = vpop.permute.xlu0 %8136
  %8140 = vset.pattern.permute.xlu0 0
  %8141 = vperm.xlu0 %8140, %v6857
  %v8142 = vpop.permute.xlu0 %8141
  %8145 = vset.pattern.permute.xlu0 0
  %8146 = vperm.xlu0 %8145, %v6858
  %v8147 = vpop.permute.xlu0 %8146
  %8150 = vset.pattern.permute.xlu0 0
  %8151 = vperm.xlu0 %8150, %v6873
  %v8152 = vpop.permute.xlu0 %8151
  %8155 = vset.pattern.permute.xlu0 0
  %8156 = vperm.xlu0 %8155, %v6874
  %v8157 = vpop.permute.xlu0 %8156
  %8160 = vset.pattern.permute.xlu0 0
  %8161 = vperm.xlu0 %8160, %v6889
  %v8162 = vpop.permute.xlu0 %8161
  %8165 = vset.pattern.permute.xlu0 0
  %8166 = vperm.xlu0 %8165, %v6890
  %v8167 = vpop.permute.xlu0 %8166
  %8170 = vset.pattern.permute.xlu0 0
  %8171 = vperm.xlu0 %8170, %v6905
  %v8172 = vpop.permute.xlu0 %8171
  %8175 = vset.pattern.permute.xlu0 0
  %8176 = vperm.xlu0 %8175, %v6906
  %v8177 = vpop.permute.xlu0 %8176
  %8180 = vset.pattern.permute.xlu0 0
  %8181 = vperm.xlu0 %8180, %v6921
  %v8182 = vpop.permute.xlu0 %8181
  %8185 = vset.pattern.permute.xlu0 0
  %8186 = vperm.xlu0 %8185, %v6922
  %v8187 = vpop.permute.xlu0 %8186
  %8190 = vset.pattern.permute.xlu0 0
  %8191 = vperm.xlu0 %8190, %v6937
  %v8192 = vpop.permute.xlu0 %8191
  %8195 = vset.pattern.permute.xlu0 0
  %8196 = vperm.xlu0 %8195, %v6938
  %v8197 = vpop.permute.xlu0 %8196
  %8200 = vset.pattern.permute.xlu0 0
  %8201 = vperm.xlu0 %8200, %v6953
  %v8202 = vpop.permute.xlu0 %8201
  %8205 = vset.pattern.permute.xlu0 0
  %8206 = vperm.xlu0 %8205, %v6954
  %v8207 = vpop.permute.xlu0 %8206
  %8210 = vset.pattern.permute.xlu0 0
  %8211 = vperm.xlu0 %8210, %v6969
  %v8212 = vpop.permute.xlu0 %8211
  %8215 = vset.pattern.permute.xlu0 0
  %8216 = vperm.xlu0 %8215, %v6970
  %v8217 = vpop.permute.xlu0 %8216
  %8220 = vset.pattern.permute.xlu0 0
  %8221 = vperm.xlu0 %8220, %v6985
  %v8222 = vpop.permute.xlu0 %8221
  %8225 = vset.pattern.permute.xlu0 0
  %8226 = vperm.xlu0 %8225, %v6986
  %v8227 = vpop.permute.xlu0 %8226
  %8230 = vset.pattern.permute.xlu0 0
  %8231 = vperm.xlu0 %8230, %v7001
  %v8232 = vpop.permute.xlu0 %8231
  %8235 = vset.pattern.permute.xlu0 0
  %8236 = vperm.xlu0 %8235, %v7002
  %v8237 = vpop.permute.xlu0 %8236
  %8240 = vset.pattern.permute.xlu0 0
  %8241 = vperm.xlu0 %8240, %v7017
  %v8242 = vpop.permute.xlu0 %8241
  %8245 = vset.pattern.permute.xlu0 0
  %8246 = vperm.xlu0 %8245, %v7018
  %v8247 = vpop.permute.xlu0 %8246
  %8250 = vset.pattern.permute.xlu0 0
  %8251 = vperm.xlu0 %8250, %v7033
  %v8252 = vpop.permute.xlu0 %8251
  %8255 = vset.pattern.permute.xlu0 0
  %8256 = vperm.xlu0 %8255, %v7034
  %v8257 = vpop.permute.xlu0 %8256
  %8260 = vset.pattern.permute.xlu0 0
  %8261 = vperm.xlu0 %8260, %v7049
  %v8262 = vpop.permute.xlu0 %8261
  %8265 = vset.pattern.permute.xlu0 0
  %8266 = vperm.xlu0 %8265, %v7050
  %v8267 = vpop.permute.xlu0 %8266
  %8270 = vset.pattern.permute.xlu0 0
  %8271 = vperm.xlu0 %8270, %v7065
  %v8272 = vpop.permute.xlu0 %8271
  %8275 = vset.pattern.permute.xlu0 0
  %8276 = vperm.xlu0 %8275, %v7066
  %v8277 = vpop.permute.xlu0 %8276
  %8280 = vset.pattern.permute.xlu0 0
  %8281 = vperm.xlu0 %8280, %v7081
  %v8282 = vpop.permute.xlu0 %8281
  %8285 = vset.pattern.permute.xlu0 0
  %8286 = vperm.xlu0 %8285, %v7082
  %v8287 = vpop.permute.xlu0 %8286
  %8290 = vset.pattern.permute.xlu0 0
  %8291 = vperm.xlu0 %8290, %v7097
  %v8292 = vpop.permute.xlu0 %8291
  %8295 = vset.pattern.permute.xlu0 0
  %8296 = vperm.xlu0 %8295, %v7098
  %v8297 = vpop.permute.xlu0 %8296
  %8300 = vset.pattern.permute.xlu0 0
  %8301 = vperm.xlu0 %8300, %v7113
  %v8302 = vpop.permute.xlu0 %8301
  %8305 = vset.pattern.permute.xlu0 0
  %8306 = vperm.xlu0 %8305, %v7114
  %v8307 = vpop.permute.xlu0 %8306
  %8310 = vset.pattern.permute.xlu0 0
  %8311 = vperm.xlu0 %8310, %v7129
  %v8312 = vpop.permute.xlu0 %8311
  %8315 = vset.pattern.permute.xlu0 0
  %8316 = vperm.xlu0 %8315, %v7130
  %v8317 = vpop.permute.xlu0 %8316
  %8320 = vset.pattern.permute.xlu0 0
  %8321 = vperm.xlu0 %8320, %v7145
  %v8322 = vpop.permute.xlu0 %8321
  %8325 = vset.pattern.permute.xlu0 0
  %8326 = vperm.xlu0 %8325, %v7146
  %v8327 = vpop.permute.xlu0 %8326
  %8330 = vset.pattern.permute.xlu0 0
  %8331 = vperm.xlu0 %8330, %v7161
  %v8332 = vpop.permute.xlu0 %8331
  %8335 = vset.pattern.permute.xlu0 0
  %8336 = vperm.xlu0 %8335, %v7162
  %v8337 = vpop.permute.xlu0 %8336
  %8340 = vset.pattern.permute.xlu0 0
  %8341 = vperm.xlu0 %8340, %v7177
  %v8342 = vpop.permute.xlu0 %8341
  %8345 = vset.pattern.permute.xlu0 0
  %8346 = vperm.xlu0 %8345, %v7178
  %v8347 = vpop.permute.xlu0 %8346
  %8350 = vset.pattern.permute.xlu0 0
  %8351 = vperm.xlu0 %8350, %v7193
  %v8352 = vpop.permute.xlu0 %8351
  %8355 = vset.pattern.permute.xlu0 0
  %8356 = vperm.xlu0 %8355, %v7194
  %v8357 = vpop.permute.xlu0 %8356
  %8360 = vset.pattern.permute.xlu0 0
  %8361 = vperm.xlu0 %8360, %v7209
  %v8362 = vpop.permute.xlu0 %8361
  %8365 = vset.pattern.permute.xlu0 0
  %8366 = vperm.xlu0 %8365, %v7210
  %v8367 = vpop.permute.xlu0 %8366
  %8370 = vset.pattern.permute.xlu0 0
  %8371 = vperm.xlu0 %8370, %v7225
  %v8372 = vpop.permute.xlu0 %8371
  %8375 = vset.pattern.permute.xlu0 0
  %8376 = vperm.xlu0 %8375, %v7226
  %v8377 = vpop.permute.xlu0 %8376
  %8380 = vset.pattern.permute.xlu0 0
  %8381 = vperm.xlu0 %8380, %v7241
  %v8382 = vpop.permute.xlu0 %8381
  %8385 = vset.pattern.permute.xlu0 0
  %8386 = vperm.xlu0 %8385, %v7242
  %v8387 = vpop.permute.xlu0 %8386
  %8390 = vset.pattern.permute.xlu0 0
  %8391 = vperm.xlu0 %8390, %v7257
  %v8392 = vpop.permute.xlu0 %8391
  %8395 = vset.pattern.permute.xlu0 0
  %8396 = vperm.xlu0 %8395, %v7258
  %v8397 = vpop.permute.xlu0 %8396
  %8400 = vset.pattern.permute.xlu0 0
  %8401 = vperm.xlu0 %8400, %v7273
  %v8402 = vpop.permute.xlu0 %8401
  %8405 = vset.pattern.permute.xlu0 0
  %8406 = vperm.xlu0 %8405, %v7274
  %v8407 = vpop.permute.xlu0 %8406
  %8410 = vset.pattern.permute.xlu0 0
  %8411 = vperm.xlu0 %8410, %v7289
  %v8412 = vpop.permute.xlu0 %8411
  %8415 = vset.pattern.permute.xlu0 0
  %8416 = vperm.xlu0 %8415, %v7290
  %v8417 = vpop.permute.xlu0 %8416
  %8420 = vset.pattern.permute.xlu0 0
  %8421 = vperm.xlu0 %8420, %v7305
  %v8422 = vpop.permute.xlu0 %8421
  %8425 = vset.pattern.permute.xlu0 0
  %8426 = vperm.xlu0 %8425, %v7306
  %v8427 = vpop.permute.xlu0 %8426
  %8430 = vset.pattern.permute.xlu0 0
  %8431 = vperm.xlu0 %8430, %v7321
  %v8432 = vpop.permute.xlu0 %8431
  %8435 = vset.pattern.permute.xlu0 0
  %8436 = vperm.xlu0 %8435, %v7322
  %v8437 = vpop.permute.xlu0 %8436
  %8440 = vset.pattern.permute.xlu0 0
  %8441 = vperm.xlu0 %8440, %v7337
  %v8442 = vpop.permute.xlu0 %8441
  %8445 = vset.pattern.permute.xlu0 0
  %8446 = vperm.xlu0 %8445, %v7338
  %v8447 = vpop.permute.xlu0 %8446
  %8450 = vset.pattern.permute.xlu0 0
  %8451 = vperm.xlu0 %8450, %v7353
  %v8452 = vpop.permute.xlu0 %8451
  %8455 = vset.pattern.permute.xlu0 0
  %8456 = vperm.xlu0 %8455, %v7354
  %v8457 = vpop.permute.xlu0 %8456
  %8460 = vset.pattern.permute.xlu0 0
  %8461 = vperm.xlu0 %8460, %v7369
  %v8462 = vpop.permute.xlu0 %8461
  %8465 = vset.pattern.permute.xlu0 0
  %8466 = vperm.xlu0 %8465, %v7370
  %v8467 = vpop.permute.xlu0 %8466
  %8470 = vset.pattern.permute.xlu0 0
  %8471 = vperm.xlu0 %8470, %v7385
  %v8472 = vpop.permute.xlu0 %8471
  %8475 = vset.pattern.permute.xlu0 0
  %8476 = vperm.xlu0 %8475, %v7386
  %v8477 = vpop.permute.xlu0 %8476
  %8480 = vset.pattern.permute.xlu0 0
  %8481 = vperm.xlu0 %8480, %v7401
  %v8482 = vpop.permute.xlu0 %8481
  %8485 = vset.pattern.permute.xlu0 0
  %8486 = vperm.xlu0 %8485, %v7402
  %v8487 = vpop.permute.xlu0 %8486
  %8490 = vset.pattern.permute.xlu0 0
  %8491 = vperm.xlu0 %8490, %v7417
  %v8492 = vpop.permute.xlu0 %8491
  %8495 = vset.pattern.permute.xlu0 0
  %8496 = vperm.xlu0 %8495, %v7418
  %v8497 = vpop.permute.xlu0 %8496
  %8500 = vset.pattern.permute.xlu0 0
  %8501 = vperm.xlu0 %8500, %v7433
  %v8502 = vpop.permute.xlu0 %8501
  %8505 = vset.pattern.permute.xlu0 0
  %8506 = vperm.xlu0 %8505, %v7434
  %v8507 = vpop.permute.xlu0 %8506
  %8510 = vset.pattern.permute.xlu0 0
  %8511 = vperm.xlu0 %8510, %v7449
  %v8512 = vpop.permute.xlu0 %8511
  %8515 = vset.pattern.permute.xlu0 0
  %8516 = vperm.xlu0 %8515, %v7450
  %v8517 = vpop.permute.xlu0 %8516
  %8520 = vset.pattern.permute.xlu0 0
  %8521 = vperm.xlu0 %8520, %v7465
  %v8522 = vpop.permute.xlu0 %8521
  %8525 = vset.pattern.permute.xlu0 0
  %8526 = vperm.xlu0 %8525, %v7466
  %v8527 = vpop.permute.xlu0 %8526
  %8530 = vset.pattern.permute.xlu0 0
  %8531 = vperm.xlu0 %8530, %v7481
  %v8532 = vpop.permute.xlu0 %8531
  %8535 = vset.pattern.permute.xlu0 0
  %8536 = vperm.xlu0 %8535, %v7482
  %v8537 = vpop.permute.xlu0 %8536
  %8540 = vset.pattern.permute.xlu0 0
  %8541 = vperm.xlu0 %8540, %v7497
  %v8542 = vpop.permute.xlu0 %8541
  %8545 = vset.pattern.permute.xlu0 0
  %8546 = vperm.xlu0 %8545, %v7498
  %v8547 = vpop.permute.xlu0 %8546
  %8550 = vset.pattern.permute.xlu0 0
  %8551 = vperm.xlu0 %8550, %v7513
  %v8552 = vpop.permute.xlu0 %8551
  %8555 = vset.pattern.permute.xlu0 0
  %8556 = vperm.xlu0 %8555, %v7514
  %v8557 = vpop.permute.xlu0 %8556
  %8560 = vset.pattern.permute.xlu0 0
  %8561 = vperm.xlu0 %8560, %v7529
  %v8562 = vpop.permute.xlu0 %8561
  %8565 = vset.pattern.permute.xlu0 0
  %8566 = vperm.xlu0 %8565, %v7530
  %v8567 = vpop.permute.xlu0 %8566
  %8570 = vset.pattern.permute.xlu0 0
  %8571 = vperm.xlu0 %8570, %v7545
  %v8572 = vpop.permute.xlu0 %8571
  %8575 = vset.pattern.permute.xlu0 0
  %8576 = vperm.xlu0 %8575, %v7546
  %v8577 = vpop.permute.xlu0 %8576
  %8580 = vset.pattern.permute.xlu0 0
  %8581 = vperm.xlu0 %8580, %v7561
  %v8582 = vpop.permute.xlu0 %8581
  %8585 = vset.pattern.permute.xlu0 0
  %8586 = vperm.xlu0 %8585, %v7562
  %v8587 = vpop.permute.xlu0 %8586
  %8590 = vset.pattern.permute.xlu0 0
  %8591 = vperm.xlu0 %8590, %v7577
  %v8592 = vpop.permute.xlu0 %8591
  %8595 = vset.pattern.permute.xlu0 0
  %8596 = vperm.xlu0 %8595, %v7578
  %v8597 = vpop.permute.xlu0 %8596
  %8600 = vset.pattern.permute.xlu0 0
  %8601 = vperm.xlu0 %8600, %v7593
  %v8602 = vpop.permute.xlu0 %8601
  %8605 = vset.pattern.permute.xlu0 0
  %8606 = vperm.xlu0 %8605, %v7594
  %v8607 = vpop.permute.xlu0 %8606
  %8610 = vset.pattern.permute.xlu0 0
  %8611 = vperm.xlu0 %8610, %v7609
  %v8612 = vpop.permute.xlu0 %8611
  %8615 = vset.pattern.permute.xlu0 0
  %8616 = vperm.xlu0 %8615, %v7610
  %v8617 = vpop.permute.xlu0 %8616
  %8620 = vset.pattern.permute.xlu0 0
  %8621 = vperm.xlu0 %8620, %v7625
  %v8622 = vpop.permute.xlu0 %8621
  %8625 = vset.pattern.permute.xlu0 0
  %8626 = vperm.xlu0 %8625, %v7626
  %v8627 = vpop.permute.xlu0 %8626
  %8630 = vset.pattern.permute.xlu0 0
  %8631 = vperm.xlu0 %8630, %v7641
  %v8632 = vpop.permute.xlu0 %8631
  %8635 = vset.pattern.permute.xlu0 0
  %8636 = vperm.xlu0 %8635, %v7642
  %v8637 = vpop.permute.xlu0 %8636
  %8640 = vset.pattern.permute.xlu0 0
  %8641 = vperm.xlu0 %8640, %v7657
  %v8642 = vpop.permute.xlu0 %8641
  %8645 = vset.pattern.permute.xlu0 0
  %8646 = vperm.xlu0 %8645, %v7658
  %v8647 = vpop.permute.xlu0 %8646
  %8650 = vset.pattern.permute.xlu0 0
  %8651 = vperm.xlu0 %8650, %v7673
  %v8652 = vpop.permute.xlu0 %8651
  %8655 = vset.pattern.permute.xlu0 0
  %8656 = vperm.xlu0 %8655, %v7674
  %v8657 = vpop.permute.xlu0 %8656
  %8660 = vset.pattern.permute.xlu0 0
  %8661 = vperm.xlu0 %8660, %v7689
  %v8662 = vpop.permute.xlu0 %8661
  %8665 = vset.pattern.permute.xlu0 0
  %8666 = vperm.xlu0 %8665, %v7690
  %v8667 = vpop.permute.xlu0 %8666
  %8670 = vset.pattern.permute.xlu0 0
  %8671 = vperm.xlu0 %8670, %v7705
  %v8672 = vpop.permute.xlu0 %8671
  %8675 = vset.pattern.permute.xlu0 0
  %8676 = vperm.xlu0 %8675, %v7706
  %v8677 = vpop.permute.xlu0 %8676
  %8680 = vset.pattern.permute.xlu0 0
  %8681 = vperm.xlu0 %8680, %v7721
  %v8682 = vpop.permute.xlu0 %8681
  %8685 = vset.pattern.permute.xlu0 0
  %8686 = vperm.xlu0 %8685, %v7722
  %v8687 = vpop.permute.xlu0 %8686
  %8690 = vset.pattern.permute.xlu0 0
  %8691 = vperm.xlu0 %8690, %v7737
  %v8692 = vpop.permute.xlu0 %8691
  %8695 = vset.pattern.permute.xlu0 0
  %8696 = vperm.xlu0 %8695, %v7738
  %v8697 = vpop.permute.xlu0 %8696
  %v8699 = vmul.f32 %v7742, %v1363
  %v8700 = vmul.f32 %v7747, %v1364
  %v8701 = vmul.f32 %v7752, %v1365
  %v8702 = vmul.f32 %v7757, %v1366
  %v8703 = vmul.f32 %v7762, %v1367
  %v8704 = vmul.f32 %v7767, %v1368
  %v8705 = vmul.f32 %v7772, %v1369
  %v8706 = vmul.f32 %v7777, %v1370
  %v8707 = vmul.f32 %v7782, %v1371
  %v8708 = vmul.f32 %v7787, %v1372
  %v8709 = vmul.f32 %v7792, %v1373
  %v8710 = vmul.f32 %v7797, %v1374
  %v8711 = vmul.f32 %v7802, %v1375
  %v8712 = vmul.f32 %v7807, %v1376
  %v8713 = vmul.f32 %v7812, %v1377
  %v8714 = vmul.f32 %v7817, %v1378
  %v8715 = vmul.f32 %v7822, %v1379
  %v8716 = vmul.f32 %v7827, %v1380
  %v8717 = vmul.f32 %v7832, %v1381
  %v8718 = vmul.f32 %v7837, %v1382
  %v8719 = vmul.f32 %v7842, %v1383
  %v8720 = vmul.f32 %v7847, %v1384
  %v8721 = vmul.f32 %v7852, %v1385
  %v8722 = vmul.f32 %v7857, %v1386
  %v8723 = vmul.f32 %v7862, %v1387
  %v8724 = vmul.f32 %v7867, %v1388
  %v8725 = vmul.f32 %v7872, %v1389
  %v8726 = vmul.f32 %v7877, %v1390
  %v8727 = vmul.f32 %v7882, %v1391
  %v8728 = vmul.f32 %v7887, %v1392
  %v8729 = vmul.f32 %v7892, %v1393
  %v8730 = vmul.f32 %v7897, %v1394
  %v8731 = vmul.f32 %v7902, %v1395
  %v8732 = vmul.f32 %v7907, %v1396
  %v8733 = vmul.f32 %v7912, %v1397
  %v8734 = vmul.f32 %v7917, %v1398
  %v8735 = vmul.f32 %v7922, %v1399
  %v8736 = vmul.f32 %v7927, %v1400
  %v8737 = vmul.f32 %v7932, %v1401
  %v8738 = vmul.f32 %v7937, %v1402
  %v8739 = vmul.f32 %v7942, %v1403
  %v8740 = vmul.f32 %v7947, %v1404
  %v8741 = vmul.f32 %v7952, %v1405
  %v8742 = vmul.f32 %v7957, %v1406
  %v8743 = vmul.f32 %v7962, %v1407
  %v8744 = vmul.f32 %v7967, %v1408
  %v8745 = vmul.f32 %v7972, %v1409
  %v8746 = vmul.f32 %v7977, %v1410
  %v8747 = vmul.f32 %v7982, %v1411
  %v8748 = vmul.f32 %v7987, %v1412
  %v8749 = vmul.f32 %v7992, %v1413
  %v8750 = vmul.f32 %v7997, %v1414
  %v8751 = vmul.f32 %v8002, %v1415
  %v8752 = vmul.f32 %v8007, %v1416
  %v8753 = vmul.f32 %v8012, %v1417
  %v8754 = vmul.f32 %v8017, %v1418
  %v8755 = vmul.f32 %v8022, %v1419
  %v8756 = vmul.f32 %v8027, %v1420
  %v8757 = vmul.f32 %v8032, %v1421
  %v8758 = vmul.f32 %v8037, %v1422
  %v8759 = vmul.f32 %v8042, %v1423
  %v8760 = vmul.f32 %v8047, %v1424
  %v8761 = vmul.f32 %v8052, %v1425
  %v8762 = vmul.f32 %v8057, %v1426
  %v8763 = vmul.f32 %v8062, %v1427
  %v8764 = vmul.f32 %v8067, %v1428
  %v8765 = vmul.f32 %v8072, %v1429
  %v8766 = vmul.f32 %v8077, %v1430
  %v8767 = vmul.f32 %v8082, %v1431
  %v8768 = vmul.f32 %v8087, %v1432
  %v8769 = vmul.f32 %v8092, %v1433
  %v8770 = vmul.f32 %v8097, %v1434
  %v8771 = vmul.f32 %v8102, %v1435
  %v8772 = vmul.f32 %v8107, %v1436
  %v8773 = vmul.f32 %v8112, %v1437
  %v8774 = vmul.f32 %v8117, %v1438
  %v8775 = vmul.f32 %v8122, %v1439
  %v8776 = vmul.f32 %v8127, %v1440
  %v8777 = vmul.f32 %v8132, %v1441
  %v8778 = vmul.f32 %v8137, %v1442
  %v8779 = vmul.f32 %v8142, %v1443
  %v8780 = vmul.f32 %v8147, %v1444
  %v8781 = vmul.f32 %v8152, %v1445
  %v8782 = vmul.f32 %v8157, %v1446
  %v8783 = vmul.f32 %v8162, %v1447
  %v8784 = vmul.f32 %v8167, %v1448
  %v8785 = vmul.f32 %v8172, %v1449
  %v8786 = vmul.f32 %v8177, %v1450
  %v8787 = vmul.f32 %v8182, %v1451
  %v8788 = vmul.f32 %v8187, %v1452
  %v8789 = vmul.f32 %v8192, %v1453
  %v8790 = vmul.f32 %v8197, %v1454
  %v8791 = vmul.f32 %v8202, %v1455
  %v8792 = vmul.f32 %v8207, %v1456
  %v8793 = vmul.f32 %v8212, %v1457
  %v8794 = vmul.f32 %v8217, %v1458
  %v8795 = vmul.f32 %v8222, %v1459
  %v8796 = vmul.f32 %v8227, %v1460
  %v8797 = vmul.f32 %v8232, %v1461
  %v8798 = vmul.f32 %v8237, %v1462
  %v8799 = vmul.f32 %v8242, %v1463
  %v8800 = vmul.f32 %v8247, %v1464
  %v8801 = vmul.f32 %v8252, %v1465
  %v8802 = vmul.f32 %v8257, %v1466
  %v8803 = vmul.f32 %v8262, %v1467
  %v8804 = vmul.f32 %v8267, %v1468
  %v8805 = vmul.f32 %v8272, %v1469
  %v8806 = vmul.f32 %v8277, %v1470
  %v8807 = vmul.f32 %v8282, %v1471
  %v8808 = vmul.f32 %v8287, %v1472
  %v8809 = vmul.f32 %v8292, %v1473
  %v8810 = vmul.f32 %v8297, %v1474
  %v8811 = vmul.f32 %v8302, %v1475
  %v8812 = vmul.f32 %v8307, %v1476
  %v8813 = vmul.f32 %v8312, %v1477
  %v8814 = vmul.f32 %v8317, %v1478
  %v8815 = vmul.f32 %v8322, %v1479
  %v8816 = vmul.f32 %v8327, %v1480
  %v8817 = vmul.f32 %v8332, %v1481
  %v8818 = vmul.f32 %v8337, %v1482
  %v8819 = vmul.f32 %v8342, %v1483
  %v8820 = vmul.f32 %v8347, %v1484
  %v8821 = vmul.f32 %v8352, %v1485
  %v8822 = vmul.f32 %v8357, %v1486
  %v8823 = vmul.f32 %v8362, %v1487
  %v8824 = vmul.f32 %v8367, %v1488
  %v8825 = vmul.f32 %v8372, %v1489
  %v8826 = vmul.f32 %v8377, %v1490
  %v8827 = vmul.f32 %v8382, %v1491
  %v8828 = vmul.f32 %v8387, %v1492
  %v8829 = vmul.f32 %v8392, %v1493
  %v8830 = vmul.f32 %v8397, %v1494
  %v8831 = vmul.f32 %v8402, %v1495
  %v8832 = vmul.f32 %v8407, %v1496
  %v8833 = vmul.f32 %v8412, %v1497
  %v8834 = vmul.f32 %v8417, %v1498
  %v8835 = vmul.f32 %v8422, %v1499
  %v8836 = vmul.f32 %v8427, %v1500
  %v8837 = vmul.f32 %v8432, %v1501
  %v8838 = vmul.f32 %v8437, %v1502
  %v8839 = vmul.f32 %v8442, %v1503
  %v8840 = vmul.f32 %v8447, %v1504
  %v8841 = vmul.f32 %v8452, %v1505
  %v8842 = vmul.f32 %v8457, %v1506
  %v8843 = vmul.f32 %v8462, %v1507
  %v8844 = vmul.f32 %v8467, %v1508
  %v8845 = vmul.f32 %v8472, %v1509
  %v8846 = vmul.f32 %v8477, %v1510
  %v8847 = vmul.f32 %v8482, %v1511
  %v8848 = vmul.f32 %v8487, %v1512
  %v8849 = vmul.f32 %v8492, %v1513
  %v8850 = vmul.f32 %v8497, %v1514
  %v8851 = vmul.f32 %v8502, %v1515
  %v8852 = vmul.f32 %v8507, %v1516
  %v8853 = vmul.f32 %v8512, %v1517
  %v8854 = vmul.f32 %v8517, %v1518
  %v8855 = vmul.f32 %v8522, %v1519
  %v8856 = vmul.f32 %v8527, %v1520
  %v8857 = vmul.f32 %v8532, %v1521
  %v8858 = vmul.f32 %v8537, %v1522
  %v8859 = vmul.f32 %v8542, %v1523
  %v8860 = vmul.f32 %v8547, %v1524
  %v8861 = vmul.f32 %v8552, %v1525
  %v8862 = vmul.f32 %v8557, %v1526
  %v8863 = vmul.f32 %v8562, %v1527
  %v8864 = vmul.f32 %v8567, %v1528
  %v8865 = vmul.f32 %v8572, %v1529
  %v8866 = vmul.f32 %v8577, %v1530
  %v8867 = vmul.f32 %v8582, %v1531
  %v8868 = vmul.f32 %v8587, %v1532
  %v8869 = vmul.f32 %v8592, %v1533
  %v8870 = vmul.f32 %v8597, %v1534
  %v8871 = vmul.f32 %v8602, %v1535
  %v8872 = vmul.f32 %v8607, %v1536
  %v8873 = vmul.f32 %v8612, %v1537
  %v8874 = vmul.f32 %v8617, %v1538
  %v8875 = vmul.f32 %v8622, %v1539
  %v8876 = vmul.f32 %v8627, %v1540
  %v8877 = vmul.f32 %v8632, %v1541
  %v8878 = vmul.f32 %v8637, %v1542
  %v8879 = vmul.f32 %v8642, %v1543
  %v8880 = vmul.f32 %v8647, %v1544
  %v8881 = vmul.f32 %v8652, %v1545
  %v8882 = vmul.f32 %v8657, %v1546
  %v8883 = vmul.f32 %v8662, %v1547
  %v8884 = vmul.f32 %v8667, %v1548
  %v8885 = vmul.f32 %v8672, %v1549
  %v8886 = vmul.f32 %v8677, %v1550
  %v8887 = vmul.f32 %v8682, %v1551
  %v8888 = vmul.f32 %v8687, %v1552
  %v8889 = vmul.f32 %v8692, %v1553
  %v8890 = vmul.f32 %v8697, %v1554
  %v8891 = vsel %vm1668, %v8699, 0.0
  %v8892 = vsel %vm1668, %v8700, 0.0
  %v8893 = vadd.f32 %v8891, %v8892
  %v8894 = vrot.slane %v8893, 4
  %v8895 = vadd.f32 %v8893, %v8894
  %v8896 = vrot.slane %v8895, 2
  %v8897 = vadd.f32 %v8895, %v8896
  %v8898 = vrot.slane %v8897, 1
  %v8899 = vadd.f32 %v8897, %v8898
  %v8900 = vsel %vm1668, %v8701, 0.0
  %v8901 = vsel %vm1668, %v8702, 0.0
  %v8902 = vadd.f32 %v8900, %v8901
  %v8903 = vrot.slane %v8902, 4
  %v8904 = vadd.f32 %v8902, %v8903
  %v8905 = vrot.slane %v8904, 2
  %v8906 = vadd.f32 %v8904, %v8905
  %v8907 = vrot.slane %v8906, 1
  %v8908 = vadd.f32 %v8906, %v8907
  %v8909 = vsel %vm1668, %v8703, 0.0
  %v8910 = vsel %vm1668, %v8704, 0.0
  %v8911 = vadd.f32 %v8909, %v8910
  %v8912 = vrot.slane %v8911, 4
  %v8913 = vadd.f32 %v8911, %v8912
  %v8914 = vrot.slane %v8913, 2
  %v8915 = vadd.f32 %v8913, %v8914
  %v8916 = vrot.slane %v8915, 1
  %v8917 = vadd.f32 %v8915, %v8916
  %v8918 = vsel %vm1668, %v8705, 0.0
  %v8919 = vsel %vm1668, %v8706, 0.0
  %v8920 = vadd.f32 %v8918, %v8919
  %v8921 = vrot.slane %v8920, 4
  %v8922 = vadd.f32 %v8920, %v8921
  %v8923 = vrot.slane %v8922, 2
  %v8924 = vadd.f32 %v8922, %v8923
  %v8925 = vrot.slane %v8924, 1
  %v8926 = vadd.f32 %v8924, %v8925
  %v8927 = vsel %vm1668, %v8707, 0.0
  %v8928 = vsel %vm1668, %v8708, 0.0
  %v8929 = vadd.f32 %v8927, %v8928
  %v8930 = vrot.slane %v8929, 4
  %v8931 = vadd.f32 %v8929, %v8930
  %v8932 = vrot.slane %v8931, 2
  %v8933 = vadd.f32 %v8931, %v8932
  %v8934 = vrot.slane %v8933, 1
  %v8935 = vadd.f32 %v8933, %v8934
  %v8936 = vsel %vm1668, %v8709, 0.0
  %v8937 = vsel %vm1668, %v8710, 0.0
  %v8938 = vadd.f32 %v8936, %v8937
  %v8939 = vrot.slane %v8938, 4
  %v8940 = vadd.f32 %v8938, %v8939
  %v8941 = vrot.slane %v8940, 2
  %v8942 = vadd.f32 %v8940, %v8941
  %v8943 = vrot.slane %v8942, 1
  %v8944 = vadd.f32 %v8942, %v8943
  %v8945 = vsel %vm1668, %v8711, 0.0
  %v8946 = vsel %vm1668, %v8712, 0.0
  %v8947 = vadd.f32 %v8945, %v8946
  %v8948 = vrot.slane %v8947, 4
  %v8949 = vadd.f32 %v8947, %v8948
  %v8950 = vrot.slane %v8949, 2
  %v8951 = vadd.f32 %v8949, %v8950
  %v8952 = vrot.slane %v8951, 1
  %v8953 = vadd.f32 %v8951, %v8952
  %v8954 = vsel %vm1668, %v8713, 0.0
  %v8955 = vsel %vm1668, %v8714, 0.0
  %v8956 = vadd.f32 %v8954, %v8955
  %v8957 = vrot.slane %v8956, 4
  %v8958 = vadd.f32 %v8956, %v8957
  %v8959 = vrot.slane %v8958, 2
  %v8960 = vadd.f32 %v8958, %v8959
  %v8961 = vrot.slane %v8960, 1
  %v8962 = vadd.f32 %v8960, %v8961
  %v8963 = vsel %vm1668, %v8715, 0.0
  %v8964 = vsel %vm1668, %v8716, 0.0
  %v8965 = vadd.f32 %v8963, %v8964
  %v8966 = vrot.slane %v8965, 4
  %v8967 = vadd.f32 %v8965, %v8966
  %v8968 = vrot.slane %v8967, 2
  %v8969 = vadd.f32 %v8967, %v8968
  %v8970 = vrot.slane %v8969, 1
  %v8971 = vadd.f32 %v8969, %v8970
  %v8972 = vsel %vm1668, %v8717, 0.0
  %v8973 = vsel %vm1668, %v8718, 0.0
  %v8974 = vadd.f32 %v8972, %v8973
  %v8975 = vrot.slane %v8974, 4
  %v8976 = vadd.f32 %v8974, %v8975
  %v8977 = vrot.slane %v8976, 2
  %v8978 = vadd.f32 %v8976, %v8977
  %v8979 = vrot.slane %v8978, 1
  %v8980 = vadd.f32 %v8978, %v8979
  %v8981 = vsel %vm1668, %v8719, 0.0
  %v8982 = vsel %vm1668, %v8720, 0.0
  %v8983 = vadd.f32 %v8981, %v8982
  %v8984 = vrot.slane %v8983, 4
  %v8985 = vadd.f32 %v8983, %v8984
  %v8986 = vrot.slane %v8985, 2
  %v8987 = vadd.f32 %v8985, %v8986
  %v8988 = vrot.slane %v8987, 1
  %v8989 = vadd.f32 %v8987, %v8988
  %v8990 = vsel %vm1668, %v8721, 0.0
  %v8991 = vsel %vm1668, %v8722, 0.0
  %v8992 = vadd.f32 %v8990, %v8991
  %v8993 = vrot.slane %v8992, 4
  %v8994 = vadd.f32 %v8992, %v8993
  %v8995 = vrot.slane %v8994, 2
  %v8996 = vadd.f32 %v8994, %v8995
  %v8997 = vrot.slane %v8996, 1
  %v8998 = vadd.f32 %v8996, %v8997
  %v8999 = vsel %vm1668, %v8723, 0.0
  %v9000 = vsel %vm1668, %v8724, 0.0
  %v9001 = vadd.f32 %v8999, %v9000
  %v9002 = vrot.slane %v9001, 4
  %v9003 = vadd.f32 %v9001, %v9002
  %v9004 = vrot.slane %v9003, 2
  %v9005 = vadd.f32 %v9003, %v9004
  %v9006 = vrot.slane %v9005, 1
  %v9007 = vadd.f32 %v9005, %v9006
  %v9008 = vsel %vm1668, %v8725, 0.0
  %v9009 = vsel %vm1668, %v8726, 0.0
  %v9010 = vadd.f32 %v9008, %v9009
  %v9011 = vrot.slane %v9010, 4
  %v9012 = vadd.f32 %v9010, %v9011
  %v9013 = vrot.slane %v9012, 2
  %v9014 = vadd.f32 %v9012, %v9013
  %v9015 = vrot.slane %v9014, 1
  %v9016 = vadd.f32 %v9014, %v9015
  %v9017 = vsel %vm1668, %v8727, 0.0
  %v9018 = vsel %vm1668, %v8728, 0.0
  %v9019 = vadd.f32 %v9017, %v9018
  %v9020 = vrot.slane %v9019, 4
  %v9021 = vadd.f32 %v9019, %v9020
  %v9022 = vrot.slane %v9021, 2
  %v9023 = vadd.f32 %v9021, %v9022
  %v9024 = vrot.slane %v9023, 1
  %v9025 = vadd.f32 %v9023, %v9024
  %v9026 = vsel %vm1668, %v8729, 0.0
  %v9027 = vsel %vm1668, %v8730, 0.0
  %v9028 = vadd.f32 %v9026, %v9027
  %v9029 = vrot.slane %v9028, 4
  %v9030 = vadd.f32 %v9028, %v9029
  %v9031 = vrot.slane %v9030, 2
  %v9032 = vadd.f32 %v9030, %v9031
  %v9033 = vrot.slane %v9032, 1
  %v9034 = vadd.f32 %v9032, %v9033
  %v9035 = vsel %vm1668, %v8731, 0.0
  %v9036 = vsel %vm1668, %v8732, 0.0
  %v9037 = vadd.f32 %v9035, %v9036
  %v9038 = vrot.slane %v9037, 4
  %v9039 = vadd.f32 %v9037, %v9038
  %v9040 = vrot.slane %v9039, 2
  %v9041 = vadd.f32 %v9039, %v9040
  %v9042 = vrot.slane %v9041, 1
  %v9043 = vadd.f32 %v9041, %v9042
  %v9044 = vsel %vm1668, %v8733, 0.0
  %v9045 = vsel %vm1668, %v8734, 0.0
  %v9046 = vadd.f32 %v9044, %v9045
  %v9047 = vrot.slane %v9046, 4
  %v9048 = vadd.f32 %v9046, %v9047
  %v9049 = vrot.slane %v9048, 2
  %v9050 = vadd.f32 %v9048, %v9049
  %v9051 = vrot.slane %v9050, 1
  %v9052 = vadd.f32 %v9050, %v9051
  %v9053 = vsel %vm1668, %v8735, 0.0
  %v9054 = vsel %vm1668, %v8736, 0.0
  %v9055 = vadd.f32 %v9053, %v9054
  %v9056 = vrot.slane %v9055, 4
  %v9057 = vadd.f32 %v9055, %v9056
  %v9058 = vrot.slane %v9057, 2
  %v9059 = vadd.f32 %v9057, %v9058
  %v9060 = vrot.slane %v9059, 1
  %v9061 = vadd.f32 %v9059, %v9060
  %v9062 = vsel %vm1668, %v8737, 0.0
  %v9063 = vsel %vm1668, %v8738, 0.0
  %v9064 = vadd.f32 %v9062, %v9063
  %v9065 = vrot.slane %v9064, 4
  %v9066 = vadd.f32 %v9064, %v9065
  %v9067 = vrot.slane %v9066, 2
  %v9068 = vadd.f32 %v9066, %v9067
  %v9069 = vrot.slane %v9068, 1
  %v9070 = vadd.f32 %v9068, %v9069
  %v9071 = vsel %vm1668, %v8739, 0.0
  %v9072 = vsel %vm1668, %v8740, 0.0
  %v9073 = vadd.f32 %v9071, %v9072
  %v9074 = vrot.slane %v9073, 4
  %v9075 = vadd.f32 %v9073, %v9074
  %v9076 = vrot.slane %v9075, 2
  %v9077 = vadd.f32 %v9075, %v9076
  %v9078 = vrot.slane %v9077, 1
  %v9079 = vadd.f32 %v9077, %v9078
  %v9080 = vsel %vm1668, %v8741, 0.0
  %v9081 = vsel %vm1668, %v8742, 0.0
  %v9082 = vadd.f32 %v9080, %v9081
  %v9083 = vrot.slane %v9082, 4
  %v9084 = vadd.f32 %v9082, %v9083
  %v9085 = vrot.slane %v9084, 2
  %v9086 = vadd.f32 %v9084, %v9085
  %v9087 = vrot.slane %v9086, 1
  %v9088 = vadd.f32 %v9086, %v9087
  %v9089 = vsel %vm1668, %v8743, 0.0
  %v9090 = vsel %vm1668, %v8744, 0.0
  %v9091 = vadd.f32 %v9089, %v9090
  %v9092 = vrot.slane %v9091, 4
  %v9093 = vadd.f32 %v9091, %v9092
  %v9094 = vrot.slane %v9093, 2
  %v9095 = vadd.f32 %v9093, %v9094
  %v9096 = vrot.slane %v9095, 1
  %v9097 = vadd.f32 %v9095, %v9096
  %v9098 = vsel %vm1668, %v8745, 0.0
  %v9099 = vsel %vm1668, %v8746, 0.0
  %v9100 = vadd.f32 %v9098, %v9099
  %v9101 = vrot.slane %v9100, 4
  %v9102 = vadd.f32 %v9100, %v9101
  %v9103 = vrot.slane %v9102, 2
  %v9104 = vadd.f32 %v9102, %v9103
  %v9105 = vrot.slane %v9104, 1
  %v9106 = vadd.f32 %v9104, %v9105
  %v9107 = vsel %vm1668, %v8747, 0.0
  %v9108 = vsel %vm1668, %v8748, 0.0
  %v9109 = vadd.f32 %v9107, %v9108
  %v9110 = vrot.slane %v9109, 4
  %v9111 = vadd.f32 %v9109, %v9110
  %v9112 = vrot.slane %v9111, 2
  %v9113 = vadd.f32 %v9111, %v9112
  %v9114 = vrot.slane %v9113, 1
  %v9115 = vadd.f32 %v9113, %v9114
  %v9116 = vsel %vm1668, %v8749, 0.0
  %v9117 = vsel %vm1668, %v8750, 0.0
  %v9118 = vadd.f32 %v9116, %v9117
  %v9119 = vrot.slane %v9118, 4
  %v9120 = vadd.f32 %v9118, %v9119
  %v9121 = vrot.slane %v9120, 2
  %v9122 = vadd.f32 %v9120, %v9121
  %v9123 = vrot.slane %v9122, 1
  %v9124 = vadd.f32 %v9122, %v9123
  %v9125 = vsel %vm1668, %v8751, 0.0
  %v9126 = vsel %vm1668, %v8752, 0.0
  %v9127 = vadd.f32 %v9125, %v9126
  %v9128 = vrot.slane %v9127, 4
  %v9129 = vadd.f32 %v9127, %v9128
  %v9130 = vrot.slane %v9129, 2
  %v9131 = vadd.f32 %v9129, %v9130
  %v9132 = vrot.slane %v9131, 1
  %v9133 = vadd.f32 %v9131, %v9132
  %v9134 = vsel %vm1668, %v8753, 0.0
  %v9135 = vsel %vm1668, %v8754, 0.0
  %v9136 = vadd.f32 %v9134, %v9135
  %v9137 = vrot.slane %v9136, 4
  %v9138 = vadd.f32 %v9136, %v9137
  %v9139 = vrot.slane %v9138, 2
  %v9140 = vadd.f32 %v9138, %v9139
  %v9141 = vrot.slane %v9140, 1
  %v9142 = vadd.f32 %v9140, %v9141
  %v9143 = vsel %vm1668, %v8755, 0.0
  %v9144 = vsel %vm1668, %v8756, 0.0
  %v9145 = vadd.f32 %v9143, %v9144
  %v9146 = vrot.slane %v9145, 4
  %v9147 = vadd.f32 %v9145, %v9146
  %v9148 = vrot.slane %v9147, 2
  %v9149 = vadd.f32 %v9147, %v9148
  %v9150 = vrot.slane %v9149, 1
  %v9151 = vadd.f32 %v9149, %v9150
  %v9152 = vsel %vm1668, %v8757, 0.0
  %v9153 = vsel %vm1668, %v8758, 0.0
  %v9154 = vadd.f32 %v9152, %v9153
  %v9155 = vrot.slane %v9154, 4
  %v9156 = vadd.f32 %v9154, %v9155
  %v9157 = vrot.slane %v9156, 2
  %v9158 = vadd.f32 %v9156, %v9157
  %v9159 = vrot.slane %v9158, 1
  %v9160 = vadd.f32 %v9158, %v9159
  %v9161 = vsel %vm1668, %v8759, 0.0
  %v9162 = vsel %vm1668, %v8760, 0.0
  %v9163 = vadd.f32 %v9161, %v9162
  %v9164 = vrot.slane %v9163, 4
  %v9165 = vadd.f32 %v9163, %v9164
  %v9166 = vrot.slane %v9165, 2
  %v9167 = vadd.f32 %v9165, %v9166
  %v9168 = vrot.slane %v9167, 1
  %v9169 = vadd.f32 %v9167, %v9168
  %v9170 = vsel %vm1668, %v8761, 0.0
  %v9171 = vsel %vm1668, %v8762, 0.0
  %v9172 = vadd.f32 %v9170, %v9171
  %v9173 = vrot.slane %v9172, 4
  %v9174 = vadd.f32 %v9172, %v9173
  %v9175 = vrot.slane %v9174, 2
  %v9176 = vadd.f32 %v9174, %v9175
  %v9177 = vrot.slane %v9176, 1
  %v9178 = vadd.f32 %v9176, %v9177
  %v9179 = vsel %vm1668, %v8763, 0.0
  %v9180 = vsel %vm1668, %v8764, 0.0
  %v9181 = vadd.f32 %v9179, %v9180
  %v9182 = vrot.slane %v9181, 4
  %v9183 = vadd.f32 %v9181, %v9182
  %v9184 = vrot.slane %v9183, 2
  %v9185 = vadd.f32 %v9183, %v9184
  %v9186 = vrot.slane %v9185, 1
  %v9187 = vadd.f32 %v9185, %v9186
  %v9188 = vsel %vm1668, %v8765, 0.0
  %v9189 = vsel %vm1668, %v8766, 0.0
  %v9190 = vadd.f32 %v9188, %v9189
  %v9191 = vrot.slane %v9190, 4
  %v9192 = vadd.f32 %v9190, %v9191
  %v9193 = vrot.slane %v9192, 2
  %v9194 = vadd.f32 %v9192, %v9193
  %v9195 = vrot.slane %v9194, 1
  %v9196 = vadd.f32 %v9194, %v9195
  %v9197 = vsel %vm1668, %v8767, 0.0
  %v9198 = vsel %vm1668, %v8768, 0.0
  %v9199 = vadd.f32 %v9197, %v9198
  %v9200 = vrot.slane %v9199, 4
  %v9201 = vadd.f32 %v9199, %v9200
  %v9202 = vrot.slane %v9201, 2
  %v9203 = vadd.f32 %v9201, %v9202
  %v9204 = vrot.slane %v9203, 1
  %v9205 = vadd.f32 %v9203, %v9204
  %v9206 = vsel %vm1668, %v8769, 0.0
  %v9207 = vsel %vm1668, %v8770, 0.0
  %v9208 = vadd.f32 %v9206, %v9207
  %v9209 = vrot.slane %v9208, 4
  %v9210 = vadd.f32 %v9208, %v9209
  %v9211 = vrot.slane %v9210, 2
  %v9212 = vadd.f32 %v9210, %v9211
  %v9213 = vrot.slane %v9212, 1
  %v9214 = vadd.f32 %v9212, %v9213
  %v9215 = vsel %vm1668, %v8771, 0.0
  %v9216 = vsel %vm1668, %v8772, 0.0
  %v9217 = vadd.f32 %v9215, %v9216
  %v9218 = vrot.slane %v9217, 4
  %v9219 = vadd.f32 %v9217, %v9218
  %v9220 = vrot.slane %v9219, 2
  %v9221 = vadd.f32 %v9219, %v9220
  %v9222 = vrot.slane %v9221, 1
  %v9223 = vadd.f32 %v9221, %v9222
  %v9224 = vsel %vm1668, %v8773, 0.0
  %v9225 = vsel %vm1668, %v8774, 0.0
  %v9226 = vadd.f32 %v9224, %v9225
  %v9227 = vrot.slane %v9226, 4
  %v9228 = vadd.f32 %v9226, %v9227
  %v9229 = vrot.slane %v9228, 2
  %v9230 = vadd.f32 %v9228, %v9229
  %v9231 = vrot.slane %v9230, 1
  %v9232 = vadd.f32 %v9230, %v9231
  %v9233 = vsel %vm1668, %v8775, 0.0
  %v9234 = vsel %vm1668, %v8776, 0.0
  %v9235 = vadd.f32 %v9233, %v9234
  %v9236 = vrot.slane %v9235, 4
  %v9237 = vadd.f32 %v9235, %v9236
  %v9238 = vrot.slane %v9237, 2
  %v9239 = vadd.f32 %v9237, %v9238
  %v9240 = vrot.slane %v9239, 1
  %v9241 = vadd.f32 %v9239, %v9240
  %v9242 = vsel %vm1668, %v8777, 0.0
  %v9243 = vsel %vm1668, %v8778, 0.0
  %v9244 = vadd.f32 %v9242, %v9243
  %v9245 = vrot.slane %v9244, 4
  %v9246 = vadd.f32 %v9244, %v9245
  %v9247 = vrot.slane %v9246, 2
  %v9248 = vadd.f32 %v9246, %v9247
  %v9249 = vrot.slane %v9248, 1
  %v9250 = vadd.f32 %v9248, %v9249
  %v9251 = vsel %vm1668, %v8779, 0.0
  %v9252 = vsel %vm1668, %v8780, 0.0
  %v9253 = vadd.f32 %v9251, %v9252
  %v9254 = vrot.slane %v9253, 4
  %v9255 = vadd.f32 %v9253, %v9254
  %v9256 = vrot.slane %v9255, 2
  %v9257 = vadd.f32 %v9255, %v9256
  %v9258 = vrot.slane %v9257, 1
  %v9259 = vadd.f32 %v9257, %v9258
  %v9260 = vsel %vm1668, %v8781, 0.0
  %v9261 = vsel %vm1668, %v8782, 0.0
  %v9262 = vadd.f32 %v9260, %v9261
  %v9263 = vrot.slane %v9262, 4
  %v9264 = vadd.f32 %v9262, %v9263
  %v9265 = vrot.slane %v9264, 2
  %v9266 = vadd.f32 %v9264, %v9265
  %v9267 = vrot.slane %v9266, 1
  %v9268 = vadd.f32 %v9266, %v9267
  %v9269 = vsel %vm1668, %v8783, 0.0
  %v9270 = vsel %vm1668, %v8784, 0.0
  %v9271 = vadd.f32 %v9269, %v9270
  %v9272 = vrot.slane %v9271, 4
  %v9273 = vadd.f32 %v9271, %v9272
  %v9274 = vrot.slane %v9273, 2
  %v9275 = vadd.f32 %v9273, %v9274
  %v9276 = vrot.slane %v9275, 1
  %v9277 = vadd.f32 %v9275, %v9276
  %v9278 = vsel %vm1668, %v8785, 0.0
  %v9279 = vsel %vm1668, %v8786, 0.0
  %v9280 = vadd.f32 %v9278, %v9279
  %v9281 = vrot.slane %v9280, 4
  %v9282 = vadd.f32 %v9280, %v9281
  %v9283 = vrot.slane %v9282, 2
  %v9284 = vadd.f32 %v9282, %v9283
  %v9285 = vrot.slane %v9284, 1
  %v9286 = vadd.f32 %v9284, %v9285
  %v9287 = vsel %vm1668, %v8787, 0.0
  %v9288 = vsel %vm1668, %v8788, 0.0
  %v9289 = vadd.f32 %v9287, %v9288
  %v9290 = vrot.slane %v9289, 4
  %v9291 = vadd.f32 %v9289, %v9290
  %v9292 = vrot.slane %v9291, 2
  %v9293 = vadd.f32 %v9291, %v9292
  %v9294 = vrot.slane %v9293, 1
  %v9295 = vadd.f32 %v9293, %v9294
  %v9296 = vsel %vm1668, %v8789, 0.0
  %v9297 = vsel %vm1668, %v8790, 0.0
  %v9298 = vadd.f32 %v9296, %v9297
  %v9299 = vrot.slane %v9298, 4
  %v9300 = vadd.f32 %v9298, %v9299
  %v9301 = vrot.slane %v9300, 2
  %v9302 = vadd.f32 %v9300, %v9301
  %v9303 = vrot.slane %v9302, 1
  %v9304 = vadd.f32 %v9302, %v9303
  %v9305 = vsel %vm1668, %v8791, 0.0
  %v9306 = vsel %vm1668, %v8792, 0.0
  %v9307 = vadd.f32 %v9305, %v9306
  %v9308 = vrot.slane %v9307, 4
  %v9309 = vadd.f32 %v9307, %v9308
  %v9310 = vrot.slane %v9309, 2
  %v9311 = vadd.f32 %v9309, %v9310
  %v9312 = vrot.slane %v9311, 1
  %v9313 = vadd.f32 %v9311, %v9312
  %v9314 = vsel %vm1668, %v8793, 0.0
  %v9315 = vsel %vm1668, %v8794, 0.0
  %v9316 = vadd.f32 %v9314, %v9315
  %v9317 = vrot.slane %v9316, 4
  %v9318 = vadd.f32 %v9316, %v9317
  %v9319 = vrot.slane %v9318, 2
  %v9320 = vadd.f32 %v9318, %v9319
  %v9321 = vrot.slane %v9320, 1
  %v9322 = vadd.f32 %v9320, %v9321
  %v9323 = vsel %vm1668, %v8795, 0.0
  %v9324 = vsel %vm1668, %v8796, 0.0
  %v9325 = vadd.f32 %v9323, %v9324
  %v9326 = vrot.slane %v9325, 4
  %v9327 = vadd.f32 %v9325, %v9326
  %v9328 = vrot.slane %v9327, 2
  %v9329 = vadd.f32 %v9327, %v9328
  %v9330 = vrot.slane %v9329, 1
  %v9331 = vadd.f32 %v9329, %v9330
  %v9332 = vsel %vm1668, %v8797, 0.0
  %v9333 = vsel %vm1668, %v8798, 0.0
  %v9334 = vadd.f32 %v9332, %v9333
  %v9335 = vrot.slane %v9334, 4
  %v9336 = vadd.f32 %v9334, %v9335
  %v9337 = vrot.slane %v9336, 2
  %v9338 = vadd.f32 %v9336, %v9337
  %v9339 = vrot.slane %v9338, 1
  %v9340 = vadd.f32 %v9338, %v9339
  %v9341 = vsel %vm1668, %v8799, 0.0
  %v9342 = vsel %vm1668, %v8800, 0.0
  %v9343 = vadd.f32 %v9341, %v9342
  %v9344 = vrot.slane %v9343, 4
  %v9345 = vadd.f32 %v9343, %v9344
  %v9346 = vrot.slane %v9345, 2
  %v9347 = vadd.f32 %v9345, %v9346
  %v9348 = vrot.slane %v9347, 1
  %v9349 = vadd.f32 %v9347, %v9348
  %v9350 = vsel %vm1668, %v8801, 0.0
  %v9351 = vsel %vm1668, %v8802, 0.0
  %v9352 = vadd.f32 %v9350, %v9351
  %v9353 = vrot.slane %v9352, 4
  %v9354 = vadd.f32 %v9352, %v9353
  %v9355 = vrot.slane %v9354, 2
  %v9356 = vadd.f32 %v9354, %v9355
  %v9357 = vrot.slane %v9356, 1
  %v9358 = vadd.f32 %v9356, %v9357
  %v9359 = vsel %vm1668, %v8803, 0.0
  %v9360 = vsel %vm1668, %v8804, 0.0
  %v9361 = vadd.f32 %v9359, %v9360
  %v9362 = vrot.slane %v9361, 4
  %v9363 = vadd.f32 %v9361, %v9362
  %v9364 = vrot.slane %v9363, 2
  %v9365 = vadd.f32 %v9363, %v9364
  %v9366 = vrot.slane %v9365, 1
  %v9367 = vadd.f32 %v9365, %v9366
  %v9368 = vsel %vm1668, %v8805, 0.0
  %v9369 = vsel %vm1668, %v8806, 0.0
  %v9370 = vadd.f32 %v9368, %v9369
  %v9371 = vrot.slane %v9370, 4
  %v9372 = vadd.f32 %v9370, %v9371
  %v9373 = vrot.slane %v9372, 2
  %v9374 = vadd.f32 %v9372, %v9373
  %v9375 = vrot.slane %v9374, 1
  %v9376 = vadd.f32 %v9374, %v9375
  %v9377 = vsel %vm1668, %v8807, 0.0
  %v9378 = vsel %vm1668, %v8808, 0.0
  %v9379 = vadd.f32 %v9377, %v9378
  %v9380 = vrot.slane %v9379, 4
  %v9381 = vadd.f32 %v9379, %v9380
  %v9382 = vrot.slane %v9381, 2
  %v9383 = vadd.f32 %v9381, %v9382
  %v9384 = vrot.slane %v9383, 1
  %v9385 = vadd.f32 %v9383, %v9384
  %v9386 = vsel %vm1668, %v8809, 0.0
  %v9387 = vsel %vm1668, %v8810, 0.0
  %v9388 = vadd.f32 %v9386, %v9387
  %v9389 = vrot.slane %v9388, 4
  %v9390 = vadd.f32 %v9388, %v9389
  %v9391 = vrot.slane %v9390, 2
  %v9392 = vadd.f32 %v9390, %v9391
  %v9393 = vrot.slane %v9392, 1
  %v9394 = vadd.f32 %v9392, %v9393
  %v9395 = vsel %vm1668, %v8811, 0.0
  %v9396 = vsel %vm1668, %v8812, 0.0
  %v9397 = vadd.f32 %v9395, %v9396
  %v9398 = vrot.slane %v9397, 4
  %v9399 = vadd.f32 %v9397, %v9398
  %v9400 = vrot.slane %v9399, 2
  %v9401 = vadd.f32 %v9399, %v9400
  %v9402 = vrot.slane %v9401, 1
  %v9403 = vadd.f32 %v9401, %v9402
  %v9404 = vsel %vm1668, %v8813, 0.0
  %v9405 = vsel %vm1668, %v8814, 0.0
  %v9406 = vadd.f32 %v9404, %v9405
  %v9407 = vrot.slane %v9406, 4
  %v9408 = vadd.f32 %v9406, %v9407
  %v9409 = vrot.slane %v9408, 2
  %v9410 = vadd.f32 %v9408, %v9409
  %v9411 = vrot.slane %v9410, 1
  %v9412 = vadd.f32 %v9410, %v9411
  %v9413 = vsel %vm1668, %v8815, 0.0
  %v9414 = vsel %vm1668, %v8816, 0.0
  %v9415 = vadd.f32 %v9413, %v9414
  %v9416 = vrot.slane %v9415, 4
  %v9417 = vadd.f32 %v9415, %v9416
  %v9418 = vrot.slane %v9417, 2
  %v9419 = vadd.f32 %v9417, %v9418
  %v9420 = vrot.slane %v9419, 1
  %v9421 = vadd.f32 %v9419, %v9420
  %v9422 = vsel %vm1668, %v8817, 0.0
  %v9423 = vsel %vm1668, %v8818, 0.0
  %v9424 = vadd.f32 %v9422, %v9423
  %v9425 = vrot.slane %v9424, 4
  %v9426 = vadd.f32 %v9424, %v9425
  %v9427 = vrot.slane %v9426, 2
  %v9428 = vadd.f32 %v9426, %v9427
  %v9429 = vrot.slane %v9428, 1
  %v9430 = vadd.f32 %v9428, %v9429
  %v9431 = vsel %vm1668, %v8819, 0.0
  %v9432 = vsel %vm1668, %v8820, 0.0
  %v9433 = vadd.f32 %v9431, %v9432
  %v9434 = vrot.slane %v9433, 4
  %v9435 = vadd.f32 %v9433, %v9434
  %v9436 = vrot.slane %v9435, 2
  %v9437 = vadd.f32 %v9435, %v9436
  %v9438 = vrot.slane %v9437, 1
  %v9439 = vadd.f32 %v9437, %v9438
  %v9440 = vsel %vm1668, %v8821, 0.0
  %v9441 = vsel %vm1668, %v8822, 0.0
  %v9442 = vadd.f32 %v9440, %v9441
  %v9443 = vrot.slane %v9442, 4
  %v9444 = vadd.f32 %v9442, %v9443
  %v9445 = vrot.slane %v9444, 2
  %v9446 = vadd.f32 %v9444, %v9445
  %v9447 = vrot.slane %v9446, 1
  %v9448 = vadd.f32 %v9446, %v9447
  %v9449 = vsel %vm1668, %v8823, 0.0
  %v9450 = vsel %vm1668, %v8824, 0.0
  %v9451 = vadd.f32 %v9449, %v9450
  %v9452 = vrot.slane %v9451, 4
  %v9453 = vadd.f32 %v9451, %v9452
  %v9454 = vrot.slane %v9453, 2
  %v9455 = vadd.f32 %v9453, %v9454
  %v9456 = vrot.slane %v9455, 1
  %v9457 = vadd.f32 %v9455, %v9456
  %v9458 = vsel %vm1668, %v8825, 0.0
  %v9459 = vsel %vm1668, %v8826, 0.0
  %v9460 = vadd.f32 %v9458, %v9459
  %v9461 = vrot.slane %v9460, 4
  %v9462 = vadd.f32 %v9460, %v9461
  %v9463 = vrot.slane %v9462, 2
  %v9464 = vadd.f32 %v9462, %v9463
  %v9465 = vrot.slane %v9464, 1
  %v9466 = vadd.f32 %v9464, %v9465
  %v9467 = vsel %vm1668, %v8827, 0.0
  %v9468 = vsel %vm1668, %v8828, 0.0
  %v9469 = vadd.f32 %v9467, %v9468
  %v9470 = vrot.slane %v9469, 4
  %v9471 = vadd.f32 %v9469, %v9470
  %v9472 = vrot.slane %v9471, 2
  %v9473 = vadd.f32 %v9471, %v9472
  %v9474 = vrot.slane %v9473, 1
  %v9475 = vadd.f32 %v9473, %v9474
  %v9476 = vsel %vm1668, %v8829, 0.0
  %v9477 = vsel %vm1668, %v8830, 0.0
  %v9478 = vadd.f32 %v9476, %v9477
  %v9479 = vrot.slane %v9478, 4
  %v9480 = vadd.f32 %v9478, %v9479
  %v9481 = vrot.slane %v9480, 2
  %v9482 = vadd.f32 %v9480, %v9481
  %v9483 = vrot.slane %v9482, 1
  %v9484 = vadd.f32 %v9482, %v9483
  %v9485 = vsel %vm1668, %v8831, 0.0
  %v9486 = vsel %vm1668, %v8832, 0.0
  %v9487 = vadd.f32 %v9485, %v9486
  %v9488 = vrot.slane %v9487, 4
  %v9489 = vadd.f32 %v9487, %v9488
  %v9490 = vrot.slane %v9489, 2
  %v9491 = vadd.f32 %v9489, %v9490
  %v9492 = vrot.slane %v9491, 1
  %v9493 = vadd.f32 %v9491, %v9492
  %v9494 = vsel %vm1668, %v8833, 0.0
  %v9495 = vsel %vm1668, %v8834, 0.0
  %v9496 = vadd.f32 %v9494, %v9495
  %v9497 = vrot.slane %v9496, 4
  %v9498 = vadd.f32 %v9496, %v9497
  %v9499 = vrot.slane %v9498, 2
  %v9500 = vadd.f32 %v9498, %v9499
  %v9501 = vrot.slane %v9500, 1
  %v9502 = vadd.f32 %v9500, %v9501
  %v9503 = vsel %vm1668, %v8835, 0.0
  %v9504 = vsel %vm1668, %v8836, 0.0
  %v9505 = vadd.f32 %v9503, %v9504
  %v9506 = vrot.slane %v9505, 4
  %v9507 = vadd.f32 %v9505, %v9506
  %v9508 = vrot.slane %v9507, 2
  %v9509 = vadd.f32 %v9507, %v9508
  %v9510 = vrot.slane %v9509, 1
  %v9511 = vadd.f32 %v9509, %v9510
  %v9512 = vsel %vm1668, %v8837, 0.0
  %v9513 = vsel %vm1668, %v8838, 0.0
  %v9514 = vadd.f32 %v9512, %v9513
  %v9515 = vrot.slane %v9514, 4
  %v9516 = vadd.f32 %v9514, %v9515
  %v9517 = vrot.slane %v9516, 2
  %v9518 = vadd.f32 %v9516, %v9517
  %v9519 = vrot.slane %v9518, 1
  %v9520 = vadd.f32 %v9518, %v9519
  %v9521 = vsel %vm1668, %v8839, 0.0
  %v9522 = vsel %vm1668, %v8840, 0.0
  %v9523 = vadd.f32 %v9521, %v9522
  %v9524 = vrot.slane %v9523, 4
  %v9525 = vadd.f32 %v9523, %v9524
  %v9526 = vrot.slane %v9525, 2
  %v9527 = vadd.f32 %v9525, %v9526
  %v9528 = vrot.slane %v9527, 1
  %v9529 = vadd.f32 %v9527, %v9528
  %v9530 = vsel %vm1668, %v8841, 0.0
  %v9531 = vsel %vm1668, %v8842, 0.0
  %v9532 = vadd.f32 %v9530, %v9531
  %v9533 = vrot.slane %v9532, 4
  %v9534 = vadd.f32 %v9532, %v9533
  %v9535 = vrot.slane %v9534, 2
  %v9536 = vadd.f32 %v9534, %v9535
  %v9537 = vrot.slane %v9536, 1
  %v9538 = vadd.f32 %v9536, %v9537
  %v9539 = vsel %vm1668, %v8843, 0.0
  %v9540 = vsel %vm1668, %v8844, 0.0
  %v9541 = vadd.f32 %v9539, %v9540
  %v9542 = vrot.slane %v9541, 4
  %v9543 = vadd.f32 %v9541, %v9542
  %v9544 = vrot.slane %v9543, 2
  %v9545 = vadd.f32 %v9543, %v9544
  %v9546 = vrot.slane %v9545, 1
  %v9547 = vadd.f32 %v9545, %v9546
  %v9548 = vsel %vm1668, %v8845, 0.0
  %v9549 = vsel %vm1668, %v8846, 0.0
  %v9550 = vadd.f32 %v9548, %v9549
  %v9551 = vrot.slane %v9550, 4
  %v9552 = vadd.f32 %v9550, %v9551
  %v9553 = vrot.slane %v9552, 2
  %v9554 = vadd.f32 %v9552, %v9553
  %v9555 = vrot.slane %v9554, 1
  %v9556 = vadd.f32 %v9554, %v9555
  %v9557 = vsel %vm1668, %v8847, 0.0
  %v9558 = vsel %vm1668, %v8848, 0.0
  %v9559 = vadd.f32 %v9557, %v9558
  %v9560 = vrot.slane %v9559, 4
  %v9561 = vadd.f32 %v9559, %v9560
  %v9562 = vrot.slane %v9561, 2
  %v9563 = vadd.f32 %v9561, %v9562
  %v9564 = vrot.slane %v9563, 1
  %v9565 = vadd.f32 %v9563, %v9564
  %v9566 = vsel %vm1668, %v8849, 0.0
  %v9567 = vsel %vm1668, %v8850, 0.0
  %v9568 = vadd.f32 %v9566, %v9567
  %v9569 = vrot.slane %v9568, 4
  %v9570 = vadd.f32 %v9568, %v9569
  %v9571 = vrot.slane %v9570, 2
  %v9572 = vadd.f32 %v9570, %v9571
  %v9573 = vrot.slane %v9572, 1
  %v9574 = vadd.f32 %v9572, %v9573
  %v9575 = vsel %vm1668, %v8851, 0.0
  %v9576 = vsel %vm1668, %v8852, 0.0
  %v9577 = vadd.f32 %v9575, %v9576
  %v9578 = vrot.slane %v9577, 4
  %v9579 = vadd.f32 %v9577, %v9578
  %v9580 = vrot.slane %v9579, 2
  %v9581 = vadd.f32 %v9579, %v9580
  %v9582 = vrot.slane %v9581, 1
  %v9583 = vadd.f32 %v9581, %v9582
  %v9584 = vsel %vm1668, %v8853, 0.0
  %v9585 = vsel %vm1668, %v8854, 0.0
  %v9586 = vadd.f32 %v9584, %v9585
  %v9587 = vrot.slane %v9586, 4
  %v9588 = vadd.f32 %v9586, %v9587
  %v9589 = vrot.slane %v9588, 2
  %v9590 = vadd.f32 %v9588, %v9589
  %v9591 = vrot.slane %v9590, 1
  %v9592 = vadd.f32 %v9590, %v9591
  %v9593 = vsel %vm1668, %v8855, 0.0
  %v9594 = vsel %vm1668, %v8856, 0.0
  %v9595 = vadd.f32 %v9593, %v9594
  %v9596 = vrot.slane %v9595, 4
  %v9597 = vadd.f32 %v9595, %v9596
  %v9598 = vrot.slane %v9597, 2
  %v9599 = vadd.f32 %v9597, %v9598
  %v9600 = vrot.slane %v9599, 1
  %v9601 = vadd.f32 %v9599, %v9600
  %v9602 = vsel %vm1668, %v8857, 0.0
  %v9603 = vsel %vm1668, %v8858, 0.0
  %v9604 = vadd.f32 %v9602, %v9603
  %v9605 = vrot.slane %v9604, 4
  %v9606 = vadd.f32 %v9604, %v9605
  %v9607 = vrot.slane %v9606, 2
  %v9608 = vadd.f32 %v9606, %v9607
  %v9609 = vrot.slane %v9608, 1
  %v9610 = vadd.f32 %v9608, %v9609
  %v9611 = vsel %vm1668, %v8859, 0.0
  %v9612 = vsel %vm1668, %v8860, 0.0
  %v9613 = vadd.f32 %v9611, %v9612
  %v9614 = vrot.slane %v9613, 4
  %v9615 = vadd.f32 %v9613, %v9614
  %v9616 = vrot.slane %v9615, 2
  %v9617 = vadd.f32 %v9615, %v9616
  %v9618 = vrot.slane %v9617, 1
  %v9619 = vadd.f32 %v9617, %v9618
  %v9620 = vsel %vm1668, %v8861, 0.0
  %v9621 = vsel %vm1668, %v8862, 0.0
  %v9622 = vadd.f32 %v9620, %v9621
  %v9623 = vrot.slane %v9622, 4
  %v9624 = vadd.f32 %v9622, %v9623
  %v9625 = vrot.slane %v9624, 2
  %v9626 = vadd.f32 %v9624, %v9625
  %v9627 = vrot.slane %v9626, 1
  %v9628 = vadd.f32 %v9626, %v9627
  %v9629 = vsel %vm1668, %v8863, 0.0
  %v9630 = vsel %vm1668, %v8864, 0.0
  %v9631 = vadd.f32 %v9629, %v9630
  %v9632 = vrot.slane %v9631, 4
  %v9633 = vadd.f32 %v9631, %v9632
  %v9634 = vrot.slane %v9633, 2
  %v9635 = vadd.f32 %v9633, %v9634
  %v9636 = vrot.slane %v9635, 1
  %v9637 = vadd.f32 %v9635, %v9636
  %v9638 = vsel %vm1668, %v8865, 0.0
  %v9639 = vsel %vm1668, %v8866, 0.0
  %v9640 = vadd.f32 %v9638, %v9639
  %v9641 = vrot.slane %v9640, 4
  %v9642 = vadd.f32 %v9640, %v9641
  %v9643 = vrot.slane %v9642, 2
  %v9644 = vadd.f32 %v9642, %v9643
  %v9645 = vrot.slane %v9644, 1
  %v9646 = vadd.f32 %v9644, %v9645
  %v9647 = vsel %vm1668, %v8867, 0.0
  %v9648 = vsel %vm1668, %v8868, 0.0
  %v9649 = vadd.f32 %v9647, %v9648
  %v9650 = vrot.slane %v9649, 4
  %v9651 = vadd.f32 %v9649, %v9650
  %v9652 = vrot.slane %v9651, 2
  %v9653 = vadd.f32 %v9651, %v9652
  %v9654 = vrot.slane %v9653, 1
  %v9655 = vadd.f32 %v9653, %v9654
  %v9656 = vsel %vm1668, %v8869, 0.0
  %v9657 = vsel %vm1668, %v8870, 0.0
  %v9658 = vadd.f32 %v9656, %v9657
  %v9659 = vrot.slane %v9658, 4
  %v9660 = vadd.f32 %v9658, %v9659
  %v9661 = vrot.slane %v9660, 2
  %v9662 = vadd.f32 %v9660, %v9661
  %v9663 = vrot.slane %v9662, 1
  %v9664 = vadd.f32 %v9662, %v9663
  %v9665 = vsel %vm1668, %v8871, 0.0
  %v9666 = vsel %vm1668, %v8872, 0.0
  %v9667 = vadd.f32 %v9665, %v9666
  %v9668 = vrot.slane %v9667, 4
  %v9669 = vadd.f32 %v9667, %v9668
  %v9670 = vrot.slane %v9669, 2
  %v9671 = vadd.f32 %v9669, %v9670
  %v9672 = vrot.slane %v9671, 1
  %v9673 = vadd.f32 %v9671, %v9672
  %v9674 = vsel %vm1668, %v8873, 0.0
  %v9675 = vsel %vm1668, %v8874, 0.0
  %v9676 = vadd.f32 %v9674, %v9675
  %v9677 = vrot.slane %v9676, 4
  %v9678 = vadd.f32 %v9676, %v9677
  %v9679 = vrot.slane %v9678, 2
  %v9680 = vadd.f32 %v9678, %v9679
  %v9681 = vrot.slane %v9680, 1
  %v9682 = vadd.f32 %v9680, %v9681
  %v9683 = vsel %vm1668, %v8875, 0.0
  %v9684 = vsel %vm1668, %v8876, 0.0
  %v9685 = vadd.f32 %v9683, %v9684
  %v9686 = vrot.slane %v9685, 4
  %v9687 = vadd.f32 %v9685, %v9686
  %v9688 = vrot.slane %v9687, 2
  %v9689 = vadd.f32 %v9687, %v9688
  %v9690 = vrot.slane %v9689, 1
  %v9691 = vadd.f32 %v9689, %v9690
  %v9692 = vsel %vm1668, %v8877, 0.0
  %v9693 = vsel %vm1668, %v8878, 0.0
  %v9694 = vadd.f32 %v9692, %v9693
  %v9695 = vrot.slane %v9694, 4
  %v9696 = vadd.f32 %v9694, %v9695
  %v9697 = vrot.slane %v9696, 2
  %v9698 = vadd.f32 %v9696, %v9697
  %v9699 = vrot.slane %v9698, 1
  %v9700 = vadd.f32 %v9698, %v9699
  %v9701 = vsel %vm1668, %v8879, 0.0
  %v9702 = vsel %vm1668, %v8880, 0.0
  %v9703 = vadd.f32 %v9701, %v9702
  %v9704 = vrot.slane %v9703, 4
  %v9705 = vadd.f32 %v9703, %v9704
  %v9706 = vrot.slane %v9705, 2
  %v9707 = vadd.f32 %v9705, %v9706
  %v9708 = vrot.slane %v9707, 1
  %v9709 = vadd.f32 %v9707, %v9708
  %v9710 = vsel %vm1668, %v8881, 0.0
  %v9711 = vsel %vm1668, %v8882, 0.0
  %v9712 = vadd.f32 %v9710, %v9711
  %v9713 = vrot.slane %v9712, 4
  %v9714 = vadd.f32 %v9712, %v9713
  %v9715 = vrot.slane %v9714, 2
  %v9716 = vadd.f32 %v9714, %v9715
  %v9717 = vrot.slane %v9716, 1
  %v9718 = vadd.f32 %v9716, %v9717
  %v9719 = vsel %vm1668, %v8883, 0.0
  %v9720 = vsel %vm1668, %v8884, 0.0
  %v9721 = vadd.f32 %v9719, %v9720
  %v9722 = vrot.slane %v9721, 4
  %v9723 = vadd.f32 %v9721, %v9722
  %v9724 = vrot.slane %v9723, 2
  %v9725 = vadd.f32 %v9723, %v9724
  %v9726 = vrot.slane %v9725, 1
  %v9727 = vadd.f32 %v9725, %v9726
  %v9728 = vsel %vm1668, %v8885, 0.0
  %v9729 = vsel %vm1668, %v8886, 0.0
  %v9730 = vadd.f32 %v9728, %v9729
  %v9731 = vrot.slane %v9730, 4
  %v9732 = vadd.f32 %v9730, %v9731
  %v9733 = vrot.slane %v9732, 2
  %v9734 = vadd.f32 %v9732, %v9733
  %v9735 = vrot.slane %v9734, 1
  %v9736 = vadd.f32 %v9734, %v9735
  %v9737 = vsel %vm1668, %v8887, 0.0
  %v9738 = vsel %vm1668, %v8888, 0.0
  %v9739 = vadd.f32 %v9737, %v9738
  %v9740 = vrot.slane %v9739, 4
  %v9741 = vadd.f32 %v9739, %v9740
  %v9742 = vrot.slane %v9741, 2
  %v9743 = vadd.f32 %v9741, %v9742
  %v9744 = vrot.slane %v9743, 1
  %v9745 = vadd.f32 %v9743, %v9744
  %v9746 = vsel %vm1668, %v8889, 0.0
  %v9747 = vsel %vm1668, %v8890, 0.0
  %v9748 = vadd.f32 %v9746, %v9747
  %v9749 = vrot.slane %v9748, 4
  %v9750 = vadd.f32 %v9748, %v9749
  %v9751 = vrot.slane %v9750, 2
  %v9752 = vadd.f32 %v9750, %v9751
  %v9753 = vrot.slane %v9752, 1
  %v9754 = vadd.f32 %v9752, %v9753
  %v9851 = vsel %vm3892, %v8908, %v8899
  %v9852 = vsel %vm3894, %v8917, %v9851
  %v9853 = vsel %vm3896, %v8926, %v9852
  %v9854 = vsel %vm3898, %v8935, %v9853
  %v9855 = vsel %vm3900, %v8944, %v9854
  %v9856 = vsel %vm3902, %v8953, %v9855
  %v9857 = vsel %vm3904, %v8962, %v9856
  %v9858 = vsel %vm3892, %v8980, %v8971
  %v9859 = vsel %vm3894, %v8989, %v9858
  %v9860 = vsel %vm3896, %v8998, %v9859
  %v9861 = vsel %vm3898, %v9007, %v9860
  %v9862 = vsel %vm3900, %v9016, %v9861
  %v9863 = vsel %vm3902, %v9025, %v9862
  %v9864 = vsel %vm3904, %v9034, %v9863
  %v9865 = vsel %vm3892, %v9052, %v9043
  %v9866 = vsel %vm3894, %v9061, %v9865
  %v9867 = vsel %vm3896, %v9070, %v9866
  %v9868 = vsel %vm3898, %v9079, %v9867
  %v9869 = vsel %vm3900, %v9088, %v9868
  %v9870 = vsel %vm3902, %v9097, %v9869
  %v9871 = vsel %vm3904, %v9106, %v9870
  %v9872 = vsel %vm3892, %v9124, %v9115
  %v9873 = vsel %vm3894, %v9133, %v9872
  %v9874 = vsel %vm3896, %v9142, %v9873
  %v9875 = vsel %vm3898, %v9151, %v9874
  %v9876 = vsel %vm3900, %v9160, %v9875
  %v9877 = vsel %vm3902, %v9169, %v9876
  %v9878 = vsel %vm3904, %v9178, %v9877
  %v9879 = vsel %vm3892, %v9196, %v9187
  %v9880 = vsel %vm3894, %v9205, %v9879
  %v9881 = vsel %vm3896, %v9214, %v9880
  %v9882 = vsel %vm3898, %v9223, %v9881
  %v9883 = vsel %vm3900, %v9232, %v9882
  %v9884 = vsel %vm3902, %v9241, %v9883
  %v9885 = vsel %vm3904, %v9250, %v9884
  %v9886 = vsel %vm3892, %v9268, %v9259
  %v9887 = vsel %vm3894, %v9277, %v9886
  %v9888 = vsel %vm3896, %v9286, %v9887
  %v9889 = vsel %vm3898, %v9295, %v9888
  %v9890 = vsel %vm3900, %v9304, %v9889
  %v9891 = vsel %vm3902, %v9313, %v9890
  %v9892 = vsel %vm3904, %v9322, %v9891
  %v9893 = vsel %vm3892, %v9340, %v9331
  %v9894 = vsel %vm3894, %v9349, %v9893
  %v9895 = vsel %vm3896, %v9358, %v9894
  %v9896 = vsel %vm3898, %v9367, %v9895
  %v9897 = vsel %vm3900, %v9376, %v9896
  %v9898 = vsel %vm3902, %v9385, %v9897
  %v9899 = vsel %vm3904, %v9394, %v9898
  %v9900 = vsel %vm3892, %v9412, %v9403
  %v9901 = vsel %vm3894, %v9421, %v9900
  %v9902 = vsel %vm3896, %v9430, %v9901
  %v9903 = vsel %vm3898, %v9439, %v9902
  %v9904 = vsel %vm3900, %v9448, %v9903
  %v9905 = vsel %vm3902, %v9457, %v9904
  %v9906 = vsel %vm3904, %v9466, %v9905
  %v9907 = vsel %vm3892, %v9484, %v9475
  %v9908 = vsel %vm3894, %v9493, %v9907
  %v9909 = vsel %vm3896, %v9502, %v9908
  %v9910 = vsel %vm3898, %v9511, %v9909
  %v9911 = vsel %vm3900, %v9520, %v9910
  %v9912 = vsel %vm3902, %v9529, %v9911
  %v9913 = vsel %vm3904, %v9538, %v9912
  %v9914 = vsel %vm3892, %v9556, %v9547
  %v9915 = vsel %vm3894, %v9565, %v9914
  %v9916 = vsel %vm3896, %v9574, %v9915
  %v9917 = vsel %vm3898, %v9583, %v9916
  %v9918 = vsel %vm3900, %v9592, %v9917
  %v9919 = vsel %vm3902, %v9601, %v9918
  %v9920 = vsel %vm3904, %v9610, %v9919
  %v9921 = vsel %vm3892, %v9628, %v9619
  %v9922 = vsel %vm3894, %v9637, %v9921
  %v9923 = vsel %vm3896, %v9646, %v9922
  %v9924 = vsel %vm3898, %v9655, %v9923
  %v9925 = vsel %vm3900, %v9664, %v9924
  %v9926 = vsel %vm3902, %v9673, %v9925
  %v9927 = vsel %vm3904, %v9682, %v9926
  %v9928 = vsel %vm3892, %v9700, %v9691
  %v9929 = vsel %vm3894, %v9709, %v9928
  %v9930 = vsel %vm3896, %v9718, %v9929
  %v9931 = vsel %vm3898, %v9727, %v9930
  %v9932 = vsel %vm3900, %v9736, %v9931
  %v9933 = vsel %vm3902, %v9745, %v9932
  %v9934 = vsel %vm3904, %v9754, %v9933
  %v9947 = vsel %vm1668, %v9857, 0.0
  %9948 = vadd.xlane.f32.xlu0 %v9947
  %v9949 = vpop.xlane.xlu0 %9948
  %v9950 = vsel %vm1668, %v9864, 0.0
  %9951 = vadd.xlane.f32.xlu0 %v9950
  %v9952 = vpop.xlane.xlu0 %9951
  %v9953 = vsel %vm1668, %v9871, 0.0
  %9954 = vadd.xlane.f32.xlu0 %v9953
  %v9955 = vpop.xlane.xlu0 %9954
  %v9956 = vsel %vm1668, %v9878, 0.0
  %9957 = vadd.xlane.f32.xlu0 %v9956
  %v9958 = vpop.xlane.xlu0 %9957
  %v9959 = vsel %vm1668, %v9885, 0.0
  %9960 = vadd.xlane.f32.xlu0 %v9959
  %v9961 = vpop.xlane.xlu0 %9960
  %v9962 = vsel %vm1668, %v9892, 0.0
  %9963 = vadd.xlane.f32.xlu0 %v9962
  %v9964 = vpop.xlane.xlu0 %9963
  %v9965 = vsel %vm1668, %v9899, 0.0
  %9966 = vadd.xlane.f32.xlu0 %v9965
  %v9967 = vpop.xlane.xlu0 %9966
  %v9968 = vsel %vm1668, %v9906, 0.0
  %9969 = vadd.xlane.f32.xlu0 %v9968
  %v9970 = vpop.xlane.xlu0 %9969
  %v9971 = vsel %vm1668, %v9913, 0.0
  %9972 = vadd.xlane.f32.xlu0 %v9971
  %v9973 = vpop.xlane.xlu0 %9972
  %v9974 = vsel %vm1668, %v9920, 0.0
  %9975 = vadd.xlane.f32.xlu0 %v9974
  %v9976 = vpop.xlane.xlu0 %9975
  %v9977 = vsel %vm1668, %v9927, 0.0
  %9978 = vadd.xlane.f32.xlu0 %v9977
  %v9979 = vpop.xlane.xlu0 %9978
  %v9980 = vsel %vm1668, %v9934, 0.0
  %9981 = vadd.xlane.f32.xlu0 %v9980
  %v9982 = vpop.xlane.xlu0 %9981
  %v9983 = vrcp.pop 32.0
  %v9984 = vmul.f32 32.0, %v9983
  %v9985 = vsub.f32 1.0, %v9984
  %v9986 = vmul.f32 %v9983, %v9985
  %v9987 = vadd.f32 %v9983, %v9986
  %vm9988 = vweird.f32 %v9983
  %v9989 = vsel %vm9988, %v9983, %v9987
  %v9990 = vmul.f32 %v9949, %v9989
  %v9991 = vmul.f32 %v9952, %v9989
  %v9992 = vmul.f32 %v9955, %v9989
  %v9993 = vmul.f32 %v9958, %v9989
  %v9994 = vmul.f32 %v9961, %v9989
  %v9995 = vmul.f32 %v9964, %v9989
  %v9996 = vmul.f32 %v9967, %v9989
  %v9997 = vmul.f32 %v9970, %v9989
  %v9998 = vmul.f32 %v9973, %v9989
  %v9999 = vmul.f32 %v9976, %v9989
  %v10000 = vmul.f32 %v9979, %v9989
  %v10001 = vmul.f32 %v9982, %v9989
  %v10014 = vrot.slane %v9990, 1
  %v10015 = vrot.slane %v9990, 2
  %v10016 = vrot.slane %v9990, 3
  %v10017 = vrot.slane %v9990, 4
  %v10018 = vrot.slane %v9990, 5
  %v10019 = vrot.slane %v9990, 6
  %v10020 = vrot.slane %v9990, 7
  %v10021 = vrot.slane %v9991, 1
  %v10022 = vrot.slane %v9991, 2
  %v10023 = vrot.slane %v9991, 3
  %v10024 = vrot.slane %v9991, 4
  %v10025 = vrot.slane %v9991, 5
  %v10026 = vrot.slane %v9991, 6
  %v10027 = vrot.slane %v9991, 7
  %v10028 = vrot.slane %v9992, 1
  %v10029 = vrot.slane %v9992, 2
  %v10030 = vrot.slane %v9992, 3
  %v10031 = vrot.slane %v9992, 4
  %v10032 = vrot.slane %v9992, 5
  %v10033 = vrot.slane %v9992, 6
  %v10034 = vrot.slane %v9992, 7
  %v10035 = vrot.slane %v9993, 1
  %v10036 = vrot.slane %v9993, 2
  %v10037 = vrot.slane %v9993, 3
  %v10038 = vrot.slane %v9993, 4
  %v10039 = vrot.slane %v9993, 5
  %v10040 = vrot.slane %v9993, 6
  %v10041 = vrot.slane %v9993, 7
  %v10042 = vrot.slane %v9994, 1
  %v10043 = vrot.slane %v9994, 2
  %v10044 = vrot.slane %v9994, 3
  %v10045 = vrot.slane %v9994, 4
  %v10046 = vrot.slane %v9994, 5
  %v10047 = vrot.slane %v9994, 6
  %v10048 = vrot.slane %v9994, 7
  %v10049 = vrot.slane %v9995, 1
  %v10050 = vrot.slane %v9995, 2
  %v10051 = vrot.slane %v9995, 3
  %v10052 = vrot.slane %v9995, 4
  %v10053 = vrot.slane %v9995, 5
  %v10054 = vrot.slane %v9995, 6
  %v10055 = vrot.slane %v9995, 7
  %v10056 = vrot.slane %v9996, 1
  %v10057 = vrot.slane %v9996, 2
  %v10058 = vrot.slane %v9996, 3
  %v10059 = vrot.slane %v9996, 4
  %v10060 = vrot.slane %v9996, 5
  %v10061 = vrot.slane %v9996, 6
  %v10062 = vrot.slane %v9996, 7
  %v10063 = vrot.slane %v9997, 1
  %v10064 = vrot.slane %v9997, 2
  %v10065 = vrot.slane %v9997, 3
  %v10066 = vrot.slane %v9997, 4
  %v10067 = vrot.slane %v9997, 5
  %v10068 = vrot.slane %v9997, 6
  %v10069 = vrot.slane %v9997, 7
  %v10070 = vrot.slane %v9998, 1
  %v10071 = vrot.slane %v9998, 2
  %v10072 = vrot.slane %v9998, 3
  %v10073 = vrot.slane %v9998, 4
  %v10074 = vrot.slane %v9998, 5
  %v10075 = vrot.slane %v9998, 6
  %v10076 = vrot.slane %v9998, 7
  %v10077 = vrot.slane %v9999, 1
  %v10078 = vrot.slane %v9999, 2
  %v10079 = vrot.slane %v9999, 3
  %v10080 = vrot.slane %v9999, 4
  %v10081 = vrot.slane %v9999, 5
  %v10082 = vrot.slane %v9999, 6
  %v10083 = vrot.slane %v9999, 7
  %v10084 = vrot.slane %v10000, 1
  %v10085 = vrot.slane %v10000, 2
  %v10086 = vrot.slane %v10000, 3
  %v10087 = vrot.slane %v10000, 4
  %v10088 = vrot.slane %v10000, 5
  %v10089 = vrot.slane %v10000, 6
  %v10090 = vrot.slane %v10000, 7
  %v10091 = vrot.slane %v10001, 1
  %v10092 = vrot.slane %v10001, 2
  %v10093 = vrot.slane %v10001, 3
  %v10094 = vrot.slane %v10001, 4
  %v10095 = vrot.slane %v10001, 5
  %v10096 = vrot.slane %v10001, 6
  %v10097 = vrot.slane %v10001, 7
  %v10194 = vsub.f32 %v8899, %v9990
  %v10195 = vsub.f32 %v8908, %v10014
  %v10196 = vsub.f32 %v8917, %v10015
  %v10197 = vsub.f32 %v8926, %v10016
  %v10198 = vsub.f32 %v8935, %v10017
  %v10199 = vsub.f32 %v8944, %v10018
  %v10200 = vsub.f32 %v8953, %v10019
  %v10201 = vsub.f32 %v8962, %v10020
  %v10202 = vsub.f32 %v8971, %v9991
  %v10203 = vsub.f32 %v8980, %v10021
  %v10204 = vsub.f32 %v8989, %v10022
  %v10205 = vsub.f32 %v8998, %v10023
  %v10206 = vsub.f32 %v9007, %v10024
  %v10207 = vsub.f32 %v9016, %v10025
  %v10208 = vsub.f32 %v9025, %v10026
  %v10209 = vsub.f32 %v9034, %v10027
  %v10210 = vsub.f32 %v9043, %v9992
  %v10211 = vsub.f32 %v9052, %v10028
  %v10212 = vsub.f32 %v9061, %v10029
  %v10213 = vsub.f32 %v9070, %v10030
  %v10214 = vsub.f32 %v9079, %v10031
  %v10215 = vsub.f32 %v9088, %v10032
  %v10216 = vsub.f32 %v9097, %v10033
  %v10217 = vsub.f32 %v9106, %v10034
  %v10218 = vsub.f32 %v9115, %v9993
  %v10219 = vsub.f32 %v9124, %v10035
  %v10220 = vsub.f32 %v9133, %v10036
  %v10221 = vsub.f32 %v9142, %v10037
  %v10222 = vsub.f32 %v9151, %v10038
  %v10223 = vsub.f32 %v9160, %v10039
  %v10224 = vsub.f32 %v9169, %v10040
  %v10225 = vsub.f32 %v9178, %v10041
  %v10226 = vsub.f32 %v9187, %v9994
  %v10227 = vsub.f32 %v9196, %v10042
  %v10228 = vsub.f32 %v9205, %v10043
  %v10229 = vsub.f32 %v9214, %v10044
  %v10230 = vsub.f32 %v9223, %v10045
  %v10231 = vsub.f32 %v9232, %v10046
  %v10232 = vsub.f32 %v9241, %v10047
  %v10233 = vsub.f32 %v9250, %v10048
  %v10234 = vsub.f32 %v9259, %v9995
  %v10235 = vsub.f32 %v9268, %v10049
  %v10236 = vsub.f32 %v9277, %v10050
  %v10237 = vsub.f32 %v9286, %v10051
  %v10238 = vsub.f32 %v9295, %v10052
  %v10239 = vsub.f32 %v9304, %v10053
  %v10240 = vsub.f32 %v9313, %v10054
  %v10241 = vsub.f32 %v9322, %v10055
  %v10242 = vsub.f32 %v9331, %v9996
  %v10243 = vsub.f32 %v9340, %v10056
  %v10244 = vsub.f32 %v9349, %v10057
  %v10245 = vsub.f32 %v9358, %v10058
  %v10246 = vsub.f32 %v9367, %v10059
  %v10247 = vsub.f32 %v9376, %v10060
  %v10248 = vsub.f32 %v9385, %v10061
  %v10249 = vsub.f32 %v9394, %v10062
  %v10250 = vsub.f32 %v9403, %v9997
  %v10251 = vsub.f32 %v9412, %v10063
  %v10252 = vsub.f32 %v9421, %v10064
  %v10253 = vsub.f32 %v9430, %v10065
  %v10254 = vsub.f32 %v9439, %v10066
  %v10255 = vsub.f32 %v9448, %v10067
  %v10256 = vsub.f32 %v9457, %v10068
  %v10257 = vsub.f32 %v9466, %v10069
  %v10258 = vsub.f32 %v9475, %v9998
  %v10259 = vsub.f32 %v9484, %v10070
  %v10260 = vsub.f32 %v9493, %v10071
  %v10261 = vsub.f32 %v9502, %v10072
  %v10262 = vsub.f32 %v9511, %v10073
  %v10263 = vsub.f32 %v9520, %v10074
  %v10264 = vsub.f32 %v9529, %v10075
  %v10265 = vsub.f32 %v9538, %v10076
  %v10266 = vsub.f32 %v9547, %v9999
  %v10267 = vsub.f32 %v9556, %v10077
  %v10268 = vsub.f32 %v9565, %v10078
  %v10269 = vsub.f32 %v9574, %v10079
  %v10270 = vsub.f32 %v9583, %v10080
  %v10271 = vsub.f32 %v9592, %v10081
  %v10272 = vsub.f32 %v9601, %v10082
  %v10273 = vsub.f32 %v9610, %v10083
  %v10274 = vsub.f32 %v9619, %v10000
  %v10275 = vsub.f32 %v9628, %v10084
  %v10276 = vsub.f32 %v9637, %v10085
  %v10277 = vsub.f32 %v9646, %v10086
  %v10278 = vsub.f32 %v9655, %v10087
  %v10279 = vsub.f32 %v9664, %v10088
  %v10280 = vsub.f32 %v9673, %v10089
  %v10281 = vsub.f32 %v9682, %v10090
  %v10282 = vsub.f32 %v9691, %v10001
  %v10283 = vsub.f32 %v9700, %v10091
  %v10284 = vsub.f32 %v9709, %v10092
  %v10285 = vsub.f32 %v9718, %v10093
  %v10286 = vsub.f32 %v9727, %v10094
  %v10287 = vsub.f32 %v9736, %v10095
  %v10288 = vsub.f32 %v9745, %v10096
  %v10289 = vsub.f32 %v9754, %v10097
  %v10290 = vmul.f32 %v10194, %v10194
  %v10291 = vmul.f32 %v10195, %v10195
  %v10292 = vmul.f32 %v10196, %v10196
  %v10293 = vmul.f32 %v10197, %v10197
  %v10294 = vmul.f32 %v10198, %v10198
  %v10295 = vmul.f32 %v10199, %v10199
  %v10296 = vmul.f32 %v10200, %v10200
  %v10297 = vmul.f32 %v10201, %v10201
  %v10298 = vmul.f32 %v10202, %v10202
  %v10299 = vmul.f32 %v10203, %v10203
  %v10300 = vmul.f32 %v10204, %v10204
  %v10301 = vmul.f32 %v10205, %v10205
  %v10302 = vmul.f32 %v10206, %v10206
  %v10303 = vmul.f32 %v10207, %v10207
  %v10304 = vmul.f32 %v10208, %v10208
  %v10305 = vmul.f32 %v10209, %v10209
  %v10306 = vmul.f32 %v10210, %v10210
  %v10307 = vmul.f32 %v10211, %v10211
  %v10308 = vmul.f32 %v10212, %v10212
  %v10309 = vmul.f32 %v10213, %v10213
  %v10310 = vmul.f32 %v10214, %v10214
  %v10311 = vmul.f32 %v10215, %v10215
  %v10312 = vmul.f32 %v10216, %v10216
  %v10313 = vmul.f32 %v10217, %v10217
  %v10314 = vmul.f32 %v10218, %v10218
  %v10315 = vmul.f32 %v10219, %v10219
  %v10316 = vmul.f32 %v10220, %v10220
  %v10317 = vmul.f32 %v10221, %v10221
  %v10318 = vmul.f32 %v10222, %v10222
  %v10319 = vmul.f32 %v10223, %v10223
  %v10320 = vmul.f32 %v10224, %v10224
  %v10321 = vmul.f32 %v10225, %v10225
  %v10322 = vmul.f32 %v10226, %v10226
  %v10323 = vmul.f32 %v10227, %v10227
  %v10324 = vmul.f32 %v10228, %v10228
  %v10325 = vmul.f32 %v10229, %v10229
  %v10326 = vmul.f32 %v10230, %v10230
  %v10327 = vmul.f32 %v10231, %v10231
  %v10328 = vmul.f32 %v10232, %v10232
  %v10329 = vmul.f32 %v10233, %v10233
  %v10330 = vmul.f32 %v10234, %v10234
  %v10331 = vmul.f32 %v10235, %v10235
  %v10332 = vmul.f32 %v10236, %v10236
  %v10333 = vmul.f32 %v10237, %v10237
  %v10334 = vmul.f32 %v10238, %v10238
  %v10335 = vmul.f32 %v10239, %v10239
  %v10336 = vmul.f32 %v10240, %v10240
  %v10337 = vmul.f32 %v10241, %v10241
  %v10338 = vmul.f32 %v10242, %v10242
  %v10339 = vmul.f32 %v10243, %v10243
  %v10340 = vmul.f32 %v10244, %v10244
  %v10341 = vmul.f32 %v10245, %v10245
  %v10342 = vmul.f32 %v10246, %v10246
  %v10343 = vmul.f32 %v10247, %v10247
  %v10344 = vmul.f32 %v10248, %v10248
  %v10345 = vmul.f32 %v10249, %v10249
  %v10346 = vmul.f32 %v10250, %v10250
  %v10347 = vmul.f32 %v10251, %v10251
  %v10348 = vmul.f32 %v10252, %v10252
  %v10349 = vmul.f32 %v10253, %v10253
  %v10350 = vmul.f32 %v10254, %v10254
  %v10351 = vmul.f32 %v10255, %v10255
  %v10352 = vmul.f32 %v10256, %v10256
  %v10353 = vmul.f32 %v10257, %v10257
  %v10354 = vmul.f32 %v10258, %v10258
  %v10355 = vmul.f32 %v10259, %v10259
  %v10356 = vmul.f32 %v10260, %v10260
  %v10357 = vmul.f32 %v10261, %v10261
  %v10358 = vmul.f32 %v10262, %v10262
  %v10359 = vmul.f32 %v10263, %v10263
  %v10360 = vmul.f32 %v10264, %v10264
  %v10361 = vmul.f32 %v10265, %v10265
  %v10362 = vmul.f32 %v10266, %v10266
  %v10363 = vmul.f32 %v10267, %v10267
  %v10364 = vmul.f32 %v10268, %v10268
  %v10365 = vmul.f32 %v10269, %v10269
  %v10366 = vmul.f32 %v10270, %v10270
  %v10367 = vmul.f32 %v10271, %v10271
  %v10368 = vmul.f32 %v10272, %v10272
  %v10369 = vmul.f32 %v10273, %v10273
  %v10370 = vmul.f32 %v10274, %v10274
  %v10371 = vmul.f32 %v10275, %v10275
  %v10372 = vmul.f32 %v10276, %v10276
  %v10373 = vmul.f32 %v10277, %v10277
  %v10374 = vmul.f32 %v10278, %v10278
  %v10375 = vmul.f32 %v10279, %v10279
  %v10376 = vmul.f32 %v10280, %v10280
  %v10377 = vmul.f32 %v10281, %v10281
  %v10378 = vmul.f32 %v10282, %v10282
  %v10379 = vmul.f32 %v10283, %v10283
  %v10380 = vmul.f32 %v10284, %v10284
  %v10381 = vmul.f32 %v10285, %v10285
  %v10382 = vmul.f32 %v10286, %v10286
  %v10383 = vmul.f32 %v10287, %v10287
  %v10384 = vmul.f32 %v10288, %v10288
  %v10385 = vmul.f32 %v10289, %v10289
  %v10482 = vrot.slane %v10291, 7
  %v10483 = vsel %vm3892, %v10482, %v10290
  %v10484 = vrot.slane %v10292, 6
  %v10485 = vsel %vm3894, %v10484, %v10483
  %v10486 = vrot.slane %v10293, 5
  %v10487 = vsel %vm3896, %v10486, %v10485
  %v10488 = vrot.slane %v10294, 4
  %v10489 = vsel %vm3898, %v10488, %v10487
  %v10490 = vrot.slane %v10295, 3
  %v10491 = vsel %vm3900, %v10490, %v10489
  %v10492 = vrot.slane %v10296, 2
  %v10493 = vsel %vm3902, %v10492, %v10491
  %v10494 = vrot.slane %v10297, 1
  %v10495 = vsel %vm3904, %v10494, %v10493
  %v10496 = vrot.slane %v10299, 7
  %v10497 = vsel %vm3892, %v10496, %v10298
  %v10498 = vrot.slane %v10300, 6
  %v10499 = vsel %vm3894, %v10498, %v10497
  %v10500 = vrot.slane %v10301, 5
  %v10501 = vsel %vm3896, %v10500, %v10499
  %v10502 = vrot.slane %v10302, 4
  %v10503 = vsel %vm3898, %v10502, %v10501
  %v10504 = vrot.slane %v10303, 3
  %v10505 = vsel %vm3900, %v10504, %v10503
  %v10506 = vrot.slane %v10304, 2
  %v10507 = vsel %vm3902, %v10506, %v10505
  %v10508 = vrot.slane %v10305, 1
  %v10509 = vsel %vm3904, %v10508, %v10507
  %v10510 = vrot.slane %v10307, 7
  %v10511 = vsel %vm3892, %v10510, %v10306
  %v10512 = vrot.slane %v10308, 6
  %v10513 = vsel %vm3894, %v10512, %v10511
  %v10514 = vrot.slane %v10309, 5
  %v10515 = vsel %vm3896, %v10514, %v10513
  %v10516 = vrot.slane %v10310, 4
  %v10517 = vsel %vm3898, %v10516, %v10515
  %v10518 = vrot.slane %v10311, 3
  %v10519 = vsel %vm3900, %v10518, %v10517
  %v10520 = vrot.slane %v10312, 2
  %v10521 = vsel %vm3902, %v10520, %v10519
  %v10522 = vrot.slane %v10313, 1
  %v10523 = vsel %vm3904, %v10522, %v10521
  %v10524 = vrot.slane %v10315, 7
  %v10525 = vsel %vm3892, %v10524, %v10314
  %v10526 = vrot.slane %v10316, 6
  %v10527 = vsel %vm3894, %v10526, %v10525
  %v10528 = vrot.slane %v10317, 5
  %v10529 = vsel %vm3896, %v10528, %v10527
  %v10530 = vrot.slane %v10318, 4
  %v10531 = vsel %vm3898, %v10530, %v10529
  %v10532 = vrot.slane %v10319, 3
  %v10533 = vsel %vm3900, %v10532, %v10531
  %v10534 = vrot.slane %v10320, 2
  %v10535 = vsel %vm3902, %v10534, %v10533
  %v10536 = vrot.slane %v10321, 1
  %v10537 = vsel %vm3904, %v10536, %v10535
  %v10538 = vrot.slane %v10323, 7
  %v10539 = vsel %vm3892, %v10538, %v10322
  %v10540 = vrot.slane %v10324, 6
  %v10541 = vsel %vm3894, %v10540, %v10539
  %v10542 = vrot.slane %v10325, 5
  %v10543 = vsel %vm3896, %v10542, %v10541
  %v10544 = vrot.slane %v10326, 4
  %v10545 = vsel %vm3898, %v10544, %v10543
  %v10546 = vrot.slane %v10327, 3
  %v10547 = vsel %vm3900, %v10546, %v10545
  %v10548 = vrot.slane %v10328, 2
  %v10549 = vsel %vm3902, %v10548, %v10547
  %v10550 = vrot.slane %v10329, 1
  %v10551 = vsel %vm3904, %v10550, %v10549
  %v10552 = vrot.slane %v10331, 7
  %v10553 = vsel %vm3892, %v10552, %v10330
  %v10554 = vrot.slane %v10332, 6
  %v10555 = vsel %vm3894, %v10554, %v10553
  %v10556 = vrot.slane %v10333, 5
  %v10557 = vsel %vm3896, %v10556, %v10555
  %v10558 = vrot.slane %v10334, 4
  %v10559 = vsel %vm3898, %v10558, %v10557
  %v10560 = vrot.slane %v10335, 3
  %v10561 = vsel %vm3900, %v10560, %v10559
  %v10562 = vrot.slane %v10336, 2
  %v10563 = vsel %vm3902, %v10562, %v10561
  %v10564 = vrot.slane %v10337, 1
  %v10565 = vsel %vm3904, %v10564, %v10563
  %v10566 = vrot.slane %v10339, 7
  %v10567 = vsel %vm3892, %v10566, %v10338
  %v10568 = vrot.slane %v10340, 6
  %v10569 = vsel %vm3894, %v10568, %v10567
  %v10570 = vrot.slane %v10341, 5
  %v10571 = vsel %vm3896, %v10570, %v10569
  %v10572 = vrot.slane %v10342, 4
  %v10573 = vsel %vm3898, %v10572, %v10571
  %v10574 = vrot.slane %v10343, 3
  %v10575 = vsel %vm3900, %v10574, %v10573
  %v10576 = vrot.slane %v10344, 2
  %v10577 = vsel %vm3902, %v10576, %v10575
  %v10578 = vrot.slane %v10345, 1
  %v10579 = vsel %vm3904, %v10578, %v10577
  %v10580 = vrot.slane %v10347, 7
  %v10581 = vsel %vm3892, %v10580, %v10346
  %v10582 = vrot.slane %v10348, 6
  %v10583 = vsel %vm3894, %v10582, %v10581
  %v10584 = vrot.slane %v10349, 5
  %v10585 = vsel %vm3896, %v10584, %v10583
  %v10586 = vrot.slane %v10350, 4
  %v10587 = vsel %vm3898, %v10586, %v10585
  %v10588 = vrot.slane %v10351, 3
  %v10589 = vsel %vm3900, %v10588, %v10587
  %v10590 = vrot.slane %v10352, 2
  %v10591 = vsel %vm3902, %v10590, %v10589
  %v10592 = vrot.slane %v10353, 1
  %v10593 = vsel %vm3904, %v10592, %v10591
  %v10594 = vrot.slane %v10355, 7
  %v10595 = vsel %vm3892, %v10594, %v10354
  %v10596 = vrot.slane %v10356, 6
  %v10597 = vsel %vm3894, %v10596, %v10595
  %v10598 = vrot.slane %v10357, 5
  %v10599 = vsel %vm3896, %v10598, %v10597
  %v10600 = vrot.slane %v10358, 4
  %v10601 = vsel %vm3898, %v10600, %v10599
  %v10602 = vrot.slane %v10359, 3
  %v10603 = vsel %vm3900, %v10602, %v10601
  %v10604 = vrot.slane %v10360, 2
  %v10605 = vsel %vm3902, %v10604, %v10603
  %v10606 = vrot.slane %v10361, 1
  %v10607 = vsel %vm3904, %v10606, %v10605
  %v10608 = vrot.slane %v10363, 7
  %v10609 = vsel %vm3892, %v10608, %v10362
  %v10610 = vrot.slane %v10364, 6
  %v10611 = vsel %vm3894, %v10610, %v10609
  %v10612 = vrot.slane %v10365, 5
  %v10613 = vsel %vm3896, %v10612, %v10611
  %v10614 = vrot.slane %v10366, 4
  %v10615 = vsel %vm3898, %v10614, %v10613
  %v10616 = vrot.slane %v10367, 3
  %v10617 = vsel %vm3900, %v10616, %v10615
  %v10618 = vrot.slane %v10368, 2
  %v10619 = vsel %vm3902, %v10618, %v10617
  %v10620 = vrot.slane %v10369, 1
  %v10621 = vsel %vm3904, %v10620, %v10619
  %v10622 = vrot.slane %v10371, 7
  %v10623 = vsel %vm3892, %v10622, %v10370
  %v10624 = vrot.slane %v10372, 6
  %v10625 = vsel %vm3894, %v10624, %v10623
  %v10626 = vrot.slane %v10373, 5
  %v10627 = vsel %vm3896, %v10626, %v10625
  %v10628 = vrot.slane %v10374, 4
  %v10629 = vsel %vm3898, %v10628, %v10627
  %v10630 = vrot.slane %v10375, 3
  %v10631 = vsel %vm3900, %v10630, %v10629
  %v10632 = vrot.slane %v10376, 2
  %v10633 = vsel %vm3902, %v10632, %v10631
  %v10634 = vrot.slane %v10377, 1
  %v10635 = vsel %vm3904, %v10634, %v10633
  %v10636 = vrot.slane %v10379, 7
  %v10637 = vsel %vm3892, %v10636, %v10378
  %v10638 = vrot.slane %v10380, 6
  %v10639 = vsel %vm3894, %v10638, %v10637
  %v10640 = vrot.slane %v10381, 5
  %v10641 = vsel %vm3896, %v10640, %v10639
  %v10642 = vrot.slane %v10382, 4
  %v10643 = vsel %vm3898, %v10642, %v10641
  %v10644 = vrot.slane %v10383, 3
  %v10645 = vsel %vm3900, %v10644, %v10643
  %v10646 = vrot.slane %v10384, 2
  %v10647 = vsel %vm3902, %v10646, %v10645
  %v10648 = vrot.slane %v10385, 1
  %v10649 = vsel %vm3904, %v10648, %v10647
  %v10662 = vsel %vm1668, %v10495, 0.0
  %10663 = vadd.xlane.f32.xlu0 %v10662
  %v10664 = vpop.xlane.xlu0 %10663
  %v10665 = vsel %vm1668, %v10509, 0.0
  %10666 = vadd.xlane.f32.xlu0 %v10665
  %v10667 = vpop.xlane.xlu0 %10666
  %v10668 = vsel %vm1668, %v10523, 0.0
  %10669 = vadd.xlane.f32.xlu0 %v10668
  %v10670 = vpop.xlane.xlu0 %10669
  %v10671 = vsel %vm1668, %v10537, 0.0
  %10672 = vadd.xlane.f32.xlu0 %v10671
  %v10673 = vpop.xlane.xlu0 %10672
  %v10674 = vsel %vm1668, %v10551, 0.0
  %10675 = vadd.xlane.f32.xlu0 %v10674
  %v10676 = vpop.xlane.xlu0 %10675
  %v10677 = vsel %vm1668, %v10565, 0.0
  %10678 = vadd.xlane.f32.xlu0 %v10677
  %v10679 = vpop.xlane.xlu0 %10678
  %v10680 = vsel %vm1668, %v10579, 0.0
  %10681 = vadd.xlane.f32.xlu0 %v10680
  %v10682 = vpop.xlane.xlu0 %10681
  %v10683 = vsel %vm1668, %v10593, 0.0
  %10684 = vadd.xlane.f32.xlu0 %v10683
  %v10685 = vpop.xlane.xlu0 %10684
  %v10686 = vsel %vm1668, %v10607, 0.0
  %10687 = vadd.xlane.f32.xlu0 %v10686
  %v10688 = vpop.xlane.xlu0 %10687
  %v10689 = vsel %vm1668, %v10621, 0.0
  %10690 = vadd.xlane.f32.xlu0 %v10689
  %v10691 = vpop.xlane.xlu0 %10690
  %v10692 = vsel %vm1668, %v10635, 0.0
  %10693 = vadd.xlane.f32.xlu0 %v10692
  %v10694 = vpop.xlane.xlu0 %10693
  %v10695 = vsel %vm1668, %v10649, 0.0
  %10696 = vadd.xlane.f32.xlu0 %v10695
  %v10697 = vpop.xlane.xlu0 %10696
  %v10698 = vmul.f32 %v10664, %v9989
  %v10699 = vmul.f32 %v10667, %v9989
  %v10700 = vmul.f32 %v10670, %v9989
  %v10701 = vmul.f32 %v10673, %v9989
  %v10702 = vmul.f32 %v10676, %v9989
  %v10703 = vmul.f32 %v10679, %v9989
  %v10704 = vmul.f32 %v10682, %v9989
  %v10705 = vmul.f32 %v10685, %v9989
  %v10706 = vmul.f32 %v10688, %v9989
  %v10707 = vmul.f32 %v10691, %v9989
  %v10708 = vmul.f32 %v10694, %v9989
  %v10709 = vmul.f32 %v10697, %v9989
  %v10710 = vadd.f32 %v10698, 1e-05
  %v10711 = vadd.f32 %v10699, 1e-05
  %v10712 = vadd.f32 %v10700, 1e-05
  %v10713 = vadd.f32 %v10701, 1e-05
  %v10714 = vadd.f32 %v10702, 1e-05
  %v10715 = vadd.f32 %v10703, 1e-05
  %v10716 = vadd.f32 %v10704, 1e-05
  %v10717 = vadd.f32 %v10705, 1e-05
  %v10718 = vadd.f32 %v10706, 1e-05
  %v10719 = vadd.f32 %v10707, 1e-05
  %v10720 = vadd.f32 %v10708, 1e-05
  %v10721 = vadd.f32 %v10709, 1e-05
  %v10722 = vrsqrt.pop %v10710
  %v10723 = vmul.f32 %v10722, %v10710
  %v10724 = vmul.f32 %v10723, %v10722
  %v10725 = vmul.f32 0.5, %v10724
  %v10726 = vsub.f32 1.5, %v10725
  %v10727 = vmul.f32 %v10722, %v10726
  %vm10728 = vweird.f32 %v10710
  %vm10729 = vweird.f32 %v10722
  %vm10730 = vmor %vm10728, %vm10729
  %v10731 = vsel %vm10730, %v10722, %v10727
  %v10732 = vrsqrt.pop %v10711
  %v10733 = vmul.f32 %v10732, %v10711
  %v10734 = vmul.f32 %v10733, %v10732
  %v10735 = vmul.f32 0.5, %v10734
  %v10736 = vsub.f32 1.5, %v10735
  %v10737 = vmul.f32 %v10732, %v10736
  %vm10738 = vweird.f32 %v10711
  %vm10739 = vweird.f32 %v10732
  %vm10740 = vmor %vm10738, %vm10739
  %v10741 = vsel %vm10740, %v10732, %v10737
  %v10742 = vrsqrt.pop %v10712
  %v10743 = vmul.f32 %v10742, %v10712
  %v10744 = vmul.f32 %v10743, %v10742
  %v10745 = vmul.f32 0.5, %v10744
  %v10746 = vsub.f32 1.5, %v10745
  %v10747 = vmul.f32 %v10742, %v10746
  %vm10748 = vweird.f32 %v10712
  %vm10749 = vweird.f32 %v10742
  %vm10750 = vmor %vm10748, %vm10749
  %v10751 = vsel %vm10750, %v10742, %v10747
  %v10752 = vrsqrt.pop %v10713
  %v10753 = vmul.f32 %v10752, %v10713
  %v10754 = vmul.f32 %v10753, %v10752
  %v10755 = vmul.f32 0.5, %v10754
  %v10756 = vsub.f32 1.5, %v10755
  %v10757 = vmul.f32 %v10752, %v10756
  %vm10758 = vweird.f32 %v10713
  %vm10759 = vweird.f32 %v10752
  %vm10760 = vmor %vm10758, %vm10759
  %v10761 = vsel %vm10760, %v10752, %v10757
  %v10762 = vrsqrt.pop %v10714
  %v10763 = vmul.f32 %v10762, %v10714
  %v10764 = vmul.f32 %v10763, %v10762
  %v10765 = vmul.f32 0.5, %v10764
  %v10766 = vsub.f32 1.5, %v10765
  %v10767 = vmul.f32 %v10762, %v10766
  %vm10768 = vweird.f32 %v10714
  %vm10769 = vweird.f32 %v10762
  %vm10770 = vmor %vm10768, %vm10769
  %v10771 = vsel %vm10770, %v10762, %v10767
  %v10772 = vrsqrt.pop %v10715
  %v10773 = vmul.f32 %v10772, %v10715
  %v10774 = vmul.f32 %v10773, %v10772
  %v10775 = vmul.f32 0.5, %v10774
  %v10776 = vsub.f32 1.5, %v10775
  %v10777 = vmul.f32 %v10772, %v10776
  %vm10778 = vweird.f32 %v10715
  %vm10779 = vweird.f32 %v10772
  %vm10780 = vmor %vm10778, %vm10779
  %v10781 = vsel %vm10780, %v10772, %v10777
  %v10782 = vrsqrt.pop %v10716
  %v10783 = vmul.f32 %v10782, %v10716
  %v10784 = vmul.f32 %v10783, %v10782
  %v10785 = vmul.f32 0.5, %v10784
  %v10786 = vsub.f32 1.5, %v10785
  %v10787 = vmul.f32 %v10782, %v10786
  %vm10788 = vweird.f32 %v10716
  %vm10789 = vweird.f32 %v10782
  %vm10790 = vmor %vm10788, %vm10789
  %v10791 = vsel %vm10790, %v10782, %v10787
  %v10792 = vrsqrt.pop %v10717
  %v10793 = vmul.f32 %v10792, %v10717
  %v10794 = vmul.f32 %v10793, %v10792
  %v10795 = vmul.f32 0.5, %v10794
  %v10796 = vsub.f32 1.5, %v10795
  %v10797 = vmul.f32 %v10792, %v10796
  %vm10798 = vweird.f32 %v10717
  %vm10799 = vweird.f32 %v10792
  %vm10800 = vmor %vm10798, %vm10799
  %v10801 = vsel %vm10800, %v10792, %v10797
  %v10802 = vrsqrt.pop %v10718
  %v10803 = vmul.f32 %v10802, %v10718
  %v10804 = vmul.f32 %v10803, %v10802
  %v10805 = vmul.f32 0.5, %v10804
  %v10806 = vsub.f32 1.5, %v10805
  %v10807 = vmul.f32 %v10802, %v10806
  %vm10808 = vweird.f32 %v10718
  %vm10809 = vweird.f32 %v10802
  %vm10810 = vmor %vm10808, %vm10809
  %v10811 = vsel %vm10810, %v10802, %v10807
  %v10812 = vrsqrt.pop %v10719
  %v10813 = vmul.f32 %v10812, %v10719
  %v10814 = vmul.f32 %v10813, %v10812
  %v10815 = vmul.f32 0.5, %v10814
  %v10816 = vsub.f32 1.5, %v10815
  %v10817 = vmul.f32 %v10812, %v10816
  %vm10818 = vweird.f32 %v10719
  %vm10819 = vweird.f32 %v10812
  %vm10820 = vmor %vm10818, %vm10819
  %v10821 = vsel %vm10820, %v10812, %v10817
  %v10822 = vrsqrt.pop %v10720
  %v10823 = vmul.f32 %v10822, %v10720
  %v10824 = vmul.f32 %v10823, %v10822
  %v10825 = vmul.f32 0.5, %v10824
  %v10826 = vsub.f32 1.5, %v10825
  %v10827 = vmul.f32 %v10822, %v10826
  %vm10828 = vweird.f32 %v10720
  %vm10829 = vweird.f32 %v10822
  %vm10830 = vmor %vm10828, %vm10829
  %v10831 = vsel %vm10830, %v10822, %v10827
  %v10832 = vrsqrt.pop %v10721
  %v10833 = vmul.f32 %v10832, %v10721
  %v10834 = vmul.f32 %v10833, %v10832
  %v10835 = vmul.f32 0.5, %v10834
  %v10836 = vsub.f32 1.5, %v10835
  %v10837 = vmul.f32 %v10832, %v10836
  %vm10838 = vweird.f32 %v10721
  %vm10839 = vweird.f32 %v10832
  %vm10840 = vmor %vm10838, %vm10839
  %v10841 = vsel %vm10840, %v10832, %v10837
  %v10854 = vrot.slane %v10731, 1
  %v10855 = vrot.slane %v10731, 2
  %v10856 = vrot.slane %v10731, 3
  %v10857 = vrot.slane %v10731, 4
  %v10858 = vrot.slane %v10731, 5
  %v10859 = vrot.slane %v10731, 6
  %v10860 = vrot.slane %v10731, 7
  %v10861 = vrot.slane %v10741, 1
  %v10862 = vrot.slane %v10741, 2
  %v10863 = vrot.slane %v10741, 3
  %v10864 = vrot.slane %v10741, 4
  %v10865 = vrot.slane %v10741, 5
  %v10866 = vrot.slane %v10741, 6
  %v10867 = vrot.slane %v10741, 7
  %v10868 = vrot.slane %v10751, 1
  %v10869 = vrot.slane %v10751, 2
  %v10870 = vrot.slane %v10751, 3
  %v10871 = vrot.slane %v10751, 4
  %v10872 = vrot.slane %v10751, 5
  %v10873 = vrot.slane %v10751, 6
  %v10874 = vrot.slane %v10751, 7
  %v10875 = vrot.slane %v10761, 1
  %v10876 = vrot.slane %v10761, 2
  %v10877 = vrot.slane %v10761, 3
  %v10878 = vrot.slane %v10761, 4
  %v10879 = vrot.slane %v10761, 5
  %v10880 = vrot.slane %v10761, 6
  %v10881 = vrot.slane %v10761, 7
  %v10882 = vrot.slane %v10771, 1
  %v10883 = vrot.slane %v10771, 2
  %v10884 = vrot.slane %v10771, 3
  %v10885 = vrot.slane %v10771, 4
  %v10886 = vrot.slane %v10771, 5
  %v10887 = vrot.slane %v10771, 6
  %v10888 = vrot.slane %v10771, 7
  %v10889 = vrot.slane %v10781, 1
  %v10890 = vrot.slane %v10781, 2
  %v10891 = vrot.slane %v10781, 3
  %v10892 = vrot.slane %v10781, 4
  %v10893 = vrot.slane %v10781, 5
  %v10894 = vrot.slane %v10781, 6
  %v10895 = vrot.slane %v10781, 7
  %v10896 = vrot.slane %v10791, 1
  %v10897 = vrot.slane %v10791, 2
  %v10898 = vrot.slane %v10791, 3
  %v10899 = vrot.slane %v10791, 4
  %v10900 = vrot.slane %v10791, 5
  %v10901 = vrot.slane %v10791, 6
  %v10902 = vrot.slane %v10791, 7
  %v10903 = vrot.slane %v10801, 1
  %v10904 = vrot.slane %v10801, 2
  %v10905 = vrot.slane %v10801, 3
  %v10906 = vrot.slane %v10801, 4
  %v10907 = vrot.slane %v10801, 5
  %v10908 = vrot.slane %v10801, 6
  %v10909 = vrot.slane %v10801, 7
  %v10910 = vrot.slane %v10811, 1
  %v10911 = vrot.slane %v10811, 2
  %v10912 = vrot.slane %v10811, 3
  %v10913 = vrot.slane %v10811, 4
  %v10914 = vrot.slane %v10811, 5
  %v10915 = vrot.slane %v10811, 6
  %v10916 = vrot.slane %v10811, 7
  %v10917 = vrot.slane %v10821, 1
  %v10918 = vrot.slane %v10821, 2
  %v10919 = vrot.slane %v10821, 3
  %v10920 = vrot.slane %v10821, 4
  %v10921 = vrot.slane %v10821, 5
  %v10922 = vrot.slane %v10821, 6
  %v10923 = vrot.slane %v10821, 7
  %v10924 = vrot.slane %v10831, 1
  %v10925 = vrot.slane %v10831, 2
  %v10926 = vrot.slane %v10831, 3
  %v10927 = vrot.slane %v10831, 4
  %v10928 = vrot.slane %v10831, 5
  %v10929 = vrot.slane %v10831, 6
  %v10930 = vrot.slane %v10831, 7
  %v10931 = vrot.slane %v10841, 1
  %v10932 = vrot.slane %v10841, 2
  %v10933 = vrot.slane %v10841, 3
  %v10934 = vrot.slane %v10841, 4
  %v10935 = vrot.slane %v10841, 5
  %v10936 = vrot.slane %v10841, 6
  %v10937 = vrot.slane %v10841, 7
  %v11034 = vmul.f32 %v10194, %v10731
  %v11035 = vmul.f32 %v10195, %v10854
  %v11036 = vmul.f32 %v10196, %v10855
  %v11037 = vmul.f32 %v10197, %v10856
  %v11038 = vmul.f32 %v10198, %v10857
  %v11039 = vmul.f32 %v10199, %v10858
  %v11040 = vmul.f32 %v10200, %v10859
  %v11041 = vmul.f32 %v10201, %v10860
  %v11042 = vmul.f32 %v10202, %v10741
  %v11043 = vmul.f32 %v10203, %v10861
  %v11044 = vmul.f32 %v10204, %v10862
  %v11045 = vmul.f32 %v10205, %v10863
  %v11046 = vmul.f32 %v10206, %v10864
  %v11047 = vmul.f32 %v10207, %v10865
  %v11048 = vmul.f32 %v10208, %v10866
  %v11049 = vmul.f32 %v10209, %v10867
  %v11050 = vmul.f32 %v10210, %v10751
  %v11051 = vmul.f32 %v10211, %v10868
  %v11052 = vmul.f32 %v10212, %v10869
  %v11053 = vmul.f32 %v10213, %v10870
  %v11054 = vmul.f32 %v10214, %v10871
  %v11055 = vmul.f32 %v10215, %v10872
  %v11056 = vmul.f32 %v10216, %v10873
  %v11057 = vmul.f32 %v10217, %v10874
  %v11058 = vmul.f32 %v10218, %v10761
  %v11059 = vmul.f32 %v10219, %v10875
  %v11060 = vmul.f32 %v10220, %v10876
  %v11061 = vmul.f32 %v10221, %v10877
  %v11062 = vmul.f32 %v10222, %v10878
  %v11063 = vmul.f32 %v10223, %v10879
  %v11064 = vmul.f32 %v10224, %v10880
  %v11065 = vmul.f32 %v10225, %v10881
  %v11066 = vmul.f32 %v10226, %v10771
  %v11067 = vmul.f32 %v10227, %v10882
  %v11068 = vmul.f32 %v10228, %v10883
  %v11069 = vmul.f32 %v10229, %v10884
  %v11070 = vmul.f32 %v10230, %v10885
  %v11071 = vmul.f32 %v10231, %v10886
  %v11072 = vmul.f32 %v10232, %v10887
  %v11073 = vmul.f32 %v10233, %v10888
  %v11074 = vmul.f32 %v10234, %v10781
  %v11075 = vmul.f32 %v10235, %v10889
  %v11076 = vmul.f32 %v10236, %v10890
  %v11077 = vmul.f32 %v10237, %v10891
  %v11078 = vmul.f32 %v10238, %v10892
  %v11079 = vmul.f32 %v10239, %v10893
  %v11080 = vmul.f32 %v10240, %v10894
  %v11081 = vmul.f32 %v10241, %v10895
  %v11082 = vmul.f32 %v10242, %v10791
  %v11083 = vmul.f32 %v10243, %v10896
  %v11084 = vmul.f32 %v10244, %v10897
  %v11085 = vmul.f32 %v10245, %v10898
  %v11086 = vmul.f32 %v10246, %v10899
  %v11087 = vmul.f32 %v10247, %v10900
  %v11088 = vmul.f32 %v10248, %v10901
  %v11089 = vmul.f32 %v10249, %v10902
  %v11090 = vmul.f32 %v10250, %v10801
  %v11091 = vmul.f32 %v10251, %v10903
  %v11092 = vmul.f32 %v10252, %v10904
  %v11093 = vmul.f32 %v10253, %v10905
  %v11094 = vmul.f32 %v10254, %v10906
  %v11095 = vmul.f32 %v10255, %v10907
  %v11096 = vmul.f32 %v10256, %v10908
  %v11097 = vmul.f32 %v10257, %v10909
  %v11098 = vmul.f32 %v10258, %v10811
  %v11099 = vmul.f32 %v10259, %v10910
  %v11100 = vmul.f32 %v10260, %v10911
  %v11101 = vmul.f32 %v10261, %v10912
  %v11102 = vmul.f32 %v10262, %v10913
  %v11103 = vmul.f32 %v10263, %v10914
  %v11104 = vmul.f32 %v10264, %v10915
  %v11105 = vmul.f32 %v10265, %v10916
  %v11106 = vmul.f32 %v10266, %v10821
  %v11107 = vmul.f32 %v10267, %v10917
  %v11108 = vmul.f32 %v10268, %v10918
  %v11109 = vmul.f32 %v10269, %v10919
  %v11110 = vmul.f32 %v10270, %v10920
  %v11111 = vmul.f32 %v10271, %v10921
  %v11112 = vmul.f32 %v10272, %v10922
  %v11113 = vmul.f32 %v10273, %v10923
  %v11114 = vmul.f32 %v10274, %v10831
  %v11115 = vmul.f32 %v10275, %v10924
  %v11116 = vmul.f32 %v10276, %v10925
  %v11117 = vmul.f32 %v10277, %v10926
  %v11118 = vmul.f32 %v10278, %v10927
  %v11119 = vmul.f32 %v10279, %v10928
  %v11120 = vmul.f32 %v10280, %v10929
  %v11121 = vmul.f32 %v10281, %v10930
  %v11122 = vmul.f32 %v10282, %v10841
  %v11123 = vmul.f32 %v10283, %v10931
  %v11124 = vmul.f32 %v10284, %v10932
  %v11125 = vmul.f32 %v10285, %v10933
  %v11126 = vmul.f32 %v10286, %v10934
  %v11127 = vmul.f32 %v10287, %v10935
  %v11128 = vmul.f32 %v10288, %v10936
  %v11129 = vmul.f32 %v10289, %v10937
  %v11130 = vperm.slane %v40, 1
  %v11131 = vmul.f32 %v11034, %v11130
  %v11132 = vmul.f32 %v11035, %v11130
  %v11133 = vmul.f32 %v11036, %v11130
  %v11134 = vmul.f32 %v11037, %v11130
  %v11135 = vmul.f32 %v11038, %v11130
  %v11136 = vmul.f32 %v11039, %v11130
  %v11137 = vmul.f32 %v11040, %v11130
  %v11138 = vmul.f32 %v11041, %v11130
  %v11139 = vmul.f32 %v11042, %v11130
  %v11140 = vmul.f32 %v11043, %v11130
  %v11141 = vmul.f32 %v11044, %v11130
  %v11142 = vmul.f32 %v11045, %v11130
  %v11143 = vmul.f32 %v11046, %v11130
  %v11144 = vmul.f32 %v11047, %v11130
  %v11145 = vmul.f32 %v11048, %v11130
  %v11146 = vmul.f32 %v11049, %v11130
  %v11147 = vmul.f32 %v11050, %v11130
  %v11148 = vmul.f32 %v11051, %v11130
  %v11149 = vmul.f32 %v11052, %v11130
  %v11150 = vmul.f32 %v11053, %v11130
  %v11151 = vmul.f32 %v11054, %v11130
  %v11152 = vmul.f32 %v11055, %v11130
  %v11153 = vmul.f32 %v11056, %v11130
  %v11154 = vmul.f32 %v11057, %v11130
  %v11155 = vmul.f32 %v11058, %v11130
  %v11156 = vmul.f32 %v11059, %v11130
  %v11157 = vmul.f32 %v11060, %v11130
  %v11158 = vmul.f32 %v11061, %v11130
  %v11159 = vmul.f32 %v11062, %v11130
  %v11160 = vmul.f32 %v11063, %v11130
  %v11161 = vmul.f32 %v11064, %v11130
  %v11162 = vmul.f32 %v11065, %v11130
  %v11163 = vmul.f32 %v11066, %v11130
  %v11164 = vmul.f32 %v11067, %v11130
  %v11165 = vmul.f32 %v11068, %v11130
  %v11166 = vmul.f32 %v11069, %v11130
  %v11167 = vmul.f32 %v11070, %v11130
  %v11168 = vmul.f32 %v11071, %v11130
  %v11169 = vmul.f32 %v11072, %v11130
  %v11170 = vmul.f32 %v11073, %v11130
  %v11171 = vmul.f32 %v11074, %v11130
  %v11172 = vmul.f32 %v11075, %v11130
  %v11173 = vmul.f32 %v11076, %v11130
  %v11174 = vmul.f32 %v11077, %v11130
  %v11175 = vmul.f32 %v11078, %v11130
  %v11176 = vmul.f32 %v11079, %v11130
  %v11177 = vmul.f32 %v11080, %v11130
  %v11178 = vmul.f32 %v11081, %v11130
  %v11179 = vmul.f32 %v11082, %v11130
  %v11180 = vmul.f32 %v11083, %v11130
  %v11181 = vmul.f32 %v11084, %v11130
  %v11182 = vmul.f32 %v11085, %v11130
  %v11183 = vmul.f32 %v11086, %v11130
  %v11184 = vmul.f32 %v11087, %v11130
  %v11185 = vmul.f32 %v11088, %v11130
  %v11186 = vmul.f32 %v11089, %v11130
  %v11187 = vmul.f32 %v11090, %v11130
  %v11188 = vmul.f32 %v11091, %v11130
  %v11189 = vmul.f32 %v11092, %v11130
  %v11190 = vmul.f32 %v11093, %v11130
  %v11191 = vmul.f32 %v11094, %v11130
  %v11192 = vmul.f32 %v11095, %v11130
  %v11193 = vmul.f32 %v11096, %v11130
  %v11194 = vmul.f32 %v11097, %v11130
  %v11195 = vmul.f32 %v11098, %v11130
  %v11196 = vmul.f32 %v11099, %v11130
  %v11197 = vmul.f32 %v11100, %v11130
  %v11198 = vmul.f32 %v11101, %v11130
  %v11199 = vmul.f32 %v11102, %v11130
  %v11200 = vmul.f32 %v11103, %v11130
  %v11201 = vmul.f32 %v11104, %v11130
  %v11202 = vmul.f32 %v11105, %v11130
  %v11203 = vmul.f32 %v11106, %v11130
  %v11204 = vmul.f32 %v11107, %v11130
  %v11205 = vmul.f32 %v11108, %v11130
  %v11206 = vmul.f32 %v11109, %v11130
  %v11207 = vmul.f32 %v11110, %v11130
  %v11208 = vmul.f32 %v11111, %v11130
  %v11209 = vmul.f32 %v11112, %v11130
  %v11210 = vmul.f32 %v11113, %v11130
  %v11211 = vmul.f32 %v11114, %v11130
  %v11212 = vmul.f32 %v11115, %v11130
  %v11213 = vmul.f32 %v11116, %v11130
  %v11214 = vmul.f32 %v11117, %v11130
  %v11215 = vmul.f32 %v11118, %v11130
  %v11216 = vmul.f32 %v11119, %v11130
  %v11217 = vmul.f32 %v11120, %v11130
  %v11218 = vmul.f32 %v11121, %v11130
  %v11219 = vmul.f32 %v11122, %v11130
  %v11220 = vmul.f32 %v11123, %v11130
  %v11221 = vmul.f32 %v11124, %v11130
  %v11222 = vmul.f32 %v11125, %v11130
  %v11223 = vmul.f32 %v11126, %v11130
  %v11224 = vmul.f32 %v11127, %v11130
  %v11225 = vmul.f32 %v11128, %v11130
  %v11226 = vmul.f32 %v11129, %v11130
  %v11227 = vperm.slane %v40, 2
  %v11228 = vadd.f32 %v11131, %v11227
  %v11229 = vadd.f32 %v11132, %v11227
  %v11230 = vadd.f32 %v11133, %v11227
  %v11231 = vadd.f32 %v11134, %v11227
  %v11232 = vadd.f32 %v11135, %v11227
  %v11233 = vadd.f32 %v11136, %v11227
  %v11234 = vadd.f32 %v11137, %v11227
  %v11235 = vadd.f32 %v11138, %v11227
  %v11236 = vadd.f32 %v11139, %v11227
  %v11237 = vadd.f32 %v11140, %v11227
  %v11238 = vadd.f32 %v11141, %v11227
  %v11239 = vadd.f32 %v11142, %v11227
  %v11240 = vadd.f32 %v11143, %v11227
  %v11241 = vadd.f32 %v11144, %v11227
  %v11242 = vadd.f32 %v11145, %v11227
  %v11243 = vadd.f32 %v11146, %v11227
  %v11244 = vadd.f32 %v11147, %v11227
  %v11245 = vadd.f32 %v11148, %v11227
  %v11246 = vadd.f32 %v11149, %v11227
  %v11247 = vadd.f32 %v11150, %v11227
  %v11248 = vadd.f32 %v11151, %v11227
  %v11249 = vadd.f32 %v11152, %v11227
  %v11250 = vadd.f32 %v11153, %v11227
  %v11251 = vadd.f32 %v11154, %v11227
  %v11252 = vadd.f32 %v11155, %v11227
  %v11253 = vadd.f32 %v11156, %v11227
  %v11254 = vadd.f32 %v11157, %v11227
  %v11255 = vadd.f32 %v11158, %v11227
  %v11256 = vadd.f32 %v11159, %v11227
  %v11257 = vadd.f32 %v11160, %v11227
  %v11258 = vadd.f32 %v11161, %v11227
  %v11259 = vadd.f32 %v11162, %v11227
  %v11260 = vadd.f32 %v11163, %v11227
  %v11261 = vadd.f32 %v11164, %v11227
  %v11262 = vadd.f32 %v11165, %v11227
  %v11263 = vadd.f32 %v11166, %v11227
  %v11264 = vadd.f32 %v11167, %v11227
  %v11265 = vadd.f32 %v11168, %v11227
  %v11266 = vadd.f32 %v11169, %v11227
  %v11267 = vadd.f32 %v11170, %v11227
  %v11268 = vadd.f32 %v11171, %v11227
  %v11269 = vadd.f32 %v11172, %v11227
  %v11270 = vadd.f32 %v11173, %v11227
  %v11271 = vadd.f32 %v11174, %v11227
  %v11272 = vadd.f32 %v11175, %v11227
  %v11273 = vadd.f32 %v11176, %v11227
  %v11274 = vadd.f32 %v11177, %v11227
  %v11275 = vadd.f32 %v11178, %v11227
  %v11276 = vadd.f32 %v11179, %v11227
  %v11277 = vadd.f32 %v11180, %v11227
  %v11278 = vadd.f32 %v11181, %v11227
  %v11279 = vadd.f32 %v11182, %v11227
  %v11280 = vadd.f32 %v11183, %v11227
  %v11281 = vadd.f32 %v11184, %v11227
  %v11282 = vadd.f32 %v11185, %v11227
  %v11283 = vadd.f32 %v11186, %v11227
  %v11284 = vadd.f32 %v11187, %v11227
  %v11285 = vadd.f32 %v11188, %v11227
  %v11286 = vadd.f32 %v11189, %v11227
  %v11287 = vadd.f32 %v11190, %v11227
  %v11288 = vadd.f32 %v11191, %v11227
  %v11289 = vadd.f32 %v11192, %v11227
  %v11290 = vadd.f32 %v11193, %v11227
  %v11291 = vadd.f32 %v11194, %v11227
  %v11292 = vadd.f32 %v11195, %v11227
  %v11293 = vadd.f32 %v11196, %v11227
  %v11294 = vadd.f32 %v11197, %v11227
  %v11295 = vadd.f32 %v11198, %v11227
  %v11296 = vadd.f32 %v11199, %v11227
  %v11297 = vadd.f32 %v11200, %v11227
  %v11298 = vadd.f32 %v11201, %v11227
  %v11299 = vadd.f32 %v11202, %v11227
  %v11300 = vadd.f32 %v11203, %v11227
  %v11301 = vadd.f32 %v11204, %v11227
  %v11302 = vadd.f32 %v11205, %v11227
  %v11303 = vadd.f32 %v11206, %v11227
  %v11304 = vadd.f32 %v11207, %v11227
  %v11305 = vadd.f32 %v11208, %v11227
  %v11306 = vadd.f32 %v11209, %v11227
  %v11307 = vadd.f32 %v11210, %v11227
  %v11308 = vadd.f32 %v11211, %v11227
  %v11309 = vadd.f32 %v11212, %v11227
  %v11310 = vadd.f32 %v11213, %v11227
  %v11311 = vadd.f32 %v11214, %v11227
  %v11312 = vadd.f32 %v11215, %v11227
  %v11313 = vadd.f32 %v11216, %v11227
  %v11314 = vadd.f32 %v11217, %v11227
  %v11315 = vadd.f32 %v11218, %v11227
  %v11316 = vadd.f32 %v11219, %v11227
  %v11317 = vadd.f32 %v11220, %v11227
  %v11318 = vadd.f32 %v11221, %v11227
  %v11319 = vadd.f32 %v11222, %v11227
  %v11320 = vadd.f32 %v11223, %v11227
  %v11321 = vadd.f32 %v11224, %v11227
  %v11322 = vadd.f32 %v11225, %v11227
  %v11323 = vadd.f32 %v11226, %v11227
  %v11324 = vld [vmem:[%s1] sm:$0xf]
  %v11325 = vld [vmem:[%s1 + $0x4] sm:$0xf]
  %v11326 = vld [vmem:[%s1 + $0x8] sm:$0xf]
  %v11327 = vld [vmem:[%s1 + $0xc] sm:$0xf]
  %v11328 = vld [vmem:[%s1 + $0x10] sm:$0xf]
  %v11329 = vld [vmem:[%s1 + $0x14] sm:$0xf]
  %v11330 = vld [vmem:[%s1 + $0x18] sm:$0xf]
  %v11331 = vld [vmem:[%s1 + $0x1c] sm:$0xf]
  %v11332 = vld [vmem:[%s1 + $0x20] sm:$0xf]
  %v11333 = vld [vmem:[%s1 + $0x24] sm:$0xf]
  %v11334 = vld [vmem:[%s1 + $0x28] sm:$0xf]
  %v11335 = vld [vmem:[%s1 + $0x2c] sm:$0xf]
  %v11336 = vld [vmem:[%s6] sm:$0xf]
  %v11337 = vld [vmem:[%s6 + $0x4] sm:$0xf]
  %v11338 = vld [vmem:[%s6 + $0x8] sm:$0xf]
  %v11339 = vld [vmem:[%s6 + $0xc] sm:$0xf]
  %v11340 = vld [vmem:[%s6 + $0x10] sm:$0xf]
  %v11341 = vld [vmem:[%s6 + $0x14] sm:$0xf]
  %v11342 = vld [vmem:[%s6 + $0x18] sm:$0xf]
  %v11343 = vld [vmem:[%s6 + $0x1c] sm:$0xf]
  %v11344 = vld [vmem:[%s6 + $0x20] sm:$0xf]
  %v11345 = vld [vmem:[%s6 + $0x24] sm:$0xf]
  %v11346 = vld [vmem:[%s6 + $0x28] sm:$0xf]
  %v11347 = vld [vmem:[%s6 + $0x2c] sm:$0xf]
  %v11348 = vld [vmem:[%s6 + $0x30] sm:$0xf]
  %v11349 = vld [vmem:[%s6 + $0x34] sm:$0xf]
  %v11350 = vld [vmem:[%s6 + $0x38] sm:$0xf]
  %v11351 = vld [vmem:[%s6 + $0x3c] sm:$0xf]
  %v11364 = vunpack.c.l.b16 %v11324
  %v11365 = vunpack.c.l.b16 %v11325
  %v11366 = vunpack.c.l.b16 %v11326
  %v11367 = vunpack.c.l.b16 %v11327
  %v11368 = vunpack.c.l.b16 %v11328
  %v11369 = vunpack.c.l.b16 %v11329
  %v11370 = vunpack.c.l.b16 %v11330
  %v11371 = vunpack.c.l.b16 %v11331
  %v11372 = vunpack.c.l.b16 %v11332
  %v11373 = vunpack.c.l.b16 %v11333
  %v11374 = vunpack.c.l.b16 %v11334
  %v11375 = vunpack.c.l.b16 %v11335
  %v11376 = vpack.c.b16 %v11365, %v11364
  %v11377 = vpack.c.b16 %v11367, %v11366
  %v11378 = vpack.c.b16 %v11369, %v11368
  %v11379 = vpack.c.b16 %v11371, %v11370
  %v11380 = vpack.c.b16 %v11373, %v11372
  %v11381 = vpack.c.b16 %v11375, %v11374
  %v11404 = vunpack.c.l.b16 %v11336
  %v11405 = vunpack.c.l.b16 %v11337
  %v11406 = vunpack.c.l.b16 %v11338
  %v11407 = vunpack.c.l.b16 %v11339
  %v11408 = vunpack.c.l.b16 %v11340
  %v11409 = vunpack.c.l.b16 %v11341
  %v11410 = vunpack.c.l.b16 %v11342
  %v11411 = vunpack.c.l.b16 %v11343
  %v11412 = vunpack.c.l.b16 %v11344
  %v11413 = vunpack.c.l.b16 %v11345
  %v11414 = vunpack.c.l.b16 %v11346
  %v11415 = vunpack.c.l.b16 %v11347
  %v11416 = vunpack.c.l.b16 %v11348
  %v11417 = vunpack.c.l.b16 %v11349
  %v11418 = vunpack.c.l.b16 %v11350
  %v11419 = vunpack.c.l.b16 %v11351
  %v11420 = vpack.c.b16 %v11405, %v11404
  %v11421 = vpack.c.b16 %v11407, %v11406
  %v11422 = vpack.c.b16 %v11409, %v11408
  %v11423 = vpack.c.b16 %v11411, %v11410
  %v11424 = vpack.c.b16 %v11413, %v11412
  %v11425 = vpack.c.b16 %v11415, %v11414
  %v11426 = vpack.c.b16 %v11417, %v11416
  %v11427 = vpack.c.b16 %v11419, %v11418
  %11436 = vmatpush.bf16.msra.mxu0 %v11427
  %11437 = vmatpush.bf16.msra.mxu0 %v11426
  %11438 = vmatpush.bf16.msra.mxu0 %v11425
  %11439 = vmatpush.bf16.msra.mxu0 %v11424
  %11440 = vmatpush.bf16.msra.mxu0 %v11423
  %11441 = vmatpush.bf16.msra.mxu0 %v11422
  %11442 = vmatpush.bf16.msra.mxu0 %v11421
  %11443 = vmatpush.bf16.msra.mxu0 %v11420
  %11444 = vmatmul.bf16.gmra.mxu0 %v11376
  %v11445 = vpop.f32.mrf.mxu0
  %v11446 = vadd.f32 0.0, %v11445
  %v11447 = vpop.f32.mrf.mxu0
  %v11448 = vadd.f32 0.0, %v11447
  %11449 = vmatmul.bf16.gmra.mxu0 %v11377
  %v11450 = vpop.f32.mrf.mxu0
  %v11451 = vadd.f32 0.0, %v11450
  %v11452 = vpop.f32.mrf.mxu0
  %v11453 = vadd.f32 0.0, %v11452
  %11454 = vmatmul.bf16.gmra.mxu0 %v11378
  %v11455 = vpop.f32.mrf.mxu0
  %v11456 = vadd.f32 0.0, %v11455
  %v11457 = vpop.f32.mrf.mxu0
  %v11458 = vadd.f32 0.0, %v11457
  %11459 = vmatmul.bf16.gmra.mxu0 %v11379
  %v11460 = vpop.f32.mrf.mxu0
  %v11461 = vadd.f32 0.0, %v11460
  %v11462 = vpop.f32.mrf.mxu0
  %v11463 = vadd.f32 0.0, %v11462
  %11464 = vmatmul.bf16.gmra.mxu0 %v11380
  %v11465 = vpop.f32.mrf.mxu0
  %v11466 = vadd.f32 0.0, %v11465
  %v11467 = vpop.f32.mrf.mxu0
  %v11468 = vadd.f32 0.0, %v11467
  %11469 = vmatmul.bf16.gmra.mxu0 %v11381
  %v11470 = vpop.f32.mrf.mxu0
  %v11471 = vadd.f32 0.0, %v11470
  %v11472 = vpop.f32.mrf.mxu0
  %v11473 = vadd.f32 0.0, %v11472
  %11474 = vdwg.mxu0
  %v11475 = vperm.slane %v39, 3
  %v11476 = vadd.f32 %v11446, %v11475
  %v11477 = vadd.f32 %v11448, %v11475
  %v11478 = vadd.f32 %v11451, %v11475
  %v11479 = vadd.f32 %v11453, %v11475
  %v11480 = vadd.f32 %v11456, %v11475
  %v11481 = vadd.f32 %v11458, %v11475
  %v11482 = vadd.f32 %v11461, %v11475
  %v11483 = vadd.f32 %v11463, %v11475
  %v11484 = vadd.f32 %v11466, %v11475
  %v11485 = vadd.f32 %v11468, %v11475
  %v11486 = vadd.f32 %v11471, %v11475
  %v11487 = vadd.f32 %v11473, %v11475
  %v11488 = vsel %vm1668, %v11476, 0.0
  %11489 = vadd.xlane.f32.xlu0 %v11488
  %v11490 = vpop.xlane.xlu0 %11489
  %v11491 = vsel %vm1668, %v11477, 0.0
  %11492 = vadd.xlane.f32.xlu0 %v11491
  %v11493 = vpop.xlane.xlu0 %11492
  %v11494 = vsel %vm1668, %v11478, 0.0
  %11495 = vadd.xlane.f32.xlu0 %v11494
  %v11496 = vpop.xlane.xlu0 %11495
  %v11497 = vsel %vm1668, %v11479, 0.0
  %11498 = vadd.xlane.f32.xlu0 %v11497
  %v11499 = vpop.xlane.xlu0 %11498
  %v11500 = vsel %vm1668, %v11480, 0.0
  %11501 = vadd.xlane.f32.xlu0 %v11500
  %v11502 = vpop.xlane.xlu0 %11501
  %v11503 = vsel %vm1668, %v11481, 0.0
  %11504 = vadd.xlane.f32.xlu0 %v11503
  %v11505 = vpop.xlane.xlu0 %11504
  %v11506 = vsel %vm1668, %v11482, 0.0
  %11507 = vadd.xlane.f32.xlu0 %v11506
  %v11508 = vpop.xlane.xlu0 %11507
  %v11509 = vsel %vm1668, %v11483, 0.0
  %11510 = vadd.xlane.f32.xlu0 %v11509
  %v11511 = vpop.xlane.xlu0 %11510
  %v11512 = vsel %vm1668, %v11484, 0.0
  %11513 = vadd.xlane.f32.xlu0 %v11512
  %v11514 = vpop.xlane.xlu0 %11513
  %v11515 = vsel %vm1668, %v11485, 0.0
  %11516 = vadd.xlane.f32.xlu0 %v11515
  %v11517 = vpop.xlane.xlu0 %11516
  %v11518 = vsel %vm1668, %v11486, 0.0
  %11519 = vadd.xlane.f32.xlu0 %v11518
  %v11520 = vpop.xlane.xlu0 %11519
  %v11521 = vsel %vm1668, %v11487, 0.0
  %11522 = vadd.xlane.f32.xlu0 %v11521
  %v11523 = vpop.xlane.xlu0 %11522
  %v11524 = vmul.f32 %v11490, %v9989
  %v11525 = vmul.f32 %v11493, %v9989
  %v11526 = vmul.f32 %v11496, %v9989
  %v11527 = vmul.f32 %v11499, %v9989
  %v11528 = vmul.f32 %v11502, %v9989
  %v11529 = vmul.f32 %v11505, %v9989
  %v11530 = vmul.f32 %v11508, %v9989
  %v11531 = vmul.f32 %v11511, %v9989
  %v11532 = vmul.f32 %v11514, %v9989
  %v11533 = vmul.f32 %v11517, %v9989
  %v11534 = vmul.f32 %v11520, %v9989
  %v11535 = vmul.f32 %v11523, %v9989
  %v11536 = vsub.f32 %v11476, %v11524
  %v11537 = vsub.f32 %v11477, %v11525
  %v11538 = vsub.f32 %v11478, %v11526
  %v11539 = vsub.f32 %v11479, %v11527
  %v11540 = vsub.f32 %v11480, %v11528
  %v11541 = vsub.f32 %v11481, %v11529
  %v11542 = vsub.f32 %v11482, %v11530
  %v11543 = vsub.f32 %v11483, %v11531
  %v11544 = vsub.f32 %v11484, %v11532
  %v11545 = vsub.f32 %v11485, %v11533
  %v11546 = vsub.f32 %v11486, %v11534
  %v11547 = vsub.f32 %v11487, %v11535
  %v11548 = vmul.f32 %v11536, %v11536
  %v11549 = vmul.f32 %v11537, %v11537
  %v11550 = vmul.f32 %v11538, %v11538
  %v11551 = vmul.f32 %v11539, %v11539
  %v11552 = vmul.f32 %v11540, %v11540
  %v11553 = vmul.f32 %v11541, %v11541
  %v11554 = vmul.f32 %v11542, %v11542
  %v11555 = vmul.f32 %v11543, %v11543
  %v11556 = vmul.f32 %v11544, %v11544
  %v11557 = vmul.f32 %v11545, %v11545
  %v11558 = vmul.f32 %v11546, %v11546
  %v11559 = vmul.f32 %v11547, %v11547
  %v11560 = vsel %vm1668, %v11548, 0.0
  %11561 = vadd.xlane.f32.xlu0 %v11560
  %v11562 = vpop.xlane.xlu0 %11561
  %v11563 = vsel %vm1668, %v11549, 0.0
  %11564 = vadd.xlane.f32.xlu0 %v11563
  %v11565 = vpop.xlane.xlu0 %11564
  %v11566 = vsel %vm1668, %v11550, 0.0
  %11567 = vadd.xlane.f32.xlu0 %v11566
  %v11568 = vpop.xlane.xlu0 %11567
  %v11569 = vsel %vm1668, %v11551, 0.0
  %11570 = vadd.xlane.f32.xlu0 %v11569
  %v11571 = vpop.xlane.xlu0 %11570
  %v11572 = vsel %vm1668, %v11552, 0.0
  %11573 = vadd.xlane.f32.xlu0 %v11572
  %v11574 = vpop.xlane.xlu0 %11573
  %v11575 = vsel %vm1668, %v11553, 0.0
  %11576 = vadd.xlane.f32.xlu0 %v11575
  %v11577 = vpop.xlane.xlu0 %11576
  %v11578 = vsel %vm1668, %v11554, 0.0
  %11579 = vadd.xlane.f32.xlu0 %v11578
  %v11580 = vpop.xlane.xlu0 %11579
  %v11581 = vsel %vm1668, %v11555, 0.0
  %11582 = vadd.xlane.f32.xlu0 %v11581
  %v11583 = vpop.xlane.xlu0 %11582
  %v11584 = vsel %vm1668, %v11556, 0.0
  %11585 = vadd.xlane.f32.xlu0 %v11584
  %v11586 = vpop.xlane.xlu0 %11585
  %v11587 = vsel %vm1668, %v11557, 0.0
  %11588 = vadd.xlane.f32.xlu0 %v11587
  %v11589 = vpop.xlane.xlu0 %11588
  %v11590 = vsel %vm1668, %v11558, 0.0
  %11591 = vadd.xlane.f32.xlu0 %v11590
  %v11592 = vpop.xlane.xlu0 %11591
  %v11593 = vsel %vm1668, %v11559, 0.0
  %11594 = vadd.xlane.f32.xlu0 %v11593
  %v11595 = vpop.xlane.xlu0 %11594
  %v11596 = vmul.f32 %v11562, %v9989
  %v11597 = vmul.f32 %v11565, %v9989
  %v11598 = vmul.f32 %v11568, %v9989
  %v11599 = vmul.f32 %v11571, %v9989
  %v11600 = vmul.f32 %v11574, %v9989
  %v11601 = vmul.f32 %v11577, %v9989
  %v11602 = vmul.f32 %v11580, %v9989
  %v11603 = vmul.f32 %v11583, %v9989
  %v11604 = vmul.f32 %v11586, %v9989
  %v11605 = vmul.f32 %v11589, %v9989
  %v11606 = vmul.f32 %v11592, %v9989
  %v11607 = vmul.f32 %v11595, %v9989
  %v11608 = vadd.f32 %v11596, 1e-05
  %v11609 = vadd.f32 %v11597, 1e-05
  %v11610 = vadd.f32 %v11598, 1e-05
  %v11611 = vadd.f32 %v11599, 1e-05
  %v11612 = vadd.f32 %v11600, 1e-05
  %v11613 = vadd.f32 %v11601, 1e-05
  %v11614 = vadd.f32 %v11602, 1e-05
  %v11615 = vadd.f32 %v11603, 1e-05
  %v11616 = vadd.f32 %v11604, 1e-05
  %v11617 = vadd.f32 %v11605, 1e-05
  %v11618 = vadd.f32 %v11606, 1e-05
  %v11619 = vadd.f32 %v11607, 1e-05
  %v11620 = vrsqrt.pop %v11608
  %v11621 = vmul.f32 %v11620, %v11608
  %v11622 = vmul.f32 %v11621, %v11620
  %v11623 = vmul.f32 0.5, %v11622
  %v11624 = vsub.f32 1.5, %v11623
  %v11625 = vmul.f32 %v11620, %v11624
  %vm11626 = vweird.f32 %v11608
  %vm11627 = vweird.f32 %v11620
  %vm11628 = vmor %vm11626, %vm11627
  %v11629 = vsel %vm11628, %v11620, %v11625
  %v11630 = vrsqrt.pop %v11609
  %v11631 = vmul.f32 %v11630, %v11609
  %v11632 = vmul.f32 %v11631, %v11630
  %v11633 = vmul.f32 0.5, %v11632
  %v11634 = vsub.f32 1.5, %v11633
  %v11635 = vmul.f32 %v11630, %v11634
  %vm11636 = vweird.f32 %v11609
  %vm11637 = vweird.f32 %v11630
  %vm11638 = vmor %vm11636, %vm11637
  %v11639 = vsel %vm11638, %v11630, %v11635
  %v11640 = vrsqrt.pop %v11610
  %v11641 = vmul.f32 %v11640, %v11610
  %v11642 = vmul.f32 %v11641, %v11640
  %v11643 = vmul.f32 0.5, %v11642
  %v11644 = vsub.f32 1.5, %v11643
  %v11645 = vmul.f32 %v11640, %v11644
  %vm11646 = vweird.f32 %v11610
  %vm11647 = vweird.f32 %v11640
  %vm11648 = vmor %vm11646, %vm11647
  %v11649 = vsel %vm11648, %v11640, %v11645
  %v11650 = vrsqrt.pop %v11611
  %v11651 = vmul.f32 %v11650, %v11611
  %v11652 = vmul.f32 %v11651, %v11650
  %v11653 = vmul.f32 0.5, %v11652
  %v11654 = vsub.f32 1.5, %v11653
  %v11655 = vmul.f32 %v11650, %v11654
  %vm11656 = vweird.f32 %v11611
  %vm11657 = vweird.f32 %v11650
  %vm11658 = vmor %vm11656, %vm11657
  %v11659 = vsel %vm11658, %v11650, %v11655
  %v11660 = vrsqrt.pop %v11612
  %v11661 = vmul.f32 %v11660, %v11612
  %v11662 = vmul.f32 %v11661, %v11660
  %v11663 = vmul.f32 0.5, %v11662
  %v11664 = vsub.f32 1.5, %v11663
  %v11665 = vmul.f32 %v11660, %v11664
  %vm11666 = vweird.f32 %v11612
  %vm11667 = vweird.f32 %v11660
  %vm11668 = vmor %vm11666, %vm11667
  %v11669 = vsel %vm11668, %v11660, %v11665
  %v11670 = vrsqrt.pop %v11613
  %v11671 = vmul.f32 %v11670, %v11613
  %v11672 = vmul.f32 %v11671, %v11670
  %v11673 = vmul.f32 0.5, %v11672
  %v11674 = vsub.f32 1.5, %v11673
  %v11675 = vmul.f32 %v11670, %v11674
  %vm11676 = vweird.f32 %v11613
  %vm11677 = vweird.f32 %v11670
  %vm11678 = vmor %vm11676, %vm11677
  %v11679 = vsel %vm11678, %v11670, %v11675
  %v11680 = vrsqrt.pop %v11614
  %v11681 = vmul.f32 %v11680, %v11614
  %v11682 = vmul.f32 %v11681, %v11680
  %v11683 = vmul.f32 0.5, %v11682
  %v11684 = vsub.f32 1.5, %v11683
  %v11685 = vmul.f32 %v11680, %v11684
  %vm11686 = vweird.f32 %v11614
  %vm11687 = vweird.f32 %v11680
  %vm11688 = vmor %vm11686, %vm11687
  %v11689 = vsel %vm11688, %v11680, %v11685
  %v11690 = vrsqrt.pop %v11615
  %v11691 = vmul.f32 %v11690, %v11615
  %v11692 = vmul.f32 %v11691, %v11690
  %v11693 = vmul.f32 0.5, %v11692
  %v11694 = vsub.f32 1.5, %v11693
  %v11695 = vmul.f32 %v11690, %v11694
  %vm11696 = vweird.f32 %v11615
  %vm11697 = vweird.f32 %v11690
  %vm11698 = vmor %vm11696, %vm11697
  %v11699 = vsel %vm11698, %v11690, %v11695
  %v11700 = vrsqrt.pop %v11616
  %v11701 = vmul.f32 %v11700, %v11616
  %v11702 = vmul.f32 %v11701, %v11700
  %v11703 = vmul.f32 0.5, %v11702
  %v11704 = vsub.f32 1.5, %v11703
  %v11705 = vmul.f32 %v11700, %v11704
  %vm11706 = vweird.f32 %v11616
  %vm11707 = vweird.f32 %v11700
  %vm11708 = vmor %vm11706, %vm11707
  %v11709 = vsel %vm11708, %v11700, %v11705
  %v11710 = vrsqrt.pop %v11617
  %v11711 = vmul.f32 %v11710, %v11617
  %v11712 = vmul.f32 %v11711, %v11710
  %v11713 = vmul.f32 0.5, %v11712
  %v11714 = vsub.f32 1.5, %v11713
  %v11715 = vmul.f32 %v11710, %v11714
  %vm11716 = vweird.f32 %v11617
  %vm11717 = vweird.f32 %v11710
  %vm11718 = vmor %vm11716, %vm11717
  %v11719 = vsel %vm11718, %v11710, %v11715
  %v11720 = vrsqrt.pop %v11618
  %v11721 = vmul.f32 %v11720, %v11618
  %v11722 = vmul.f32 %v11721, %v11720
  %v11723 = vmul.f32 0.5, %v11722
  %v11724 = vsub.f32 1.5, %v11723
  %v11725 = vmul.f32 %v11720, %v11724
  %vm11726 = vweird.f32 %v11618
  %vm11727 = vweird.f32 %v11720
  %vm11728 = vmor %vm11726, %vm11727
  %v11729 = vsel %vm11728, %v11720, %v11725
  %v11730 = vrsqrt.pop %v11619
  %v11731 = vmul.f32 %v11730, %v11619
  %v11732 = vmul.f32 %v11731, %v11730
  %v11733 = vmul.f32 0.5, %v11732
  %v11734 = vsub.f32 1.5, %v11733
  %v11735 = vmul.f32 %v11730, %v11734
  %vm11736 = vweird.f32 %v11619
  %vm11737 = vweird.f32 %v11730
  %vm11738 = vmor %vm11736, %vm11737
  %v11739 = vsel %vm11738, %v11730, %v11735
  %v11740 = vmul.f32 %v11536, %v11629
  %v11741 = vmul.f32 %v11537, %v11639
  %v11742 = vmul.f32 %v11538, %v11649
  %v11743 = vmul.f32 %v11539, %v11659
  %v11744 = vmul.f32 %v11540, %v11669
  %v11745 = vmul.f32 %v11541, %v11679
  %v11746 = vmul.f32 %v11542, %v11689
  %v11747 = vmul.f32 %v11543, %v11699
  %v11748 = vmul.f32 %v11544, %v11709
  %v11749 = vmul.f32 %v11545, %v11719
  %v11750 = vmul.f32 %v11546, %v11729
  %v11751 = vmul.f32 %v11547, %v11739
  %v11752 = vperm.slane %v39, 5
  %v11753 = vmul.f32 %v11740, %v11752
  %v11754 = vmul.f32 %v11741, %v11752
  %v11755 = vmul.f32 %v11742, %v11752
  %v11756 = vmul.f32 %v11743, %v11752
  %v11757 = vmul.f32 %v11744, %v11752
  %v11758 = vmul.f32 %v11745, %v11752
  %v11759 = vmul.f32 %v11746, %v11752
  %v11760 = vmul.f32 %v11747, %v11752
  %v11761 = vmul.f32 %v11748, %v11752
  %v11762 = vmul.f32 %v11749, %v11752
  %v11763 = vmul.f32 %v11750, %v11752
  %v11764 = vmul.f32 %v11751, %v11752
  %v11765 = vperm.slane %v39, 6
  %v11766 = vadd.f32 %v11753, %v11765
  %v11767 = vadd.f32 %v11754, %v11765
  %v11768 = vadd.f32 %v11755, %v11765
  %v11769 = vadd.f32 %v11756, %v11765
  %v11770 = vadd.f32 %v11757, %v11765
  %v11771 = vadd.f32 %v11758, %v11765
  %v11772 = vadd.f32 %v11759, %v11765
  %v11773 = vadd.f32 %v11760, %v11765
  %v11774 = vadd.f32 %v11761, %v11765
  %v11775 = vadd.f32 %v11762, %v11765
  %v11776 = vadd.f32 %v11763, %v11765
  %v11777 = vadd.f32 %v11764, %v11765
  %v11778 = vperm.slane %v39, 4
  %11780 = vrot.lane.b32.xlu0 %v11778, 32
  %v11781 = vpop.permute.xlu0 %11780
  %v11783 = vadd.f32 %v11446, %v11781
  %v11784 = vadd.f32 %v11448, %v11781
  %v11785 = vadd.f32 %v11451, %v11781
  %v11786 = vadd.f32 %v11453, %v11781
  %v11787 = vadd.f32 %v11456, %v11781
  %v11788 = vadd.f32 %v11458, %v11781
  %v11789 = vadd.f32 %v11461, %v11781
  %v11790 = vadd.f32 %v11463, %v11781
  %v11791 = vadd.f32 %v11466, %v11781
  %v11792 = vadd.f32 %v11468, %v11781
  %v11793 = vadd.f32 %v11471, %v11781
  %v11794 = vadd.f32 %v11473, %v11781
  %11807 = vrot.lane.b32.xlu0 %v11783, 96
  %v11808 = vpop.permute.xlu0 %11807
  %11809 = vrot.lane.b32.xlu0 %v11784, 96
  %v11810 = vpop.permute.xlu0 %11809
  %11811 = vrot.lane.b32.xlu0 %v11785, 96
  %v11812 = vpop.permute.xlu0 %11811
  %11813 = vrot.lane.b32.xlu0 %v11786, 96
  %v11814 = vpop.permute.xlu0 %11813
  %11815 = vrot.lane.b32.xlu0 %v11787, 96
  %v11816 = vpop.permute.xlu0 %11815
  %11817 = vrot.lane.b32.xlu0 %v11788, 96
  %v11818 = vpop.permute.xlu0 %11817
  %11819 = vrot.lane.b32.xlu0 %v11789, 96
  %v11820 = vpop.permute.xlu0 %11819
  %11821 = vrot.lane.b32.xlu0 %v11790, 96
  %v11822 = vpop.permute.xlu0 %11821
  %11823 = vrot.lane.b32.xlu0 %v11791, 96
  %v11824 = vpop.permute.xlu0 %11823
  %11825 = vrot.lane.b32.xlu0 %v11792, 96
  %v11826 = vpop.permute.xlu0 %11825
  %11827 = vrot.lane.b32.xlu0 %v11793, 96
  %v11828 = vpop.permute.xlu0 %11827
  %11829 = vrot.lane.b32.xlu0 %v11794, 96
  %v11830 = vpop.permute.xlu0 %11829
  %v11843 = vsel %vm1668, %v11808, 0.0
  %11844 = vadd.xlane.f32.xlu0 %v11843
  %v11845 = vpop.xlane.xlu0 %11844
  %v11846 = vsel %vm1668, %v11810, 0.0
  %11847 = vadd.xlane.f32.xlu0 %v11846
  %v11848 = vpop.xlane.xlu0 %11847
  %v11849 = vsel %vm1668, %v11812, 0.0
  %11850 = vadd.xlane.f32.xlu0 %v11849
  %v11851 = vpop.xlane.xlu0 %11850
  %v11852 = vsel %vm1668, %v11814, 0.0
  %11853 = vadd.xlane.f32.xlu0 %v11852
  %v11854 = vpop.xlane.xlu0 %11853
  %v11855 = vsel %vm1668, %v11816, 0.0
  %11856 = vadd.xlane.f32.xlu0 %v11855
  %v11857 = vpop.xlane.xlu0 %11856
  %v11858 = vsel %vm1668, %v11818, 0.0
  %11859 = vadd.xlane.f32.xlu0 %v11858
  %v11860 = vpop.xlane.xlu0 %11859
  %v11861 = vsel %vm1668, %v11820, 0.0
  %11862 = vadd.xlane.f32.xlu0 %v11861
  %v11863 = vpop.xlane.xlu0 %11862
  %v11864 = vsel %vm1668, %v11822, 0.0
  %11865 = vadd.xlane.f32.xlu0 %v11864
  %v11866 = vpop.xlane.xlu0 %11865
  %v11867 = vsel %vm1668, %v11824, 0.0
  %11868 = vadd.xlane.f32.xlu0 %v11867
  %v11869 = vpop.xlane.xlu0 %11868
  %v11870 = vsel %vm1668, %v11826, 0.0
  %11871 = vadd.xlane.f32.xlu0 %v11870
  %v11872 = vpop.xlane.xlu0 %11871
  %v11873 = vsel %vm1668, %v11828, 0.0
  %11874 = vadd.xlane.f32.xlu0 %v11873
  %v11875 = vpop.xlane.xlu0 %11874
  %v11876 = vsel %vm1668, %v11830, 0.0
  %11877 = vadd.xlane.f32.xlu0 %v11876
  %v11878 = vpop.xlane.xlu0 %11877
  %v11879 = vmul.f32 %v11845, %v9989
  %v11880 = vmul.f32 %v11848, %v9989
  %v11881 = vmul.f32 %v11851, %v9989
  %v11882 = vmul.f32 %v11854, %v9989
  %v11883 = vmul.f32 %v11857, %v9989
  %v11884 = vmul.f32 %v11860, %v9989
  %v11885 = vmul.f32 %v11863, %v9989
  %v11886 = vmul.f32 %v11866, %v9989
  %v11887 = vmul.f32 %v11869, %v9989
  %v11888 = vmul.f32 %v11872, %v9989
  %v11889 = vmul.f32 %v11875, %v9989
  %v11890 = vmul.f32 %v11878, %v9989
  %v11891 = vsub.f32 %v11783, %v11879
  %v11892 = vsub.f32 %v11784, %v11880
  %v11893 = vsub.f32 %v11785, %v11881
  %v11894 = vsub.f32 %v11786, %v11882
  %v11895 = vsub.f32 %v11787, %v11883
  %v11896 = vsub.f32 %v11788, %v11884
  %v11897 = vsub.f32 %v11789, %v11885
  %v11898 = vsub.f32 %v11790, %v11886
  %v11899 = vsub.f32 %v11791, %v11887
  %v11900 = vsub.f32 %v11792, %v11888
  %v11901 = vsub.f32 %v11793, %v11889
  %v11902 = vsub.f32 %v11794, %v11890
  %v11903 = vmul.f32 %v11891, %v11891
  %v11904 = vmul.f32 %v11892, %v11892
  %v11905 = vmul.f32 %v11893, %v11893
  %v11906 = vmul.f32 %v11894, %v11894
  %v11907 = vmul.f32 %v11895, %v11895
  %v11908 = vmul.f32 %v11896, %v11896
  %v11909 = vmul.f32 %v11897, %v11897
  %v11910 = vmul.f32 %v11898, %v11898
  %v11911 = vmul.f32 %v11899, %v11899
  %v11912 = vmul.f32 %v11900, %v11900
  %v11913 = vmul.f32 %v11901, %v11901
  %v11914 = vmul.f32 %v11902, %v11902
  %11927 = vrot.lane.b32.xlu0 %v11903, 96
  %v11928 = vpop.permute.xlu0 %11927
  %11929 = vrot.lane.b32.xlu0 %v11904, 96
  %v11930 = vpop.permute.xlu0 %11929
  %11931 = vrot.lane.b32.xlu0 %v11905, 96
  %v11932 = vpop.permute.xlu0 %11931
  %11933 = vrot.lane.b32.xlu0 %v11906, 96
  %v11934 = vpop.permute.xlu0 %11933
  %11935 = vrot.lane.b32.xlu0 %v11907, 96
  %v11936 = vpop.permute.xlu0 %11935
  %11937 = vrot.lane.b32.xlu0 %v11908, 96
  %v11938 = vpop.permute.xlu0 %11937
  %11939 = vrot.lane.b32.xlu0 %v11909, 96
  %v11940 = vpop.permute.xlu0 %11939
  %11941 = vrot.lane.b32.xlu0 %v11910, 96
  %v11942 = vpop.permute.xlu0 %11941
  %11943 = vrot.lane.b32.xlu0 %v11911, 96
  %v11944 = vpop.permute.xlu0 %11943
  %11945 = vrot.lane.b32.xlu0 %v11912, 96
  %v11946 = vpop.permute.xlu0 %11945
  %11947 = vrot.lane.b32.xlu0 %v11913, 96
  %v11948 = vpop.permute.xlu0 %11947
  %11949 = vrot.lane.b32.xlu0 %v11914, 96
  %v11950 = vpop.permute.xlu0 %11949
  %v11963 = vsel %vm1668, %v11928, 0.0
  %11964 = vadd.xlane.f32.xlu0 %v11963
  %v11965 = vpop.xlane.xlu0 %11964
  %v11966 = vsel %vm1668, %v11930, 0.0
  %11967 = vadd.xlane.f32.xlu0 %v11966
  %v11968 = vpop.xlane.xlu0 %11967
  %v11969 = vsel %vm1668, %v11932, 0.0
  %11970 = vadd.xlane.f32.xlu0 %v11969
  %v11971 = vpop.xlane.xlu0 %11970
  %v11972 = vsel %vm1668, %v11934, 0.0
  %11973 = vadd.xlane.f32.xlu0 %v11972
  %v11974 = vpop.xlane.xlu0 %11973
  %v11975 = vsel %vm1668, %v11936, 0.0
  %11976 = vadd.xlane.f32.xlu0 %v11975
  %v11977 = vpop.xlane.xlu0 %11976
  %v11978 = vsel %vm1668, %v11938, 0.0
  %11979 = vadd.xlane.f32.xlu0 %v11978
  %v11980 = vpop.xlane.xlu0 %11979
  %v11981 = vsel %vm1668, %v11940, 0.0
  %11982 = vadd.xlane.f32.xlu0 %v11981
  %v11983 = vpop.xlane.xlu0 %11982
  %v11984 = vsel %vm1668, %v11942, 0.0
  %11985 = vadd.xlane.f32.xlu0 %v11984
  %v11986 = vpop.xlane.xlu0 %11985
  %v11987 = vsel %vm1668, %v11944, 0.0
  %11988 = vadd.xlane.f32.xlu0 %v11987
  %v11989 = vpop.xlane.xlu0 %11988
  %v11990 = vsel %vm1668, %v11946, 0.0
  %11991 = vadd.xlane.f32.xlu0 %v11990
  %v11992 = vpop.xlane.xlu0 %11991
  %v11993 = vsel %vm1668, %v11948, 0.0
  %11994 = vadd.xlane.f32.xlu0 %v11993
  %v11995 = vpop.xlane.xlu0 %11994
  %v11996 = vsel %vm1668, %v11950, 0.0
  %11997 = vadd.xlane.f32.xlu0 %v11996
  %v11998 = vpop.xlane.xlu0 %11997
  %v11999 = vmul.f32 %v11965, %v9989
  %v12000 = vmul.f32 %v11968, %v9989
  %v12001 = vmul.f32 %v11971, %v9989
  %v12002 = vmul.f32 %v11974, %v9989
  %v12003 = vmul.f32 %v11977, %v9989
  %v12004 = vmul.f32 %v11980, %v9989
  %v12005 = vmul.f32 %v11983, %v9989
  %v12006 = vmul.f32 %v11986, %v9989
  %v12007 = vmul.f32 %v11989, %v9989
  %v12008 = vmul.f32 %v11992, %v9989
  %v12009 = vmul.f32 %v11995, %v9989
  %v12010 = vmul.f32 %v11998, %v9989
  %v12011 = vadd.f32 %v11999, 1e-05
  %v12012 = vadd.f32 %v12000, 1e-05
  %v12013 = vadd.f32 %v12001, 1e-05
  %v12014 = vadd.f32 %v12002, 1e-05
  %v12015 = vadd.f32 %v12003, 1e-05
  %v12016 = vadd.f32 %v12004, 1e-05
  %v12017 = vadd.f32 %v12005, 1e-05
  %v12018 = vadd.f32 %v12006, 1e-05
  %v12019 = vadd.f32 %v12007, 1e-05
  %v12020 = vadd.f32 %v12008, 1e-05
  %v12021 = vadd.f32 %v12009, 1e-05
  %v12022 = vadd.f32 %v12010, 1e-05
  %v12023 = vrsqrt.pop %v12011
  %v12024 = vmul.f32 %v12023, %v12011
  %v12025 = vmul.f32 %v12024, %v12023
  %v12026 = vmul.f32 0.5, %v12025
  %v12027 = vsub.f32 1.5, %v12026
  %v12028 = vmul.f32 %v12023, %v12027
  %vm12029 = vweird.f32 %v12011
  %vm12030 = vweird.f32 %v12023
  %vm12031 = vmor %vm12029, %vm12030
  %v12032 = vsel %vm12031, %v12023, %v12028
  %v12033 = vrsqrt.pop %v12012
  %v12034 = vmul.f32 %v12033, %v12012
  %v12035 = vmul.f32 %v12034, %v12033
  %v12036 = vmul.f32 0.5, %v12035
  %v12037 = vsub.f32 1.5, %v12036
  %v12038 = vmul.f32 %v12033, %v12037
  %vm12039 = vweird.f32 %v12012
  %vm12040 = vweird.f32 %v12033
  %vm12041 = vmor %vm12039, %vm12040
  %v12042 = vsel %vm12041, %v12033, %v12038
  %v12043 = vrsqrt.pop %v12013
  %v12044 = vmul.f32 %v12043, %v12013
  %v12045 = vmul.f32 %v12044, %v12043
  %v12046 = vmul.f32 0.5, %v12045
  %v12047 = vsub.f32 1.5, %v12046
  %v12048 = vmul.f32 %v12043, %v12047
  %vm12049 = vweird.f32 %v12013
  %vm12050 = vweird.f32 %v12043
  %vm12051 = vmor %vm12049, %vm12050
  %v12052 = vsel %vm12051, %v12043, %v12048
  %v12053 = vrsqrt.pop %v12014
  %v12054 = vmul.f32 %v12053, %v12014
  %v12055 = vmul.f32 %v12054, %v12053
  %v12056 = vmul.f32 0.5, %v12055
  %v12057 = vsub.f32 1.5, %v12056
  %v12058 = vmul.f32 %v12053, %v12057
  %vm12059 = vweird.f32 %v12014
  %vm12060 = vweird.f32 %v12053
  %vm12061 = vmor %vm12059, %vm12060
  %v12062 = vsel %vm12061, %v12053, %v12058
  %v12063 = vrsqrt.pop %v12015
  %v12064 = vmul.f32 %v12063, %v12015
  %v12065 = vmul.f32 %v12064, %v12063
  %v12066 = vmul.f32 0.5, %v12065
  %v12067 = vsub.f32 1.5, %v12066
  %v12068 = vmul.f32 %v12063, %v12067
  %vm12069 = vweird.f32 %v12015
  %vm12070 = vweird.f32 %v12063
  %vm12071 = vmor %vm12069, %vm12070
  %v12072 = vsel %vm12071, %v12063, %v12068
  %v12073 = vrsqrt.pop %v12016
  %v12074 = vmul.f32 %v12073, %v12016
  %v12075 = vmul.f32 %v12074, %v12073
  %v12076 = vmul.f32 0.5, %v12075
  %v12077 = vsub.f32 1.5, %v12076
  %v12078 = vmul.f32 %v12073, %v12077
  %vm12079 = vweird.f32 %v12016
  %vm12080 = vweird.f32 %v12073
  %vm12081 = vmor %vm12079, %vm12080
  %v12082 = vsel %vm12081, %v12073, %v12078
  %v12083 = vrsqrt.pop %v12017
  %v12084 = vmul.f32 %v12083, %v12017
  %v12085 = vmul.f32 %v12084, %v12083
  %v12086 = vmul.f32 0.5, %v12085
  %v12087 = vsub.f32 1.5, %v12086
  %v12088 = vmul.f32 %v12083, %v12087
  %vm12089 = vweird.f32 %v12017
  %vm12090 = vweird.f32 %v12083
  %vm12091 = vmor %vm12089, %vm12090
  %v12092 = vsel %vm12091, %v12083, %v12088
  %v12093 = vrsqrt.pop %v12018
  %v12094 = vmul.f32 %v12093, %v12018
  %v12095 = vmul.f32 %v12094, %v12093
  %v12096 = vmul.f32 0.5, %v12095
  %v12097 = vsub.f32 1.5, %v12096
  %v12098 = vmul.f32 %v12093, %v12097
  %vm12099 = vweird.f32 %v12018
  %vm12100 = vweird.f32 %v12093
  %vm12101 = vmor %vm12099, %vm12100
  %v12102 = vsel %vm12101, %v12093, %v12098
  %v12103 = vrsqrt.pop %v12019
  %v12104 = vmul.f32 %v12103, %v12019
  %v12105 = vmul.f32 %v12104, %v12103
  %v12106 = vmul.f32 0.5, %v12105
  %v12107 = vsub.f32 1.5, %v12106
  %v12108 = vmul.f32 %v12103, %v12107
  %vm12109 = vweird.f32 %v12019
  %vm12110 = vweird.f32 %v12103
  %vm12111 = vmor %vm12109, %vm12110
  %v12112 = vsel %vm12111, %v12103, %v12108
  %v12113 = vrsqrt.pop %v12020
  %v12114 = vmul.f32 %v12113, %v12020
  %v12115 = vmul.f32 %v12114, %v12113
  %v12116 = vmul.f32 0.5, %v12115
  %v12117 = vsub.f32 1.5, %v12116
  %v12118 = vmul.f32 %v12113, %v12117
  %vm12119 = vweird.f32 %v12020
  %vm12120 = vweird.f32 %v12113
  %vm12121 = vmor %vm12119, %vm12120
  %v12122 = vsel %vm12121, %v12113, %v12118
  %v12123 = vrsqrt.pop %v12021
  %v12124 = vmul.f32 %v12123, %v12021
  %v12125 = vmul.f32 %v12124, %v12123
  %v12126 = vmul.f32 0.5, %v12125
  %v12127 = vsub.f32 1.5, %v12126
  %v12128 = vmul.f32 %v12123, %v12127
  %vm12129 = vweird.f32 %v12021
  %vm12130 = vweird.f32 %v12123
  %vm12131 = vmor %vm12129, %vm12130
  %v12132 = vsel %vm12131, %v12123, %v12128
  %v12133 = vrsqrt.pop %v12022
  %v12134 = vmul.f32 %v12133, %v12022
  %v12135 = vmul.f32 %v12134, %v12133
  %v12136 = vmul.f32 0.5, %v12135
  %v12137 = vsub.f32 1.5, %v12136
  %v12138 = vmul.f32 %v12133, %v12137
  %vm12139 = vweird.f32 %v12022
  %vm12140 = vweird.f32 %v12133
  %vm12141 = vmor %vm12139, %vm12140
  %v12142 = vsel %vm12141, %v12133, %v12138
  %v12143 = vmul.f32 %v11891, %v12032
  %v12144 = vmul.f32 %v11892, %v12042
  %v12145 = vmul.f32 %v11893, %v12052
  %v12146 = vmul.f32 %v11894, %v12062
  %v12147 = vmul.f32 %v11895, %v12072
  %v12148 = vmul.f32 %v11896, %v12082
  %v12149 = vmul.f32 %v11897, %v12092
  %v12150 = vmul.f32 %v11898, %v12102
  %v12151 = vmul.f32 %v11899, %v12112
  %v12152 = vmul.f32 %v11900, %v12122
  %v12153 = vmul.f32 %v11901, %v12132
  %v12154 = vmul.f32 %v11902, %v12142
  %v12155 = vperm.slane %v39, 7
  %12157 = vrot.lane.b32.xlu0 %v12155, 32
  %v12158 = vpop.permute.xlu0 %12157
  %v12160 = vmul.f32 %v12143, %v12158
  %v12161 = vmul.f32 %v12144, %v12158
  %v12162 = vmul.f32 %v12145, %v12158
  %v12163 = vmul.f32 %v12146, %v12158
  %v12164 = vmul.f32 %v12147, %v12158
  %v12165 = vmul.f32 %v12148, %v12158
  %v12166 = vmul.f32 %v12149, %v12158
  %v12167 = vmul.f32 %v12150, %v12158
  %v12168 = vmul.f32 %v12151, %v12158
  %v12169 = vmul.f32 %v12152, %v12158
  %v12170 = vmul.f32 %v12153, %v12158
  %v12171 = vmul.f32 %v12154, %v12158
  %v12172 = vperm.slane %v40, 0
  %12174 = vrot.lane.b32.xlu0 %v12172, 32
  %v12175 = vpop.permute.xlu0 %12174
  %v12177 = vadd.f32 %v12160, %v12175
  %v12178 = vadd.f32 %v12161, %v12175
  %v12179 = vadd.f32 %v12162, %v12175
  %v12180 = vadd.f32 %v12163, %v12175
  %v12181 = vadd.f32 %v12164, %v12175
  %v12182 = vadd.f32 %v12165, %v12175
  %v12183 = vadd.f32 %v12166, %v12175
  %v12184 = vadd.f32 %v12167, %v12175
  %v12185 = vadd.f32 %v12168, %v12175
  %v12186 = vadd.f32 %v12169, %v12175
  %v12187 = vadd.f32 %v12170, %v12175
  %v12188 = vadd.f32 %v12171, %v12175
  %v12285 = vrot.slane %v11229, 7
  %v12286 = vsel %vm3892, %v12285, %v11228
  %v12287 = vrot.slane %v11230, 6
  %v12288 = vsel %vm3894, %v12287, %v12286
  %v12289 = vrot.slane %v11231, 5
  %v12290 = vsel %vm3896, %v12289, %v12288
  %v12291 = vrot.slane %v11232, 4
  %v12292 = vsel %vm3898, %v12291, %v12290
  %v12293 = vrot.slane %v11233, 3
  %v12294 = vsel %vm3900, %v12293, %v12292
  %v12295 = vrot.slane %v11234, 2
  %v12296 = vsel %vm3902, %v12295, %v12294
  %v12297 = vrot.slane %v11235, 1
  %v12298 = vsel %vm3904, %v12297, %v12296
  %v12299 = vrot.slane %v11237, 7
  %v12300 = vsel %vm3892, %v12299, %v11236
  %v12301 = vrot.slane %v11238, 6
  %v12302 = vsel %vm3894, %v12301, %v12300
  %v12303 = vrot.slane %v11239, 5
  %v12304 = vsel %vm3896, %v12303, %v12302
  %v12305 = vrot.slane %v11240, 4
  %v12306 = vsel %vm3898, %v12305, %v12304
  %v12307 = vrot.slane %v11241, 3
  %v12308 = vsel %vm3900, %v12307, %v12306
  %v12309 = vrot.slane %v11242, 2
  %v12310 = vsel %vm3902, %v12309, %v12308
  %v12311 = vrot.slane %v11243, 1
  %v12312 = vsel %vm3904, %v12311, %v12310
  %v12313 = vrot.slane %v11245, 7
  %v12314 = vsel %vm3892, %v12313, %v11244
  %v12315 = vrot.slane %v11246, 6
  %v12316 = vsel %vm3894, %v12315, %v12314
  %v12317 = vrot.slane %v11247, 5
  %v12318 = vsel %vm3896, %v12317, %v12316
  %v12319 = vrot.slane %v11248, 4
  %v12320 = vsel %vm3898, %v12319, %v12318
  %v12321 = vrot.slane %v11249, 3
  %v12322 = vsel %vm3900, %v12321, %v12320
  %v12323 = vrot.slane %v11250, 2
  %v12324 = vsel %vm3902, %v12323, %v12322
  %v12325 = vrot.slane %v11251, 1
  %v12326 = vsel %vm3904, %v12325, %v12324
  %v12327 = vrot.slane %v11253, 7
  %v12328 = vsel %vm3892, %v12327, %v11252
  %v12329 = vrot.slane %v11254, 6
  %v12330 = vsel %vm3894, %v12329, %v12328
  %v12331 = vrot.slane %v11255, 5
  %v12332 = vsel %vm3896, %v12331, %v12330
  %v12333 = vrot.slane %v11256, 4
  %v12334 = vsel %vm3898, %v12333, %v12332
  %v12335 = vrot.slane %v11257, 3
  %v12336 = vsel %vm3900, %v12335, %v12334
  %v12337 = vrot.slane %v11258, 2
  %v12338 = vsel %vm3902, %v12337, %v12336
  %v12339 = vrot.slane %v11259, 1
  %v12340 = vsel %vm3904, %v12339, %v12338
  %v12341 = vrot.slane %v11261, 7
  %v12342 = vsel %vm3892, %v12341, %v11260
  %v12343 = vrot.slane %v11262, 6
  %v12344 = vsel %vm3894, %v12343, %v12342
  %v12345 = vrot.slane %v11263, 5
  %v12346 = vsel %vm3896, %v12345, %v12344
  %v12347 = vrot.slane %v11264, 4
  %v12348 = vsel %vm3898, %v12347, %v12346
  %v12349 = vrot.slane %v11265, 3
  %v12350 = vsel %vm3900, %v12349, %v12348
  %v12351 = vrot.slane %v11266, 2
  %v12352 = vsel %vm3902, %v12351, %v12350
  %v12353 = vrot.slane %v11267, 1
  %v12354 = vsel %vm3904, %v12353, %v12352
  %v12355 = vrot.slane %v11269, 7
  %v12356 = vsel %vm3892, %v12355, %v11268
  %v12357 = vrot.slane %v11270, 6
  %v12358 = vsel %vm3894, %v12357, %v12356
  %v12359 = vrot.slane %v11271, 5
  %v12360 = vsel %vm3896, %v12359, %v12358
  %v12361 = vrot.slane %v11272, 4
  %v12362 = vsel %vm3898, %v12361, %v12360
  %v12363 = vrot.slane %v11273, 3
  %v12364 = vsel %vm3900, %v12363, %v12362
  %v12365 = vrot.slane %v11274, 2
  %v12366 = vsel %vm3902, %v12365, %v12364
  %v12367 = vrot.slane %v11275, 1
  %v12368 = vsel %vm3904, %v12367, %v12366
  %v12369 = vrot.slane %v11277, 7
  %v12370 = vsel %vm3892, %v12369, %v11276
  %v12371 = vrot.slane %v11278, 6
  %v12372 = vsel %vm3894, %v12371, %v12370
  %v12373 = vrot.slane %v11279, 5
  %v12374 = vsel %vm3896, %v12373, %v12372
  %v12375 = vrot.slane %v11280, 4
  %v12376 = vsel %vm3898, %v12375, %v12374
  %v12377 = vrot.slane %v11281, 3
  %v12378 = vsel %vm3900, %v12377, %v12376
  %v12379 = vrot.slane %v11282, 2
  %v12380 = vsel %vm3902, %v12379, %v12378
  %v12381 = vrot.slane %v11283, 1
  %v12382 = vsel %vm3904, %v12381, %v12380
  %v12383 = vrot.slane %v11285, 7
  %v12384 = vsel %vm3892, %v12383, %v11284
  %v12385 = vrot.slane %v11286, 6
  %v12386 = vsel %vm3894, %v12385, %v12384
  %v12387 = vrot.slane %v11287, 5
  %v12388 = vsel %vm3896, %v12387, %v12386
  %v12389 = vrot.slane %v11288, 4
  %v12390 = vsel %vm3898, %v12389, %v12388
  %v12391 = vrot.slane %v11289, 3
  %v12392 = vsel %vm3900, %v12391, %v12390
  %v12393 = vrot.slane %v11290, 2
  %v12394 = vsel %vm3902, %v12393, %v12392
  %v12395 = vrot.slane %v11291, 1
  %v12396 = vsel %vm3904, %v12395, %v12394
  %v12397 = vrot.slane %v11293, 7
  %v12398 = vsel %vm3892, %v12397, %v11292
  %v12399 = vrot.slane %v11294, 6
  %v12400 = vsel %vm3894, %v12399, %v12398
  %v12401 = vrot.slane %v11295, 5
  %v12402 = vsel %vm3896, %v12401, %v12400
  %v12403 = vrot.slane %v11296, 4
  %v12404 = vsel %vm3898, %v12403, %v12402
  %v12405 = vrot.slane %v11297, 3
  %v12406 = vsel %vm3900, %v12405, %v12404
  %v12407 = vrot.slane %v11298, 2
  %v12408 = vsel %vm3902, %v12407, %v12406
  %v12409 = vrot.slane %v11299, 1
  %v12410 = vsel %vm3904, %v12409, %v12408
  %v12411 = vrot.slane %v11301, 7
  %v12412 = vsel %vm3892, %v12411, %v11300
  %v12413 = vrot.slane %v11302, 6
  %v12414 = vsel %vm3894, %v12413, %v12412
  %v12415 = vrot.slane %v11303, 5
  %v12416 = vsel %vm3896, %v12415, %v12414
  %v12417 = vrot.slane %v11304, 4
  %v12418 = vsel %vm3898, %v12417, %v12416
  %v12419 = vrot.slane %v11305, 3
  %v12420 = vsel %vm3900, %v12419, %v12418
  %v12421 = vrot.slane %v11306, 2
  %v12422 = vsel %vm3902, %v12421, %v12420
  %v12423 = vrot.slane %v11307, 1
  %v12424 = vsel %vm3904, %v12423, %v12422
  %v12425 = vrot.slane %v11309, 7
  %v12426 = vsel %vm3892, %v12425, %v11308
  %v12427 = vrot.slane %v11310, 6
  %v12428 = vsel %vm3894, %v12427, %v12426
  %v12429 = vrot.slane %v11311, 5
  %v12430 = vsel %vm3896, %v12429, %v12428
  %v12431 = vrot.slane %v11312, 4
  %v12432 = vsel %vm3898, %v12431, %v12430
  %v12433 = vrot.slane %v11313, 3
  %v12434 = vsel %vm3900, %v12433, %v12432
  %v12435 = vrot.slane %v11314, 2
  %v12436 = vsel %vm3902, %v12435, %v12434
  %v12437 = vrot.slane %v11315, 1
  %v12438 = vsel %vm3904, %v12437, %v12436
  %v12439 = vrot.slane %v11317, 7
  %v12440 = vsel %vm3892, %v12439, %v11316
  %v12441 = vrot.slane %v11318, 6
  %v12442 = vsel %vm3894, %v12441, %v12440
  %v12443 = vrot.slane %v11319, 5
  %v12444 = vsel %vm3896, %v12443, %v12442
  %v12445 = vrot.slane %v11320, 4
  %v12446 = vsel %vm3898, %v12445, %v12444
  %v12447 = vrot.slane %v11321, 3
  %v12448 = vsel %vm3900, %v12447, %v12446
  %v12449 = vrot.slane %v11322, 2
  %v12450 = vsel %vm3902, %v12449, %v12448
  %v12451 = vrot.slane %v11323, 1
  %v12452 = vsel %vm3904, %v12451, %v12450
  %12477 = vrot.lane.b32.xlu0 %v11766, 32
  %v12478 = vpop.permute.xlu0 %12477
  %12479 = vrot.lane.b32.xlu0 %v11767, 32
  %v12480 = vpop.permute.xlu0 %12479
  %12481 = vrot.lane.b32.xlu0 %v11768, 32
  %v12482 = vpop.permute.xlu0 %12481
  %12483 = vrot.lane.b32.xlu0 %v11769, 32
  %v12484 = vpop.permute.xlu0 %12483
  %12485 = vrot.lane.b32.xlu0 %v11770, 32
  %v12486 = vpop.permute.xlu0 %12485
  %12487 = vrot.lane.b32.xlu0 %v11771, 32
  %v12488 = vpop.permute.xlu0 %12487
  %12489 = vrot.lane.b32.xlu0 %v11772, 32
  %v12490 = vpop.permute.xlu0 %12489
  %12491 = vrot.lane.b32.xlu0 %v11773, 32
  %v12492 = vpop.permute.xlu0 %12491
  %12493 = vrot.lane.b32.xlu0 %v11774, 32
  %v12494 = vpop.permute.xlu0 %12493
  %12495 = vrot.lane.b32.xlu0 %v11775, 32
  %v12496 = vpop.permute.xlu0 %12495
  %12497 = vrot.lane.b32.xlu0 %v11776, 32
  %v12498 = vpop.permute.xlu0 %12497
  %12499 = vrot.lane.b32.xlu0 %v11777, 32
  %v12500 = vpop.permute.xlu0 %12499
  %12525 = vrot.lane.b32.xlu0 %v12177, 32
  %v12526 = vpop.permute.xlu0 %12525
  %12527 = vrot.lane.b32.xlu0 %v12178, 32
  %v12528 = vpop.permute.xlu0 %12527
  %12529 = vrot.lane.b32.xlu0 %v12179, 32
  %v12530 = vpop.permute.xlu0 %12529
  %12531 = vrot.lane.b32.xlu0 %v12180, 32
  %v12532 = vpop.permute.xlu0 %12531
  %12533 = vrot.lane.b32.xlu0 %v12181, 32
  %v12534 = vpop.permute.xlu0 %12533
  %12535 = vrot.lane.b32.xlu0 %v12182, 32
  %v12536 = vpop.permute.xlu0 %12535
  %12537 = vrot.lane.b32.xlu0 %v12183, 32
  %v12538 = vpop.permute.xlu0 %12537
  %12539 = vrot.lane.b32.xlu0 %v12184, 32
  %v12540 = vpop.permute.xlu0 %12539
  %12541 = vrot.lane.b32.xlu0 %v12185, 32
  %v12542 = vpop.permute.xlu0 %12541
  %12543 = vrot.lane.b32.xlu0 %v12186, 32
  %v12544 = vpop.permute.xlu0 %12543
  %12545 = vrot.lane.b32.xlu0 %v12187, 32
  %v12546 = vpop.permute.xlu0 %12545
  %12547 = vrot.lane.b32.xlu0 %v12188, 32
  %v12548 = vpop.permute.xlu0 %12547
  %v12561 = vsel %vm1668, %v12298, %v12478
  %v12562 = vsel %vm1668, %v12312, %v12480
  %v12563 = vsel %vm1668, %v12326, %v12482
  %v12564 = vsel %vm1668, %v12340, %v12484
  %v12565 = vsel %vm1668, %v12354, %v12486
  %v12566 = vsel %vm1668, %v12368, %v12488
  %v12567 = vsel %vm1668, %v12382, %v12490
  %v12568 = vsel %vm1668, %v12396, %v12492
  %v12569 = vsel %vm1668, %v12410, %v12494
  %v12570 = vsel %vm1668, %v12424, %v12496
  %v12571 = vsel %vm1668, %v12438, %v12498
  %v12572 = vsel %vm1668, %v12452, %v12500
  %vm12573 = vcmask 523264
  %v12574 = vsel %vm12573, %v12561, %v12526
  %v12575 = vsel %vm12573, %v12562, %v12528
  %v12576 = vsel %vm12573, %v12563, %v12530
  %v12577 = vsel %vm12573, %v12564, %v12532
  %v12578 = vsel %vm12573, %v12565, %v12534
  %v12579 = vsel %vm12573, %v12566, %v12536
  %v12580 = vsel %vm12573, %v12567, %v12538
  %v12581 = vsel %vm12573, %v12568, %v12540
  %v12582 = vsel %vm12573, %v12569, %v12542
  %v12583 = vsel %vm12573, %v12570, %v12544
  %v12584 = vsel %vm12573, %v12571, %v12546
  %v12585 = vsel %vm12573, %v12572, %v12548
  %vm12586 = vcmask 785408
  %v12587 = vsel %vm12586, %v12574, 0.0
  %v12588 = vsel %vm12586, %v12575, 0.0
  %v12589 = vsel %vm12586, %v12576, 0.0
  %v12590 = vsel %vm12586, %v12577, 0.0
  %v12591 = vsel %vm12586, %v12578, 0.0
  %v12592 = vsel %vm12586, %v12579, 0.0
  %v12593 = vsel %vm12586, %v12580, 0.0
  %v12594 = vsel %vm12586, %v12581, 0.0
  %v12595 = vsel %vm12586, %v12582, 0.0
  %v12596 = vsel %vm12586, %v12583, 0.0
  %v12597 = vsel %vm12586, %v12584, 0.0
  %v12598 = vsel %vm12586, %v12585, 0.0
  %v12599 = vld [vmem:[%s10] sm:$0x3f]
  %v12600 = vpack.c.bf16 %v12592, %v12591
  %v12601 = vpack.c.bf16 %v12594, %v12593
  %v12602 = vpack.c.bf16 %v12596, %v12595
  %v12603 = vpack.c.bf16 %v12598, %v12597
  %v12604 = vld [vmem:[%s8] sm:$0xff]
  %v12605 = vld [vmem:[%s8 + $0x8] sm:$0xf]
  %v12606 = vld [vmem:[%s8 + $0xc] sm:$0xff]
  %v12607 = vld [vmem:[%s8 + $0x14] sm:$0xf]
  %v12608 = vld [vmem:[%s8 + $0x18] sm:$0xff]
  %v12609 = vld [vmem:[%s8 + $0x20] sm:$0xf]
  %v12610 = vld [vmem:[%s8 + $0x24] sm:$0xff]
  %v12611 = vld [vmem:[%s8 + $0x2c] sm:$0xf]
  %v12612 = vld [vmem:[%s8 + $0x30] sm:$0xff]
  %v12613 = vld [vmem:[%s8 + $0x38] sm:$0xf]
  %v12614 = vld [vmem:[%s8 + $0x3c] sm:$0xff]
  %v12615 = vld [vmem:[%s8 + $0x44] sm:$0xf]
  %v12616 = vld [vmem:[%s8 + $0x48] sm:$0xff]
  %v12617 = vld [vmem:[%s8 + $0x50] sm:$0xf]
  %v12618 = vld [vmem:[%s8 + $0x54] sm:$0xff]
  %v12619 = vld [vmem:[%s8 + $0x5c] sm:$0xf]
  %v12620 = vld [vmem:[%s8 + $0x60] sm:$0xff]
  %v12621 = vld [vmem:[%s8 + $0x68] sm:$0xf]
  %v12622 = vld [vmem:[%s8 + $0x6c] sm:$0xff]
  %v12623 = vld [vmem:[%s8 + $0x74] sm:$0xf]
  %v12624 = vld [vmem:[%s8 + $0x78] sm:$0xff]
  %v12625 = vld [vmem:[%s8 + $0x80] sm:$0xf]
  %v12626 = vld [vmem:[%s8 + $0x84] sm:$0xff]
  %v12627 = vld [vmem:[%s8 + $0x8c] sm:$0xf]
  %v12628 = vld [vmem:[%s8 + $0x90] sm:$0xff]
  %v12629 = vld [vmem:[%s8 + $0x98] sm:$0xf]
  %v12630 = vld [vmem:[%s8 + $0x9c] sm:$0xff]
  %v12631 = vld [vmem:[%s8 + $0xa4] sm:$0xf]
  %v12632 = vld [vmem:[%s8 + $0xa8] sm:$0xff]
  %v12633 = vld [vmem:[%s8 + $0xb0] sm:$0xf]
  %v12634 = vld [vmem:[%s8 + $0xb4] sm:$0xff]
  %v12635 = vld [vmem:[%s8 + $0xbc] sm:$0xf]
  %v12637 = vperm.slane %v12599, 0
  %v12638 = vperm.slane %v12599, 2
  %v12639 = vperm.slane %v12599, 4
  %v12643 = vperm.slane %v12637, 0
  %v12644 = vperm.slane %v12638, 0
  %v12645 = vperm.slane %v12639, 0
  %v12678 = vunpack.c.l.b16 %v12604
  %v12679 = vunpack.c.h.b16 %v12604
  %v12680 = vunpack.c.l.b16 %v12605
  %v12681 = vunpack.c.l.b16 %v12606
  %v12682 = vunpack.c.h.b16 %v12606
  %v12683 = vunpack.c.l.b16 %v12607
  %v12684 = vunpack.c.l.b16 %v12608
  %v12685 = vunpack.c.h.b16 %v12608
  %v12686 = vunpack.c.l.b16 %v12609
  %v12687 = vunpack.c.l.b16 %v12610
  %v12688 = vunpack.c.h.b16 %v12610
  %v12689 = vunpack.c.l.b16 %v12611
  %v12690 = vunpack.c.l.b16 %v12612
  %v12691 = vunpack.c.h.b16 %v12612
  %v12692 = vunpack.c.l.b16 %v12613
  %v12693 = vunpack.c.l.b16 %v12614
  %v12694 = vunpack.c.h.b16 %v12614
  %v12695 = vunpack.c.l.b16 %v12615
  %v12696 = vunpack.c.l.b16 %v12616
  %v12697 = vunpack.c.h.b16 %v12616
  %v12698 = vunpack.c.l.b16 %v12617
  %v12699 = vunpack.c.l.b16 %v12618
  %v12700 = vunpack.c.h.b16 %v12618
  %v12701 = vunpack.c.l.b16 %v12619
  %v12702 = vunpack.c.l.b16 %v12620
  %v12703 = vunpack.c.h.b16 %v12620
  %v12704 = vunpack.c.l.b16 %v12621
  %v12705 = vunpack.c.l.b16 %v12622
  %v12706 = vunpack.c.h.b16 %v12622
  %v12707 = vunpack.c.l.b16 %v12623
  %v12708 = vunpack.c.l.b16 %v12624
  %v12709 = vunpack.c.h.b16 %v12624
  %v12710 = vunpack.c.l.b16 %v12625
  %v12711 = vunpack.c.l.b16 %v12626
  %v12712 = vunpack.c.h.b16 %v12626
  %v12713 = vunpack.c.l.b16 %v12627
  %v12714 = vunpack.c.l.b16 %v12628
  %v12715 = vunpack.c.h.b16 %v12628
  %v12716 = vunpack.c.l.b16 %v12629
  %v12717 = vunpack.c.l.b16 %v12630
  %v12718 = vunpack.c.h.b16 %v12630
  %v12719 = vunpack.c.l.b16 %v12631
  %v12720 = vunpack.c.l.b16 %v12632
  %v12721 = vunpack.c.h.b16 %v12632
  %v12722 = vunpack.c.l.b16 %v12633
  %v12723 = vunpack.c.l.b16 %v12634
  %v12724 = vunpack.c.h.b16 %v12634
  %v12725 = vunpack.c.l.b16 %v12635
  %v12726 = vpack.c.b16 %v12681, %v12678
  %v12727 = vpack.c.b16 %v12682, %v12679
  %v12728 = vpack.c.b16 %v12683, %v12680
  %v12729 = vpack.c.b16 %v12687, %v12684
  %v12730 = vpack.c.b16 %v12688, %v12685
  %v12731 = vpack.c.b16 %v12689, %v12686
  %v12732 = vpack.c.b16 %v12693, %v12690
  %v12733 = vpack.c.b16 %v12694, %v12691
  %v12734 = vpack.c.b16 %v12695, %v12692
  %v12735 = vpack.c.b16 %v12699, %v12696
  %v12736 = vpack.c.b16 %v12700, %v12697
  %v12737 = vpack.c.b16 %v12701, %v12698
  %v12738 = vpack.c.b16 %v12705, %v12702
  %v12739 = vpack.c.b16 %v12706, %v12703
  %v12740 = vpack.c.b16 %v12707, %v12704
  %v12741 = vpack.c.b16 %v12711, %v12708
  %v12742 = vpack.c.b16 %v12712, %v12709
  %v12743 = vpack.c.b16 %v12713, %v12710
  %v12744 = vpack.c.b16 %v12717, %v12714
  %v12745 = vpack.c.b16 %v12718, %v12715
  %v12746 = vpack.c.b16 %v12719, %v12716
  %v12747 = vpack.c.b16 %v12723, %v12720
  %v12748 = vpack.c.b16 %v12724, %v12721
  %v12749 = vpack.c.b16 %v12725, %v12722
  %12774 = vmatpush.bf16.msra.mxu0 %v12747
  %12775 = vmatpush.bf16.msra.mxu0 %v12744
  %12776 = vmatpush.bf16.msra.mxu0 %v12741
  %12777 = vmatpush.bf16.msra.mxu0 %v12738
  %12778 = vmatpush.bf16.msra.mxu0 %v12735
  %12779 = vmatpush.bf16.msra.mxu0 %v12732
  %12780 = vmatpush.bf16.msra.mxu0 %v12729
  %12781 = vmatpush.bf16.msra.mxu0 %v12726
  %12782 = vmatmul.bf16.gmra.mxu0 %v12600
  %v12783 = vpop.f32.mrf.mxu0
  %v12784 = vadd.f32 %v12643, %v12783
  %v12785 = vpop.f32.mrf.mxu0
  %v12786 = vadd.f32 %v12643, %v12785
  %12787 = vmatmul.bf16.gmra.mxu0 %v12601
  %v12788 = vpop.f32.mrf.mxu0
  %v12789 = vadd.f32 %v12643, %v12788
  %v12790 = vpop.f32.mrf.mxu0
  %v12791 = vadd.f32 %v12643, %v12790
  %12792 = vmatmul.bf16.gmra.mxu0 %v12602
  %v12793 = vpop.f32.mrf.mxu0
  %v12794 = vadd.f32 %v12643, %v12793
  %v12795 = vpop.f32.mrf.mxu0
  %v12796 = vadd.f32 %v12643, %v12795
  %12797 = vmatmul.bf16.gmra.mxu0 %v12603
  %v12798 = vpop.f32.mrf.mxu0
  %v12799 = vadd.f32 %v12643, %v12798
  %v12800 = vpop.f32.mrf.mxu0
  %v12801 = vadd.f32 %v12643, %v12800
  %12802 = vdwg.mxu0
  %12803 = vmatpush.bf16.msra.mxu0 %v12748
  %12804 = vmatpush.bf16.msra.mxu0 %v12745
  %12805 = vmatpush.bf16.msra.mxu0 %v12742
  %12806 = vmatpush.bf16.msra.mxu0 %v12739
  %12807 = vmatpush.bf16.msra.mxu0 %v12736
  %12808 = vmatpush.bf16.msra.mxu0 %v12733
  %12809 = vmatpush.bf16.msra.mxu0 %v12730
  %12810 = vmatpush.bf16.msra.mxu0 %v12727
  %12811 = vmatmul.bf16.gmra.mxu0 %v12600
  %v12812 = vpop.f32.mrf.mxu0
  %v12813 = vadd.f32 %v12644, %v12812
  %v12814 = vpop.f32.mrf.mxu0
  %v12815 = vadd.f32 %v12644, %v12814
  %12816 = vmatmul.bf16.gmra.mxu0 %v12601
  %v12817 = vpop.f32.mrf.mxu0
  %v12818 = vadd.f32 %v12644, %v12817
  %v12819 = vpop.f32.mrf.mxu0
  %v12820 = vadd.f32 %v12644, %v12819
  %12821 = vmatmul.bf16.gmra.mxu0 %v12602
  %v12822 = vpop.f32.mrf.mxu0
  %v12823 = vadd.f32 %v12644, %v12822
  %v12824 = vpop.f32.mrf.mxu0
  %v12825 = vadd.f32 %v12644, %v12824
  %12826 = vmatmul.bf16.gmra.mxu0 %v12603
  %v12827 = vpop.f32.mrf.mxu0
  %v12828 = vadd.f32 %v12644, %v12827
  %v12829 = vpop.f32.mrf.mxu0
  %v12830 = vadd.f32 %v12644, %v12829
  %12831 = vdwg.mxu0
  %12832 = vmatpush.bf16.msra.mxu0 %v12749
  %12833 = vmatpush.bf16.msra.mxu0 %v12746
  %12834 = vmatpush.bf16.msra.mxu0 %v12743
  %12835 = vmatpush.bf16.msra.mxu0 %v12740
  %12836 = vmatpush.bf16.msra.mxu0 %v12737
  %12837 = vmatpush.bf16.msra.mxu0 %v12734
  %12838 = vmatpush.bf16.msra.mxu0 %v12731
  %12839 = vmatpush.bf16.msra.mxu0 %v12728
  %12840 = vmatmul.bf16.gmra.mxu0 %v12600
  %v12841 = vpop.f32.mrf.mxu0
  %v12842 = vadd.f32 %v12645, %v12841
  %v12843 = vpop.f32.mrf.mxu0
  %v12844 = vadd.f32 %v12645, %v12843
  %12845 = vmatmul.bf16.gmra.mxu0 %v12601
  %v12846 = vpop.f32.mrf.mxu0
  %v12847 = vadd.f32 %v12645, %v12846
  %v12848 = vpop.f32.mrf.mxu0
  %v12849 = vadd.f32 %v12645, %v12848
  %12850 = vmatmul.bf16.gmra.mxu0 %v12602
  %v12851 = vpop.f32.mrf.mxu0
  %v12852 = vadd.f32 %v12645, %v12851
  %v12853 = vpop.f32.mrf.mxu0
  %v12854 = vadd.f32 %v12645, %v12853
  %12855 = vmatmul.bf16.gmra.mxu0 %v12603
  %v12856 = vpop.f32.mrf.mxu0
  %v12857 = vadd.f32 %v12645, %v12856
  %v12858 = vpop.f32.mrf.mxu0
  %v12859 = vadd.f32 %v12645, %v12858
  %12860 = vdwg.mxu0
  %v12861 = vld [vmem:[%s9] sm:$0xff]
  %v12862 = vld [vmem:[%s9 + $0x8] sm:$0xf]
  %v12863 = vld [vmem:[%s9 + $0xc] sm:$0xff]
  %v12864 = vld [vmem:[%s9 + $0x14] sm:$0xf]
  %v12865 = vld [vmem:[%s9 + $0x18] sm:$0xff]
  %v12866 = vld [vmem:[%s9 + $0x20] sm:$0xf]
  %v12867 = vld [vmem:[%s9 + $0x24] sm:$0xff]
  %v12868 = vld [vmem:[%s9 + $0x2c] sm:$0xf]
  %v12869 = vld [vmem:[%s9 + $0x30] sm:$0xff]
  %v12870 = vld [vmem:[%s9 + $0x38] sm:$0xf]
  %v12871 = vld [vmem:[%s9 + $0x3c] sm:$0xff]
  %v12872 = vld [vmem:[%s9 + $0x44] sm:$0xf]
  %v12873 = vld [vmem:[%s9 + $0x48] sm:$0xff]
  %v12874 = vld [vmem:[%s9 + $0x50] sm:$0xf]
  %v12875 = vld [vmem:[%s9 + $0x54] sm:$0xff]
  %v12876 = vld [vmem:[%s9 + $0x5c] sm:$0xf]
  %v12877 = vld [vmem:[%s9 + $0x60] sm:$0xff]
  %v12878 = vld [vmem:[%s9 + $0x68] sm:$0xf]
  %v12879 = vld [vmem:[%s9 + $0x6c] sm:$0xff]
  %v12880 = vld [vmem:[%s9 + $0x74] sm:$0xf]
  %v12881 = vld [vmem:[%s9 + $0x78] sm:$0xff]
  %v12882 = vld [vmem:[%s9 + $0x80] sm:$0xf]
  %v12883 = vld [vmem:[%s9 + $0x84] sm:$0xff]
  %v12884 = vld [vmem:[%s9 + $0x8c] sm:$0xf]
  %v12885 = vld [vmem:[%s9 + $0x90] sm:$0xff]
  %v12886 = vld [vmem:[%s9 + $0x98] sm:$0xf]
  %v12887 = vld [vmem:[%s9 + $0x9c] sm:$0xff]
  %v12888 = vld [vmem:[%s9 + $0xa4] sm:$0xf]
  %v12889 = vld [vmem:[%s9 + $0xa8] sm:$0xff]
  %v12890 = vld [vmem:[%s9 + $0xb0] sm:$0xf]
  %v12891 = vld [vmem:[%s9 + $0xb4] sm:$0xff]
  %v12892 = vld [vmem:[%s9 + $0xbc] sm:$0xf]
  %v12893 = vld [vmem:[%s3] sm:$0xff]
  %v12894 = vld [vmem:[%s2] sm:$0xff]
  %v12895 = vpack.c.bf16 %v12894, %v12894
  %v12896 = vperm.slane %v12599, 1
  %v12897 = vperm.slane %v12599, 3
  %v12898 = vperm.slane %v12599, 5
  %v12902 = vperm.slane %v12896, 1
  %v12903 = vperm.slane %v12897, 1
  %v12904 = vperm.slane %v12898, 1
  %v12937 = vunpack.c.l.b16 %v12861
  %v12938 = vunpack.c.h.b16 %v12861
  %v12939 = vunpack.c.l.b16 %v12862
  %v12940 = vunpack.c.l.b16 %v12863
  %v12941 = vunpack.c.h.b16 %v12863
  %v12942 = vunpack.c.l.b16 %v12864
  %v12943 = vunpack.c.l.b16 %v12865
  %v12944 = vunpack.c.h.b16 %v12865
  %v12945 = vunpack.c.l.b16 %v12866
  %v12946 = vunpack.c.l.b16 %v12867
  %v12947 = vunpack.c.h.b16 %v12867
  %v12948 = vunpack.c.l.b16 %v12868
  %v12949 = vunpack.c.l.b16 %v12869
  %v12950 = vunpack.c.h.b16 %v12869
  %v12951 = vunpack.c.l.b16 %v12870
  %v12952 = vunpack.c.l.b16 %v12871
  %v12953 = vunpack.c.h.b16 %v12871
  %v12954 = vunpack.c.l.b16 %v12872
  %v12955 = vunpack.c.l.b16 %v12873
  %v12956 = vunpack.c.h.b16 %v12873
  %v12957 = vunpack.c.l.b16 %v12874
  %v12958 = vunpack.c.l.b16 %v12875
  %v12959 = vunpack.c.h.b16 %v12875
  %v12960 = vunpack.c.l.b16 %v12876
  %v12961 = vunpack.c.l.b16 %v12877
  %v12962 = vunpack.c.h.b16 %v12877
  %v12963 = vunpack.c.l.b16 %v12878
  %v12964 = vunpack.c.l.b16 %v12879
  %v12965 = vunpack.c.h.b16 %v12879
  %v12966 = vunpack.c.l.b16 %v12880
  %v12967 = vunpack.c.l.b16 %v12881
  %v12968 = vunpack.c.h.b16 %v12881
  %v12969 = vunpack.c.l.b16 %v12882
  %v12970 = vunpack.c.l.b16 %v12883
  %v12971 = vunpack.c.h.b16 %v12883
  %v12972 = vunpack.c.l.b16 %v12884
  %v12973 = vunpack.c.l.b16 %v12885
  %v12974 = vunpack.c.h.b16 %v12885
  %v12975 = vunpack.c.l.b16 %v12886
  %v12976 = vunpack.c.l.b16 %v12887
  %v12977 = vunpack.c.h.b16 %v12887
  %v12978 = vunpack.c.l.b16 %v12888
  %v12979 = vunpack.c.l.b16 %v12889
  %v12980 = vunpack.c.h.b16 %v12889
  %v12981 = vunpack.c.l.b16 %v12890
  %v12982 = vunpack.c.l.b16 %v12891
  %v12983 = vunpack.c.h.b16 %v12891
  %v12984 = vunpack.c.l.b16 %v12892
  %v12985 = vpack.c.b16 %v12940, %v12937
  %v12986 = vpack.c.b16 %v12941, %v12938
  %v12987 = vpack.c.b16 %v12942, %v12939
  %v12988 = vpack.c.b16 %v12946, %v12943
  %v12989 = vpack.c.b16 %v12947, %v12944
  %v12990 = vpack.c.b16 %v12948, %v12945
  %v12991 = vpack.c.b16 %v12952, %v12949
  %v12992 = vpack.c.b16 %v12953, %v12950
  %v12993 = vpack.c.b16 %v12954, %v12951
  %v12994 = vpack.c.b16 %v12958, %v12955
  %v12995 = vpack.c.b16 %v12959, %v12956
  %v12996 = vpack.c.b16 %v12960, %v12957
  %v12997 = vpack.c.b16 %v12964, %v12961
  %v12998 = vpack.c.b16 %v12965, %v12962
  %v12999 = vpack.c.b16 %v12966, %v12963
  %v13000 = vpack.c.b16 %v12970, %v12967
  %v13001 = vpack.c.b16 %v12971, %v12968
  %v13002 = vpack.c.b16 %v12972, %v12969
  %v13003 = vpack.c.b16 %v12976, %v12973
  %v13004 = vpack.c.b16 %v12977, %v12974
  %v13005 = vpack.c.b16 %v12978, %v12975
  %v13006 = vpack.c.b16 %v12982, %v12979
  %v13007 = vpack.c.b16 %v12983, %v12980
  %v13008 = vpack.c.b16 %v12984, %v12981
  %13033 = vmatpush.bf16.msra.mxu0 %v13006
  %13034 = vmatpush.bf16.msra.mxu0 %v13003
  %13035 = vmatpush.bf16.msra.mxu0 %v13000
  %13036 = vmatpush.bf16.msra.mxu0 %v12997
  %13037 = vmatpush.bf16.msra.mxu0 %v12994
  %13038 = vmatpush.bf16.msra.mxu0 %v12991
  %13039 = vmatpush.bf16.msra.mxu0 %v12988
  %13040 = vmatpush.bf16.msra.mxu0 %v12985
  %13041 = vmatmul.bf16.gmra.mxu0 %v12895
  %v13042 = vpop.f32.mrf.mxu0
  %v13043 = vadd.f32 %v12902, %v13042
  %v13044 = vpop.f32.mrf.mxu0
  %13045 = vdwg.mxu0
  %13046 = vmatpush.bf16.msra.mxu0 %v13007
  %13047 = vmatpush.bf16.msra.mxu0 %v13004
  %13048 = vmatpush.bf16.msra.mxu0 %v13001
  %13049 = vmatpush.bf16.msra.mxu0 %v12998
  %13050 = vmatpush.bf16.msra.mxu0 %v12995
  %13051 = vmatpush.bf16.msra.mxu0 %v12992
  %13052 = vmatpush.bf16.msra.mxu0 %v12989
  %13053 = vmatpush.bf16.msra.mxu0 %v12986
  %13054 = vmatmul.bf16.gmra.mxu0 %v12895
  %v13055 = vpop.f32.mrf.mxu0
  %v13056 = vadd.f32 %v12903, %v13055
  %v13057 = vpop.f32.mrf.mxu0
  %13058 = vdwg.mxu0
  %13059 = vmatpush.bf16.msra.mxu0 %v13008
  %13060 = vmatpush.bf16.msra.mxu0 %v13005
  %13061 = vmatpush.bf16.msra.mxu0 %v13002
  %13062 = vmatpush.bf16.msra.mxu0 %v12999
  %13063 = vmatpush.bf16.msra.mxu0 %v12996
  %13064 = vmatpush.bf16.msra.mxu0 %v12993
  %13065 = vmatpush.bf16.msra.mxu0 %v12990
  %13066 = vmatpush.bf16.msra.mxu0 %v12987
  %13067 = vmatmul.bf16.gmra.mxu0 %v12895
  %v13068 = vpop.f32.mrf.mxu0
  %v13069 = vadd.f32 %v12904, %v13068
  %v13070 = vpop.f32.mrf.mxu0
  %13071 = vdwg.mxu0
  %v13072 = vadd.f32 %v12784, %v13043
  %v13073 = vxor.u32 %v13072, 2147483648
  %v13074 = vmul.f32 %v13073, 1.442695
  %v13075 = vpow.pop %v13074
  %v13076 = vadd.f32 %v13075, 1.0
  %v13077 = vrcp.pop %v13076
  %v13078 = vmul.f32 %v13076, %v13077
  %v13079 = vsub.f32 1.0, %v13078
  %v13080 = vmul.f32 %v13077, %v13079
  %v13081 = vadd.f32 %v13077, %v13080
  %vm13082 = vweird.f32 %v13076
  %vm13083 = vweird.f32 %v13077
  %vm13084 = vmor %vm13082, %vm13083
  %v13085 = vsel %vm13084, %v13077, %v13081
  %v13086 = vand.u32 2147483647, %v13076
  %vm13087 = vcmp.eq.f32.partialorder %v13086, 8.507059e+37
  %v13088 = vand.u32 %v13076, 2147483648
  %v13089 = vor.u32 1.1754944e-38, %v13088
  %v13090 = vsel %vm13087, %v13089, %v13085
  %v13091 = vmul.f32 1.0, %v13090
  %v13092 = vadd.f32 %v12813, %v13056
  %v13093 = vxor.u32 %v13092, 2147483648
  %v13094 = vmul.f32 %v13093, 1.442695
  %v13095 = vpow.pop %v13094
  %v13096 = vadd.f32 %v13095, 1.0
  %v13097 = vrcp.pop %v13096
  %v13098 = vmul.f32 %v13096, %v13097
  %v13099 = vsub.f32 1.0, %v13098
  %v13100 = vmul.f32 %v13097, %v13099
  %v13101 = vadd.f32 %v13097, %v13100
  %vm13102 = vweird.f32 %v13096
  %vm13103 = vweird.f32 %v13097
  %vm13104 = vmor %vm13102, %vm13103
  %v13105 = vsel %vm13104, %v13097, %v13101
  %v13106 = vand.u32 2147483647, %v13096
  %vm13107 = vcmp.eq.f32.partialorder %v13106, 8.507059e+37
  %v13108 = vand.u32 %v13096, 2147483648
  %v13109 = vor.u32 1.1754944e-38, %v13108
  %v13110 = vsel %vm13107, %v13109, %v13105
  %v13111 = vmul.f32 1.0, %v13110
  %v13112 = vmul.f32 %v13091, %v13069
  %v13113 = vadd.f32 %v12842, %v13112
  %v13114 = vtanh.pop %v13113
  %v13115 = vsub.f32 1.0, %v13111
  %v13116 = vmul.f32 %v13115, %v13114
  %v13117 = vmul.f32 %v13111, %v12894
  %v13118 = vadd.f32 %v13116, %v13117
  %v13119 = vsub.f32 %v13118, %v12894
  %13121 = vset.pattern.permute.xlu0 0
  %13122 = vperm.xlu0 %13121, %v12893
  %v13123 = vpop.permute.xlu0 %13122
  %v13125 = vmul.f32 %v13123, %v13119
  %v13126 = vadd.f32 %v12894, %v13125
  %v13127 = vpack.c.bf16 %v13126, %v13126
  %13128 = vmatpush.bf16.msra.mxu0 %v13006
  %13129 = vmatpush.bf16.msra.mxu0 %v13003
  %13130 = vmatpush.bf16.msra.mxu0 %v13000
  %13131 = vmatpush.bf16.msra.mxu0 %v12997
  %13132 = vmatpush.bf16.msra.mxu0 %v12994
  %13133 = vmatpush.bf16.msra.mxu0 %v12991
  %13134 = vmatpush.bf16.msra.mxu0 %v12988
  %13135 = vmatpush.bf16.msra.mxu0 %v12985
  %13136 = vmatmul.bf16.gmra.mxu0 %v13127
  %v13137 = vpop.f32.mrf.mxu0
  %v13138 = vadd.f32 %v12902, %v13137
  %v13139 = vpop.f32.mrf.mxu0
  %13140 = vdwg.mxu0
  %13141 = vmatpush.bf16.msra.mxu0 %v13007
  %13142 = vmatpush.bf16.msra.mxu0 %v13004
  %13143 = vmatpush.bf16.msra.mxu0 %v13001
  %13144 = vmatpush.bf16.msra.mxu0 %v12998
  %13145 = vmatpush.bf16.msra.mxu0 %v12995
  %13146 = vmatpush.bf16.msra.mxu0 %v12992
  %13147 = vmatpush.bf16.msra.mxu0 %v12989
  %13148 = vmatpush.bf16.msra.mxu0 %v12986
  %13149 = vmatmul.bf16.gmra.mxu0 %v13127
  %v13150 = vpop.f32.mrf.mxu0
  %v13151 = vadd.f32 %v12903, %v13150
  %v13152 = vpop.f32.mrf.mxu0
  %13153 = vdwg.mxu0
  %13154 = vmatpush.bf16.msra.mxu0 %v13008
  %13155 = vmatpush.bf16.msra.mxu0 %v13005
  %13156 = vmatpush.bf16.msra.mxu0 %v13002
  %13157 = vmatpush.bf16.msra.mxu0 %v12999
  %13158 = vmatpush.bf16.msra.mxu0 %v12996
  %13159 = vmatpush.bf16.msra.mxu0 %v12993
  %13160 = vmatpush.bf16.msra.mxu0 %v12990
  %13161 = vmatpush.bf16.msra.mxu0 %v12987
  %13162 = vmatmul.bf16.gmra.mxu0 %v13127
  %v13163 = vpop.f32.mrf.mxu0
  %v13164 = vadd.f32 %v12904, %v13163
  %v13165 = vpop.f32.mrf.mxu0
  %13166 = vdwg.mxu0
  %v13167 = vadd.f32 %v12786, %v13138
  %v13168 = vxor.u32 %v13167, 2147483648
  %v13169 = vmul.f32 %v13168, 1.442695
  %v13170 = vpow.pop %v13169
  %v13171 = vadd.f32 %v13170, 1.0
  %v13172 = vrcp.pop %v13171
  %v13173 = vmul.f32 %v13171, %v13172
  %v13174 = vsub.f32 1.0, %v13173
  %v13175 = vmul.f32 %v13172, %v13174
  %v13176 = vadd.f32 %v13172, %v13175
  %vm13177 = vweird.f32 %v13171
  %vm13178 = vweird.f32 %v13172
  %vm13179 = vmor %vm13177, %vm13178
  %v13180 = vsel %vm13179, %v13172, %v13176
  %v13181 = vand.u32 2147483647, %v13171
  %vm13182 = vcmp.eq.f32.partialorder %v13181, 8.507059e+37
  %v13183 = vand.u32 %v13171, 2147483648
  %v13184 = vor.u32 1.1754944e-38, %v13183
  %v13185 = vsel %vm13182, %v13184, %v13180
  %v13186 = vmul.f32 1.0, %v13185
  %v13187 = vadd.f32 %v12815, %v13151
  %v13188 = vxor.u32 %v13187, 2147483648
  %v13189 = vmul.f32 %v13188, 1.442695
  %v13190 = vpow.pop %v13189
  %v13191 = vadd.f32 %v13190, 1.0
  %v13192 = vrcp.pop %v13191
  %v13193 = vmul.f32 %v13191, %v13192
  %v13194 = vsub.f32 1.0, %v13193
  %v13195 = vmul.f32 %v13192, %v13194
  %v13196 = vadd.f32 %v13192, %v13195
  %vm13197 = vweird.f32 %v13191
  %vm13198 = vweird.f32 %v13192
  %vm13199 = vmor %vm13197, %vm13198
  %v13200 = vsel %vm13199, %v13192, %v13196
  %v13201 = vand.u32 2147483647, %v13191
  %vm13202 = vcmp.eq.f32.partialorder %v13201, 8.507059e+37
  %v13203 = vand.u32 %v13191, 2147483648
  %v13204 = vor.u32 1.1754944e-38, %v13203
  %v13205 = vsel %vm13202, %v13204, %v13200
  %v13206 = vmul.f32 1.0, %v13205
  %v13207 = vmul.f32 %v13186, %v13164
  %v13208 = vadd.f32 %v12844, %v13207
  %v13209 = vtanh.pop %v13208
  %v13210 = vsub.f32 1.0, %v13206
  %v13211 = vmul.f32 %v13210, %v13209
  %v13212 = vmul.f32 %v13206, %v13126
  %v13213 = vadd.f32 %v13211, %v13212
  %v13214 = vsub.f32 %v13213, %v13126
  %13215 = vset.pattern.permute.xlu0 1
  %13216 = vperm.xlu0 %13215, %v12893
  %v13217 = vpop.permute.xlu0 %13216
  %v13219 = vmul.f32 %v13217, %v13214
  %v13220 = vadd.f32 %v13126, %v13219
  %v13221 = vpack.c.bf16 %v13220, %v13220
  %13222 = vmatpush.bf16.msra.mxu0 %v13006
  %13223 = vmatpush.bf16.msra.mxu0 %v13003
  %13224 = vmatpush.bf16.msra.mxu0 %v13000
  %13225 = vmatpush.bf16.msra.mxu0 %v12997
  %13226 = vmatpush.bf16.msra.mxu0 %v12994
  %13227 = vmatpush.bf16.msra.mxu0 %v12991
  %13228 = vmatpush.bf16.msra.mxu0 %v12988
  %13229 = vmatpush.bf16.msra.mxu0 %v12985
  %13230 = vmatmul.bf16.gmra.mxu0 %v13221
  %v13231 = vpop.f32.mrf.mxu0
  %v13232 = vadd.f32 %v12902, %v13231
  %v13233 = vpop.f32.mrf.mxu0
  %13234 = vdwg.mxu0
  %13235 = vmatpush.bf16.msra.mxu0 %v13007
  %13236 = vmatpush.bf16.msra.mxu0 %v13004
  %13237 = vmatpush.bf16.msra.mxu0 %v13001
  %13238 = vmatpush.bf16.msra.mxu0 %v12998
  %13239 = vmatpush.bf16.msra.mxu0 %v12995
  %13240 = vmatpush.bf16.msra.mxu0 %v12992
  %13241 = vmatpush.bf16.msra.mxu0 %v12989
  %13242 = vmatpush.bf16.msra.mxu0 %v12986
  %13243 = vmatmul.bf16.gmra.mxu0 %v13221
  %v13244 = vpop.f32.mrf.mxu0
  %v13245 = vadd.f32 %v12903, %v13244
  %v13246 = vpop.f32.mrf.mxu0
  %13247 = vdwg.mxu0
  %13248 = vmatpush.bf16.msra.mxu0 %v13008
  %13249 = vmatpush.bf16.msra.mxu0 %v13005
  %13250 = vmatpush.bf16.msra.mxu0 %v13002
  %13251 = vmatpush.bf16.msra.mxu0 %v12999
  %13252 = vmatpush.bf16.msra.mxu0 %v12996
  %13253 = vmatpush.bf16.msra.mxu0 %v12993
  %13254 = vmatpush.bf16.msra.mxu0 %v12990
  %13255 = vmatpush.bf16.msra.mxu0 %v12987
  %13256 = vmatmul.bf16.gmra.mxu0 %v13221
  %v13257 = vpop.f32.mrf.mxu0
  %v13258 = vadd.f32 %v12904, %v13257
  %v13259 = vpop.f32.mrf.mxu0
  %13260 = vdwg.mxu0
  %v13261 = vadd.f32 %v12789, %v13232
  %v13262 = vxor.u32 %v13261, 2147483648
  %v13263 = vmul.f32 %v13262, 1.442695
  %v13264 = vpow.pop %v13263
  %v13265 = vadd.f32 %v13264, 1.0
  %v13266 = vrcp.pop %v13265
  %v13267 = vmul.f32 %v13265, %v13266
  %v13268 = vsub.f32 1.0, %v13267
  %v13269 = vmul.f32 %v13266, %v13268
  %v13270 = vadd.f32 %v13266, %v13269
  %vm13271 = vweird.f32 %v13265
  %vm13272 = vweird.f32 %v13266
  %vm13273 = vmor %vm13271, %vm13272
  %v13274 = vsel %vm13273, %v13266, %v13270
  %v13275 = vand.u32 2147483647, %v13265
  %vm13276 = vcmp.eq.f32.partialorder %v13275, 8.507059e+37
  %v13277 = vand.u32 %v13265, 2147483648
  %v13278 = vor.u32 1.1754944e-38, %v13277
  %v13279 = vsel %vm13276, %v13278, %v13274
  %v13280 = vmul.f32 1.0, %v13279
  %v13281 = vadd.f32 %v12818, %v13245
  %v13282 = vxor.u32 %v13281, 2147483648
  %v13283 = vmul.f32 %v13282, 1.442695
  %v13284 = vpow.pop %v13283
  %v13285 = vadd.f32 %v13284, 1.0
  %v13286 = vrcp.pop %v13285
  %v13287 = vmul.f32 %v13285, %v13286
  %v13288 = vsub.f32 1.0, %v13287
  %v13289 = vmul.f32 %v13286, %v13288
  %v13290 = vadd.f32 %v13286, %v13289
  %vm13291 = vweird.f32 %v13285
  %vm13292 = vweird.f32 %v13286
  %vm13293 = vmor %vm13291, %vm13292
  %v13294 = vsel %vm13293, %v13286, %v13290
  %v13295 = vand.u32 2147483647, %v13285
  %vm13296 = vcmp.eq.f32.partialorder %v13295, 8.507059e+37
  %v13297 = vand.u32 %v13285, 2147483648
  %v13298 = vor.u32 1.1754944e-38, %v13297
  %v13299 = vsel %vm13296, %v13298, %v13294
  %v13300 = vmul.f32 1.0, %v13299
  %v13301 = vmul.f32 %v13280, %v13258
  %v13302 = vadd.f32 %v12847, %v13301
  %v13303 = vtanh.pop %v13302
  %v13304 = vsub.f32 1.0, %v13300
  %v13305 = vmul.f32 %v13304, %v13303
  %v13306 = vmul.f32 %v13300, %v13220
  %v13307 = vadd.f32 %v13305, %v13306
  %v13308 = vsub.f32 %v13307, %v13220
  %13309 = vset.pattern.permute.xlu0 2
  %13310 = vperm.xlu0 %13309, %v12893
  %v13311 = vpop.permute.xlu0 %13310
  %v13313 = vmul.f32 %v13311, %v13308
  %v13314 = vadd.f32 %v13220, %v13313
  %v13315 = vpack.c.bf16 %v13314, %v13314
  %13316 = vmatpush.bf16.msra.mxu0 %v13006
  %13317 = vmatpush.bf16.msra.mxu0 %v13003
  %13318 = vmatpush.bf16.msra.mxu0 %v13000
  %13319 = vmatpush.bf16.msra.mxu0 %v12997
  %13320 = vmatpush.bf16.msra.mxu0 %v12994
  %13321 = vmatpush.bf16.msra.mxu0 %v12991
  %13322 = vmatpush.bf16.msra.mxu0 %v12988
  %13323 = vmatpush.bf16.msra.mxu0 %v12985
  %13324 = vmatmul.bf16.gmra.mxu0 %v13315
  %v13325 = vpop.f32.mrf.mxu0
  %v13326 = vadd.f32 %v12902, %v13325
  %v13327 = vpop.f32.mrf.mxu0
  %13328 = vdwg.mxu0
  %13329 = vmatpush.bf16.msra.mxu0 %v13007
  %13330 = vmatpush.bf16.msra.mxu0 %v13004
  %13331 = vmatpush.bf16.msra.mxu0 %v13001
  %13332 = vmatpush.bf16.msra.mxu0 %v12998
  %13333 = vmatpush.bf16.msra.mxu0 %v12995
  %13334 = vmatpush.bf16.msra.mxu0 %v12992
  %13335 = vmatpush.bf16.msra.mxu0 %v12989
  %13336 = vmatpush.bf16.msra.mxu0 %v12986
  %13337 = vmatmul.bf16.gmra.mxu0 %v13315
  %v13338 = vpop.f32.mrf.mxu0
  %v13339 = vadd.f32 %v12903, %v13338
  %v13340 = vpop.f32.mrf.mxu0
  %13341 = vdwg.mxu0
  %13342 = vmatpush.bf16.msra.mxu0 %v13008
  %13343 = vmatpush.bf16.msra.mxu0 %v13005
  %13344 = vmatpush.bf16.msra.mxu0 %v13002
  %13345 = vmatpush.bf16.msra.mxu0 %v12999
  %13346 = vmatpush.bf16.msra.mxu0 %v12996
  %13347 = vmatpush.bf16.msra.mxu0 %v12993
  %13348 = vmatpush.bf16.msra.mxu0 %v12990
  %13349 = vmatpush.bf16.msra.mxu0 %v12987
  %13350 = vmatmul.bf16.gmra.mxu0 %v13315
  %v13351 = vpop.f32.mrf.mxu0
  %v13352 = vadd.f32 %v12904, %v13351
  %v13353 = vpop.f32.mrf.mxu0
  %13354 = vdwg.mxu0
  %v13355 = vadd.f32 %v12791, %v13326
  %v13356 = vxor.u32 %v13355, 2147483648
  %v13357 = vmul.f32 %v13356, 1.442695
  %v13358 = vpow.pop %v13357
  %v13359 = vadd.f32 %v13358, 1.0
  %v13360 = vrcp.pop %v13359
  %v13361 = vmul.f32 %v13359, %v13360
  %v13362 = vsub.f32 1.0, %v13361
  %v13363 = vmul.f32 %v13360, %v13362
  %v13364 = vadd.f32 %v13360, %v13363
  %vm13365 = vweird.f32 %v13359
  %vm13366 = vweird.f32 %v13360
  %vm13367 = vmor %vm13365, %vm13366
  %v13368 = vsel %vm13367, %v13360, %v13364
  %v13369 = vand.u32 2147483647, %v13359
  %vm13370 = vcmp.eq.f32.partialorder %v13369, 8.507059e+37
  %v13371 = vand.u32 %v13359, 2147483648
  %v13372 = vor.u32 1.1754944e-38, %v13371
  %v13373 = vsel %vm13370, %v13372, %v13368
  %v13374 = vmul.f32 1.0, %v13373
  %v13375 = vadd.f32 %v12820, %v13339
  %v13376 = vxor.u32 %v13375, 2147483648
  %v13377 = vmul.f32 %v13376, 1.442695
  %v13378 = vpow.pop %v13377
  %v13379 = vadd.f32 %v13378, 1.0
  %v13380 = vrcp.pop %v13379
  %v13381 = vmul.f32 %v13379, %v13380
  %v13382 = vsub.f32 1.0, %v13381
  %v13383 = vmul.f32 %v13380, %v13382
  %v13384 = vadd.f32 %v13380, %v13383
  %vm13385 = vweird.f32 %v13379
  %vm13386 = vweird.f32 %v13380
  %vm13387 = vmor %vm13385, %vm13386
  %v13388 = vsel %vm13387, %v13380, %v13384
  %v13389 = vand.u32 2147483647, %v13379
  %vm13390 = vcmp.eq.f32.partialorder %v13389, 8.507059e+37
  %v13391 = vand.u32 %v13379, 2147483648
  %v13392 = vor.u32 1.1754944e-38, %v13391
  %v13393 = vsel %vm13390, %v13392, %v13388
  %v13394 = vmul.f32 1.0, %v13393
  %v13395 = vmul.f32 %v13374, %v13352
  %v13396 = vadd.f32 %v12849, %v13395
  %v13397 = vtanh.pop %v13396
  %v13398 = vsub.f32 1.0, %v13394
  %v13399 = vmul.f32 %v13398, %v13397
  %v13400 = vmul.f32 %v13394, %v13314
  %v13401 = vadd.f32 %v13399, %v13400
  %v13402 = vsub.f32 %v13401, %v13314
  %13403 = vset.pattern.permute.xlu0 3
  %13404 = vperm.xlu0 %13403, %v12893
  %v13405 = vpop.permute.xlu0 %13404
  %v13407 = vmul.f32 %v13405, %v13402
  %v13408 = vadd.f32 %v13314, %v13407
  %v13409 = vpack.c.bf16 %v13408, %v13408
  %13410 = vmatpush.bf16.msra.mxu0 %v13006
  %13411 = vmatpush.bf16.msra.mxu0 %v13003
  %13412 = vmatpush.bf16.msra.mxu0 %v13000
  %13413 = vmatpush.bf16.msra.mxu0 %v12997
  %13414 = vmatpush.bf16.msra.mxu0 %v12994
  %13415 = vmatpush.bf16.msra.mxu0 %v12991
  %13416 = vmatpush.bf16.msra.mxu0 %v12988
  %13417 = vmatpush.bf16.msra.mxu0 %v12985
  %13418 = vmatmul.bf16.gmra.mxu0 %v13409
  %v13419 = vpop.f32.mrf.mxu0
  %v13420 = vadd.f32 %v12902, %v13419
  %v13421 = vpop.f32.mrf.mxu0
  %13422 = vdwg.mxu0
  %13423 = vmatpush.bf16.msra.mxu0 %v13007
  %13424 = vmatpush.bf16.msra.mxu0 %v13004
  %13425 = vmatpush.bf16.msra.mxu0 %v13001
  %13426 = vmatpush.bf16.msra.mxu0 %v12998
  %13427 = vmatpush.bf16.msra.mxu0 %v12995
  %13428 = vmatpush.bf16.msra.mxu0 %v12992
  %13429 = vmatpush.bf16.msra.mxu0 %v12989
  %13430 = vmatpush.bf16.msra.mxu0 %v12986
  %13431 = vmatmul.bf16.gmra.mxu0 %v13409
  %v13432 = vpop.f32.mrf.mxu0
  %v13433 = vadd.f32 %v12903, %v13432
  %v13434 = vpop.f32.mrf.mxu0
  %13435 = vdwg.mxu0
  %13436 = vmatpush.bf16.msra.mxu0 %v13008
  %13437 = vmatpush.bf16.msra.mxu0 %v13005
  %13438 = vmatpush.bf16.msra.mxu0 %v13002
  %13439 = vmatpush.bf16.msra.mxu0 %v12999
  %13440 = vmatpush.bf16.msra.mxu0 %v12996
  %13441 = vmatpush.bf16.msra.mxu0 %v12993
  %13442 = vmatpush.bf16.msra.mxu0 %v12990
  %13443 = vmatpush.bf16.msra.mxu0 %v12987
  %13444 = vmatmul.bf16.gmra.mxu0 %v13409
  %v13445 = vpop.f32.mrf.mxu0
  %v13446 = vadd.f32 %v12904, %v13445
  %v13447 = vpop.f32.mrf.mxu0
  %13448 = vdwg.mxu0
  %v13449 = vadd.f32 %v12794, %v13420
  %v13450 = vxor.u32 %v13449, 2147483648
  %v13451 = vmul.f32 %v13450, 1.442695
  %v13452 = vpow.pop %v13451
  %v13453 = vadd.f32 %v13452, 1.0
  %v13454 = vrcp.pop %v13453
  %v13455 = vmul.f32 %v13453, %v13454
  %v13456 = vsub.f32 1.0, %v13455
  %v13457 = vmul.f32 %v13454, %v13456
  %v13458 = vadd.f32 %v13454, %v13457
  %vm13459 = vweird.f32 %v13453
  %vm13460 = vweird.f32 %v13454
  %vm13461 = vmor %vm13459, %vm13460
  %v13462 = vsel %vm13461, %v13454, %v13458
  %v13463 = vand.u32 2147483647, %v13453
  %vm13464 = vcmp.eq.f32.partialorder %v13463, 8.507059e+37
  %v13465 = vand.u32 %v13453, 2147483648
  %v13466 = vor.u32 1.1754944e-38, %v13465
  %v13467 = vsel %vm13464, %v13466, %v13462
  %v13468 = vmul.f32 1.0, %v13467
  %v13469 = vadd.f32 %v12823, %v13433
  %v13470 = vxor.u32 %v13469, 2147483648
  %v13471 = vmul.f32 %v13470, 1.442695
  %v13472 = vpow.pop %v13471
  %v13473 = vadd.f32 %v13472, 1.0
  %v13474 = vrcp.pop %v13473
  %v13475 = vmul.f32 %v13473, %v13474
  %v13476 = vsub.f32 1.0, %v13475
  %v13477 = vmul.f32 %v13474, %v13476
  %v13478 = vadd.f32 %v13474, %v13477
  %vm13479 = vweird.f32 %v13473
  %vm13480 = vweird.f32 %v13474
  %vm13481 = vmor %vm13479, %vm13480
  %v13482 = vsel %vm13481, %v13474, %v13478
  %v13483 = vand.u32 2147483647, %v13473
  %vm13484 = vcmp.eq.f32.partialorder %v13483, 8.507059e+37
  %v13485 = vand.u32 %v13473, 2147483648
  %v13486 = vor.u32 1.1754944e-38, %v13485
  %v13487 = vsel %vm13484, %v13486, %v13482
  %v13488 = vmul.f32 1.0, %v13487
  %v13489 = vmul.f32 %v13468, %v13446
  %v13490 = vadd.f32 %v12852, %v13489
  %v13491 = vtanh.pop %v13490
  %v13492 = vsub.f32 1.0, %v13488
  %v13493 = vmul.f32 %v13492, %v13491
  %v13494 = vmul.f32 %v13488, %v13408
  %v13495 = vadd.f32 %v13493, %v13494
  %v13496 = vsub.f32 %v13495, %v13408
  %13497 = vset.pattern.permute.xlu0 4
  %13498 = vperm.xlu0 %13497, %v12893
  %v13499 = vpop.permute.xlu0 %13498
  %v13501 = vmul.f32 %v13499, %v13496
  %v13502 = vadd.f32 %v13408, %v13501
  %v13503 = vpack.c.bf16 %v13502, %v13502
  %13504 = vmatpush.bf16.msra.mxu0 %v13006
  %13505 = vmatpush.bf16.msra.mxu0 %v13003
  %13506 = vmatpush.bf16.msra.mxu0 %v13000
  %13507 = vmatpush.bf16.msra.mxu0 %v12997
  %13508 = vmatpush.bf16.msra.mxu0 %v12994
  %13509 = vmatpush.bf16.msra.mxu0 %v12991
  %13510 = vmatpush.bf16.msra.mxu0 %v12988
  %13511 = vmatpush.bf16.msra.mxu0 %v12985
  %13512 = vmatmul.bf16.gmra.mxu0 %v13503
  %v13513 = vpop.f32.mrf.mxu0
  %v13514 = vadd.f32 %v12902, %v13513
  %v13515 = vpop.f32.mrf.mxu0
  %13516 = vdwg.mxu0
  %13517 = vmatpush.bf16.msra.mxu0 %v13007
  %13518 = vmatpush.bf16.msra.mxu0 %v13004
  %13519 = vmatpush.bf16.msra.mxu0 %v13001
  %13520 = vmatpush.bf16.msra.mxu0 %v12998
  %13521 = vmatpush.bf16.msra.mxu0 %v12995
  %13522 = vmatpush.bf16.msra.mxu0 %v12992
  %13523 = vmatpush.bf16.msra.mxu0 %v12989
  %13524 = vmatpush.bf16.msra.mxu0 %v12986
  %13525 = vmatmul.bf16.gmra.mxu0 %v13503
  %v13526 = vpop.f32.mrf.mxu0
  %v13527 = vadd.f32 %v12903, %v13526
  %v13528 = vpop.f32.mrf.mxu0
  %13529 = vdwg.mxu0
  %13530 = vmatpush.bf16.msra.mxu0 %v13008
  %13531 = vmatpush.bf16.msra.mxu0 %v13005
  %13532 = vmatpush.bf16.msra.mxu0 %v13002
  %13533 = vmatpush.bf16.msra.mxu0 %v12999
  %13534 = vmatpush.bf16.msra.mxu0 %v12996
  %13535 = vmatpush.bf16.msra.mxu0 %v12993
  %13536 = vmatpush.bf16.msra.mxu0 %v12990
  %13537 = vmatpush.bf16.msra.mxu0 %v12987
  %13538 = vmatmul.bf16.gmra.mxu0 %v13503
  %v13539 = vpop.f32.mrf.mxu0
  %v13540 = vadd.f32 %v12904, %v13539
  %v13541 = vpop.f32.mrf.mxu0
  %13542 = vdwg.mxu0
  %v13543 = vadd.f32 %v12796, %v13514
  %v13544 = vxor.u32 %v13543, 2147483648
  %v13545 = vmul.f32 %v13544, 1.442695
  %v13546 = vpow.pop %v13545
  %v13547 = vadd.f32 %v13546, 1.0
  %v13548 = vrcp.pop %v13547
  %v13549 = vmul.f32 %v13547, %v13548
  %v13550 = vsub.f32 1.0, %v13549
  %v13551 = vmul.f32 %v13548, %v13550
  %v13552 = vadd.f32 %v13548, %v13551
  %vm13553 = vweird.f32 %v13547
  %vm13554 = vweird.f32 %v13548
  %vm13555 = vmor %vm13553, %vm13554
  %v13556 = vsel %vm13555, %v13548, %v13552
  %v13557 = vand.u32 2147483647, %v13547
  %vm13558 = vcmp.eq.f32.partialorder %v13557, 8.507059e+37
  %v13559 = vand.u32 %v13547, 2147483648
  %v13560 = vor.u32 1.1754944e-38, %v13559
  %v13561 = vsel %vm13558, %v13560, %v13556
  %v13562 = vmul.f32 1.0, %v13561
  %v13563 = vadd.f32 %v12825, %v13527
  %v13564 = vxor.u32 %v13563, 2147483648
  %v13565 = vmul.f32 %v13564, 1.442695
  %v13566 = vpow.pop %v13565
  %v13567 = vadd.f32 %v13566, 1.0
  %v13568 = vrcp.pop %v13567
  %v13569 = vmul.f32 %v13567, %v13568
  %v13570 = vsub.f32 1.0, %v13569
  %v13571 = vmul.f32 %v13568, %v13570
  %v13572 = vadd.f32 %v13568, %v13571
  %vm13573 = vweird.f32 %v13567
  %vm13574 = vweird.f32 %v13568
  %vm13575 = vmor %vm13573, %vm13574
  %v13576 = vsel %vm13575, %v13568, %v13572
  %v13577 = vand.u32 2147483647, %v13567
  %vm13578 = vcmp.eq.f32.partialorder %v13577, 8.507059e+37
  %v13579 = vand.u32 %v13567, 2147483648
  %v13580 = vor.u32 1.1754944e-38, %v13579
  %v13581 = vsel %vm13578, %v13580, %v13576
  %v13582 = vmul.f32 1.0, %v13581
  %v13583 = vmul.f32 %v13562, %v13540
  %v13584 = vadd.f32 %v12854, %v13583
  %v13585 = vtanh.pop %v13584
  %v13586 = vsub.f32 1.0, %v13582
  %v13587 = vmul.f32 %v13586, %v13585
  %v13588 = vmul.f32 %v13582, %v13502
  %v13589 = vadd.f32 %v13587, %v13588
  %v13590 = vsub.f32 %v13589, %v13502
  %13591 = vset.pattern.permute.xlu0 5
  %13592 = vperm.xlu0 %13591, %v12893
  %v13593 = vpop.permute.xlu0 %13592
  %v13595 = vmul.f32 %v13593, %v13590
  %v13596 = vadd.f32 %v13502, %v13595
  %v13597 = vpack.c.bf16 %v13596, %v13596
  %13598 = vmatpush.bf16.msra.mxu0 %v13006
  %13599 = vmatpush.bf16.msra.mxu0 %v13003
  %13600 = vmatpush.bf16.msra.mxu0 %v13000
  %13601 = vmatpush.bf16.msra.mxu0 %v12997
  %13602 = vmatpush.bf16.msra.mxu0 %v12994
  %13603 = vmatpush.bf16.msra.mxu0 %v12991
  %13604 = vmatpush.bf16.msra.mxu0 %v12988
  %13605 = vmatpush.bf16.msra.mxu0 %v12985
  %13606 = vmatmul.bf16.gmra.mxu0 %v13597
  %v13607 = vpop.f32.mrf.mxu0
  %v13608 = vadd.f32 %v12902, %v13607
  %v13609 = vpop.f32.mrf.mxu0
  %13610 = vdwg.mxu0
  %13611 = vmatpush.bf16.msra.mxu0 %v13007
  %13612 = vmatpush.bf16.msra.mxu0 %v13004
  %13613 = vmatpush.bf16.msra.mxu0 %v13001
  %13614 = vmatpush.bf16.msra.mxu0 %v12998
  %13615 = vmatpush.bf16.msra.mxu0 %v12995
  %13616 = vmatpush.bf16.msra.mxu0 %v12992
  %13617 = vmatpush.bf16.msra.mxu0 %v12989
  %13618 = vmatpush.bf16.msra.mxu0 %v12986
  %13619 = vmatmul.bf16.gmra.mxu0 %v13597
  %v13620 = vpop.f32.mrf.mxu0
  %v13621 = vadd.f32 %v12903, %v13620
  %v13622 = vpop.f32.mrf.mxu0
  %13623 = vdwg.mxu0
  %13624 = vmatpush.bf16.msra.mxu0 %v13008
  %13625 = vmatpush.bf16.msra.mxu0 %v13005
  %13626 = vmatpush.bf16.msra.mxu0 %v13002
  %13627 = vmatpush.bf16.msra.mxu0 %v12999
  %13628 = vmatpush.bf16.msra.mxu0 %v12996
  %13629 = vmatpush.bf16.msra.mxu0 %v12993
  %13630 = vmatpush.bf16.msra.mxu0 %v12990
  %13631 = vmatpush.bf16.msra.mxu0 %v12987
  %13632 = vmatmul.bf16.gmra.mxu0 %v13597
  %v13633 = vpop.f32.mrf.mxu0
  %v13634 = vadd.f32 %v12904, %v13633
  %v13635 = vpop.f32.mrf.mxu0
  %13636 = vdwg.mxu0
  %v13637 = vadd.f32 %v12799, %v13608
  %v13638 = vxor.u32 %v13637, 2147483648
  %v13639 = vmul.f32 %v13638, 1.442695
  %v13640 = vpow.pop %v13639
  %v13641 = vadd.f32 %v13640, 1.0
  %v13642 = vrcp.pop %v13641
  %v13643 = vmul.f32 %v13641, %v13642
  %v13644 = vsub.f32 1.0, %v13643
  %v13645 = vmul.f32 %v13642, %v13644
  %v13646 = vadd.f32 %v13642, %v13645
  %vm13647 = vweird.f32 %v13641
  %vm13648 = vweird.f32 %v13642
  %vm13649 = vmor %vm13647, %vm13648
  %v13650 = vsel %vm13649, %v13642, %v13646
  %v13651 = vand.u32 2147483647, %v13641
  %vm13652 = vcmp.eq.f32.partialorder %v13651, 8.507059e+37
  %v13653 = vand.u32 %v13641, 2147483648
  %v13654 = vor.u32 1.1754944e-38, %v13653
  %v13655 = vsel %vm13652, %v13654, %v13650
  %v13656 = vmul.f32 1.0, %v13655
  %v13657 = vadd.f32 %v12828, %v13621
  %v13658 = vxor.u32 %v13657, 2147483648
  %v13659 = vmul.f32 %v13658, 1.442695
  %v13660 = vpow.pop %v13659
  %v13661 = vadd.f32 %v13660, 1.0
  %v13662 = vrcp.pop %v13661
  %v13663 = vmul.f32 %v13661, %v13662
  %v13664 = vsub.f32 1.0, %v13663
  %v13665 = vmul.f32 %v13662, %v13664
  %v13666 = vadd.f32 %v13662, %v13665
  %vm13667 = vweird.f32 %v13661
  %vm13668 = vweird.f32 %v13662
  %vm13669 = vmor %vm13667, %vm13668
  %v13670 = vsel %vm13669, %v13662, %v13666
  %v13671 = vand.u32 2147483647, %v13661
  %vm13672 = vcmp.eq.f32.partialorder %v13671, 8.507059e+37
  %v13673 = vand.u32 %v13661, 2147483648
  %v13674 = vor.u32 1.1754944e-38, %v13673
  %v13675 = vsel %vm13672, %v13674, %v13670
  %v13676 = vmul.f32 1.0, %v13675
  %v13677 = vmul.f32 %v13656, %v13634
  %v13678 = vadd.f32 %v12857, %v13677
  %v13679 = vtanh.pop %v13678
  %v13680 = vsub.f32 1.0, %v13676
  %v13681 = vmul.f32 %v13680, %v13679
  %v13682 = vmul.f32 %v13676, %v13596
  %v13683 = vadd.f32 %v13681, %v13682
  %v13684 = vsub.f32 %v13683, %v13596
  %13685 = vset.pattern.permute.xlu0 6
  %13686 = vperm.xlu0 %13685, %v12893
  %v13687 = vpop.permute.xlu0 %13686
  %v13689 = vmul.f32 %v13687, %v13684
  %v13690 = vadd.f32 %v13596, %v13689
  %v13691 = vpack.c.bf16 %v13690, %v13690
  %13692 = vmatpush.bf16.msra.mxu0 %v13006
  %13693 = vmatpush.bf16.msra.mxu0 %v13003
  %13694 = vmatpush.bf16.msra.mxu0 %v13000
  %13695 = vmatpush.bf16.msra.mxu0 %v12997
  %13696 = vmatpush.bf16.msra.mxu0 %v12994
  %13697 = vmatpush.bf16.msra.mxu0 %v12991
  %13698 = vmatpush.bf16.msra.mxu0 %v12988
  %13699 = vmatpush.bf16.msra.mxu0 %v12985
  %13700 = vmatmul.bf16.gmra.mxu0 %v13691
  %v13701 = vpop.f32.mrf.mxu0
  %v13702 = vadd.f32 %v12902, %v13701
  %v13703 = vpop.f32.mrf.mxu0
  %13704 = vdwg.mxu0
  %13705 = vmatpush.bf16.msra.mxu0 %v13007
  %13706 = vmatpush.bf16.msra.mxu0 %v13004
  %13707 = vmatpush.bf16.msra.mxu0 %v13001
  %13708 = vmatpush.bf16.msra.mxu0 %v12998
  %13709 = vmatpush.bf16.msra.mxu0 %v12995
  %13710 = vmatpush.bf16.msra.mxu0 %v12992
  %13711 = vmatpush.bf16.msra.mxu0 %v12989
  %13712 = vmatpush.bf16.msra.mxu0 %v12986
  %13713 = vmatmul.bf16.gmra.mxu0 %v13691
  %v13714 = vpop.f32.mrf.mxu0
  %v13715 = vadd.f32 %v12903, %v13714
  %v13716 = vpop.f32.mrf.mxu0
  %13717 = vdwg.mxu0
  %13718 = vmatpush.bf16.msra.mxu0 %v13008
  %13719 = vmatpush.bf16.msra.mxu0 %v13005
  %13720 = vmatpush.bf16.msra.mxu0 %v13002
  %13721 = vmatpush.bf16.msra.mxu0 %v12999
  %13722 = vmatpush.bf16.msra.mxu0 %v12996
  %13723 = vmatpush.bf16.msra.mxu0 %v12993
  %13724 = vmatpush.bf16.msra.mxu0 %v12990
  %13725 = vmatpush.bf16.msra.mxu0 %v12987
  %13726 = vmatmul.bf16.gmra.mxu0 %v13691
  %v13727 = vpop.f32.mrf.mxu0
  %v13728 = vadd.f32 %v12904, %v13727
  %v13729 = vpop.f32.mrf.mxu0
  %13730 = vdwg.mxu0
  %v13731 = vadd.f32 %v12801, %v13702
  %v13732 = vxor.u32 %v13731, 2147483648
  %v13733 = vmul.f32 %v13732, 1.442695
  %v13734 = vpow.pop %v13733
  %v13735 = vadd.f32 %v13734, 1.0
  %v13736 = vrcp.pop %v13735
  %v13737 = vmul.f32 %v13735, %v13736
  %v13738 = vsub.f32 1.0, %v13737
  %v13739 = vmul.f32 %v13736, %v13738
  %v13740 = vadd.f32 %v13736, %v13739
  %vm13741 = vweird.f32 %v13735
  %vm13742 = vweird.f32 %v13736
  %vm13743 = vmor %vm13741, %vm13742
  %v13744 = vsel %vm13743, %v13736, %v13740
  %v13745 = vand.u32 2147483647, %v13735
  %vm13746 = vcmp.eq.f32.partialorder %v13745, 8.507059e+37
  %v13747 = vand.u32 %v13735, 2147483648
  %v13748 = vor.u32 1.1754944e-38, %v13747
  %v13749 = vsel %vm13746, %v13748, %v13744
  %v13750 = vmul.f32 1.0, %v13749
  %v13751 = vadd.f32 %v12830, %v13715
  %v13752 = vxor.u32 %v13751, 2147483648
  %v13753 = vmul.f32 %v13752, 1.442695
  %v13754 = vpow.pop %v13753
  %v13755 = vadd.f32 %v13754, 1.0
  %v13756 = vrcp.pop %v13755
  %v13757 = vmul.f32 %v13755, %v13756
  %v13758 = vsub.f32 1.0, %v13757
  %v13759 = vmul.f32 %v13756, %v13758
  %v13760 = vadd.f32 %v13756, %v13759
  %vm13761 = vweird.f32 %v13755
  %vm13762 = vweird.f32 %v13756
  %vm13763 = vmor %vm13761, %vm13762
  %v13764 = vsel %vm13763, %v13756, %v13760
  %v13765 = vand.u32 2147483647, %v13755
  %vm13766 = vcmp.eq.f32.partialorder %v13765, 8.507059e+37
  %v13767 = vand.u32 %v13755, 2147483648
  %v13768 = vor.u32 1.1754944e-38, %v13767
  %v13769 = vsel %vm13766, %v13768, %v13764
  %v13770 = vmul.f32 1.0, %v13769
  %v13771 = vmul.f32 %v13750, %v13728
  %v13772 = vadd.f32 %v12859, %v13771
  %v13773 = vtanh.pop %v13772
  %v13774 = vsub.f32 1.0, %v13770
  %v13775 = vmul.f32 %v13774, %v13773
  %v13776 = vmul.f32 %v13770, %v13690
  %v13777 = vadd.f32 %v13775, %v13776
  %v13778 = vsub.f32 %v13777, %v13690
  %13779 = vset.pattern.permute.xlu0 7
  %13780 = vperm.xlu0 %13779, %v12893
  %v13781 = vpop.permute.xlu0 %13780
  %v13783 = vmul.f32 %v13781, %v13778
  %v13784 = vadd.f32 %v13690, %v13783
  %v13785 = vmul.f32 %v12587, %v13784
  %13786 = vadd.xlane.f32.xlu0 %v13785
  %v13787 = vpop.xlane.xlu0 %13786
  %v13788 = vmul.f32 %v12588, %v13784
  %13789 = vadd.xlane.f32.xlu0 %v13788
  %v13790 = vpop.xlane.xlu0 %13789
  %v13791 = vmul.f32 %v12589, %v13784
  %13792 = vadd.xlane.f32.xlu0 %v13791
  %v13793 = vpop.xlane.xlu0 %13792
  %v13794 = vmul.f32 %v12590, %v13784
  %13795 = vadd.xlane.f32.xlu0 %v13794
  %v13796 = vpop.xlane.xlu0 %13795
  %vm13797 = vcmask 7168
  %v13798 = vsel %vm13797, %v13787, %v13790
  %vm13799 = vcmask 15360
  %v13800 = vsel %vm13799, %v13798, %v13793
  %vm13801 = vcmask 23552
  %v13802 = vsel %vm13801, %v13800, %v13796
  %vm13803 = vcmask 31744
  %v13804 = vsel %vm13803, %v13802, 0.0
  %13805 = vst [vmem:[%s11] sm:$0xff] %v13804
  // Predicated region
  $region46: #{lstur_forward.1} parent=0 // pred_check
    _
  $region47: #{lstur_forward.1} parent=0 // pred_check_branch
    %13807 = sbr.rel (0) target = $region49
  $region48: #{lstur_forward.1} parent=0 // pred_region
    _
  $region49: #{lstur_forward.1} parent=0 // pred_fallthru
    _
  // Predicated region
  $region50: #{lstur_forward.1} parent=0 // pred_check
    _
  $region51: #{lstur_forward.1} parent=0 // pred_check_branch
    %13809 = sbr.rel (0) target = $region53
  $region52: #{lstur_forward.1} parent=0 // pred_region
    _
  $region53: #{lstur_forward.1} parent=0 // pred_fallthru
    _

</llo_original>
